<compile_context>
chip_gen: v6e
topology: v6e:2x2x1
jax: 0.10.0
libtpu: 0.0.40
codegen_flags: <defaults>
</compile_context>

<pallas_src>
import functools

import jax
import jax.numpy as jnp
from jax.experimental import pallas as pl
from jax.experimental.pallas import tpu as pltpu


def _attention_kernel(x_ref, kv_ref, wq_ref, wkv_ref, wp_ref, bp_ref,
                      mk_ref, mv_ref, o_ref,
                      *, block_b, seq_q, seq_kv, num_heads):
    # x_ref : (Bt*HW, C1)      kv_ref: (Bt*N, C2)
    # wq_ref: (C1, 2*C2)  (scale folded, right half zero)
    # wkv_ref: (C2, 2*C2) (fused k|v projection)
    # wp_ref: (2*C2, C1)  (top half zero -> consumes the v-half channels)
    # bp_ref: (1, C1)     mk_ref/mv_ref: (H, 2*C2) per-head channel masks
    # o_ref : (Bt*HW, C1)
    Bt, HW, N, H = block_b, seq_q, seq_kv, num_heads
    C2p = wq_ref.shape[-1]                      # fused channel width = 2*C2

    x = x_ref[...]                              # (Bt*HW, C1) bf16
    kv = kv_ref[...]                            # (Bt*N,  C2) bf16

    # --- fat projections: bf16 operands, f32 accumulation (MXU fast path) ---
    q = jnp.dot(x, wq_ref[...], preferred_element_type=jnp.float32)      # (Bt*HW, 2C2)
    kvp = jnp.dot(kv, wkv_ref[...], preferred_element_type=jnp.float32)  # (Bt*N,  2C2)

    # leading-dim splits only (no lane-axis movement)
    q3 = q.reshape(Bt, HW, C2p).astype(jnp.bfloat16)
    kvp3 = kvp.reshape(Bt, N, C2p)              # f32

    # head-selection masks over the fused channel axis (k-half / v-half);
    # mask multiply in f32 (v5e-safe), cast to bf16 at the dot boundary.
    mk = mk_ref[...]                            # (H, 2C2) f32
    mv = mv_ref[...]
    km = (kvp3[:, None, :, :] * mk[None, :, None, :]
          ).reshape(Bt, H * N, C2p).astype(jnp.bfloat16)
    vm = (kvp3[:, None, :, :] * mv[None, :, None, :]
          ).reshape(Bt, H * N, C2p).astype(jnp.bfloat16)

    # scores: column h*N + j holds (head h, key j); full 128-lane contraction.
    s = jnp.einsum('bqc,bkc->bqk', q3, km,
                   preferred_element_type=jnp.float32)                   # (Bt, HW, H*N)

    # per-(query, head) softmax over the key axis (f32 throughout)
    s4 = s.reshape(Bt, HW, H, N)
    s4 = s4 - jnp.max(s4, axis=-1, keepdims=True)
    p4 = jnp.exp(s4)
    p4 = p4 * pl.reciprocal(jnp.sum(p4, axis=-1, keepdims=True), approx=True)
    p = p4.reshape(Bt, HW, H * N).astype(jnp.bfloat16)
    # attn_drop / proj_drop have p = 0.0 in the module -> identity; mask=None path.

    # attn @ V: the v-mask places each head's output only in its own channels
    # (upper C2 half), so one batched matmul recombines all heads at once.
    o3 = jnp.einsum('bqk,bkc->bqc', p, vm,
                    preferred_element_type=jnp.float32)                  # (Bt, HW, 2C2)

    # output projection (zero-padded wp consumes only the v-half channels) + bias
    y = jnp.dot(o3.reshape(Bt * HW, C2p).astype(jnp.bfloat16), wp_ref[...],
                preferred_element_type=jnp.float32) + bp_ref[...]        # (Bt*HW, C1)
    o_ref[...] = y.astype(o_ref.dtype)


def attention_forward(x, kv, wq_t, wkv_t, wproj_t, bproj, *, num_heads, block_b=None):
    """x: (B, HW, C1), kv: (B, N, C2). Weights already transposed to (in, out)."""
    B, HW, C1 = x.shape
    Bk, N, C2 = kv.shape
    assert Bk == B and C2 % num_heads == 0
    H = num_heads
    D = C2 // H
    scale = D ** (-0.5)
    C2p = 2 * C2

    # One fat step by default: this kernel is latency-bound at small shapes and
    # v5e/v6e are single-TC; more grid steps only add per-step overhead.
    if block_b is None:
        block_b = B
    Bt = block_b
    assert B % Bt == 0 and (Bt * HW) % 8 == 0 and (Bt * N) % 8 == 0

    # bf16 operands halve HBM->VMEM bytes and hit the MXU's native fast path;
    # all accumulation / softmax math stays f32 inside the kernel.
    cdt = jnp.bfloat16
    x2 = x.reshape(B * HW, C1).astype(cdt)
    kv2 = kv.reshape(B * N, C2).astype(cdt)
    # q weights: fold the softmax scale, zero-pad to the fused 2*C2 width.
    wq_pad = jnp.concatenate(
        [wq_t * scale, jnp.zeros((C1, C2), wq_t.dtype)], axis=1).astype(cdt)
    wkv = wkv_t.astype(cdt)                                    # fused k|v projection
    # proj weights: zero-pad so the v-half channels map straight to outputs.
    wp_pad = jnp.concatenate(
        [jnp.zeros((C2, C1), wproj_t.dtype), wproj_t], axis=0).astype(cdt)
    bp = bproj.reshape(1, C1).astype(jnp.float32)

    # per-head channel-selection masks over the fused kvp channel axis
    c_idx = jnp.arange(C2p)[None, :]
    h_idx = jnp.arange(H)[:, None]
    mask_k = ((c_idx // D) == h_idx).astype(jnp.float32)       # (H, 2C2), k-half head h
    mask_v = ((c_idx // D) == (h_idx + H)).astype(jnp.float32)  # (H, 2C2), v-half head h

    flops = (2 * B * HW * C1 * C2p            # q projection (padded)
             + 2 * B * N * C2 * C2p           # fused kv projection
             + 4 * B * HW * H * N * C2p       # scores + attn@v (masked full-width)
             + 2 * B * HW * C2p * C1)         # output projection (padded)
    transcendentals = B * HW * H * N
    bytes_accessed = ((x2.size + kv2.size + wq_pad.size + wkv.size + wp_pad.size) * 2
                      + (bp.size + mask_k.size + mask_v.size) * 4
                      + B * HW * C1 * 4)

    kernel = functools.partial(_attention_kernel, block_b=Bt, seq_q=HW,
                               seq_kv=N, num_heads=H)

    out_flat = pl.pallas_call(
        kernel,
        out_shape=jax.ShapeDtypeStruct((B * HW, C1), jnp.float32),
        grid=(B // Bt,),
        in_specs=[
            pl.BlockSpec((Bt * HW, C1), lambda g: (g, 0)),   # x  (batch folded into M)
            pl.BlockSpec((Bt * N, C2), lambda g: (g, 0)),    # kv (batch folded into M)
            pl.BlockSpec((C1, C2p), lambda g: (0, 0)),       # Wq^T padded+scaled
            pl.BlockSpec((C2, C2p), lambda g: (0, 0)),       # Wkv^T fused
            pl.BlockSpec((C2p, C1), lambda g: (0, 0)),       # Wproj^T padded
            pl.BlockSpec((1, C1), lambda g: (0, 0)),         # bias
            pl.BlockSpec((H, C2p), lambda g: (0, 0)),        # k head mask
            pl.BlockSpec((H, C2p), lambda g: (0, 0)),        # v head mask
        ],
        out_specs=pl.BlockSpec((Bt * HW, C1), lambda g: (g, 0)),
        compiler_params=pltpu.CompilerParams(
            dimension_semantics=("parallel",)),
        cost_estimate=pl.CostEstimate(flops=flops,
                                      transcendentals=transcendentals,
                                      bytes_accessed=bytes_accessed),
    )(x2, kv2, wq_pad, wkv, wp_pad, bp, mask_k, mask_v)

    return out_flat.reshape(B, HW, C1)


def attention_reference(x, kv, wq_t, wkv_t, wproj_t, bproj, *, num_heads):
    """Plain-JAX replica of the PyTorch forward (mask=None, dropout=0)."""
    B, HW, C1 = x.shape
    _, N, C2 = kv.shape
    H = num_heads
    D = C2 // H
    scale = D ** (-0.5)
    q = (x @ wq_t).reshape(B, HW, H, D).transpose(0, 2, 1, 3)            # (B,H,HW,D)
    kvp = (kv @ wkv_t).reshape(B, N, 2, H, D).transpose(2, 0, 3, 1, 4)   # (2,B,H,N,D)
    k, v = kvp[0], kvp[1]
    attn = jnp.einsum('bhqd,bhkd->bhqk', q, k) * scale
    attn = jax.nn.softmax(attn, axis=-1)
    out = jnp.einsum('bhqk,bhkd->bhqd', attn, v).transpose(0, 2, 1, 3).reshape(B, HW, C2)
    return out @ wproj_t + bproj


if __name__ == "__main__":
    # Module config: dim=32, context_dim=64, num_heads=4 -> head_dim=16
    dim, context_dim, num_heads = 32, 64, 4
    B, HW, N = 16, 16, 8

    key = jax.random.PRNGKey(0)
    kx, kkv, kq, kw, kp, kb = jax.random.split(key, 6)

    x = jax.random.normal(kx, (B, HW, dim), dtype=jnp.float32)
    kv = jax.random.normal(kkv, (B, N, context_dim), dtype=jnp.float32)

    # PyTorch Linear weights stored transposed as (in, out).
    wq_t = 0.02 * jax.random.normal(kq, (dim, context_dim), dtype=jnp.float32)
    wkv_t = 0.02 * jax.random.normal(kw, (context_dim, 2 * context_dim), dtype=jnp.float32)
    wproj_t = 0.02 * jax.random.normal(kp, (context_dim, dim), dtype=jnp.float32)
    bproj = 0.02 * jax.random.normal(kb, (dim,), dtype=jnp.float32)

    out = attention_forward(x, kv, wq_t, wkv_t, wproj_t, bproj, num_heads=num_heads)
    out = jax.block_until_ready(out)
    assert out.shape == (B, HW, dim)

    # Reference in full f32 on the same bf16-rounded operands the kernel consumes.
    rnd = lambda a: a.astype(jnp.bfloat16).astype(jnp.float32)
    with jax.default_matmul_precision("highest"):
        ref = attention_reference(rnd(x), rnd(kv), rnd(wq_t), rnd(wkv_t), rnd(wproj_t),
                                  bproj, num_heads=num_heads)
    err = float(jnp.max(jnp.abs(out - ref)))
    assert jnp.allclose(out, ref, atol=3e-3, rtol=3e-2), f"mismatch vs reference: {err}"

    print("KERNEL_OK")
</pallas_src>

<mosaic_0001>
module attributes {stable_mosaic.version = 11 : i64} {
  func.func @_attention_kernel(%arg0: i32, %arg1: memref<256x32xbf16, #tpu.memory_space<vmem>>, %arg2: memref<128x64xbf16, #tpu.memory_space<vmem>>, %arg3: memref<32x128xbf16, #tpu.memory_space<vmem>>, %arg4: memref<64x128xbf16, #tpu.memory_space<vmem>>, %arg5: memref<128x32xbf16, #tpu.memory_space<vmem>>, %arg6: memref<1x32xf32, #tpu.memory_space<vmem>>, %arg7: memref<4x128xf32, #tpu.memory_space<vmem>>, %arg8: memref<4x128xf32, #tpu.memory_space<vmem>>, %arg9: memref<256x32xf32, #tpu.memory_space<vmem>>) attributes {dimension_semantics = [#tpu.dimension_semantics<parallel>], iteration_bounds = array<i64: 1>, scalar_prefetch = 0 : i64, scratch_operands = 0 : i64, tpu.core_type = #tpu.core_type<tc>, window_params = [{transform_indices = @transform_0, window_bounds = array<i64: 256, 32>}, {transform_indices = @transform_1, window_bounds = array<i64: 128, 64>}, {pipeline_mode = #tpu.pipeline_mode<synchronous>, transform_indices = @transform_2, window_bounds = array<i64: 32, 128>}, {pipeline_mode = #tpu.pipeline_mode<synchronous>, transform_indices = @transform_3, window_bounds = array<i64: 64, 128>}, {pipeline_mode = #tpu.pipeline_mode<synchronous>, transform_indices = @transform_4, window_bounds = array<i64: 128, 32>}, {pipeline_mode = #tpu.pipeline_mode<synchronous>, transform_indices = @transform_5, window_bounds = array<i64: 1, 32>}, {pipeline_mode = #tpu.pipeline_mode<synchronous>, transform_indices = @transform_6, window_bounds = array<i64: 4, 128>}, {pipeline_mode = #tpu.pipeline_mode<synchronous>, transform_indices = @transform_7, window_bounds = array<i64: 4, 128>}, {transform_indices = @transform_8, window_bounds = array<i64: 256, 32>}]} {
    %c0 = arith.constant 0 : index
    %c0_0 = arith.constant 0 : index
    %0 = vector.load %arg1[%c0, %c0_0] : memref<256x32xbf16, #tpu.memory_space<vmem>>, vector<256x32xbf16>
    %c0_1 = arith.constant 0 : index
    %c0_2 = arith.constant 0 : index
    %1 = vector.load %arg2[%c0_1, %c0_2] : memref<128x64xbf16, #tpu.memory_space<vmem>>, vector<128x64xbf16>
    %c0_3 = arith.constant 0 : index
    %c0_4 = arith.constant 0 : index
    %2 = vector.load %arg3[%c0_3, %c0_4] : memref<32x128xbf16, #tpu.memory_space<vmem>>, vector<32x128xbf16>
    %cst = arith.constant dense<0.000000e+00> : vector<256x128xf32>
    %3 = tpu.matmul %0, %2, %cst {dimension_numbers = #tpu.dot_dimension_numbers<[1], [0], [0], [1], [0, 0, 1, 1], [], []>} : vector<256x32xbf16>, vector<32x128xbf16>, vector<256x128xf32> -> vector<256x128xf32>
    %c0_5 = arith.constant 0 : index
    %c0_6 = arith.constant 0 : index
    %4 = vector.load %arg4[%c0_5, %c0_6] : memref<64x128xbf16, #tpu.memory_space<vmem>>, vector<64x128xbf16>
    %cst_7 = arith.constant dense<0.000000e+00> : vector<128x128xf32>
    %5 = tpu.matmul %1, %4, %cst_7 {dimension_numbers = #tpu.dot_dimension_numbers<[1], [0], [0], [1], [0, 0, 1, 1], [], []>} : vector<128x64xbf16>, vector<64x128xbf16>, vector<128x128xf32> -> vector<128x128xf32>
    %6 = vector.shape_cast %3 : vector<256x128xf32> to vector<16x16x128xf32>
    %7 = arith.truncf %6 : vector<16x16x128xf32> to vector<16x16x128xbf16>
    %8 = vector.shape_cast %5 : vector<128x128xf32> to vector<16x8x128xf32>
    %c0_8 = arith.constant 0 : index
    %c0_9 = arith.constant 0 : index
    %9 = vector.load %arg7[%c0_8, %c0_9] : memref<4x128xf32, #tpu.memory_space<vmem>>, vector<4x128xf32>
    %c0_10 = arith.constant 0 : index
    %c0_11 = arith.constant 0 : index
    %10 = vector.load %arg8[%c0_10, %c0_11] : memref<4x128xf32, #tpu.memory_space<vmem>>, vector<4x128xf32>
    %11 = vector.shape_cast %8 : vector<16x8x128xf32> to vector<16x1x8x128xf32>
    %12 = vector.shape_cast %9 : vector<4x128xf32> to vector<1x4x1x128xf32>
    %13 = vector.broadcast %11 : vector<16x1x8x128xf32> to vector<16x4x8x128xf32>
    %14 = vector.broadcast %12 : vector<1x4x1x128xf32> to vector<16x4x8x128xf32>
    %15 = arith.mulf %13, %14 : vector<16x4x8x128xf32>
    %16 = vector.shape_cast %15 : vector<16x4x8x128xf32> to vector<16x32x128xf32>
    %17 = arith.truncf %16 : vector<16x32x128xf32> to vector<16x32x128xbf16>
    %18 = vector.shape_cast %8 : vector<16x8x128xf32> to vector<16x1x8x128xf32>
    %19 = vector.shape_cast %10 : vector<4x128xf32> to vector<1x4x1x128xf32>
    %20 = vector.broadcast %18 : vector<16x1x8x128xf32> to vector<16x4x8x128xf32>
    %21 = vector.broadcast %19 : vector<1x4x1x128xf32> to vector<16x4x8x128xf32>
    %22 = arith.mulf %20, %21 : vector<16x4x8x128xf32>
    %23 = vector.shape_cast %22 : vector<16x4x8x128xf32> to vector<16x32x128xf32>
    %24 = arith.truncf %23 : vector<16x32x128xf32> to vector<16x32x128xbf16>
    "tpu.trace_start"() <{level = 10 : i32, message = "bqc,bkc->bqk"}> : () -> ()
    %cst_12 = arith.constant dense<0.000000e+00> : vector<16x16x32xf32>
    %25 = tpu.matmul %7, %17, %cst_12 {dimension_numbers = #tpu.dot_dimension_numbers<[2], [2], [1], [1], [0, 0, 0, 1, 1, 1], [0], [0]>} : vector<16x16x128xbf16>, vector<16x32x128xbf16>, vector<16x16x32xf32> -> vector<16x16x32xf32>
    "tpu.trace_stop"() : () -> ()
    %26 = vector.shape_cast %25 : vector<16x16x32xf32> to vector<16x16x4x8xf32>
    %cst_13 = arith.constant dense<0xFF800000> : vector<16x16x4xf32>
    %27 = vector.multi_reduction <maximumf>, %26, %cst_13 [3] : vector<16x16x4x8xf32> to vector<16x16x4xf32>
    %28 = vector.shape_cast %27 : vector<16x16x4xf32> to vector<16x16x4x1xf32>
    %29 = vector.broadcast %28 : vector<16x16x4x1xf32> to vector<16x16x4x8xf32>
    %30 = arith.subf %26, %29 : vector<16x16x4x8xf32>
    %31 = math.exp %30 : vector<16x16x4x8xf32>
    %cst_14 = arith.constant dense<0.000000e+00> : vector<16x16x4xf32>
    %32 = vector.multi_reduction <add>, %31, %cst_14 [3] : vector<16x16x4x8xf32> to vector<16x16x4xf32>
    %33 = vector.shape_cast %32 : vector<16x16x4xf32> to vector<16x16x4x1xf32>
    %34 = tpu.reciprocal %33 {approx = true} : vector<16x16x4x1xf32> -> vector<16x16x4x1xf32>
    %35 = vector.broadcast %34 : vector<16x16x4x1xf32> to vector<16x16x4x8xf32>
    %36 = arith.mulf %31, %35 : vector<16x16x4x8xf32>
    %37 = vector.shape_cast %36 : vector<16x16x4x8xf32> to vector<16x16x32xf32>
    %38 = arith.truncf %37 : vector<16x16x32xf32> to vector<16x16x32xbf16>
    "tpu.trace_start"() <{level = 10 : i32, message = "bqk,bkc->bqc"}> : () -> ()
    %cst_15 = arith.constant dense<0.000000e+00> : vector<16x16x128xf32>
    %39 = tpu.matmul %38, %24, %cst_15 {dimension_numbers = #tpu.dot_dimension_numbers<[2], [1], [1], [2], [0, 0, 0, 1, 1, 2], [0], [0]>} : vector<16x16x32xbf16>, vector<16x32x128xbf16>, vector<16x16x128xf32> -> vector<16x16x128xf32>
    "tpu.trace_stop"() : () -> ()
    %40 = vector.shape_cast %39 : vector<16x16x128xf32> to vector<256x128xf32>
    %41 = arith.truncf %40 : vector<256x128xf32> to vector<256x128xbf16>
    %c0_16 = arith.constant 0 : index
    %c0_17 = arith.constant 0 : index
    %42 = vector.load %arg5[%c0_16, %c0_17] : memref<128x32xbf16, #tpu.memory_space<vmem>>, vector<128x32xbf16>
    %cst_18 = arith.constant dense<0.000000e+00> : vector<256x32xf32>
    %43 = tpu.matmul %41, %42, %cst_18 {dimension_numbers = #tpu.dot_dimension_numbers<[1], [0], [0], [1], [0, 0, 1, 1], [], []>} : vector<256x128xbf16>, vector<128x32xbf16>, vector<256x32xf32> -> vector<256x32xf32>
    %c0_19 = arith.constant 0 : index
    %c0_20 = arith.constant 0 : index
    %44 = vector.load %arg6[%c0_19, %c0_20] : memref<1x32xf32, #tpu.memory_space<vmem>>, vector<1x32xf32>
    %45 = vector.broadcast %44 : vector<1x32xf32> to vector<256x32xf32>
    %46 = arith.addf %43, %45 : vector<256x32xf32>
    %c0_21 = arith.constant 0 : index
    %c0_22 = arith.constant 0 : index
    %47 = vector.load %arg9[%c0_21, %c0_22] : memref<256x32xf32, #tpu.memory_space<vmem>>, vector<256x32xf32>
    tpu.vector_store %arg9[%c0_21, %c0_22], %46 {strides = array<i32>} : memref<256x32xf32, #tpu.memory_space<vmem>>, vector<256x32xf32>,
    return
  }
  func.func @transform_0(%arg0: i32) -> (i32, i32) {
    %c0_i32 = arith.constant 0 : i32
    %c0_i32_0 = arith.constant 0 : i32
    return %arg0, %c0_i32 : i32, i32
  }
  func.func @transform_1(%arg0: i32) -> (i32, i32) {
    %c0_i32 = arith.constant 0 : i32
    %c0_i32_0 = arith.constant 0 : i32
    return %arg0, %c0_i32 : i32, i32
  }
  func.func @transform_2(%arg0: i32) -> (i32, i32) {
    %c0_i32 = arith.constant 0 : i32
    %c0_i32_0 = arith.constant 0 : i32
    %c0_i32_1 = arith.constant 0 : i32
    return %c0_i32, %c0_i32_0 : i32, i32
  }
  func.func @transform_3(%arg0: i32) -> (i32, i32) {
    %c0_i32 = arith.constant 0 : i32
    %c0_i32_0 = arith.constant 0 : i32
    %c0_i32_1 = arith.constant 0 : i32
    return %c0_i32, %c0_i32_0 : i32, i32
  }
  func.func @transform_4(%arg0: i32) -> (i32, i32) {
    %c0_i32 = arith.constant 0 : i32
    %c0_i32_0 = arith.constant 0 : i32
    %c0_i32_1 = arith.constant 0 : i32
    return %c0_i32, %c0_i32_0 : i32, i32
  }
  func.func @transform_5(%arg0: i32) -> (i32, i32) {
    %c0_i32 = arith.constant 0 : i32
    %c0_i32_0 = arith.constant 0 : i32
    %c0_i32_1 = arith.constant 0 : i32
    return %c0_i32, %c0_i32_0 : i32, i32
  }
  func.func @transform_6(%arg0: i32) -> (i32, i32) {
    %c0_i32 = arith.constant 0 : i32
    %c0_i32_0 = arith.constant 0 : i32
    %c0_i32_1 = arith.constant 0 : i32
    return %c0_i32, %c0_i32_0 : i32, i32
  }
  func.func @transform_7(%arg0: i32) -> (i32, i32) {
    %c0_i32 = arith.constant 0 : i32
    %c0_i32_0 = arith.constant 0 : i32
    %c0_i32_1 = arith.constant 0 : i32
    return %c0_i32, %c0_i32_0 : i32, i32
  }
  func.func @transform_8(%arg0: i32) -> (i32, i32) {
    %c0_i32 = arith.constant 0 : i32
    %c0_i32_0 = arith.constant 0 : i32
    return %arg0, %c0_i32 : i32, i32
  }
}

</mosaic_0001>

<llo_original>
// kernel: tpu_custom_call.1
$region0: #{tpu_custom_call.1}
  #allocation0 [shape = 'u32[]', space=smem, size = 0x4, offset = 0x4, fixed_abs, tag = 'smem constant byte address 0x4 - core index']
  #allocation1 [shape = 'u32[144,128]{1,0:T(1,128)}', space=vmem, size = 0x12000, scoped, tag = 'internal scratch']
  %s0 = inlined_call_operand.vmem [shape: bf16[256,32], index: 0, kind: input, shape index: {}]
  %s1 = inlined_call_operand.vmem [shape: bf16[128,64], index: 1, kind: input, shape index: {}]
  %s2 = inlined_call_operand.vmem [shape: bf16[32,128], index: 2, kind: input, shape index: {}]
  %s3 = inlined_call_operand.vmem [shape: bf16[64,128], index: 3, kind: input, shape index: {}]
  %s4 = inlined_call_operand.vmem [shape: bf16[128,32], index: 4, kind: input, shape index: {}]
  %s5 = inlined_call_operand.vmem [shape: f32[1,32], index: 5, kind: input, shape index: {}]
  %s6 = inlined_call_operand.vmem [shape: f32[4,128], index: 6, kind: input, shape index: {}]
  %s7 = inlined_call_operand.vmem [shape: f32[4,128], index: 7, kind: input, shape index: {}]
  %s8 = inlined_call_operand.vmem [shape: f32[256,32], index: 8, kind: output, shape index: {}]
  %s9 = sld [smem:[#allocation0]]
  $region42: #{tpu_custom_call.1} parent=0
    _
  %s11 = ssub.s32 1, %s9
  %s12 = scalar_select 0, %s11, %s9
  // Predicated region
  $region2: #{tpu_custom_call.1} parent=0 // pred_check
    _
  $region3: #{tpu_custom_call.1} parent=0 // pred_check_branch
    %14 = sbr.rel (0) target = $region5
  $region4: #{tpu_custom_call.1} parent=0 // pred_region
    _
  $region5: #{tpu_custom_call.1} parent=0 // pred_fallthru
    _
  // Predicated region
  $region6: #{tpu_custom_call.1} parent=0 // pred_check
    _
  $region7: #{tpu_custom_call.1} parent=0 // pred_check_branch
    %16 = sbr.rel (0) target = $region9
  $region8: #{tpu_custom_call.1} parent=0 // pred_region
    _
  $region9: #{tpu_custom_call.1} parent=0 // pred_fallthru
    _
  // Predicated region
  $region10: #{tpu_custom_call.1} parent=0 // pred_check
    _
  $region11: #{tpu_custom_call.1} parent=0 // pred_check_branch
    %18 = sbr.rel (0) target = $region13
  $region12: #{tpu_custom_call.1} parent=0 // pred_region
    _
  $region13: #{tpu_custom_call.1} parent=0 // pred_fallthru
    _
  // Predicated region
  $region14: #{tpu_custom_call.1} parent=0 // pred_check
    _
  $region15: #{tpu_custom_call.1} parent=0 // pred_check_branch
    %20 = sbr.rel (0) target = $region17
  $region16: #{tpu_custom_call.1} parent=0 // pred_region
    _
  $region17: #{tpu_custom_call.1} parent=0 // pred_fallthru
    _
  // Predicated region
  $region18: #{tpu_custom_call.1} parent=0 // pred_check
    _
  $region19: #{tpu_custom_call.1} parent=0 // pred_check_branch
    %22 = sbr.rel (0) target = $region21
  $region20: #{tpu_custom_call.1} parent=0 // pred_region
    _
  $region21: #{tpu_custom_call.1} parent=0 // pred_fallthru
    _
  // Predicated region
  $region22: #{tpu_custom_call.1} parent=0 // pred_check
    _
  $region23: #{tpu_custom_call.1} parent=0 // pred_check_branch
    %24 = sbr.rel (0) target = $region25
  $region24: #{tpu_custom_call.1} parent=0 // pred_region
    _
  $region25: #{tpu_custom_call.1} parent=0 // pred_fallthru
    _
  // Predicated region
  $region26: #{tpu_custom_call.1} parent=0 // pred_check
    _
  $region27: #{tpu_custom_call.1} parent=0 // pred_check_branch
    %26 = sbr.rel (0) target = $region29
  $region28: #{tpu_custom_call.1} parent=0 // pred_region
    _
  $region29: #{tpu_custom_call.1} parent=0 // pred_fallthru
    _
  // Predicated region
  $region30: #{tpu_custom_call.1} parent=0 // pred_check
    _
  $region31: #{tpu_custom_call.1} parent=0 // pred_check_branch
    %28 = sbr.rel (0) target = $region33
  $region32: #{tpu_custom_call.1} parent=0 // pred_region
    _
  $region33: #{tpu_custom_call.1} parent=0 // pred_fallthru
    _
  %v30 = vld [vmem:[%s0] sm:$0xf]
  %v31 = vld [vmem:[%s0 + $0x4] sm:$0xf]
  %v32 = vld [vmem:[%s0 + $0x8] sm:$0xf]
  %v33 = vld [vmem:[%s0 + $0xc] sm:$0xf]
  %v34 = vld [vmem:[%s0 + $0x10] sm:$0xf]
  %v35 = vld [vmem:[%s0 + $0x14] sm:$0xf]
  %v36 = vld [vmem:[%s0 + $0x18] sm:$0xf]
  %v37 = vld [vmem:[%s0 + $0x1c] sm:$0xf]
  %v38 = vld [vmem:[%s0 + $0x20] sm:$0xf]
  %v39 = vld [vmem:[%s0 + $0x24] sm:$0xf]
  %v40 = vld [vmem:[%s0 + $0x28] sm:$0xf]
  %v41 = vld [vmem:[%s0 + $0x2c] sm:$0xf]
  %v42 = vld [vmem:[%s0 + $0x30] sm:$0xf]
  %v43 = vld [vmem:[%s0 + $0x34] sm:$0xf]
  %v44 = vld [vmem:[%s0 + $0x38] sm:$0xf]
  %v45 = vld [vmem:[%s0 + $0x3c] sm:$0xf]
  %v46 = vld [vmem:[%s0 + $0x40] sm:$0xf]
  %v47 = vld [vmem:[%s0 + $0x44] sm:$0xf]
  %v48 = vld [vmem:[%s0 + $0x48] sm:$0xf]
  %v49 = vld [vmem:[%s0 + $0x4c] sm:$0xf]
  %v50 = vld [vmem:[%s0 + $0x50] sm:$0xf]
  %v51 = vld [vmem:[%s0 + $0x54] sm:$0xf]
  %v52 = vld [vmem:[%s0 + $0x58] sm:$0xf]
  %v53 = vld [vmem:[%s0 + $0x5c] sm:$0xf]
  %v54 = vld [vmem:[%s0 + $0x60] sm:$0xf]
  %v55 = vld [vmem:[%s0 + $0x64] sm:$0xf]
  %v56 = vld [vmem:[%s0 + $0x68] sm:$0xf]
  %v57 = vld [vmem:[%s0 + $0x6c] sm:$0xf]
  %v58 = vld [vmem:[%s0 + $0x70] sm:$0xf]
  %v59 = vld [vmem:[%s0 + $0x74] sm:$0xf]
  %v60 = vld [vmem:[%s0 + $0x78] sm:$0xf]
  %v61 = vld [vmem:[%s0 + $0x7c] sm:$0xf]
  %v62 = vld [vmem:[%s1] sm:$0xf]
  %v63 = vld [vmem:[%s1 + $0x4] sm:$0xf]
  %v64 = vld [vmem:[%s1 + $0x8] sm:$0xf]
  %v65 = vld [vmem:[%s1 + $0xc] sm:$0xf]
  %v66 = vld [vmem:[%s1 + $0x10] sm:$0xf]
  %v67 = vld [vmem:[%s1 + $0x14] sm:$0xf]
  %v68 = vld [vmem:[%s1 + $0x18] sm:$0xf]
  %v69 = vld [vmem:[%s1 + $0x1c] sm:$0xf]
  %v70 = vld [vmem:[%s1 + $0x20] sm:$0xf]
  %v71 = vld [vmem:[%s1 + $0x24] sm:$0xf]
  %v72 = vld [vmem:[%s1 + $0x28] sm:$0xf]
  %v73 = vld [vmem:[%s1 + $0x2c] sm:$0xf]
  %v74 = vld [vmem:[%s1 + $0x30] sm:$0xf]
  %v75 = vld [vmem:[%s1 + $0x34] sm:$0xf]
  %v76 = vld [vmem:[%s1 + $0x38] sm:$0xf]
  %v77 = vld [vmem:[%s1 + $0x3c] sm:$0xf]
  %v78 = vld [vmem:[%s2] sm:$0xf]
  %v79 = vld [vmem:[%s2 + $0x4] sm:$0xf]
  %v80 = vld [vmem:[%s2 + $0x8] sm:$0xf]
  %v81 = vld [vmem:[%s2 + $0xc] sm:$0xf]
  %v114 = vunpack.c.l.b16 %v30
  %v115 = vunpack.c.l.b16 %v31
  %v116 = vunpack.c.l.b16 %v32
  %v117 = vunpack.c.l.b16 %v33
  %v118 = vunpack.c.l.b16 %v34
  %v119 = vunpack.c.l.b16 %v35
  %v120 = vunpack.c.l.b16 %v36
  %v121 = vunpack.c.l.b16 %v37
  %v122 = vunpack.c.l.b16 %v38
  %v123 = vunpack.c.l.b16 %v39
  %v124 = vunpack.c.l.b16 %v40
  %v125 = vunpack.c.l.b16 %v41
  %v126 = vunpack.c.l.b16 %v42
  %v127 = vunpack.c.l.b16 %v43
  %v128 = vunpack.c.l.b16 %v44
  %v129 = vunpack.c.l.b16 %v45
  %v130 = vunpack.c.l.b16 %v46
  %v131 = vunpack.c.l.b16 %v47
  %v132 = vunpack.c.l.b16 %v48
  %v133 = vunpack.c.l.b16 %v49
  %v134 = vunpack.c.l.b16 %v50
  %v135 = vunpack.c.l.b16 %v51
  %v136 = vunpack.c.l.b16 %v52
  %v137 = vunpack.c.l.b16 %v53
  %v138 = vunpack.c.l.b16 %v54
  %v139 = vunpack.c.l.b16 %v55
  %v140 = vunpack.c.l.b16 %v56
  %v141 = vunpack.c.l.b16 %v57
  %v142 = vunpack.c.l.b16 %v58
  %v143 = vunpack.c.l.b16 %v59
  %v144 = vunpack.c.l.b16 %v60
  %v145 = vunpack.c.l.b16 %v61
  %v146 = vpack.c.b16 %v115, %v114
  %v147 = vpack.c.b16 %v117, %v116
  %v148 = vpack.c.b16 %v119, %v118
  %v149 = vpack.c.b16 %v121, %v120
  %v150 = vpack.c.b16 %v123, %v122
  %v151 = vpack.c.b16 %v125, %v124
  %v152 = vpack.c.b16 %v127, %v126
  %v153 = vpack.c.b16 %v129, %v128
  %v154 = vpack.c.b16 %v131, %v130
  %v155 = vpack.c.b16 %v133, %v132
  %v156 = vpack.c.b16 %v135, %v134
  %v157 = vpack.c.b16 %v137, %v136
  %v158 = vpack.c.b16 %v139, %v138
  %v159 = vpack.c.b16 %v141, %v140
  %v160 = vpack.c.b16 %v143, %v142
  %v161 = vpack.c.b16 %v145, %v144
  %v166 = vunpack.c.l.b16 %v78
  %v167 = vunpack.c.l.b16 %v79
  %v168 = vunpack.c.l.b16 %v80
  %v169 = vunpack.c.l.b16 %v81
  %v170 = vpack.c.b16 %v167, %v166
  %v171 = vpack.c.b16 %v169, %v168
  %vm174 = vcmask 261120
  %v176 = vsel %vm174, %v146, 0
  %v179 = vsel %vm174, %v147, 0
  %v182 = vsel %vm174, %v148, 0
  %v185 = vsel %vm174, %v149, 0
  %v188 = vsel %vm174, %v150, 0
  %v191 = vsel %vm174, %v151, 0
  %v194 = vsel %vm174, %v152, 0
  %v197 = vsel %vm174, %v153, 0
  %v200 = vsel %vm174, %v154, 0
  %v203 = vsel %vm174, %v155, 0
  %v206 = vsel %vm174, %v156, 0
  %v209 = vsel %vm174, %v157, 0
  %v212 = vsel %vm174, %v158, 0
  %v215 = vsel %vm174, %v159, 0
  %v218 = vsel %vm174, %v160, 0
  %v221 = vsel %vm174, %v161, 0
  %223 = vmatprep.subr.bf16.mxu0 0
  %224 = vmatpush1.bf16.msra.mxu0 0
  %225 = vmatprep.subr.bf16.mxu0 0
  %226 = vmatpush1.bf16.msra.mxu0 0
  %227 = vmatprep.subr.bf16.mxu0 0
  %228 = vmatpush1.bf16.msra.mxu0 0
  %229 = vmatprep.subr.bf16.mxu0 0
  %230 = vmatpush1.bf16.msra.mxu0 0
  %231 = vmatprep.subr.bf16.mxu0 0
  %232 = vmatpush1.bf16.msra.mxu0 0
  %233 = vmatprep.subr.bf16.mxu0 0
  %234 = vmatpush1.bf16.msra.mxu0 0
  %235 = vmatprep.subr.bf16.mxu0 0
  %236 = vmatpush1.bf16.msra.mxu0 %v171
  %237 = vmatprep.subr.bf16.mxu0 0
  %238 = vmatpush1.bf16.msra.mxu0 %v170
  %239 = vmatprep.subr.bf16.mxu0 0
  %240 = vmatpush2.bf16.msra.mxu0 0
  %241 = vmatprep.subr.bf16.mxu0 0
  %242 = vmatpush2.bf16.msra.mxu0 0
  %243 = vmatprep.subr.bf16.mxu0 0
  %244 = vmatpush2.bf16.msra.mxu0 0
  %245 = vmatprep.subr.bf16.mxu0 0
  %246 = vmatpush2.bf16.msra.mxu0 0
  %247 = vmatprep.subr.bf16.mxu0 0
  %248 = vmatpush2.bf16.msra.mxu0 0
  %249 = vmatprep.subr.bf16.mxu0 0
  %250 = vmatpush2.bf16.msra.mxu0 0
  %251 = vmatprep.subr.bf16.mxu0 0
  %252 = vmatpush2.bf16.msra.mxu0 0
  %253 = vmatprep.subr.bf16.mxu0 0
  %254 = vmatpush2.bf16.msra.mxu0 0
  %255 = vmatprep.mubr.bf16.mxu0 0
  %256 = vmatmul.mubr.bf16.gmra.mxu0 %v176
  %v257 = vpop.f32.mrf.mxu0
  %v258 = vadd.f32 0.0, %v257
  %v259 = vpop.f32.mrf.mxu0
  %v260 = vpop.f32.mrf.mxu0
  %v261 = vadd.f32 0.0, %v260
  %v262 = vpop.f32.mrf.mxu0
  %263 = vmatprep.mubr.bf16.mxu0 0
  %264 = vmatmul.mubr.bf16.gmra.mxu0 %v179
  %v265 = vpop.f32.mrf.mxu0
  %v266 = vadd.f32 0.0, %v265
  %v267 = vpop.f32.mrf.mxu0
  %v268 = vpop.f32.mrf.mxu0
  %v269 = vadd.f32 0.0, %v268
  %v270 = vpop.f32.mrf.mxu0
  %271 = vmatprep.mubr.bf16.mxu0 0
  %272 = vmatmul.mubr.bf16.gmra.mxu0 %v182
  %v273 = vpop.f32.mrf.mxu0
  %v274 = vadd.f32 0.0, %v273
  %v275 = vpop.f32.mrf.mxu0
  %v276 = vpop.f32.mrf.mxu0
  %v277 = vadd.f32 0.0, %v276
  %v278 = vpop.f32.mrf.mxu0
  %279 = vmatprep.mubr.bf16.mxu0 0
  %280 = vmatmul.mubr.bf16.gmra.mxu0 %v185
  %v281 = vpop.f32.mrf.mxu0
  %v282 = vadd.f32 0.0, %v281
  %v283 = vpop.f32.mrf.mxu0
  %v284 = vpop.f32.mrf.mxu0
  %v285 = vadd.f32 0.0, %v284
  %v286 = vpop.f32.mrf.mxu0
  %287 = vmatprep.mubr.bf16.mxu0 0
  %288 = vmatmul.mubr.bf16.gmra.mxu0 %v188
  %v289 = vpop.f32.mrf.mxu0
  %v290 = vadd.f32 0.0, %v289
  %v291 = vpop.f32.mrf.mxu0
  %v292 = vpop.f32.mrf.mxu0
  %v293 = vadd.f32 0.0, %v292
  %v294 = vpop.f32.mrf.mxu0
  %295 = vmatprep.mubr.bf16.mxu0 0
  %296 = vmatmul.mubr.bf16.gmra.mxu0 %v191
  %v297 = vpop.f32.mrf.mxu0
  %v298 = vadd.f32 0.0, %v297
  %v299 = vpop.f32.mrf.mxu0
  %v300 = vpop.f32.mrf.mxu0
  %v301 = vadd.f32 0.0, %v300
  %v302 = vpop.f32.mrf.mxu0
  %303 = vmatprep.mubr.bf16.mxu0 0
  %304 = vmatmul.mubr.bf16.gmra.mxu0 %v194
  %v305 = vpop.f32.mrf.mxu0
  %v306 = vadd.f32 0.0, %v305
  %v307 = vpop.f32.mrf.mxu0
  %v308 = vpop.f32.mrf.mxu0
  %v309 = vadd.f32 0.0, %v308
  %v310 = vpop.f32.mrf.mxu0
  %311 = vmatprep.mubr.bf16.mxu0 0
  %312 = vmatmul.mubr.bf16.gmra.mxu0 %v197
  %v313 = vpop.f32.mrf.mxu0
  %v314 = vadd.f32 0.0, %v313
  %v315 = vpop.f32.mrf.mxu0
  %v316 = vpop.f32.mrf.mxu0
  %v317 = vadd.f32 0.0, %v316
  %v318 = vpop.f32.mrf.mxu0
  %319 = vmatprep.mubr.bf16.mxu0 0
  %320 = vmatmul.mubr.bf16.gmra.mxu0 %v200
  %v321 = vpop.f32.mrf.mxu0
  %v322 = vadd.f32 0.0, %v321
  %v323 = vpop.f32.mrf.mxu0
  %v324 = vpop.f32.mrf.mxu0
  %v325 = vadd.f32 0.0, %v324
  %v326 = vpop.f32.mrf.mxu0
  %327 = vmatprep.mubr.bf16.mxu0 0
  %328 = vmatmul.mubr.bf16.gmra.mxu0 %v203
  %v329 = vpop.f32.mrf.mxu0
  %v330 = vadd.f32 0.0, %v329
  %v331 = vpop.f32.mrf.mxu0
  %v332 = vpop.f32.mrf.mxu0
  %v333 = vadd.f32 0.0, %v332
  %v334 = vpop.f32.mrf.mxu0
  %335 = vmatprep.mubr.bf16.mxu0 0
  %336 = vmatmul.mubr.bf16.gmra.mxu0 %v206
  %v337 = vpop.f32.mrf.mxu0
  %v338 = vadd.f32 0.0, %v337
  %v339 = vpop.f32.mrf.mxu0
  %v340 = vpop.f32.mrf.mxu0
  %v341 = vadd.f32 0.0, %v340
  %v342 = vpop.f32.mrf.mxu0
  %343 = vmatprep.mubr.bf16.mxu0 0
  %344 = vmatmul.mubr.bf16.gmra.mxu0 %v209
  %v345 = vpop.f32.mrf.mxu0
  %v346 = vadd.f32 0.0, %v345
  %v347 = vpop.f32.mrf.mxu0
  %v348 = vpop.f32.mrf.mxu0
  %v349 = vadd.f32 0.0, %v348
  %v350 = vpop.f32.mrf.mxu0
  %351 = vmatprep.mubr.bf16.mxu0 0
  %352 = vmatmul.mubr.bf16.gmra.mxu0 %v212
  %v353 = vpop.f32.mrf.mxu0
  %v354 = vadd.f32 0.0, %v353
  %v355 = vpop.f32.mrf.mxu0
  %v356 = vpop.f32.mrf.mxu0
  %v357 = vadd.f32 0.0, %v356
  %v358 = vpop.f32.mrf.mxu0
  %359 = vmatprep.mubr.bf16.mxu0 0
  %360 = vmatmul.mubr.bf16.gmra.mxu0 %v215
  %v361 = vpop.f32.mrf.mxu0
  %v362 = vadd.f32 0.0, %v361
  %v363 = vpop.f32.mrf.mxu0
  %v364 = vpop.f32.mrf.mxu0
  %v365 = vadd.f32 0.0, %v364
  %v366 = vpop.f32.mrf.mxu0
  %367 = vmatprep.mubr.bf16.mxu0 0
  %368 = vmatmul.mubr.bf16.gmra.mxu0 %v218
  %v369 = vpop.f32.mrf.mxu0
  %v370 = vadd.f32 0.0, %v369
  %v371 = vpop.f32.mrf.mxu0
  %v372 = vpop.f32.mrf.mxu0
  %v373 = vadd.f32 0.0, %v372
  %v374 = vpop.f32.mrf.mxu0
  %375 = vmatprep.mubr.bf16.mxu0 0
  %376 = vmatmul.mubr.bf16.gmra.mxu0 %v221
  %v377 = vpop.f32.mrf.mxu0
  %v378 = vadd.f32 0.0, %v377
  %v379 = vpop.f32.mrf.mxu0
  %v380 = vpop.f32.mrf.mxu0
  %v381 = vadd.f32 0.0, %v380
  %v382 = vpop.f32.mrf.mxu0
  %383 = vdwg.mxu0
  %v384 = vld [vmem:[%s3] sm:$0xf]
  %v385 = vld [vmem:[%s3 + $0x4] sm:$0xf]
  %v386 = vld [vmem:[%s3 + $0x8] sm:$0xf]
  %v387 = vld [vmem:[%s3 + $0xc] sm:$0xf]
  %v388 = vld [vmem:[%s3 + $0x10] sm:$0xf]
  %v389 = vld [vmem:[%s3 + $0x14] sm:$0xf]
  %v390 = vld [vmem:[%s3 + $0x18] sm:$0xf]
  %v391 = vld [vmem:[%s3 + $0x1c] sm:$0xf]
  %v408 = vunpack.c.l.b16 %v62
  %v409 = vunpack.c.l.b16 %v63
  %v410 = vunpack.c.l.b16 %v64
  %v411 = vunpack.c.l.b16 %v65
  %v412 = vunpack.c.l.b16 %v66
  %v413 = vunpack.c.l.b16 %v67
  %v414 = vunpack.c.l.b16 %v68
  %v415 = vunpack.c.l.b16 %v69
  %v416 = vunpack.c.l.b16 %v70
  %v417 = vunpack.c.l.b16 %v71
  %v418 = vunpack.c.l.b16 %v72
  %v419 = vunpack.c.l.b16 %v73
  %v420 = vunpack.c.l.b16 %v74
  %v421 = vunpack.c.l.b16 %v75
  %v422 = vunpack.c.l.b16 %v76
  %v423 = vunpack.c.l.b16 %v77
  %v424 = vpack.c.b16 %v409, %v408
  %v425 = vpack.c.b16 %v411, %v410
  %v426 = vpack.c.b16 %v413, %v412
  %v427 = vpack.c.b16 %v415, %v414
  %v428 = vpack.c.b16 %v417, %v416
  %v429 = vpack.c.b16 %v419, %v418
  %v430 = vpack.c.b16 %v421, %v420
  %v431 = vpack.c.b16 %v423, %v422
  %v440 = vunpack.c.l.b16 %v384
  %v441 = vunpack.c.l.b16 %v385
  %v442 = vunpack.c.l.b16 %v386
  %v443 = vunpack.c.l.b16 %v387
  %v444 = vunpack.c.l.b16 %v388
  %v445 = vunpack.c.l.b16 %v389
  %v446 = vunpack.c.l.b16 %v390
  %v447 = vunpack.c.l.b16 %v391
  %v448 = vpack.c.b16 %v441, %v440
  %v449 = vpack.c.b16 %v443, %v442
  %v450 = vpack.c.b16 %v445, %v444
  %v451 = vpack.c.b16 %v447, %v446
  %vm456 = vcmask 523264
  %v458 = vsel %vm456, %v424, 0
  %v461 = vsel %vm456, %v425, 0
  %v464 = vsel %vm456, %v426, 0
  %v467 = vsel %vm456, %v427, 0
  %v470 = vsel %vm456, %v428, 0
  %v473 = vsel %vm456, %v429, 0
  %v476 = vsel %vm456, %v430, 0
  %v479 = vsel %vm456, %v431, 0
  %481 = vmatprep.subr.bf16.mxu0 0
  %482 = vmatpush1.bf16.msra.mxu0 0
  %483 = vmatprep.subr.bf16.mxu0 0
  %484 = vmatpush1.bf16.msra.mxu0 0
  %485 = vmatprep.subr.bf16.mxu0 0
  %486 = vmatpush1.bf16.msra.mxu0 0
  %487 = vmatprep.subr.bf16.mxu0 0
  %488 = vmatpush1.bf16.msra.mxu0 0
  %489 = vmatprep.subr.bf16.mxu0 0
  %490 = vmatpush1.bf16.msra.mxu0 %v451
  %491 = vmatprep.subr.bf16.mxu0 0
  %492 = vmatpush1.bf16.msra.mxu0 %v450
  %493 = vmatprep.subr.bf16.mxu0 0
  %494 = vmatpush1.bf16.msra.mxu0 %v449
  %495 = vmatprep.subr.bf16.mxu0 0
  %496 = vmatpush1.bf16.msra.mxu0 %v448
  %497 = vmatprep.subr.bf16.mxu0 0
  %498 = vmatpush2.bf16.msra.mxu0 0
  %499 = vmatprep.subr.bf16.mxu0 0
  %500 = vmatpush2.bf16.msra.mxu0 0
  %501 = vmatprep.subr.bf16.mxu0 0
  %502 = vmatpush2.bf16.msra.mxu0 0
  %503 = vmatprep.subr.bf16.mxu0 0
  %504 = vmatpush2.bf16.msra.mxu0 0
  %505 = vmatprep.subr.bf16.mxu0 0
  %506 = vmatpush2.bf16.msra.mxu0 0
  %507 = vmatprep.subr.bf16.mxu0 0
  %508 = vmatpush2.bf16.msra.mxu0 0
  %509 = vmatprep.subr.bf16.mxu0 0
  %510 = vmatpush2.bf16.msra.mxu0 0
  %511 = vmatprep.subr.bf16.mxu0 0
  %512 = vmatpush2.bf16.msra.mxu0 0
  %513 = vmatprep.mubr.bf16.mxu0 0
  %514 = vmatmul.mubr.bf16.gmra.mxu0 %v458
  %v515 = vpop.f32.mrf.mxu0
  %v516 = vadd.f32 0.0, %v515
  %v517 = vpop.f32.mrf.mxu0
  %v518 = vpop.f32.mrf.mxu0
  %v519 = vadd.f32 0.0, %v518
  %v520 = vpop.f32.mrf.mxu0
  %521 = vmatprep.mubr.bf16.mxu0 0
  %522 = vmatmul.mubr.bf16.gmra.mxu0 %v461
  %v523 = vpop.f32.mrf.mxu0
  %v524 = vadd.f32 0.0, %v523
  %v525 = vpop.f32.mrf.mxu0
  %v526 = vpop.f32.mrf.mxu0
  %v527 = vadd.f32 0.0, %v526
  %v528 = vpop.f32.mrf.mxu0
  %529 = vmatprep.mubr.bf16.mxu0 0
  %530 = vmatmul.mubr.bf16.gmra.mxu0 %v464
  %v531 = vpop.f32.mrf.mxu0
  %v532 = vadd.f32 0.0, %v531
  %v533 = vpop.f32.mrf.mxu0
  %v534 = vpop.f32.mrf.mxu0
  %v535 = vadd.f32 0.0, %v534
  %v536 = vpop.f32.mrf.mxu0
  %537 = vmatprep.mubr.bf16.mxu0 0
  %538 = vmatmul.mubr.bf16.gmra.mxu0 %v467
  %v539 = vpop.f32.mrf.mxu0
  %v540 = vadd.f32 0.0, %v539
  %v541 = vpop.f32.mrf.mxu0
  %v542 = vpop.f32.mrf.mxu0
  %v543 = vadd.f32 0.0, %v542
  %v544 = vpop.f32.mrf.mxu0
  %545 = vmatprep.mubr.bf16.mxu0 0
  %546 = vmatmul.mubr.bf16.gmra.mxu0 %v470
  %v547 = vpop.f32.mrf.mxu0
  %v548 = vadd.f32 0.0, %v547
  %v549 = vpop.f32.mrf.mxu0
  %v550 = vpop.f32.mrf.mxu0
  %v551 = vadd.f32 0.0, %v550
  %v552 = vpop.f32.mrf.mxu0
  %553 = vmatprep.mubr.bf16.mxu0 0
  %554 = vmatmul.mubr.bf16.gmra.mxu0 %v473
  %v555 = vpop.f32.mrf.mxu0
  %v556 = vadd.f32 0.0, %v555
  %v557 = vpop.f32.mrf.mxu0
  %v558 = vpop.f32.mrf.mxu0
  %v559 = vadd.f32 0.0, %v558
  %v560 = vpop.f32.mrf.mxu0
  %561 = vmatprep.mubr.bf16.mxu0 0
  %562 = vmatmul.mubr.bf16.gmra.mxu0 %v476
  %v563 = vpop.f32.mrf.mxu0
  %v564 = vadd.f32 0.0, %v563
  %v565 = vpop.f32.mrf.mxu0
  %v566 = vpop.f32.mrf.mxu0
  %v567 = vadd.f32 0.0, %v566
  %v568 = vpop.f32.mrf.mxu0
  %569 = vmatprep.mubr.bf16.mxu0 0
  %570 = vmatmul.mubr.bf16.gmra.mxu0 %v479
  %v571 = vpop.f32.mrf.mxu0
  %v572 = vadd.f32 0.0, %v571
  %v573 = vpop.f32.mrf.mxu0
  %v574 = vpop.f32.mrf.mxu0
  %v575 = vadd.f32 0.0, %v574
  %v576 = vpop.f32.mrf.mxu0
  %577 = vdwg.mxu0
  %v578 = vpack.c.bf16 %v261, %v258
  %v579 = vpack.c.bf16 %v269, %v266
  %v580 = vpack.c.bf16 %v277, %v274
  %v581 = vpack.c.bf16 %v285, %v282
  %v582 = vpack.c.bf16 %v293, %v290
  %v583 = vpack.c.bf16 %v301, %v298
  %v584 = vpack.c.bf16 %v309, %v306
  %v585 = vpack.c.bf16 %v317, %v314
  %v586 = vpack.c.bf16 %v325, %v322
  %v587 = vpack.c.bf16 %v333, %v330
  %v588 = vpack.c.bf16 %v341, %v338
  %v589 = vpack.c.bf16 %v349, %v346
  %v590 = vpack.c.bf16 %v357, %v354
  %v591 = vpack.c.bf16 %v365, %v362
  %v592 = vpack.c.bf16 %v373, %v370
  %v593 = vpack.c.bf16 %v381, %v378
  %v594 = vld [vmem:[%s6] sm:$0xf]
  %v595 = vld [vmem:[%s7] sm:$0xf]
  %v598 = vunpack.c.l.s4 1966171168
  %v599 = vunpack.c.0.s8 %v598
  %v600 = vlaneseq
  %v601 = vshrl.u32 %v600, 7
  %v602 = vsub.s32 %v599, %v601
  %v603 = vrot.slane %v594, %v602
  %v604 = vcombine.high %v603, %v603
  %v606 = vunpack.c.l.s4 1966171168
  %v607 = vunpack.c.0.s8 %v606
  %v608 = vlaneseq
  %v609 = vshrl.u32 %v608, 7
  %v610 = vsub.s32 %v607, %v609
  %v611 = vrot.slane %v603, %v610
  %v613 = vunpack.c.l.s4 1966171168
  %v614 = vunpack.c.0.s8 %v613
  %v615 = vlaneseq
  %v616 = vshrl.u32 %v615, 7
  %v617 = vsub.s32 %v614, %v616
  %v618 = vrot.slane %v604, %v617
  %v619 = vcombine.high %v611, %v611
  %v620 = vcombine.high %v618, %v618
  %v621 = vlaneseq
  %v622 = vshrl.u32 %v621, 7
  %v623 = vsub.s32 0, %v622
  %v624 = vrot.slane %v611, %v623
  %v625 = vlaneseq
  %v626 = vshrl.u32 %v625, 7
  %v627 = vsub.s32 0, %v626
  %v628 = vrot.slane %v618, %v627
  %v629 = vlaneseq
  %v630 = vshrl.u32 %v629, 7
  %v631 = vsub.s32 0, %v630
  %v632 = vrot.slane %v619, %v631
  %v633 = vlaneseq
  %v634 = vshrl.u32 %v633, 7
  %v635 = vsub.s32 0, %v634
  %v636 = vrot.slane %v620, %v635
  %v641 = vmul.f32 %v516, %v624
  %v642 = vmul.f32 %v516, %v628
  %v643 = vmul.f32 %v516, %v632
  %v644 = vmul.f32 %v516, %v636
  %v645 = vmul.f32 %v519, %v624
  %v646 = vmul.f32 %v519, %v628
  %v647 = vmul.f32 %v519, %v632
  %v648 = vmul.f32 %v519, %v636
  %v649 = vmul.f32 %v524, %v624
  %v650 = vmul.f32 %v524, %v628
  %v651 = vmul.f32 %v524, %v632
  %v652 = vmul.f32 %v524, %v636
  %v653 = vmul.f32 %v527, %v624
  %v654 = vmul.f32 %v527, %v628
  %v655 = vmul.f32 %v527, %v632
  %v656 = vmul.f32 %v527, %v636
  %v657 = vmul.f32 %v532, %v624
  %v658 = vmul.f32 %v532, %v628
  %v659 = vmul.f32 %v532, %v632
  %v660 = vmul.f32 %v532, %v636
  %v661 = vmul.f32 %v535, %v624
  %v662 = vmul.f32 %v535, %v628
  %v663 = vmul.f32 %v535, %v632
  %v664 = vmul.f32 %v535, %v636
  %v665 = vmul.f32 %v540, %v624
  %v666 = vmul.f32 %v540, %v628
  %v667 = vmul.f32 %v540, %v632
  %v668 = vmul.f32 %v540, %v636
  %v669 = vmul.f32 %v543, %v624
  %v670 = vmul.f32 %v543, %v628
  %v671 = vmul.f32 %v543, %v632
  %v672 = vmul.f32 %v543, %v636
  %v673 = vmul.f32 %v548, %v624
  %v674 = vmul.f32 %v548, %v628
  %v675 = vmul.f32 %v548, %v632
  %v676 = vmul.f32 %v548, %v636
  %v677 = vmul.f32 %v551, %v624
  %v678 = vmul.f32 %v551, %v628
  %v679 = vmul.f32 %v551, %v632
  %v680 = vmul.f32 %v551, %v636
  %v681 = vmul.f32 %v556, %v624
  %v682 = vmul.f32 %v556, %v628
  %v683 = vmul.f32 %v556, %v632
  %v684 = vmul.f32 %v556, %v636
  %v685 = vmul.f32 %v559, %v624
  %v686 = vmul.f32 %v559, %v628
  %v687 = vmul.f32 %v559, %v632
  %v688 = vmul.f32 %v559, %v636
  %v689 = vmul.f32 %v564, %v624
  %v690 = vmul.f32 %v564, %v628
  %v691 = vmul.f32 %v564, %v632
  %v692 = vmul.f32 %v564, %v636
  %v693 = vmul.f32 %v567, %v624
  %v694 = vmul.f32 %v567, %v628
  %v695 = vmul.f32 %v567, %v632
  %v696 = vmul.f32 %v567, %v636
  %v697 = vmul.f32 %v572, %v624
  %v698 = vmul.f32 %v572, %v628
  %v699 = vmul.f32 %v572, %v632
  %v700 = vmul.f32 %v572, %v636
  %v701 = vmul.f32 %v575, %v624
  %v702 = vmul.f32 %v575, %v628
  %v703 = vmul.f32 %v575, %v632
  %v704 = vmul.f32 %v575, %v636
  %v705 = vpack.c.bf16 %v642, %v641
  %v706 = vpack.c.bf16 %v644, %v643
  %v707 = vpack.c.bf16 %v646, %v645
  %v708 = vpack.c.bf16 %v648, %v647
  %v709 = vpack.c.bf16 %v650, %v649
  %v710 = vpack.c.bf16 %v652, %v651
  %v711 = vpack.c.bf16 %v654, %v653
  %v712 = vpack.c.bf16 %v656, %v655
  %v713 = vpack.c.bf16 %v658, %v657
  %v714 = vpack.c.bf16 %v660, %v659
  %v715 = vpack.c.bf16 %v662, %v661
  %v716 = vpack.c.bf16 %v664, %v663
  %v717 = vpack.c.bf16 %v666, %v665
  %v718 = vpack.c.bf16 %v668, %v667
  %v719 = vpack.c.bf16 %v670, %v669
  %v720 = vpack.c.bf16 %v672, %v671
  %v721 = vpack.c.bf16 %v674, %v673
  %v722 = vpack.c.bf16 %v676, %v675
  %v723 = vpack.c.bf16 %v678, %v677
  %v724 = vpack.c.bf16 %v680, %v679
  %v725 = vpack.c.bf16 %v682, %v681
  %v726 = vpack.c.bf16 %v684, %v683
  %v727 = vpack.c.bf16 %v686, %v685
  %v728 = vpack.c.bf16 %v688, %v687
  %v729 = vpack.c.bf16 %v690, %v689
  %v730 = vpack.c.bf16 %v692, %v691
  %v731 = vpack.c.bf16 %v694, %v693
  %v732 = vpack.c.bf16 %v696, %v695
  %v733 = vpack.c.bf16 %v698, %v697
  %v734 = vpack.c.bf16 %v700, %v699
  %v735 = vpack.c.bf16 %v702, %v701
  %v736 = vpack.c.bf16 %v704, %v703
  %v739 = vunpack.c.l.s4 1966171168
  %v740 = vunpack.c.0.s8 %v739
  %v741 = vlaneseq
  %v742 = vshrl.u32 %v741, 7
  %v743 = vsub.s32 %v740, %v742
  %v744 = vrot.slane %v595, %v743
  %v745 = vcombine.high %v744, %v744
  %v747 = vunpack.c.l.s4 1966171168
  %v748 = vunpack.c.0.s8 %v747
  %v749 = vlaneseq
  %v750 = vshrl.u32 %v749, 7
  %v751 = vsub.s32 %v748, %v750
  %v752 = vrot.slane %v744, %v751
  %v754 = vunpack.c.l.s4 1966171168
  %v755 = vunpack.c.0.s8 %v754
  %v756 = vlaneseq
  %v757 = vshrl.u32 %v756, 7
  %v758 = vsub.s32 %v755, %v757
  %v759 = vrot.slane %v745, %v758
  %v760 = vcombine.high %v752, %v752
  %v761 = vcombine.high %v759, %v759
  %v762 = vlaneseq
  %v763 = vshrl.u32 %v762, 7
  %v764 = vsub.s32 0, %v763
  %v765 = vrot.slane %v752, %v764
  %v766 = vlaneseq
  %v767 = vshrl.u32 %v766, 7
  %v768 = vsub.s32 0, %v767
  %v769 = vrot.slane %v759, %v768
  %v770 = vlaneseq
  %v771 = vshrl.u32 %v770, 7
  %v772 = vsub.s32 0, %v771
  %v773 = vrot.slane %v760, %v772
  %v774 = vlaneseq
  %v775 = vshrl.u32 %v774, 7
  %v776 = vsub.s32 0, %v775
  %v777 = vrot.slane %v761, %v776
  %v782 = vmul.f32 %v516, %v765
  %v783 = vmul.f32 %v516, %v769
  %v784 = vmul.f32 %v516, %v773
  %v785 = vmul.f32 %v516, %v777
  %v786 = vmul.f32 %v519, %v765
  %v787 = vmul.f32 %v519, %v769
  %v788 = vmul.f32 %v519, %v773
  %v789 = vmul.f32 %v519, %v777
  %v790 = vmul.f32 %v524, %v765
  %v791 = vmul.f32 %v524, %v769
  %v792 = vmul.f32 %v524, %v773
  %v793 = vmul.f32 %v524, %v777
  %v794 = vmul.f32 %v527, %v765
  %v795 = vmul.f32 %v527, %v769
  %v796 = vmul.f32 %v527, %v773
  %v797 = vmul.f32 %v527, %v777
  %v798 = vmul.f32 %v532, %v765
  %v799 = vmul.f32 %v532, %v769
  %v800 = vmul.f32 %v532, %v773
  %v801 = vmul.f32 %v532, %v777
  %v802 = vmul.f32 %v535, %v765
  %v803 = vmul.f32 %v535, %v769
  %v804 = vmul.f32 %v535, %v773
  %v805 = vmul.f32 %v535, %v777
  %v806 = vmul.f32 %v540, %v765
  %v807 = vmul.f32 %v540, %v769
  %v808 = vmul.f32 %v540, %v773
  %v809 = vmul.f32 %v540, %v777
  %v810 = vmul.f32 %v543, %v765
  %v811 = vmul.f32 %v543, %v769
  %v812 = vmul.f32 %v543, %v773
  %v813 = vmul.f32 %v543, %v777
  %v814 = vmul.f32 %v548, %v765
  %v815 = vmul.f32 %v548, %v769
  %v816 = vmul.f32 %v548, %v773
  %v817 = vmul.f32 %v548, %v777
  %v818 = vmul.f32 %v551, %v765
  %v819 = vmul.f32 %v551, %v769
  %v820 = vmul.f32 %v551, %v773
  %v821 = vmul.f32 %v551, %v777
  %v822 = vmul.f32 %v556, %v765
  %v823 = vmul.f32 %v556, %v769
  %v824 = vmul.f32 %v556, %v773
  %v825 = vmul.f32 %v556, %v777
  %v826 = vmul.f32 %v559, %v765
  %v827 = vmul.f32 %v559, %v769
  %v828 = vmul.f32 %v559, %v773
  %v829 = vmul.f32 %v559, %v777
  %v830 = vmul.f32 %v564, %v765
  %v831 = vmul.f32 %v564, %v769
  %v832 = vmul.f32 %v564, %v773
  %v833 = vmul.f32 %v564, %v777
  %v834 = vmul.f32 %v567, %v765
  %v835 = vmul.f32 %v567, %v769
  %v836 = vmul.f32 %v567, %v773
  %v837 = vmul.f32 %v567, %v777
  %v838 = vmul.f32 %v572, %v765
  %v839 = vmul.f32 %v572, %v769
  %v840 = vmul.f32 %v572, %v773
  %v841 = vmul.f32 %v572, %v777
  %v842 = vmul.f32 %v575, %v765
  %v843 = vmul.f32 %v575, %v769
  %v844 = vmul.f32 %v575, %v773
  %v845 = vmul.f32 %v575, %v777
  %v846 = vpack.c.bf16 %v783, %v782
  %v847 = vpack.c.bf16 %v785, %v784
  %v848 = vpack.c.bf16 %v787, %v786
  %v849 = vpack.c.bf16 %v789, %v788
  %v850 = vpack.c.bf16 %v791, %v790
  %v851 = vpack.c.bf16 %v793, %v792
  %v852 = vpack.c.bf16 %v795, %v794
  %v853 = vpack.c.bf16 %v797, %v796
  %v854 = vpack.c.bf16 %v799, %v798
  %v855 = vpack.c.bf16 %v801, %v800
  %v856 = vpack.c.bf16 %v803, %v802
  %v857 = vpack.c.bf16 %v805, %v804
  %v858 = vpack.c.bf16 %v807, %v806
  %v859 = vpack.c.bf16 %v809, %v808
  %v860 = vpack.c.bf16 %v811, %v810
  %v861 = vpack.c.bf16 %v813, %v812
  %v862 = vpack.c.bf16 %v815, %v814
  %v863 = vpack.c.bf16 %v817, %v816
  %v864 = vpack.c.bf16 %v819, %v818
  %v865 = vpack.c.bf16 %v821, %v820
  %v866 = vpack.c.bf16 %v823, %v822
  %v867 = vpack.c.bf16 %v825, %v824
  %v868 = vpack.c.bf16 %v827, %v826
  %v869 = vpack.c.bf16 %v829, %v828
  %v870 = vpack.c.bf16 %v831, %v830
  %v871 = vpack.c.bf16 %v833, %v832
  %v872 = vpack.c.bf16 %v835, %v834
  %v873 = vpack.c.bf16 %v837, %v836
  %v874 = vpack.c.bf16 %v839, %v838
  %v875 = vpack.c.bf16 %v841, %v840
  %v876 = vpack.c.bf16 %v843, %v842
  %v877 = vpack.c.bf16 %v845, %v844
  %878 = vmatprep.subr.bf16.mxu0 0
  %879 = vmatpush1.bf16.xpose.msra.mxu0 0
  %880 = vmatprep.subr.bf16.mxu0 0
  %881 = vmatpush1.bf16.xpose.msra.mxu0 0
  %882 = vmatprep.subr.bf16.mxu0 0
  %883 = vmatpush1.bf16.xpose.msra.mxu0 0
  %884 = vmatprep.subr.bf16.mxu0 0
  %885 = vmatpush1.bf16.xpose.msra.mxu0 0
  %886 = vmatprep.subr.bf16.mxu0 0
  %887 = vmatpush1.bf16.xpose.msra.mxu0 0
  %888 = vmatprep.subr.bf16.mxu0 0
  %889 = vmatpush1.bf16.xpose.msra.mxu0 0
  %890 = vmatprep.subr.bf16.mxu0 0
  %891 = vmatpush1.bf16.xpose.msra.mxu0 %v706
  %892 = vmatprep.subr.bf16.mxu0 0
  %893 = vmatpush1.bf16.xpose.msra.mxu0 %v705
  %894 = vmatprep.subr.bf16.mxu0 0
  %895 = vmatpush2.bf16.xpose.msra.mxu0 0
  %896 = vmatprep.subr.bf16.mxu0 0
  %897 = vmatpush2.bf16.xpose.msra.mxu0 0
  %898 = vmatprep.subr.bf16.mxu0 0
  %899 = vmatpush2.bf16.xpose.msra.mxu0 0
  %900 = vmatprep.subr.bf16.mxu0 0
  %901 = vmatpush2.bf16.xpose.msra.mxu0 0
  %902 = vmatprep.subr.bf16.mxu0 0
  %903 = vmatpush2.bf16.xpose.msra.mxu0 0
  %904 = vmatprep.subr.bf16.mxu0 0
  %905 = vmatpush2.bf16.xpose.msra.mxu0 0
  %906 = vmatprep.subr.bf16.mxu0 0
  %907 = vmatpush2.bf16.xpose.msra.mxu0 0
  %908 = vmatprep.subr.bf16.mxu0 0
  %909 = vmatpush2.bf16.xpose.msra.mxu0 0
  %910 = vmatprep.mubr.bf16.mxu0 0
  %911 = vmatmul.mubr.bf16.gmra.mxu0 %v578
  %v912 = vpop.f32.mrf.mxu0
  %v913 = vadd.f32 0.0, %v912
  %v914 = vpop.f32.mrf.mxu0
  %v915 = vpop.f32.mrf.mxu0
  %v916 = vadd.f32 0.0, %v915
  %v917 = vpop.f32.mrf.mxu0
  %918 = vdwg.mxu0
  %919 = vmatprep.subr.bf16.mxu0 0
  %920 = vmatpush1.bf16.xpose.msra.mxu0 0
  %921 = vmatprep.subr.bf16.mxu0 0
  %922 = vmatpush1.bf16.xpose.msra.mxu0 0
  %923 = vmatprep.subr.bf16.mxu0 0
  %924 = vmatpush1.bf16.xpose.msra.mxu0 0
  %925 = vmatprep.subr.bf16.mxu0 0
  %926 = vmatpush1.bf16.xpose.msra.mxu0 0
  %927 = vmatprep.subr.bf16.mxu0 0
  %928 = vmatpush1.bf16.xpose.msra.mxu0 0
  %929 = vmatprep.subr.bf16.mxu0 0
  %930 = vmatpush1.bf16.xpose.msra.mxu0 0
  %931 = vmatprep.subr.bf16.mxu0 0
  %932 = vmatpush1.bf16.xpose.msra.mxu0 %v708
  %933 = vmatprep.subr.bf16.mxu0 0
  %934 = vmatpush1.bf16.xpose.msra.mxu0 %v707
  %935 = vmatprep.subr.bf16.mxu0 0
  %936 = vmatpush2.bf16.xpose.msra.mxu0 0
  %937 = vmatprep.subr.bf16.mxu0 0
  %938 = vmatpush2.bf16.xpose.msra.mxu0 0
  %939 = vmatprep.subr.bf16.mxu0 0
  %940 = vmatpush2.bf16.xpose.msra.mxu0 0
  %941 = vmatprep.subr.bf16.mxu0 0
  %942 = vmatpush2.bf16.xpose.msra.mxu0 0
  %943 = vmatprep.subr.bf16.mxu0 0
  %944 = vmatpush2.bf16.xpose.msra.mxu0 0
  %945 = vmatprep.subr.bf16.mxu0 0
  %946 = vmatpush2.bf16.xpose.msra.mxu0 0
  %947 = vmatprep.subr.bf16.mxu0 0
  %948 = vmatpush2.bf16.xpose.msra.mxu0 0
  %949 = vmatprep.subr.bf16.mxu0 0
  %950 = vmatpush2.bf16.xpose.msra.mxu0 0
  %951 = vmatprep.mubr.bf16.mxu0 0
  %952 = vmatmul.mubr.bf16.gmra.mxu0 %v579
  %v953 = vpop.f32.mrf.mxu0
  %v954 = vadd.f32 0.0, %v953
  %v955 = vpop.f32.mrf.mxu0
  %v956 = vpop.f32.mrf.mxu0
  %v957 = vadd.f32 0.0, %v956
  %v958 = vpop.f32.mrf.mxu0
  %959 = vdwg.mxu0
  %960 = vmatprep.subr.bf16.mxu0 0
  %961 = vmatpush1.bf16.xpose.msra.mxu0 0
  %962 = vmatprep.subr.bf16.mxu0 0
  %963 = vmatpush1.bf16.xpose.msra.mxu0 0
  %964 = vmatprep.subr.bf16.mxu0 0
  %965 = vmatpush1.bf16.xpose.msra.mxu0 0
  %966 = vmatprep.subr.bf16.mxu0 0
  %967 = vmatpush1.bf16.xpose.msra.mxu0 0
  %968 = vmatprep.subr.bf16.mxu0 0
  %969 = vmatpush1.bf16.xpose.msra.mxu0 0
  %970 = vmatprep.subr.bf16.mxu0 0
  %971 = vmatpush1.bf16.xpose.msra.mxu0 0
  %972 = vmatprep.subr.bf16.mxu0 0
  %973 = vmatpush1.bf16.xpose.msra.mxu0 %v710
  %974 = vmatprep.subr.bf16.mxu0 0
  %975 = vmatpush1.bf16.xpose.msra.mxu0 %v709
  %976 = vmatprep.subr.bf16.mxu0 0
  %977 = vmatpush2.bf16.xpose.msra.mxu0 0
  %978 = vmatprep.subr.bf16.mxu0 0
  %979 = vmatpush2.bf16.xpose.msra.mxu0 0
  %980 = vmatprep.subr.bf16.mxu0 0
  %981 = vmatpush2.bf16.xpose.msra.mxu0 0
  %982 = vmatprep.subr.bf16.mxu0 0
  %983 = vmatpush2.bf16.xpose.msra.mxu0 0
  %984 = vmatprep.subr.bf16.mxu0 0
  %985 = vmatpush2.bf16.xpose.msra.mxu0 0
  %986 = vmatprep.subr.bf16.mxu0 0
  %987 = vmatpush2.bf16.xpose.msra.mxu0 0
  %988 = vmatprep.subr.bf16.mxu0 0
  %989 = vmatpush2.bf16.xpose.msra.mxu0 0
  %990 = vmatprep.subr.bf16.mxu0 0
  %991 = vmatpush2.bf16.xpose.msra.mxu0 0
  %992 = vmatprep.mubr.bf16.mxu0 0
  %993 = vmatmul.mubr.bf16.gmra.mxu0 %v580
  %v994 = vpop.f32.mrf.mxu0
  %v995 = vadd.f32 0.0, %v994
  %v996 = vpop.f32.mrf.mxu0
  %v997 = vpop.f32.mrf.mxu0
  %v998 = vadd.f32 0.0, %v997
  %v999 = vpop.f32.mrf.mxu0
  %1000 = vdwg.mxu0
  %1001 = vmatprep.subr.bf16.mxu0 0
  %1002 = vmatpush1.bf16.xpose.msra.mxu0 0
  %1003 = vmatprep.subr.bf16.mxu0 0
  %1004 = vmatpush1.bf16.xpose.msra.mxu0 0
  %1005 = vmatprep.subr.bf16.mxu0 0
  %1006 = vmatpush1.bf16.xpose.msra.mxu0 0
  %1007 = vmatprep.subr.bf16.mxu0 0
  %1008 = vmatpush1.bf16.xpose.msra.mxu0 0
  %1009 = vmatprep.subr.bf16.mxu0 0
  %1010 = vmatpush1.bf16.xpose.msra.mxu0 0
  %1011 = vmatprep.subr.bf16.mxu0 0
  %1012 = vmatpush1.bf16.xpose.msra.mxu0 0
  %1013 = vmatprep.subr.bf16.mxu0 0
  %1014 = vmatpush1.bf16.xpose.msra.mxu0 %v712
  %1015 = vmatprep.subr.bf16.mxu0 0
  %1016 = vmatpush1.bf16.xpose.msra.mxu0 %v711
  %1017 = vmatprep.subr.bf16.mxu0 0
  %1018 = vmatpush2.bf16.xpose.msra.mxu0 0
  %1019 = vmatprep.subr.bf16.mxu0 0
  %1020 = vmatpush2.bf16.xpose.msra.mxu0 0
  %1021 = vmatprep.subr.bf16.mxu0 0
  %1022 = vmatpush2.bf16.xpose.msra.mxu0 0
  %1023 = vmatprep.subr.bf16.mxu0 0
  %1024 = vmatpush2.bf16.xpose.msra.mxu0 0
  %1025 = vmatprep.subr.bf16.mxu0 0
  %1026 = vmatpush2.bf16.xpose.msra.mxu0 0
  %1027 = vmatprep.subr.bf16.mxu0 0
  %1028 = vmatpush2.bf16.xpose.msra.mxu0 0
  %1029 = vmatprep.subr.bf16.mxu0 0
  %1030 = vmatpush2.bf16.xpose.msra.mxu0 0
  %1031 = vmatprep.subr.bf16.mxu0 0
  %1032 = vmatpush2.bf16.xpose.msra.mxu0 0
  %1033 = vmatprep.mubr.bf16.mxu0 0
  %1034 = vmatmul.mubr.bf16.gmra.mxu0 %v581
  %v1035 = vpop.f32.mrf.mxu0
  %v1036 = vadd.f32 0.0, %v1035
  %v1037 = vpop.f32.mrf.mxu0
  %v1038 = vpop.f32.mrf.mxu0
  %v1039 = vadd.f32 0.0, %v1038
  %v1040 = vpop.f32.mrf.mxu0
  %1041 = vdwg.mxu0
  %1042 = vmatprep.subr.bf16.mxu0 0
  %1043 = vmatpush1.bf16.xpose.msra.mxu0 0
  %1044 = vmatprep.subr.bf16.mxu0 0
  %1045 = vmatpush1.bf16.xpose.msra.mxu0 0
  %1046 = vmatprep.subr.bf16.mxu0 0
  %1047 = vmatpush1.bf16.xpose.msra.mxu0 0
  %1048 = vmatprep.subr.bf16.mxu0 0
  %1049 = vmatpush1.bf16.xpose.msra.mxu0 0
  %1050 = vmatprep.subr.bf16.mxu0 0
  %1051 = vmatpush1.bf16.xpose.msra.mxu0 0
  %1052 = vmatprep.subr.bf16.mxu0 0
  %1053 = vmatpush1.bf16.xpose.msra.mxu0 0
  %1054 = vmatprep.subr.bf16.mxu0 0
  %1055 = vmatpush1.bf16.xpose.msra.mxu0 %v714
  %1056 = vmatprep.subr.bf16.mxu0 0
  %1057 = vmatpush1.bf16.xpose.msra.mxu0 %v713
  %1058 = vmatprep.subr.bf16.mxu0 0
  %1059 = vmatpush2.bf16.xpose.msra.mxu0 0
  %1060 = vmatprep.subr.bf16.mxu0 0
  %1061 = vmatpush2.bf16.xpose.msra.mxu0 0
  %1062 = vmatprep.subr.bf16.mxu0 0
  %1063 = vmatpush2.bf16.xpose.msra.mxu0 0
  %1064 = vmatprep.subr.bf16.mxu0 0
  %1065 = vmatpush2.bf16.xpose.msra.mxu0 0
  %1066 = vmatprep.subr.bf16.mxu0 0
  %1067 = vmatpush2.bf16.xpose.msra.mxu0 0
  %1068 = vmatprep.subr.bf16.mxu0 0
  %1069 = vmatpush2.bf16.xpose.msra.mxu0 0
  %1070 = vmatprep.subr.bf16.mxu0 0
  %1071 = vmatpush2.bf16.xpose.msra.mxu0 0
  %1072 = vmatprep.subr.bf16.mxu0 0
  %1073 = vmatpush2.bf16.xpose.msra.mxu0 0
  %1074 = vmatprep.mubr.bf16.mxu0 0
  %1075 = vmatmul.mubr.bf16.gmra.mxu0 %v582
  %v1076 = vpop.f32.mrf.mxu0
  %v1077 = vadd.f32 0.0, %v1076
  %v1078 = vpop.f32.mrf.mxu0
  %v1079 = vpop.f32.mrf.mxu0
  %v1080 = vadd.f32 0.0, %v1079
  %v1081 = vpop.f32.mrf.mxu0
  %1082 = vdwg.mxu0
  %1083 = vmatprep.subr.bf16.mxu0 0
  %1084 = vmatpush1.bf16.xpose.msra.mxu0 0
  %1085 = vmatprep.subr.bf16.mxu0 0
  %1086 = vmatpush1.bf16.xpose.msra.mxu0 0
  %1087 = vmatprep.subr.bf16.mxu0 0
  %1088 = vmatpush1.bf16.xpose.msra.mxu0 0
  %1089 = vmatprep.subr.bf16.mxu0 0
  %1090 = vmatpush1.bf16.xpose.msra.mxu0 0
  %1091 = vmatprep.subr.bf16.mxu0 0
  %1092 = vmatpush1.bf16.xpose.msra.mxu0 0
  %1093 = vmatprep.subr.bf16.mxu0 0
  %1094 = vmatpush1.bf16.xpose.msra.mxu0 0
  %1095 = vmatprep.subr.bf16.mxu0 0
  %1096 = vmatpush1.bf16.xpose.msra.mxu0 %v716
  %1097 = vmatprep.subr.bf16.mxu0 0
  %1098 = vmatpush1.bf16.xpose.msra.mxu0 %v715
  %1099 = vmatprep.subr.bf16.mxu0 0
  %1100 = vmatpush2.bf16.xpose.msra.mxu0 0
  %1101 = vmatprep.subr.bf16.mxu0 0
  %1102 = vmatpush2.bf16.xpose.msra.mxu0 0
  %1103 = vmatprep.subr.bf16.mxu0 0
  %1104 = vmatpush2.bf16.xpose.msra.mxu0 0
  %1105 = vmatprep.subr.bf16.mxu0 0
  %1106 = vmatpush2.bf16.xpose.msra.mxu0 0
  %1107 = vmatprep.subr.bf16.mxu0 0
  %1108 = vmatpush2.bf16.xpose.msra.mxu0 0
  %1109 = vmatprep.subr.bf16.mxu0 0
  %1110 = vmatpush2.bf16.xpose.msra.mxu0 0
  %1111 = vmatprep.subr.bf16.mxu0 0
  %1112 = vmatpush2.bf16.xpose.msra.mxu0 0
  %1113 = vmatprep.subr.bf16.mxu0 0
  %1114 = vmatpush2.bf16.xpose.msra.mxu0 0
  %1115 = vmatprep.mubr.bf16.mxu0 0
  %1116 = vmatmul.mubr.bf16.gmra.mxu0 %v583
  %v1117 = vpop.f32.mrf.mxu0
  %v1118 = vadd.f32 0.0, %v1117
  %v1119 = vpop.f32.mrf.mxu0
  %v1120 = vpop.f32.mrf.mxu0
  %v1121 = vadd.f32 0.0, %v1120
  %v1122 = vpop.f32.mrf.mxu0
  %1123 = vdwg.mxu0
  %1124 = vmatprep.subr.bf16.mxu0 0
  %1125 = vmatpush1.bf16.xpose.msra.mxu0 0
  %1126 = vmatprep.subr.bf16.mxu0 0
  %1127 = vmatpush1.bf16.xpose.msra.mxu0 0
  %1128 = vmatprep.subr.bf16.mxu0 0
  %1129 = vmatpush1.bf16.xpose.msra.mxu0 0
  %1130 = vmatprep.subr.bf16.mxu0 0
  %1131 = vmatpush1.bf16.xpose.msra.mxu0 0
  %1132 = vmatprep.subr.bf16.mxu0 0
  %1133 = vmatpush1.bf16.xpose.msra.mxu0 0
  %1134 = vmatprep.subr.bf16.mxu0 0
  %1135 = vmatpush1.bf16.xpose.msra.mxu0 0
  %1136 = vmatprep.subr.bf16.mxu0 0
  %1137 = vmatpush1.bf16.xpose.msra.mxu0 %v718
  %1138 = vmatprep.subr.bf16.mxu0 0
  %1139 = vmatpush1.bf16.xpose.msra.mxu0 %v717
  %1140 = vmatprep.subr.bf16.mxu0 0
  %1141 = vmatpush2.bf16.xpose.msra.mxu0 0
  %1142 = vmatprep.subr.bf16.mxu0 0
  %1143 = vmatpush2.bf16.xpose.msra.mxu0 0
  %1144 = vmatprep.subr.bf16.mxu0 0
  %1145 = vmatpush2.bf16.xpose.msra.mxu0 0
  %1146 = vmatprep.subr.bf16.mxu0 0
  %1147 = vmatpush2.bf16.xpose.msra.mxu0 0
  %1148 = vmatprep.subr.bf16.mxu0 0
  %1149 = vmatpush2.bf16.xpose.msra.mxu0 0
  %1150 = vmatprep.subr.bf16.mxu0 0
  %1151 = vmatpush2.bf16.xpose.msra.mxu0 0
  %1152 = vmatprep.subr.bf16.mxu0 0
  %1153 = vmatpush2.bf16.xpose.msra.mxu0 0
  %1154 = vmatprep.subr.bf16.mxu0 0
  %1155 = vmatpush2.bf16.xpose.msra.mxu0 0
  %1156 = vmatprep.mubr.bf16.mxu0 0
  %1157 = vmatmul.mubr.bf16.gmra.mxu0 %v584
  %v1158 = vpop.f32.mrf.mxu0
  %v1159 = vadd.f32 0.0, %v1158
  %v1160 = vpop.f32.mrf.mxu0
  %v1161 = vpop.f32.mrf.mxu0
  %v1162 = vadd.f32 0.0, %v1161
  %v1163 = vpop.f32.mrf.mxu0
  %1164 = vdwg.mxu0
  %1165 = vmatprep.subr.bf16.mxu0 0
  %1166 = vmatpush1.bf16.xpose.msra.mxu0 0
  %1167 = vmatprep.subr.bf16.mxu0 0
  %1168 = vmatpush1.bf16.xpose.msra.mxu0 0
  %1169 = vmatprep.subr.bf16.mxu0 0
  %1170 = vmatpush1.bf16.xpose.msra.mxu0 0
  %1171 = vmatprep.subr.bf16.mxu0 0
  %1172 = vmatpush1.bf16.xpose.msra.mxu0 0
  %1173 = vmatprep.subr.bf16.mxu0 0
  %1174 = vmatpush1.bf16.xpose.msra.mxu0 0
  %1175 = vmatprep.subr.bf16.mxu0 0
  %1176 = vmatpush1.bf16.xpose.msra.mxu0 0
  %1177 = vmatprep.subr.bf16.mxu0 0
  %1178 = vmatpush1.bf16.xpose.msra.mxu0 %v720
  %1179 = vmatprep.subr.bf16.mxu0 0
  %1180 = vmatpush1.bf16.xpose.msra.mxu0 %v719
  %1181 = vmatprep.subr.bf16.mxu0 0
  %1182 = vmatpush2.bf16.xpose.msra.mxu0 0
  %1183 = vmatprep.subr.bf16.mxu0 0
  %1184 = vmatpush2.bf16.xpose.msra.mxu0 0
  %1185 = vmatprep.subr.bf16.mxu0 0
  %1186 = vmatpush2.bf16.xpose.msra.mxu0 0
  %1187 = vmatprep.subr.bf16.mxu0 0
  %1188 = vmatpush2.bf16.xpose.msra.mxu0 0
  %1189 = vmatprep.subr.bf16.mxu0 0
  %1190 = vmatpush2.bf16.xpose.msra.mxu0 0
  %1191 = vmatprep.subr.bf16.mxu0 0
  %1192 = vmatpush2.bf16.xpose.msra.mxu0 0
  %1193 = vmatprep.subr.bf16.mxu0 0
  %1194 = vmatpush2.bf16.xpose.msra.mxu0 0
  %1195 = vmatprep.subr.bf16.mxu0 0
  %1196 = vmatpush2.bf16.xpose.msra.mxu0 0
  %1197 = vmatprep.mubr.bf16.mxu0 0
  %1198 = vmatmul.mubr.bf16.gmra.mxu0 %v585
  %v1199 = vpop.f32.mrf.mxu0
  %v1200 = vadd.f32 0.0, %v1199
  %v1201 = vpop.f32.mrf.mxu0
  %v1202 = vpop.f32.mrf.mxu0
  %v1203 = vadd.f32 0.0, %v1202
  %v1204 = vpop.f32.mrf.mxu0
  %1205 = vdwg.mxu0
  %1206 = vmatprep.subr.bf16.mxu0 0
  %1207 = vmatpush1.bf16.xpose.msra.mxu0 0
  %1208 = vmatprep.subr.bf16.mxu0 0
  %1209 = vmatpush1.bf16.xpose.msra.mxu0 0
  %1210 = vmatprep.subr.bf16.mxu0 0
  %1211 = vmatpush1.bf16.xpose.msra.mxu0 0
  %1212 = vmatprep.subr.bf16.mxu0 0
  %1213 = vmatpush1.bf16.xpose.msra.mxu0 0
  %1214 = vmatprep.subr.bf16.mxu0 0
  %1215 = vmatpush1.bf16.xpose.msra.mxu0 0
  %1216 = vmatprep.subr.bf16.mxu0 0
  %1217 = vmatpush1.bf16.xpose.msra.mxu0 0
  %1218 = vmatprep.subr.bf16.mxu0 0
  %1219 = vmatpush1.bf16.xpose.msra.mxu0 %v722
  %1220 = vmatprep.subr.bf16.mxu0 0
  %1221 = vmatpush1.bf16.xpose.msra.mxu0 %v721
  %1222 = vmatprep.subr.bf16.mxu0 0
  %1223 = vmatpush2.bf16.xpose.msra.mxu0 0
  %1224 = vmatprep.subr.bf16.mxu0 0
  %1225 = vmatpush2.bf16.xpose.msra.mxu0 0
  %1226 = vmatprep.subr.bf16.mxu0 0
  %1227 = vmatpush2.bf16.xpose.msra.mxu0 0
  %1228 = vmatprep.subr.bf16.mxu0 0
  %1229 = vmatpush2.bf16.xpose.msra.mxu0 0
  %1230 = vmatprep.subr.bf16.mxu0 0
  %1231 = vmatpush2.bf16.xpose.msra.mxu0 0
  %1232 = vmatprep.subr.bf16.mxu0 0
  %1233 = vmatpush2.bf16.xpose.msra.mxu0 0
  %1234 = vmatprep.subr.bf16.mxu0 0
  %1235 = vmatpush2.bf16.xpose.msra.mxu0 0
  %1236 = vmatprep.subr.bf16.mxu0 0
  %1237 = vmatpush2.bf16.xpose.msra.mxu0 0
  %1238 = vmatprep.mubr.bf16.mxu0 0
  %1239 = vmatmul.mubr.bf16.gmra.mxu0 %v586
  %v1240 = vpop.f32.mrf.mxu0
  %v1241 = vadd.f32 0.0, %v1240
  %v1242 = vpop.f32.mrf.mxu0
  %v1243 = vpop.f32.mrf.mxu0
  %v1244 = vadd.f32 0.0, %v1243
  %v1245 = vpop.f32.mrf.mxu0
  %1246 = vdwg.mxu0
  %1247 = vmatprep.subr.bf16.mxu0 0
  %1248 = vmatpush1.bf16.xpose.msra.mxu0 0
  %1249 = vmatprep.subr.bf16.mxu0 0
  %1250 = vmatpush1.bf16.xpose.msra.mxu0 0
  %1251 = vmatprep.subr.bf16.mxu0 0
  %1252 = vmatpush1.bf16.xpose.msra.mxu0 0
  %1253 = vmatprep.subr.bf16.mxu0 0
  %1254 = vmatpush1.bf16.xpose.msra.mxu0 0
  %1255 = vmatprep.subr.bf16.mxu0 0
  %1256 = vmatpush1.bf16.xpose.msra.mxu0 0
  %1257 = vmatprep.subr.bf16.mxu0 0
  %1258 = vmatpush1.bf16.xpose.msra.mxu0 0
  %1259 = vmatprep.subr.bf16.mxu0 0
  %1260 = vmatpush1.bf16.xpose.msra.mxu0 %v724
  %1261 = vmatprep.subr.bf16.mxu0 0
  %1262 = vmatpush1.bf16.xpose.msra.mxu0 %v723
  %1263 = vmatprep.subr.bf16.mxu0 0
  %1264 = vmatpush2.bf16.xpose.msra.mxu0 0
  %1265 = vmatprep.subr.bf16.mxu0 0
  %1266 = vmatpush2.bf16.xpose.msra.mxu0 0
  %1267 = vmatprep.subr.bf16.mxu0 0
  %1268 = vmatpush2.bf16.xpose.msra.mxu0 0
  %1269 = vmatprep.subr.bf16.mxu0 0
  %1270 = vmatpush2.bf16.xpose.msra.mxu0 0
  %1271 = vmatprep.subr.bf16.mxu0 0
  %1272 = vmatpush2.bf16.xpose.msra.mxu0 0
  %1273 = vmatprep.subr.bf16.mxu0 0
  %1274 = vmatpush2.bf16.xpose.msra.mxu0 0
  %1275 = vmatprep.subr.bf16.mxu0 0
  %1276 = vmatpush2.bf16.xpose.msra.mxu0 0
  %1277 = vmatprep.subr.bf16.mxu0 0
  %1278 = vmatpush2.bf16.xpose.msra.mxu0 0
  %1279 = vmatprep.mubr.bf16.mxu0 0
  %1280 = vmatmul.mubr.bf16.gmra.mxu0 %v587
  %v1281 = vpop.f32.mrf.mxu0
  %v1282 = vadd.f32 0.0, %v1281
  %v1283 = vpop.f32.mrf.mxu0
  %v1284 = vpop.f32.mrf.mxu0
  %v1285 = vadd.f32 0.0, %v1284
  %v1286 = vpop.f32.mrf.mxu0
  %1287 = vdwg.mxu0
  %1288 = vmatprep.subr.bf16.mxu0 0
  %1289 = vmatpush1.bf16.xpose.msra.mxu0 0
  %1290 = vmatprep.subr.bf16.mxu0 0
  %1291 = vmatpush1.bf16.xpose.msra.mxu0 0
  %1292 = vmatprep.subr.bf16.mxu0 0
  %1293 = vmatpush1.bf16.xpose.msra.mxu0 0
  %1294 = vmatprep.subr.bf16.mxu0 0
  %1295 = vmatpush1.bf16.xpose.msra.mxu0 0
  %1296 = vmatprep.subr.bf16.mxu0 0
  %1297 = vmatpush1.bf16.xpose.msra.mxu0 0
  %1298 = vmatprep.subr.bf16.mxu0 0
  %1299 = vmatpush1.bf16.xpose.msra.mxu0 0
  %1300 = vmatprep.subr.bf16.mxu0 0
  %1301 = vmatpush1.bf16.xpose.msra.mxu0 %v726
  %1302 = vmatprep.subr.bf16.mxu0 0
  %1303 = vmatpush1.bf16.xpose.msra.mxu0 %v725
  %1304 = vmatprep.subr.bf16.mxu0 0
  %1305 = vmatpush2.bf16.xpose.msra.mxu0 0
  %1306 = vmatprep.subr.bf16.mxu0 0
  %1307 = vmatpush2.bf16.xpose.msra.mxu0 0
  %1308 = vmatprep.subr.bf16.mxu0 0
  %1309 = vmatpush2.bf16.xpose.msra.mxu0 0
  %1310 = vmatprep.subr.bf16.mxu0 0
  %1311 = vmatpush2.bf16.xpose.msra.mxu0 0
  %1312 = vmatprep.subr.bf16.mxu0 0
  %1313 = vmatpush2.bf16.xpose.msra.mxu0 0
  %1314 = vmatprep.subr.bf16.mxu0 0
  %1315 = vmatpush2.bf16.xpose.msra.mxu0 0
  %1316 = vmatprep.subr.bf16.mxu0 0
  %1317 = vmatpush2.bf16.xpose.msra.mxu0 0
  %1318 = vmatprep.subr.bf16.mxu0 0
  %1319 = vmatpush2.bf16.xpose.msra.mxu0 0
  %1320 = vmatprep.mubr.bf16.mxu0 0
  %1321 = vmatmul.mubr.bf16.gmra.mxu0 %v588
  %v1322 = vpop.f32.mrf.mxu0
  %v1323 = vadd.f32 0.0, %v1322
  %v1324 = vpop.f32.mrf.mxu0
  %v1325 = vpop.f32.mrf.mxu0
  %v1326 = vadd.f32 0.0, %v1325
  %v1327 = vpop.f32.mrf.mxu0
  %1328 = vdwg.mxu0
  %1329 = vmatprep.subr.bf16.mxu0 0
  %1330 = vmatpush1.bf16.xpose.msra.mxu0 0
  %1331 = vmatprep.subr.bf16.mxu0 0
  %1332 = vmatpush1.bf16.xpose.msra.mxu0 0
  %1333 = vmatprep.subr.bf16.mxu0 0
  %1334 = vmatpush1.bf16.xpose.msra.mxu0 0
  %1335 = vmatprep.subr.bf16.mxu0 0
  %1336 = vmatpush1.bf16.xpose.msra.mxu0 0
  %1337 = vmatprep.subr.bf16.mxu0 0
  %1338 = vmatpush1.bf16.xpose.msra.mxu0 0
  %1339 = vmatprep.subr.bf16.mxu0 0
  %1340 = vmatpush1.bf16.xpose.msra.mxu0 0
  %1341 = vmatprep.subr.bf16.mxu0 0
  %1342 = vmatpush1.bf16.xpose.msra.mxu0 %v728
  %1343 = vmatprep.subr.bf16.mxu0 0
  %1344 = vmatpush1.bf16.xpose.msra.mxu0 %v727
  %1345 = vmatprep.subr.bf16.mxu0 0
  %1346 = vmatpush2.bf16.xpose.msra.mxu0 0
  %1347 = vmatprep.subr.bf16.mxu0 0
  %1348 = vmatpush2.bf16.xpose.msra.mxu0 0
  %1349 = vmatprep.subr.bf16.mxu0 0
  %1350 = vmatpush2.bf16.xpose.msra.mxu0 0
  %1351 = vmatprep.subr.bf16.mxu0 0
  %1352 = vmatpush2.bf16.xpose.msra.mxu0 0
  %1353 = vmatprep.subr.bf16.mxu0 0
  %1354 = vmatpush2.bf16.xpose.msra.mxu0 0
  %1355 = vmatprep.subr.bf16.mxu0 0
  %1356 = vmatpush2.bf16.xpose.msra.mxu0 0
  %1357 = vmatprep.subr.bf16.mxu0 0
  %1358 = vmatpush2.bf16.xpose.msra.mxu0 0
  %1359 = vmatprep.subr.bf16.mxu0 0
  %1360 = vmatpush2.bf16.xpose.msra.mxu0 0
  %1361 = vmatprep.mubr.bf16.mxu0 0
  %1362 = vmatmul.mubr.bf16.gmra.mxu0 %v589
  %v1363 = vpop.f32.mrf.mxu0
  %v1364 = vadd.f32 0.0, %v1363
  %v1365 = vpop.f32.mrf.mxu0
  %v1366 = vpop.f32.mrf.mxu0
  %v1367 = vadd.f32 0.0, %v1366
  %v1368 = vpop.f32.mrf.mxu0
  %1369 = vdwg.mxu0
  %1370 = vmatprep.subr.bf16.mxu0 0
  %1371 = vmatpush1.bf16.xpose.msra.mxu0 0
  %1372 = vmatprep.subr.bf16.mxu0 0
  %1373 = vmatpush1.bf16.xpose.msra.mxu0 0
  %1374 = vmatprep.subr.bf16.mxu0 0
  %1375 = vmatpush1.bf16.xpose.msra.mxu0 0
  %1376 = vmatprep.subr.bf16.mxu0 0
  %1377 = vmatpush1.bf16.xpose.msra.mxu0 0
  %1378 = vmatprep.subr.bf16.mxu0 0
  %1379 = vmatpush1.bf16.xpose.msra.mxu0 0
  %1380 = vmatprep.subr.bf16.mxu0 0
  %1381 = vmatpush1.bf16.xpose.msra.mxu0 0
  %1382 = vmatprep.subr.bf16.mxu0 0
  %1383 = vmatpush1.bf16.xpose.msra.mxu0 %v730
  %1384 = vmatprep.subr.bf16.mxu0 0
  %1385 = vmatpush1.bf16.xpose.msra.mxu0 %v729
  %1386 = vmatprep.subr.bf16.mxu0 0
  %1387 = vmatpush2.bf16.xpose.msra.mxu0 0
  %1388 = vmatprep.subr.bf16.mxu0 0
  %1389 = vmatpush2.bf16.xpose.msra.mxu0 0
  %1390 = vmatprep.subr.bf16.mxu0 0
  %1391 = vmatpush2.bf16.xpose.msra.mxu0 0
  %1392 = vmatprep.subr.bf16.mxu0 0
  %1393 = vmatpush2.bf16.xpose.msra.mxu0 0
  %1394 = vmatprep.subr.bf16.mxu0 0
  %1395 = vmatpush2.bf16.xpose.msra.mxu0 0
  %1396 = vmatprep.subr.bf16.mxu0 0
  %1397 = vmatpush2.bf16.xpose.msra.mxu0 0
  %1398 = vmatprep.subr.bf16.mxu0 0
  %1399 = vmatpush2.bf16.xpose.msra.mxu0 0
  %1400 = vmatprep.subr.bf16.mxu0 0
  %1401 = vmatpush2.bf16.xpose.msra.mxu0 0
  %1402 = vmatprep.mubr.bf16.mxu0 0
  %1403 = vmatmul.mubr.bf16.gmra.mxu0 %v590
  %v1404 = vpop.f32.mrf.mxu0
  %v1405 = vadd.f32 0.0, %v1404
  %v1406 = vpop.f32.mrf.mxu0
  %v1407 = vpop.f32.mrf.mxu0
  %v1408 = vadd.f32 0.0, %v1407
  %v1409 = vpop.f32.mrf.mxu0
  %1410 = vdwg.mxu0
  %1411 = vmatprep.subr.bf16.mxu0 0
  %1412 = vmatpush1.bf16.xpose.msra.mxu0 0
  %1413 = vmatprep.subr.bf16.mxu0 0
  %1414 = vmatpush1.bf16.xpose.msra.mxu0 0
  %1415 = vmatprep.subr.bf16.mxu0 0
  %1416 = vmatpush1.bf16.xpose.msra.mxu0 0
  %1417 = vmatprep.subr.bf16.mxu0 0
  %1418 = vmatpush1.bf16.xpose.msra.mxu0 0
  %1419 = vmatprep.subr.bf16.mxu0 0
  %1420 = vmatpush1.bf16.xpose.msra.mxu0 0
  %1421 = vmatprep.subr.bf16.mxu0 0
  %1422 = vmatpush1.bf16.xpose.msra.mxu0 0
  %1423 = vmatprep.subr.bf16.mxu0 0
  %1424 = vmatpush1.bf16.xpose.msra.mxu0 %v732
  %1425 = vmatprep.subr.bf16.mxu0 0
  %1426 = vmatpush1.bf16.xpose.msra.mxu0 %v731
  %1427 = vmatprep.subr.bf16.mxu0 0
  %1428 = vmatpush2.bf16.xpose.msra.mxu0 0
  %1429 = vmatprep.subr.bf16.mxu0 0
  %1430 = vmatpush2.bf16.xpose.msra.mxu0 0
  %1431 = vmatprep.subr.bf16.mxu0 0
  %1432 = vmatpush2.bf16.xpose.msra.mxu0 0
  %1433 = vmatprep.subr.bf16.mxu0 0
  %1434 = vmatpush2.bf16.xpose.msra.mxu0 0
  %1435 = vmatprep.subr.bf16.mxu0 0
  %1436 = vmatpush2.bf16.xpose.msra.mxu0 0
  %1437 = vmatprep.subr.bf16.mxu0 0
  %1438 = vmatpush2.bf16.xpose.msra.mxu0 0
  %1439 = vmatprep.subr.bf16.mxu0 0
  %1440 = vmatpush2.bf16.xpose.msra.mxu0 0
  %1441 = vmatprep.subr.bf16.mxu0 0
  %1442 = vmatpush2.bf16.xpose.msra.mxu0 0
  %1443 = vmatprep.mubr.bf16.mxu0 0
  %1444 = vmatmul.mubr.bf16.gmra.mxu0 %v591
  %v1445 = vpop.f32.mrf.mxu0
  %v1446 = vadd.f32 0.0, %v1445
  %v1447 = vpop.f32.mrf.mxu0
  %v1448 = vpop.f32.mrf.mxu0
  %v1449 = vadd.f32 0.0, %v1448
  %v1450 = vpop.f32.mrf.mxu0
  %1451 = vdwg.mxu0
  %1452 = vmatprep.subr.bf16.mxu0 0
  %1453 = vmatpush1.bf16.xpose.msra.mxu0 0
  %1454 = vmatprep.subr.bf16.mxu0 0
  %1455 = vmatpush1.bf16.xpose.msra.mxu0 0
  %1456 = vmatprep.subr.bf16.mxu0 0
  %1457 = vmatpush1.bf16.xpose.msra.mxu0 0
  %1458 = vmatprep.subr.bf16.mxu0 0
  %1459 = vmatpush1.bf16.xpose.msra.mxu0 0
  %1460 = vmatprep.subr.bf16.mxu0 0
  %1461 = vmatpush1.bf16.xpose.msra.mxu0 0
  %1462 = vmatprep.subr.bf16.mxu0 0
  %1463 = vmatpush1.bf16.xpose.msra.mxu0 0
  %1464 = vmatprep.subr.bf16.mxu0 0
  %1465 = vmatpush1.bf16.xpose.msra.mxu0 %v734
  %1466 = vmatprep.subr.bf16.mxu0 0
  %1467 = vmatpush1.bf16.xpose.msra.mxu0 %v733
  %1468 = vmatprep.subr.bf16.mxu0 0
  %1469 = vmatpush2.bf16.xpose.msra.mxu0 0
  %1470 = vmatprep.subr.bf16.mxu0 0
  %1471 = vmatpush2.bf16.xpose.msra.mxu0 0
  %1472 = vmatprep.subr.bf16.mxu0 0
  %1473 = vmatpush2.bf16.xpose.msra.mxu0 0
  %1474 = vmatprep.subr.bf16.mxu0 0
  %1475 = vmatpush2.bf16.xpose.msra.mxu0 0
  %1476 = vmatprep.subr.bf16.mxu0 0
  %1477 = vmatpush2.bf16.xpose.msra.mxu0 0
  %1478 = vmatprep.subr.bf16.mxu0 0
  %1479 = vmatpush2.bf16.xpose.msra.mxu0 0
  %1480 = vmatprep.subr.bf16.mxu0 0
  %1481 = vmatpush2.bf16.xpose.msra.mxu0 0
  %1482 = vmatprep.subr.bf16.mxu0 0
  %1483 = vmatpush2.bf16.xpose.msra.mxu0 0
  %1484 = vmatprep.mubr.bf16.mxu0 0
  %1485 = vmatmul.mubr.bf16.gmra.mxu0 %v592
  %v1486 = vpop.f32.mrf.mxu0
  %v1487 = vadd.f32 0.0, %v1486
  %v1488 = vpop.f32.mrf.mxu0
  %v1489 = vpop.f32.mrf.mxu0
  %v1490 = vadd.f32 0.0, %v1489
  %v1491 = vpop.f32.mrf.mxu0
  %1492 = vdwg.mxu0
  %1493 = vmatprep.subr.bf16.mxu0 0
  %1494 = vmatpush1.bf16.xpose.msra.mxu0 0
  %1495 = vmatprep.subr.bf16.mxu0 0
  %1496 = vmatpush1.bf16.xpose.msra.mxu0 0
  %1497 = vmatprep.subr.bf16.mxu0 0
  %1498 = vmatpush1.bf16.xpose.msra.mxu0 0
  %1499 = vmatprep.subr.bf16.mxu0 0
  %1500 = vmatpush1.bf16.xpose.msra.mxu0 0
  %1501 = vmatprep.subr.bf16.mxu0 0
  %1502 = vmatpush1.bf16.xpose.msra.mxu0 0
  %1503 = vmatprep.subr.bf16.mxu0 0
  %1504 = vmatpush1.bf16.xpose.msra.mxu0 0
  %1505 = vmatprep.subr.bf16.mxu0 0
  %1506 = vmatpush1.bf16.xpose.msra.mxu0 %v736
  %1507 = vmatprep.subr.bf16.mxu0 0
  %1508 = vmatpush1.bf16.xpose.msra.mxu0 %v735
  %1509 = vmatprep.subr.bf16.mxu0 0
  %1510 = vmatpush2.bf16.xpose.msra.mxu0 0
  %1511 = vmatprep.subr.bf16.mxu0 0
  %1512 = vmatpush2.bf16.xpose.msra.mxu0 0
  %1513 = vmatprep.subr.bf16.mxu0 0
  %1514 = vmatpush2.bf16.xpose.msra.mxu0 0
  %1515 = vmatprep.subr.bf16.mxu0 0
  %1516 = vmatpush2.bf16.xpose.msra.mxu0 0
  %1517 = vmatprep.subr.bf16.mxu0 0
  %1518 = vmatpush2.bf16.xpose.msra.mxu0 0
  %1519 = vmatprep.subr.bf16.mxu0 0
  %1520 = vmatpush2.bf16.xpose.msra.mxu0 0
  %1521 = vmatprep.subr.bf16.mxu0 0
  %1522 = vmatpush2.bf16.xpose.msra.mxu0 0
  %1523 = vmatprep.subr.bf16.mxu0 0
  %1524 = vmatpush2.bf16.xpose.msra.mxu0 0
  %1525 = vmatprep.mubr.bf16.mxu0 0
  %1526 = vmatmul.mubr.bf16.gmra.mxu0 %v593
  %v1527 = vpop.f32.mrf.mxu0
  %v1528 = vadd.f32 0.0, %v1527
  %v1529 = vpop.f32.mrf.mxu0
  %v1530 = vpop.f32.mrf.mxu0
  %v1531 = vadd.f32 0.0, %v1530
  %v1532 = vpop.f32.mrf.mxu0
  %1533 = vdwg.mxu0
  %1566 = vrot.lane.b32.xlu0 %v913, 120
  %v1567 = vpop.permute.xlu0 %1566
  %1568 = vrot.lane.b32.xlu0 %v916, 120
  %v1569 = vpop.permute.xlu0 %1568
  %1570 = vrot.lane.b32.xlu0 %v954, 120
  %v1571 = vpop.permute.xlu0 %1570
  %1572 = vrot.lane.b32.xlu0 %v957, 120
  %v1573 = vpop.permute.xlu0 %1572
  %1574 = vrot.lane.b32.xlu0 %v995, 120
  %v1575 = vpop.permute.xlu0 %1574
  %1576 = vrot.lane.b32.xlu0 %v998, 120
  %v1577 = vpop.permute.xlu0 %1576
  %1578 = vrot.lane.b32.xlu0 %v1036, 120
  %v1579 = vpop.permute.xlu0 %1578
  %1580 = vrot.lane.b32.xlu0 %v1039, 120
  %v1581 = vpop.permute.xlu0 %1580
  %1582 = vrot.lane.b32.xlu0 %v1077, 120
  %v1583 = vpop.permute.xlu0 %1582
  %1584 = vrot.lane.b32.xlu0 %v1080, 120
  %v1585 = vpop.permute.xlu0 %1584
  %1586 = vrot.lane.b32.xlu0 %v1118, 120
  %v1587 = vpop.permute.xlu0 %1586
  %1588 = vrot.lane.b32.xlu0 %v1121, 120
  %v1589 = vpop.permute.xlu0 %1588
  %1590 = vrot.lane.b32.xlu0 %v1159, 120
  %v1591 = vpop.permute.xlu0 %1590
  %1592 = vrot.lane.b32.xlu0 %v1162, 120
  %v1593 = vpop.permute.xlu0 %1592
  %1594 = vrot.lane.b32.xlu0 %v1200, 120
  %v1595 = vpop.permute.xlu0 %1594
  %1596 = vrot.lane.b32.xlu0 %v1203, 120
  %v1597 = vpop.permute.xlu0 %1596
  %1598 = vrot.lane.b32.xlu0 %v1241, 120
  %v1599 = vpop.permute.xlu0 %1598
  %1600 = vrot.lane.b32.xlu0 %v1244, 120
  %v1601 = vpop.permute.xlu0 %1600
  %1602 = vrot.lane.b32.xlu0 %v1282, 120
  %v1603 = vpop.permute.xlu0 %1602
  %1604 = vrot.lane.b32.xlu0 %v1285, 120
  %v1605 = vpop.permute.xlu0 %1604
  %1606 = vrot.lane.b32.xlu0 %v1323, 120
  %v1607 = vpop.permute.xlu0 %1606
  %1608 = vrot.lane.b32.xlu0 %v1326, 120
  %v1609 = vpop.permute.xlu0 %1608
  %1610 = vrot.lane.b32.xlu0 %v1364, 120
  %v1611 = vpop.permute.xlu0 %1610
  %1612 = vrot.lane.b32.xlu0 %v1367, 120
  %v1613 = vpop.permute.xlu0 %1612
  %1614 = vrot.lane.b32.xlu0 %v1405, 120
  %v1615 = vpop.permute.xlu0 %1614
  %1616 = vrot.lane.b32.xlu0 %v1408, 120
  %v1617 = vpop.permute.xlu0 %1616
  %1618 = vrot.lane.b32.xlu0 %v1446, 120
  %v1619 = vpop.permute.xlu0 %1618
  %1620 = vrot.lane.b32.xlu0 %v1449, 120
  %v1621 = vpop.permute.xlu0 %1620
  %1622 = vrot.lane.b32.xlu0 %v1487, 120
  %v1623 = vpop.permute.xlu0 %1622
  %1624 = vrot.lane.b32.xlu0 %v1490, 120
  %v1625 = vpop.permute.xlu0 %1624
  %1626 = vrot.lane.b32.xlu0 %v1528, 120
  %v1627 = vpop.permute.xlu0 %1626
  %1628 = vrot.lane.b32.xlu0 %v1531, 120
  %v1629 = vpop.permute.xlu0 %1628
  %1662 = vrot.lane.b32.xlu0 %v913, 112
  %v1663 = vpop.permute.xlu0 %1662
  %1664 = vrot.lane.b32.xlu0 %v916, 112
  %v1665 = vpop.permute.xlu0 %1664
  %1666 = vrot.lane.b32.xlu0 %v954, 112
  %v1667 = vpop.permute.xlu0 %1666
  %1668 = vrot.lane.b32.xlu0 %v957, 112
  %v1669 = vpop.permute.xlu0 %1668
  %1670 = vrot.lane.b32.xlu0 %v995, 112
  %v1671 = vpop.permute.xlu0 %1670
  %1672 = vrot.lane.b32.xlu0 %v998, 112
  %v1673 = vpop.permute.xlu0 %1672
  %1674 = vrot.lane.b32.xlu0 %v1036, 112
  %v1675 = vpop.permute.xlu0 %1674
  %1676 = vrot.lane.b32.xlu0 %v1039, 112
  %v1677 = vpop.permute.xlu0 %1676
  %1678 = vrot.lane.b32.xlu0 %v1077, 112
  %v1679 = vpop.permute.xlu0 %1678
  %1680 = vrot.lane.b32.xlu0 %v1080, 112
  %v1681 = vpop.permute.xlu0 %1680
  %1682 = vrot.lane.b32.xlu0 %v1118, 112
  %v1683 = vpop.permute.xlu0 %1682
  %1684 = vrot.lane.b32.xlu0 %v1121, 112
  %v1685 = vpop.permute.xlu0 %1684
  %1686 = vrot.lane.b32.xlu0 %v1159, 112
  %v1687 = vpop.permute.xlu0 %1686
  %1688 = vrot.lane.b32.xlu0 %v1162, 112
  %v1689 = vpop.permute.xlu0 %1688
  %1690 = vrot.lane.b32.xlu0 %v1200, 112
  %v1691 = vpop.permute.xlu0 %1690
  %1692 = vrot.lane.b32.xlu0 %v1203, 112
  %v1693 = vpop.permute.xlu0 %1692
  %1694 = vrot.lane.b32.xlu0 %v1241, 112
  %v1695 = vpop.permute.xlu0 %1694
  %1696 = vrot.lane.b32.xlu0 %v1244, 112
  %v1697 = vpop.permute.xlu0 %1696
  %1698 = vrot.lane.b32.xlu0 %v1282, 112
  %v1699 = vpop.permute.xlu0 %1698
  %1700 = vrot.lane.b32.xlu0 %v1285, 112
  %v1701 = vpop.permute.xlu0 %1700
  %1702 = vrot.lane.b32.xlu0 %v1323, 112
  %v1703 = vpop.permute.xlu0 %1702
  %1704 = vrot.lane.b32.xlu0 %v1326, 112
  %v1705 = vpop.permute.xlu0 %1704
  %1706 = vrot.lane.b32.xlu0 %v1364, 112
  %v1707 = vpop.permute.xlu0 %1706
  %1708 = vrot.lane.b32.xlu0 %v1367, 112
  %v1709 = vpop.permute.xlu0 %1708
  %1710 = vrot.lane.b32.xlu0 %v1405, 112
  %v1711 = vpop.permute.xlu0 %1710
  %1712 = vrot.lane.b32.xlu0 %v1408, 112
  %v1713 = vpop.permute.xlu0 %1712
  %1714 = vrot.lane.b32.xlu0 %v1446, 112
  %v1715 = vpop.permute.xlu0 %1714
  %1716 = vrot.lane.b32.xlu0 %v1449, 112
  %v1717 = vpop.permute.xlu0 %1716
  %1718 = vrot.lane.b32.xlu0 %v1487, 112
  %v1719 = vpop.permute.xlu0 %1718
  %1720 = vrot.lane.b32.xlu0 %v1490, 112
  %v1721 = vpop.permute.xlu0 %1720
  %1722 = vrot.lane.b32.xlu0 %v1528, 112
  %v1723 = vpop.permute.xlu0 %1722
  %1724 = vrot.lane.b32.xlu0 %v1531, 112
  %v1725 = vpop.permute.xlu0 %1724
  %1758 = vrot.lane.b32.xlu0 %v913, 104
  %v1759 = vpop.permute.xlu0 %1758
  %1760 = vrot.lane.b32.xlu0 %v916, 104
  %v1761 = vpop.permute.xlu0 %1760
  %1762 = vrot.lane.b32.xlu0 %v954, 104
  %v1763 = vpop.permute.xlu0 %1762
  %1764 = vrot.lane.b32.xlu0 %v957, 104
  %v1765 = vpop.permute.xlu0 %1764
  %1766 = vrot.lane.b32.xlu0 %v995, 104
  %v1767 = vpop.permute.xlu0 %1766
  %1768 = vrot.lane.b32.xlu0 %v998, 104
  %v1769 = vpop.permute.xlu0 %1768
  %1770 = vrot.lane.b32.xlu0 %v1036, 104
  %v1771 = vpop.permute.xlu0 %1770
  %1772 = vrot.lane.b32.xlu0 %v1039, 104
  %v1773 = vpop.permute.xlu0 %1772
  %1774 = vrot.lane.b32.xlu0 %v1077, 104
  %v1775 = vpop.permute.xlu0 %1774
  %1776 = vrot.lane.b32.xlu0 %v1080, 104
  %v1777 = vpop.permute.xlu0 %1776
  %1778 = vrot.lane.b32.xlu0 %v1118, 104
  %v1779 = vpop.permute.xlu0 %1778
  %1780 = vrot.lane.b32.xlu0 %v1121, 104
  %v1781 = vpop.permute.xlu0 %1780
  %1782 = vrot.lane.b32.xlu0 %v1159, 104
  %v1783 = vpop.permute.xlu0 %1782
  %1784 = vrot.lane.b32.xlu0 %v1162, 104
  %v1785 = vpop.permute.xlu0 %1784
  %1786 = vrot.lane.b32.xlu0 %v1200, 104
  %v1787 = vpop.permute.xlu0 %1786
  %1788 = vrot.lane.b32.xlu0 %v1203, 104
  %v1789 = vpop.permute.xlu0 %1788
  %1790 = vrot.lane.b32.xlu0 %v1241, 104
  %v1791 = vpop.permute.xlu0 %1790
  %1792 = vrot.lane.b32.xlu0 %v1244, 104
  %v1793 = vpop.permute.xlu0 %1792
  %1794 = vrot.lane.b32.xlu0 %v1282, 104
  %v1795 = vpop.permute.xlu0 %1794
  %1796 = vrot.lane.b32.xlu0 %v1285, 104
  %v1797 = vpop.permute.xlu0 %1796
  %1798 = vrot.lane.b32.xlu0 %v1323, 104
  %v1799 = vpop.permute.xlu0 %1798
  %1800 = vrot.lane.b32.xlu0 %v1326, 104
  %v1801 = vpop.permute.xlu0 %1800
  %1802 = vrot.lane.b32.xlu0 %v1364, 104
  %v1803 = vpop.permute.xlu0 %1802
  %1804 = vrot.lane.b32.xlu0 %v1367, 104
  %v1805 = vpop.permute.xlu0 %1804
  %1806 = vrot.lane.b32.xlu0 %v1405, 104
  %v1807 = vpop.permute.xlu0 %1806
  %1808 = vrot.lane.b32.xlu0 %v1408, 104
  %v1809 = vpop.permute.xlu0 %1808
  %1810 = vrot.lane.b32.xlu0 %v1446, 104
  %v1811 = vpop.permute.xlu0 %1810
  %1812 = vrot.lane.b32.xlu0 %v1449, 104
  %v1813 = vpop.permute.xlu0 %1812
  %1814 = vrot.lane.b32.xlu0 %v1487, 104
  %v1815 = vpop.permute.xlu0 %1814
  %1816 = vrot.lane.b32.xlu0 %v1490, 104
  %v1817 = vpop.permute.xlu0 %1816
  %1818 = vrot.lane.b32.xlu0 %v1528, 104
  %v1819 = vpop.permute.xlu0 %1818
  %1820 = vrot.lane.b32.xlu0 %v1531, 104
  %v1821 = vpop.permute.xlu0 %1820
  %v1854 = vcombine.low %v913, %v1663
  %v1855 = vcombine.high %v913, %v1663
  %v1857 = vunpack.c.l.s4 1983009808
  %v1858 = vunpack.c.0.s8 %v1857
  %v1859 = vlaneseq
  %v1860 = vshrl.u32 %v1859, 7
  %v1861 = vsub.s32 %v1858, %v1860
  %v1862 = vrot.slane %v1854, %v1861
  %v1864 = vunpack.c.l.s4 1983009808
  %v1865 = vunpack.c.0.s8 %v1864
  %v1866 = vlaneseq
  %v1867 = vshrl.u32 %v1866, 7
  %v1868 = vsub.s32 %v1865, %v1867
  %v1869 = vrot.slane %v1855, %v1868
  %v1870 = vcombine.low %v1567, %v1759
  %v1871 = vcombine.high %v1567, %v1759
  %v1873 = vunpack.c.l.s4 1983009808
  %v1874 = vunpack.c.0.s8 %v1873
  %v1875 = vlaneseq
  %v1876 = vshrl.u32 %v1875, 7
  %v1877 = vsub.s32 %v1874, %v1876
  %v1878 = vrot.slane %v1870, %v1877
  %v1880 = vunpack.c.l.s4 1983009808
  %v1881 = vunpack.c.0.s8 %v1880
  %v1882 = vlaneseq
  %v1883 = vshrl.u32 %v1882, 7
  %v1884 = vsub.s32 %v1881, %v1883
  %v1885 = vrot.slane %v1871, %v1884
  %v1886 = vcombine.low %v1862, %v1878
  %v1887 = vcombine.high %v1862, %v1878
  %v1889 = vunpack.c.l.s4 1934713408
  %v1890 = vunpack.c.0.s8 %v1889
  %v1891 = vlaneseq
  %v1892 = vshrl.u32 %v1891, 7
  %v1893 = vsub.s32 %v1890, %v1892
  %v1894 = vrot.slane %v1886, %v1893
  %v1896 = vunpack.c.l.s4 1934713408
  %v1897 = vunpack.c.0.s8 %v1896
  %v1898 = vlaneseq
  %v1899 = vshrl.u32 %v1898, 7
  %v1900 = vsub.s32 %v1897, %v1899
  %v1901 = vrot.slane %v1887, %v1900
  %v1902 = vcombine.low %v1869, %v1885
  %v1903 = vcombine.high %v1869, %v1885
  %v1905 = vunpack.c.l.s4 1934713408
  %v1906 = vunpack.c.0.s8 %v1905
  %v1907 = vlaneseq
  %v1908 = vshrl.u32 %v1907, 7
  %v1909 = vsub.s32 %v1906, %v1908
  %v1910 = vrot.slane %v1902, %v1909
  %v1912 = vunpack.c.l.s4 1934713408
  %v1913 = vunpack.c.0.s8 %v1912
  %v1914 = vlaneseq
  %v1915 = vshrl.u32 %v1914, 7
  %v1916 = vsub.s32 %v1913, %v1915
  %v1917 = vrot.slane %v1903, %v1916
  %v1918 = vcombine.high %v1894, 0.0
  %v1919 = vcombine.high %v1901, 0.0
  %v1920 = vcombine.high %v1910, 0.0
  %v1921 = vcombine.high %v1917, 0.0
  %v1922 = vcombine.low %v916, %v1665
  %v1923 = vcombine.high %v916, %v1665
  %v1925 = vunpack.c.l.s4 1983009808
  %v1926 = vunpack.c.0.s8 %v1925
  %v1927 = vlaneseq
  %v1928 = vshrl.u32 %v1927, 7
  %v1929 = vsub.s32 %v1926, %v1928
  %v1930 = vrot.slane %v1922, %v1929
  %v1932 = vunpack.c.l.s4 1983009808
  %v1933 = vunpack.c.0.s8 %v1932
  %v1934 = vlaneseq
  %v1935 = vshrl.u32 %v1934, 7
  %v1936 = vsub.s32 %v1933, %v1935
  %v1937 = vrot.slane %v1923, %v1936
  %v1938 = vcombine.low %v1569, %v1761
  %v1939 = vcombine.high %v1569, %v1761
  %v1941 = vunpack.c.l.s4 1983009808
  %v1942 = vunpack.c.0.s8 %v1941
  %v1943 = vlaneseq
  %v1944 = vshrl.u32 %v1943, 7
  %v1945 = vsub.s32 %v1942, %v1944
  %v1946 = vrot.slane %v1938, %v1945
  %v1948 = vunpack.c.l.s4 1983009808
  %v1949 = vunpack.c.0.s8 %v1948
  %v1950 = vlaneseq
  %v1951 = vshrl.u32 %v1950, 7
  %v1952 = vsub.s32 %v1949, %v1951
  %v1953 = vrot.slane %v1939, %v1952
  %v1954 = vcombine.low %v1930, %v1946
  %v1955 = vcombine.high %v1930, %v1946
  %v1957 = vunpack.c.l.s4 1934713408
  %v1958 = vunpack.c.0.s8 %v1957
  %v1959 = vlaneseq
  %v1960 = vshrl.u32 %v1959, 7
  %v1961 = vsub.s32 %v1958, %v1960
  %v1962 = vrot.slane %v1954, %v1961
  %v1964 = vunpack.c.l.s4 1934713408
  %v1965 = vunpack.c.0.s8 %v1964
  %v1966 = vlaneseq
  %v1967 = vshrl.u32 %v1966, 7
  %v1968 = vsub.s32 %v1965, %v1967
  %v1969 = vrot.slane %v1955, %v1968
  %v1970 = vcombine.low %v1937, %v1953
  %v1971 = vcombine.high %v1937, %v1953
  %v1973 = vunpack.c.l.s4 1934713408
  %v1974 = vunpack.c.0.s8 %v1973
  %v1975 = vlaneseq
  %v1976 = vshrl.u32 %v1975, 7
  %v1977 = vsub.s32 %v1974, %v1976
  %v1978 = vrot.slane %v1970, %v1977
  %v1980 = vunpack.c.l.s4 1934713408
  %v1981 = vunpack.c.0.s8 %v1980
  %v1982 = vlaneseq
  %v1983 = vshrl.u32 %v1982, 7
  %v1984 = vsub.s32 %v1981, %v1983
  %v1985 = vrot.slane %v1971, %v1984
  %v1986 = vcombine.high %v1962, 0.0
  %v1987 = vcombine.high %v1969, 0.0
  %v1988 = vcombine.high %v1978, 0.0
  %v1989 = vcombine.high %v1985, 0.0
  %v1990 = vcombine.low %v954, %v1667
  %v1991 = vcombine.high %v954, %v1667
  %v1993 = vunpack.c.l.s4 1983009808
  %v1994 = vunpack.c.0.s8 %v1993
  %v1995 = vlaneseq
  %v1996 = vshrl.u32 %v1995, 7
  %v1997 = vsub.s32 %v1994, %v1996
  %v1998 = vrot.slane %v1990, %v1997
  %v2000 = vunpack.c.l.s4 1983009808
  %v2001 = vunpack.c.0.s8 %v2000
  %v2002 = vlaneseq
  %v2003 = vshrl.u32 %v2002, 7
  %v2004 = vsub.s32 %v2001, %v2003
  %v2005 = vrot.slane %v1991, %v2004
  %v2006 = vcombine.low %v1571, %v1763
  %v2007 = vcombine.high %v1571, %v1763
  %v2009 = vunpack.c.l.s4 1983009808
  %v2010 = vunpack.c.0.s8 %v2009
  %v2011 = vlaneseq
  %v2012 = vshrl.u32 %v2011, 7
  %v2013 = vsub.s32 %v2010, %v2012
  %v2014 = vrot.slane %v2006, %v2013
  %v2016 = vunpack.c.l.s4 1983009808
  %v2017 = vunpack.c.0.s8 %v2016
  %v2018 = vlaneseq
  %v2019 = vshrl.u32 %v2018, 7
  %v2020 = vsub.s32 %v2017, %v2019
  %v2021 = vrot.slane %v2007, %v2020
  %v2022 = vcombine.low %v1998, %v2014
  %v2023 = vcombine.high %v1998, %v2014
  %v2025 = vunpack.c.l.s4 1934713408
  %v2026 = vunpack.c.0.s8 %v2025
  %v2027 = vlaneseq
  %v2028 = vshrl.u32 %v2027, 7
  %v2029 = vsub.s32 %v2026, %v2028
  %v2030 = vrot.slane %v2022, %v2029
  %v2032 = vunpack.c.l.s4 1934713408
  %v2033 = vunpack.c.0.s8 %v2032
  %v2034 = vlaneseq
  %v2035 = vshrl.u32 %v2034, 7
  %v2036 = vsub.s32 %v2033, %v2035
  %v2037 = vrot.slane %v2023, %v2036
  %v2038 = vcombine.low %v2005, %v2021
  %v2039 = vcombine.high %v2005, %v2021
  %v2041 = vunpack.c.l.s4 1934713408
  %v2042 = vunpack.c.0.s8 %v2041
  %v2043 = vlaneseq
  %v2044 = vshrl.u32 %v2043, 7
  %v2045 = vsub.s32 %v2042, %v2044
  %v2046 = vrot.slane %v2038, %v2045
  %v2048 = vunpack.c.l.s4 1934713408
  %v2049 = vunpack.c.0.s8 %v2048
  %v2050 = vlaneseq
  %v2051 = vshrl.u32 %v2050, 7
  %v2052 = vsub.s32 %v2049, %v2051
  %v2053 = vrot.slane %v2039, %v2052
  %v2054 = vcombine.high %v2030, 0.0
  %v2055 = vcombine.high %v2037, 0.0
  %v2056 = vcombine.high %v2046, 0.0
  %v2057 = vcombine.high %v2053, 0.0
  %v2058 = vcombine.low %v957, %v1669
  %v2059 = vcombine.high %v957, %v1669
  %v2061 = vunpack.c.l.s4 1983009808
  %v2062 = vunpack.c.0.s8 %v2061
  %v2063 = vlaneseq
  %v2064 = vshrl.u32 %v2063, 7
  %v2065 = vsub.s32 %v2062, %v2064
  %v2066 = vrot.slane %v2058, %v2065
  %v2068 = vunpack.c.l.s4 1983009808
  %v2069 = vunpack.c.0.s8 %v2068
  %v2070 = vlaneseq
  %v2071 = vshrl.u32 %v2070, 7
  %v2072 = vsub.s32 %v2069, %v2071
  %v2073 = vrot.slane %v2059, %v2072
  %v2074 = vcombine.low %v1573, %v1765
  %v2075 = vcombine.high %v1573, %v1765
  %v2077 = vunpack.c.l.s4 1983009808
  %v2078 = vunpack.c.0.s8 %v2077
  %v2079 = vlaneseq
  %v2080 = vshrl.u32 %v2079, 7
  %v2081 = vsub.s32 %v2078, %v2080
  %v2082 = vrot.slane %v2074, %v2081
  %v2084 = vunpack.c.l.s4 1983009808
  %v2085 = vunpack.c.0.s8 %v2084
  %v2086 = vlaneseq
  %v2087 = vshrl.u32 %v2086, 7
  %v2088 = vsub.s32 %v2085, %v2087
  %v2089 = vrot.slane %v2075, %v2088
  %v2090 = vcombine.low %v2066, %v2082
  %v2091 = vcombine.high %v2066, %v2082
  %v2093 = vunpack.c.l.s4 1934713408
  %v2094 = vunpack.c.0.s8 %v2093
  %v2095 = vlaneseq
  %v2096 = vshrl.u32 %v2095, 7
  %v2097 = vsub.s32 %v2094, %v2096
  %v2098 = vrot.slane %v2090, %v2097
  %v2100 = vunpack.c.l.s4 1934713408
  %v2101 = vunpack.c.0.s8 %v2100
  %v2102 = vlaneseq
  %v2103 = vshrl.u32 %v2102, 7
  %v2104 = vsub.s32 %v2101, %v2103
  %v2105 = vrot.slane %v2091, %v2104
  %v2106 = vcombine.low %v2073, %v2089
  %v2107 = vcombine.high %v2073, %v2089
  %v2109 = vunpack.c.l.s4 1934713408
  %v2110 = vunpack.c.0.s8 %v2109
  %v2111 = vlaneseq
  %v2112 = vshrl.u32 %v2111, 7
  %v2113 = vsub.s32 %v2110, %v2112
  %v2114 = vrot.slane %v2106, %v2113
  %v2116 = vunpack.c.l.s4 1934713408
  %v2117 = vunpack.c.0.s8 %v2116
  %v2118 = vlaneseq
  %v2119 = vshrl.u32 %v2118, 7
  %v2120 = vsub.s32 %v2117, %v2119
  %v2121 = vrot.slane %v2107, %v2120
  %v2122 = vcombine.high %v2098, 0.0
  %v2123 = vcombine.high %v2105, 0.0
  %v2124 = vcombine.high %v2114, 0.0
  %v2125 = vcombine.high %v2121, 0.0
  %v2126 = vcombine.low %v995, %v1671
  %v2127 = vcombine.high %v995, %v1671
  %v2129 = vunpack.c.l.s4 1983009808
  %v2130 = vunpack.c.0.s8 %v2129
  %v2131 = vlaneseq
  %v2132 = vshrl.u32 %v2131, 7
  %v2133 = vsub.s32 %v2130, %v2132
  %v2134 = vrot.slane %v2126, %v2133
  %v2136 = vunpack.c.l.s4 1983009808
  %v2137 = vunpack.c.0.s8 %v2136
  %v2138 = vlaneseq
  %v2139 = vshrl.u32 %v2138, 7
  %v2140 = vsub.s32 %v2137, %v2139
  %v2141 = vrot.slane %v2127, %v2140
  %v2142 = vcombine.low %v1575, %v1767
  %v2143 = vcombine.high %v1575, %v1767
  %v2145 = vunpack.c.l.s4 1983009808
  %v2146 = vunpack.c.0.s8 %v2145
  %v2147 = vlaneseq
  %v2148 = vshrl.u32 %v2147, 7
  %v2149 = vsub.s32 %v2146, %v2148
  %v2150 = vrot.slane %v2142, %v2149
  %v2152 = vunpack.c.l.s4 1983009808
  %v2153 = vunpack.c.0.s8 %v2152
  %v2154 = vlaneseq
  %v2155 = vshrl.u32 %v2154, 7
  %v2156 = vsub.s32 %v2153, %v2155
  %v2157 = vrot.slane %v2143, %v2156
  %v2158 = vcombine.low %v2134, %v2150
  %v2159 = vcombine.high %v2134, %v2150
  %v2161 = vunpack.c.l.s4 1934713408
  %v2162 = vunpack.c.0.s8 %v2161
  %v2163 = vlaneseq
  %v2164 = vshrl.u32 %v2163, 7
  %v2165 = vsub.s32 %v2162, %v2164
  %v2166 = vrot.slane %v2158, %v2165
  %v2168 = vunpack.c.l.s4 1934713408
  %v2169 = vunpack.c.0.s8 %v2168
  %v2170 = vlaneseq
  %v2171 = vshrl.u32 %v2170, 7
  %v2172 = vsub.s32 %v2169, %v2171
  %v2173 = vrot.slane %v2159, %v2172
  %v2174 = vcombine.low %v2141, %v2157
  %v2175 = vcombine.high %v2141, %v2157
  %v2177 = vunpack.c.l.s4 1934713408
  %v2178 = vunpack.c.0.s8 %v2177
  %v2179 = vlaneseq
  %v2180 = vshrl.u32 %v2179, 7
  %v2181 = vsub.s32 %v2178, %v2180
  %v2182 = vrot.slane %v2174, %v2181
  %v2184 = vunpack.c.l.s4 1934713408
  %v2185 = vunpack.c.0.s8 %v2184
  %v2186 = vlaneseq
  %v2187 = vshrl.u32 %v2186, 7
  %v2188 = vsub.s32 %v2185, %v2187
  %v2189 = vrot.slane %v2175, %v2188
  %v2190 = vcombine.high %v2166, 0.0
  %v2191 = vcombine.high %v2173, 0.0
  %v2192 = vcombine.high %v2182, 0.0
  %v2193 = vcombine.high %v2189, 0.0
  %v2194 = vcombine.low %v998, %v1673
  %v2195 = vcombine.high %v998, %v1673
  %v2197 = vunpack.c.l.s4 1983009808
  %v2198 = vunpack.c.0.s8 %v2197
  %v2199 = vlaneseq
  %v2200 = vshrl.u32 %v2199, 7
  %v2201 = vsub.s32 %v2198, %v2200
  %v2202 = vrot.slane %v2194, %v2201
  %v2204 = vunpack.c.l.s4 1983009808
  %v2205 = vunpack.c.0.s8 %v2204
  %v2206 = vlaneseq
  %v2207 = vshrl.u32 %v2206, 7
  %v2208 = vsub.s32 %v2205, %v2207
  %v2209 = vrot.slane %v2195, %v2208
  %v2210 = vcombine.low %v1577, %v1769
  %v2211 = vcombine.high %v1577, %v1769
  %v2213 = vunpack.c.l.s4 1983009808
  %v2214 = vunpack.c.0.s8 %v2213
  %v2215 = vlaneseq
  %v2216 = vshrl.u32 %v2215, 7
  %v2217 = vsub.s32 %v2214, %v2216
  %v2218 = vrot.slane %v2210, %v2217
  %v2220 = vunpack.c.l.s4 1983009808
  %v2221 = vunpack.c.0.s8 %v2220
  %v2222 = vlaneseq
  %v2223 = vshrl.u32 %v2222, 7
  %v2224 = vsub.s32 %v2221, %v2223
  %v2225 = vrot.slane %v2211, %v2224
  %v2226 = vcombine.low %v2202, %v2218
  %v2227 = vcombine.high %v2202, %v2218
  %v2229 = vunpack.c.l.s4 1934713408
  %v2230 = vunpack.c.0.s8 %v2229
  %v2231 = vlaneseq
  %v2232 = vshrl.u32 %v2231, 7
  %v2233 = vsub.s32 %v2230, %v2232
  %v2234 = vrot.slane %v2226, %v2233
  %v2236 = vunpack.c.l.s4 1934713408
  %v2237 = vunpack.c.0.s8 %v2236
  %v2238 = vlaneseq
  %v2239 = vshrl.u32 %v2238, 7
  %v2240 = vsub.s32 %v2237, %v2239
  %v2241 = vrot.slane %v2227, %v2240
  %v2242 = vcombine.low %v2209, %v2225
  %v2243 = vcombine.high %v2209, %v2225
  %v2245 = vunpack.c.l.s4 1934713408
  %v2246 = vunpack.c.0.s8 %v2245
  %v2247 = vlaneseq
  %v2248 = vshrl.u32 %v2247, 7
  %v2249 = vsub.s32 %v2246, %v2248
  %v2250 = vrot.slane %v2242, %v2249
  %v2252 = vunpack.c.l.s4 1934713408
  %v2253 = vunpack.c.0.s8 %v2252
  %v2254 = vlaneseq
  %v2255 = vshrl.u32 %v2254, 7
  %v2256 = vsub.s32 %v2253, %v2255
  %v2257 = vrot.slane %v2243, %v2256
  %v2258 = vcombine.high %v2234, 0.0
  %v2259 = vcombine.high %v2241, 0.0
  %v2260 = vcombine.high %v2250, 0.0
  %v2261 = vcombine.high %v2257, 0.0
  %v2262 = vcombine.low %v1036, %v1675
  %v2263 = vcombine.high %v1036, %v1675
  %v2265 = vunpack.c.l.s4 1983009808
  %v2266 = vunpack.c.0.s8 %v2265
  %v2267 = vlaneseq
  %v2268 = vshrl.u32 %v2267, 7
  %v2269 = vsub.s32 %v2266, %v2268
  %v2270 = vrot.slane %v2262, %v2269
  %v2272 = vunpack.c.l.s4 1983009808
  %v2273 = vunpack.c.0.s8 %v2272
  %v2274 = vlaneseq
  %v2275 = vshrl.u32 %v2274, 7
  %v2276 = vsub.s32 %v2273, %v2275
  %v2277 = vrot.slane %v2263, %v2276
  %v2278 = vcombine.low %v1579, %v1771
  %v2279 = vcombine.high %v1579, %v1771
  %v2281 = vunpack.c.l.s4 1983009808
  %v2282 = vunpack.c.0.s8 %v2281
  %v2283 = vlaneseq
  %v2284 = vshrl.u32 %v2283, 7
  %v2285 = vsub.s32 %v2282, %v2284
  %v2286 = vrot.slane %v2278, %v2285
  %v2288 = vunpack.c.l.s4 1983009808
  %v2289 = vunpack.c.0.s8 %v2288
  %v2290 = vlaneseq
  %v2291 = vshrl.u32 %v2290, 7
  %v2292 = vsub.s32 %v2289, %v2291
  %v2293 = vrot.slane %v2279, %v2292
  %v2294 = vcombine.low %v2270, %v2286
  %v2295 = vcombine.high %v2270, %v2286
  %v2297 = vunpack.c.l.s4 1934713408
  %v2298 = vunpack.c.0.s8 %v2297
  %v2299 = vlaneseq
  %v2300 = vshrl.u32 %v2299, 7
  %v2301 = vsub.s32 %v2298, %v2300
  %v2302 = vrot.slane %v2294, %v2301
  %v2304 = vunpack.c.l.s4 1934713408
  %v2305 = vunpack.c.0.s8 %v2304
  %v2306 = vlaneseq
  %v2307 = vshrl.u32 %v2306, 7
  %v2308 = vsub.s32 %v2305, %v2307
  %v2309 = vrot.slane %v2295, %v2308
  %v2310 = vcombine.low %v2277, %v2293
  %v2311 = vcombine.high %v2277, %v2293
  %v2313 = vunpack.c.l.s4 1934713408
  %v2314 = vunpack.c.0.s8 %v2313
  %v2315 = vlaneseq
  %v2316 = vshrl.u32 %v2315, 7
  %v2317 = vsub.s32 %v2314, %v2316
  %v2318 = vrot.slane %v2310, %v2317
  %v2320 = vunpack.c.l.s4 1934713408
  %v2321 = vunpack.c.0.s8 %v2320
  %v2322 = vlaneseq
  %v2323 = vshrl.u32 %v2322, 7
  %v2324 = vsub.s32 %v2321, %v2323
  %v2325 = vrot.slane %v2311, %v2324
  %v2326 = vcombine.high %v2302, 0.0
  %v2327 = vcombine.high %v2309, 0.0
  %v2328 = vcombine.high %v2318, 0.0
  %v2329 = vcombine.high %v2325, 0.0
  %v2330 = vcombine.low %v1039, %v1677
  %v2331 = vcombine.high %v1039, %v1677
  %v2333 = vunpack.c.l.s4 1983009808
  %v2334 = vunpack.c.0.s8 %v2333
  %v2335 = vlaneseq
  %v2336 = vshrl.u32 %v2335, 7
  %v2337 = vsub.s32 %v2334, %v2336
  %v2338 = vrot.slane %v2330, %v2337
  %v2340 = vunpack.c.l.s4 1983009808
  %v2341 = vunpack.c.0.s8 %v2340
  %v2342 = vlaneseq
  %v2343 = vshrl.u32 %v2342, 7
  %v2344 = vsub.s32 %v2341, %v2343
  %v2345 = vrot.slane %v2331, %v2344
  %v2346 = vcombine.low %v1581, %v1773
  %v2347 = vcombine.high %v1581, %v1773
  %v2349 = vunpack.c.l.s4 1983009808
  %v2350 = vunpack.c.0.s8 %v2349
  %v2351 = vlaneseq
  %v2352 = vshrl.u32 %v2351, 7
  %v2353 = vsub.s32 %v2350, %v2352
  %v2354 = vrot.slane %v2346, %v2353
  %v2356 = vunpack.c.l.s4 1983009808
  %v2357 = vunpack.c.0.s8 %v2356
  %v2358 = vlaneseq
  %v2359 = vshrl.u32 %v2358, 7
  %v2360 = vsub.s32 %v2357, %v2359
  %v2361 = vrot.slane %v2347, %v2360
  %v2362 = vcombine.low %v2338, %v2354
  %v2363 = vcombine.high %v2338, %v2354
  %v2365 = vunpack.c.l.s4 1934713408
  %v2366 = vunpack.c.0.s8 %v2365
  %v2367 = vlaneseq
  %v2368 = vshrl.u32 %v2367, 7
  %v2369 = vsub.s32 %v2366, %v2368
  %v2370 = vrot.slane %v2362, %v2369
  %v2372 = vunpack.c.l.s4 1934713408
  %v2373 = vunpack.c.0.s8 %v2372
  %v2374 = vlaneseq
  %v2375 = vshrl.u32 %v2374, 7
  %v2376 = vsub.s32 %v2373, %v2375
  %v2377 = vrot.slane %v2363, %v2376
  %v2378 = vcombine.low %v2345, %v2361
  %v2379 = vcombine.high %v2345, %v2361
  %v2381 = vunpack.c.l.s4 1934713408
  %v2382 = vunpack.c.0.s8 %v2381
  %v2383 = vlaneseq
  %v2384 = vshrl.u32 %v2383, 7
  %v2385 = vsub.s32 %v2382, %v2384
  %v2386 = vrot.slane %v2378, %v2385
  %v2388 = vunpack.c.l.s4 1934713408
  %v2389 = vunpack.c.0.s8 %v2388
  %v2390 = vlaneseq
  %v2391 = vshrl.u32 %v2390, 7
  %v2392 = vsub.s32 %v2389, %v2391
  %v2393 = vrot.slane %v2379, %v2392
  %v2394 = vcombine.high %v2370, 0.0
  %v2395 = vcombine.high %v2377, 0.0
  %v2396 = vcombine.high %v2386, 0.0
  %v2397 = vcombine.high %v2393, 0.0
  %v2398 = vcombine.low %v1077, %v1679
  %v2399 = vcombine.high %v1077, %v1679
  %v2401 = vunpack.c.l.s4 1983009808
  %v2402 = vunpack.c.0.s8 %v2401
  %v2403 = vlaneseq
  %v2404 = vshrl.u32 %v2403, 7
  %v2405 = vsub.s32 %v2402, %v2404
  %v2406 = vrot.slane %v2398, %v2405
  %v2408 = vunpack.c.l.s4 1983009808
  %v2409 = vunpack.c.0.s8 %v2408
  %v2410 = vlaneseq
  %v2411 = vshrl.u32 %v2410, 7
  %v2412 = vsub.s32 %v2409, %v2411
  %v2413 = vrot.slane %v2399, %v2412
  %v2414 = vcombine.low %v1583, %v1775
  %v2415 = vcombine.high %v1583, %v1775
  %v2417 = vunpack.c.l.s4 1983009808
  %v2418 = vunpack.c.0.s8 %v2417
  %v2419 = vlaneseq
  %v2420 = vshrl.u32 %v2419, 7
  %v2421 = vsub.s32 %v2418, %v2420
  %v2422 = vrot.slane %v2414, %v2421
  %v2424 = vunpack.c.l.s4 1983009808
  %v2425 = vunpack.c.0.s8 %v2424
  %v2426 = vlaneseq
  %v2427 = vshrl.u32 %v2426, 7
  %v2428 = vsub.s32 %v2425, %v2427
  %v2429 = vrot.slane %v2415, %v2428
  %v2430 = vcombine.low %v2406, %v2422
  %v2431 = vcombine.high %v2406, %v2422
  %v2433 = vunpack.c.l.s4 1934713408
  %v2434 = vunpack.c.0.s8 %v2433
  %v2435 = vlaneseq
  %v2436 = vshrl.u32 %v2435, 7
  %v2437 = vsub.s32 %v2434, %v2436
  %v2438 = vrot.slane %v2430, %v2437
  %v2440 = vunpack.c.l.s4 1934713408
  %v2441 = vunpack.c.0.s8 %v2440
  %v2442 = vlaneseq
  %v2443 = vshrl.u32 %v2442, 7
  %v2444 = vsub.s32 %v2441, %v2443
  %v2445 = vrot.slane %v2431, %v2444
  %v2446 = vcombine.low %v2413, %v2429
  %v2447 = vcombine.high %v2413, %v2429
  %v2449 = vunpack.c.l.s4 1934713408
  %v2450 = vunpack.c.0.s8 %v2449
  %v2451 = vlaneseq
  %v2452 = vshrl.u32 %v2451, 7
  %v2453 = vsub.s32 %v2450, %v2452
  %v2454 = vrot.slane %v2446, %v2453
  %v2456 = vunpack.c.l.s4 1934713408
  %v2457 = vunpack.c.0.s8 %v2456
  %v2458 = vlaneseq
  %v2459 = vshrl.u32 %v2458, 7
  %v2460 = vsub.s32 %v2457, %v2459
  %v2461 = vrot.slane %v2447, %v2460
  %v2462 = vcombine.high %v2438, 0.0
  %v2463 = vcombine.high %v2445, 0.0
  %v2464 = vcombine.high %v2454, 0.0
  %v2465 = vcombine.high %v2461, 0.0
  %v2466 = vcombine.low %v1080, %v1681
  %v2467 = vcombine.high %v1080, %v1681
  %v2469 = vunpack.c.l.s4 1983009808
  %v2470 = vunpack.c.0.s8 %v2469
  %v2471 = vlaneseq
  %v2472 = vshrl.u32 %v2471, 7
  %v2473 = vsub.s32 %v2470, %v2472
  %v2474 = vrot.slane %v2466, %v2473
  %v2476 = vunpack.c.l.s4 1983009808
  %v2477 = vunpack.c.0.s8 %v2476
  %v2478 = vlaneseq
  %v2479 = vshrl.u32 %v2478, 7
  %v2480 = vsub.s32 %v2477, %v2479
  %v2481 = vrot.slane %v2467, %v2480
  %v2482 = vcombine.low %v1585, %v1777
  %v2483 = vcombine.high %v1585, %v1777
  %v2485 = vunpack.c.l.s4 1983009808
  %v2486 = vunpack.c.0.s8 %v2485
  %v2487 = vlaneseq
  %v2488 = vshrl.u32 %v2487, 7
  %v2489 = vsub.s32 %v2486, %v2488
  %v2490 = vrot.slane %v2482, %v2489
  %v2492 = vunpack.c.l.s4 1983009808
  %v2493 = vunpack.c.0.s8 %v2492
  %v2494 = vlaneseq
  %v2495 = vshrl.u32 %v2494, 7
  %v2496 = vsub.s32 %v2493, %v2495
  %v2497 = vrot.slane %v2483, %v2496
  %v2498 = vcombine.low %v2474, %v2490
  %v2499 = vcombine.high %v2474, %v2490
  %v2501 = vunpack.c.l.s4 1934713408
  %v2502 = vunpack.c.0.s8 %v2501
  %v2503 = vlaneseq
  %v2504 = vshrl.u32 %v2503, 7
  %v2505 = vsub.s32 %v2502, %v2504
  %v2506 = vrot.slane %v2498, %v2505
  %v2508 = vunpack.c.l.s4 1934713408
  %v2509 = vunpack.c.0.s8 %v2508
  %v2510 = vlaneseq
  %v2511 = vshrl.u32 %v2510, 7
  %v2512 = vsub.s32 %v2509, %v2511
  %v2513 = vrot.slane %v2499, %v2512
  %v2514 = vcombine.low %v2481, %v2497
  %v2515 = vcombine.high %v2481, %v2497
  %v2517 = vunpack.c.l.s4 1934713408
  %v2518 = vunpack.c.0.s8 %v2517
  %v2519 = vlaneseq
  %v2520 = vshrl.u32 %v2519, 7
  %v2521 = vsub.s32 %v2518, %v2520
  %v2522 = vrot.slane %v2514, %v2521
  %v2524 = vunpack.c.l.s4 1934713408
  %v2525 = vunpack.c.0.s8 %v2524
  %v2526 = vlaneseq
  %v2527 = vshrl.u32 %v2526, 7
  %v2528 = vsub.s32 %v2525, %v2527
  %v2529 = vrot.slane %v2515, %v2528
  %v2530 = vcombine.high %v2506, 0.0
  %v2531 = vcombine.high %v2513, 0.0
  %v2532 = vcombine.high %v2522, 0.0
  %v2533 = vcombine.high %v2529, 0.0
  %v2534 = vcombine.low %v1118, %v1683
  %v2535 = vcombine.high %v1118, %v1683
  %v2537 = vunpack.c.l.s4 1983009808
  %v2538 = vunpack.c.0.s8 %v2537
  %v2539 = vlaneseq
  %v2540 = vshrl.u32 %v2539, 7
  %v2541 = vsub.s32 %v2538, %v2540
  %v2542 = vrot.slane %v2534, %v2541
  %v2544 = vunpack.c.l.s4 1983009808
  %v2545 = vunpack.c.0.s8 %v2544
  %v2546 = vlaneseq
  %v2547 = vshrl.u32 %v2546, 7
  %v2548 = vsub.s32 %v2545, %v2547
  %v2549 = vrot.slane %v2535, %v2548
  %v2550 = vcombine.low %v1587, %v1779
  %v2551 = vcombine.high %v1587, %v1779
  %v2553 = vunpack.c.l.s4 1983009808
  %v2554 = vunpack.c.0.s8 %v2553
  %v2555 = vlaneseq
  %v2556 = vshrl.u32 %v2555, 7
  %v2557 = vsub.s32 %v2554, %v2556
  %v2558 = vrot.slane %v2550, %v2557
  %v2560 = vunpack.c.l.s4 1983009808
  %v2561 = vunpack.c.0.s8 %v2560
  %v2562 = vlaneseq
  %v2563 = vshrl.u32 %v2562, 7
  %v2564 = vsub.s32 %v2561, %v2563
  %v2565 = vrot.slane %v2551, %v2564
  %v2566 = vcombine.low %v2542, %v2558
  %v2567 = vcombine.high %v2542, %v2558
  %v2569 = vunpack.c.l.s4 1934713408
  %v2570 = vunpack.c.0.s8 %v2569
  %v2571 = vlaneseq
  %v2572 = vshrl.u32 %v2571, 7
  %v2573 = vsub.s32 %v2570, %v2572
  %v2574 = vrot.slane %v2566, %v2573
  %v2576 = vunpack.c.l.s4 1934713408
  %v2577 = vunpack.c.0.s8 %v2576
  %v2578 = vlaneseq
  %v2579 = vshrl.u32 %v2578, 7
  %v2580 = vsub.s32 %v2577, %v2579
  %v2581 = vrot.slane %v2567, %v2580
  %v2582 = vcombine.low %v2549, %v2565
  %v2583 = vcombine.high %v2549, %v2565
  %v2585 = vunpack.c.l.s4 1934713408
  %v2586 = vunpack.c.0.s8 %v2585
  %v2587 = vlaneseq
  %v2588 = vshrl.u32 %v2587, 7
  %v2589 = vsub.s32 %v2586, %v2588
  %v2590 = vrot.slane %v2582, %v2589
  %v2592 = vunpack.c.l.s4 1934713408
  %v2593 = vunpack.c.0.s8 %v2592
  %v2594 = vlaneseq
  %v2595 = vshrl.u32 %v2594, 7
  %v2596 = vsub.s32 %v2593, %v2595
  %v2597 = vrot.slane %v2583, %v2596
  %v2598 = vcombine.high %v2574, 0.0
  %v2599 = vcombine.high %v2581, 0.0
  %v2600 = vcombine.high %v2590, 0.0
  %v2601 = vcombine.high %v2597, 0.0
  %v2602 = vcombine.low %v1121, %v1685
  %v2603 = vcombine.high %v1121, %v1685
  %v2605 = vunpack.c.l.s4 1983009808
  %v2606 = vunpack.c.0.s8 %v2605
  %v2607 = vlaneseq
  %v2608 = vshrl.u32 %v2607, 7
  %v2609 = vsub.s32 %v2606, %v2608
  %v2610 = vrot.slane %v2602, %v2609
  %v2612 = vunpack.c.l.s4 1983009808
  %v2613 = vunpack.c.0.s8 %v2612
  %v2614 = vlaneseq
  %v2615 = vshrl.u32 %v2614, 7
  %v2616 = vsub.s32 %v2613, %v2615
  %v2617 = vrot.slane %v2603, %v2616
  %v2618 = vcombine.low %v1589, %v1781
  %v2619 = vcombine.high %v1589, %v1781
  %v2621 = vunpack.c.l.s4 1983009808
  %v2622 = vunpack.c.0.s8 %v2621
  %v2623 = vlaneseq
  %v2624 = vshrl.u32 %v2623, 7
  %v2625 = vsub.s32 %v2622, %v2624
  %v2626 = vrot.slane %v2618, %v2625
  %v2628 = vunpack.c.l.s4 1983009808
  %v2629 = vunpack.c.0.s8 %v2628
  %v2630 = vlaneseq
  %v2631 = vshrl.u32 %v2630, 7
  %v2632 = vsub.s32 %v2629, %v2631
  %v2633 = vrot.slane %v2619, %v2632
  %v2634 = vcombine.low %v2610, %v2626
  %v2635 = vcombine.high %v2610, %v2626
  %v2637 = vunpack.c.l.s4 1934713408
  %v2638 = vunpack.c.0.s8 %v2637
  %v2639 = vlaneseq
  %v2640 = vshrl.u32 %v2639, 7
  %v2641 = vsub.s32 %v2638, %v2640
  %v2642 = vrot.slane %v2634, %v2641
  %v2644 = vunpack.c.l.s4 1934713408
  %v2645 = vunpack.c.0.s8 %v2644
  %v2646 = vlaneseq
  %v2647 = vshrl.u32 %v2646, 7
  %v2648 = vsub.s32 %v2645, %v2647
  %v2649 = vrot.slane %v2635, %v2648
  %v2650 = vcombine.low %v2617, %v2633
  %v2651 = vcombine.high %v2617, %v2633
  %v2653 = vunpack.c.l.s4 1934713408
  %v2654 = vunpack.c.0.s8 %v2653
  %v2655 = vlaneseq
  %v2656 = vshrl.u32 %v2655, 7
  %v2657 = vsub.s32 %v2654, %v2656
  %v2658 = vrot.slane %v2650, %v2657
  %v2660 = vunpack.c.l.s4 1934713408
  %v2661 = vunpack.c.0.s8 %v2660
  %v2662 = vlaneseq
  %v2663 = vshrl.u32 %v2662, 7
  %v2664 = vsub.s32 %v2661, %v2663
  %v2665 = vrot.slane %v2651, %v2664
  %v2666 = vcombine.high %v2642, 0.0
  %v2667 = vcombine.high %v2649, 0.0
  %v2668 = vcombine.high %v2658, 0.0
  %v2669 = vcombine.high %v2665, 0.0
  %v2670 = vcombine.low %v1159, %v1687
  %v2671 = vcombine.high %v1159, %v1687
  %v2673 = vunpack.c.l.s4 1983009808
  %v2674 = vunpack.c.0.s8 %v2673
  %v2675 = vlaneseq
  %v2676 = vshrl.u32 %v2675, 7
  %v2677 = vsub.s32 %v2674, %v2676
  %v2678 = vrot.slane %v2670, %v2677
  %v2680 = vunpack.c.l.s4 1983009808
  %v2681 = vunpack.c.0.s8 %v2680
  %v2682 = vlaneseq
  %v2683 = vshrl.u32 %v2682, 7
  %v2684 = vsub.s32 %v2681, %v2683
  %v2685 = vrot.slane %v2671, %v2684
  %v2686 = vcombine.low %v1591, %v1783
  %v2687 = vcombine.high %v1591, %v1783
  %v2689 = vunpack.c.l.s4 1983009808
  %v2690 = vunpack.c.0.s8 %v2689
  %v2691 = vlaneseq
  %v2692 = vshrl.u32 %v2691, 7
  %v2693 = vsub.s32 %v2690, %v2692
  %v2694 = vrot.slane %v2686, %v2693
  %v2696 = vunpack.c.l.s4 1983009808
  %v2697 = vunpack.c.0.s8 %v2696
  %v2698 = vlaneseq
  %v2699 = vshrl.u32 %v2698, 7
  %v2700 = vsub.s32 %v2697, %v2699
  %v2701 = vrot.slane %v2687, %v2700
  %v2702 = vcombine.low %v2678, %v2694
  %v2703 = vcombine.high %v2678, %v2694
  %v2705 = vunpack.c.l.s4 1934713408
  %v2706 = vunpack.c.0.s8 %v2705
  %v2707 = vlaneseq
  %v2708 = vshrl.u32 %v2707, 7
  %v2709 = vsub.s32 %v2706, %v2708
  %v2710 = vrot.slane %v2702, %v2709
  %v2712 = vunpack.c.l.s4 1934713408
  %v2713 = vunpack.c.0.s8 %v2712
  %v2714 = vlaneseq
  %v2715 = vshrl.u32 %v2714, 7
  %v2716 = vsub.s32 %v2713, %v2715
  %v2717 = vrot.slane %v2703, %v2716
  %v2718 = vcombine.low %v2685, %v2701
  %v2719 = vcombine.high %v2685, %v2701
  %v2721 = vunpack.c.l.s4 1934713408
  %v2722 = vunpack.c.0.s8 %v2721
  %v2723 = vlaneseq
  %v2724 = vshrl.u32 %v2723, 7
  %v2725 = vsub.s32 %v2722, %v2724
  %v2726 = vrot.slane %v2718, %v2725
  %v2728 = vunpack.c.l.s4 1934713408
  %v2729 = vunpack.c.0.s8 %v2728
  %v2730 = vlaneseq
  %v2731 = vshrl.u32 %v2730, 7
  %v2732 = vsub.s32 %v2729, %v2731
  %v2733 = vrot.slane %v2719, %v2732
  %v2734 = vcombine.high %v2710, 0.0
  %v2735 = vcombine.high %v2717, 0.0
  %v2736 = vcombine.high %v2726, 0.0
  %v2737 = vcombine.high %v2733, 0.0
  %v2738 = vcombine.low %v1162, %v1689
  %v2739 = vcombine.high %v1162, %v1689
  %v2741 = vunpack.c.l.s4 1983009808
  %v2742 = vunpack.c.0.s8 %v2741
  %v2743 = vlaneseq
  %v2744 = vshrl.u32 %v2743, 7
  %v2745 = vsub.s32 %v2742, %v2744
  %v2746 = vrot.slane %v2738, %v2745
  %v2748 = vunpack.c.l.s4 1983009808
  %v2749 = vunpack.c.0.s8 %v2748
  %v2750 = vlaneseq
  %v2751 = vshrl.u32 %v2750, 7
  %v2752 = vsub.s32 %v2749, %v2751
  %v2753 = vrot.slane %v2739, %v2752
  %v2754 = vcombine.low %v1593, %v1785
  %v2755 = vcombine.high %v1593, %v1785
  %v2757 = vunpack.c.l.s4 1983009808
  %v2758 = vunpack.c.0.s8 %v2757
  %v2759 = vlaneseq
  %v2760 = vshrl.u32 %v2759, 7
  %v2761 = vsub.s32 %v2758, %v2760
  %v2762 = vrot.slane %v2754, %v2761
  %v2764 = vunpack.c.l.s4 1983009808
  %v2765 = vunpack.c.0.s8 %v2764
  %v2766 = vlaneseq
  %v2767 = vshrl.u32 %v2766, 7
  %v2768 = vsub.s32 %v2765, %v2767
  %v2769 = vrot.slane %v2755, %v2768
  %v2770 = vcombine.low %v2746, %v2762
  %v2771 = vcombine.high %v2746, %v2762
  %v2773 = vunpack.c.l.s4 1934713408
  %v2774 = vunpack.c.0.s8 %v2773
  %v2775 = vlaneseq
  %v2776 = vshrl.u32 %v2775, 7
  %v2777 = vsub.s32 %v2774, %v2776
  %v2778 = vrot.slane %v2770, %v2777
  %v2780 = vunpack.c.l.s4 1934713408
  %v2781 = vunpack.c.0.s8 %v2780
  %v2782 = vlaneseq
  %v2783 = vshrl.u32 %v2782, 7
  %v2784 = vsub.s32 %v2781, %v2783
  %v2785 = vrot.slane %v2771, %v2784
  %v2786 = vcombine.low %v2753, %v2769
  %v2787 = vcombine.high %v2753, %v2769
  %v2789 = vunpack.c.l.s4 1934713408
  %v2790 = vunpack.c.0.s8 %v2789
  %v2791 = vlaneseq
  %v2792 = vshrl.u32 %v2791, 7
  %v2793 = vsub.s32 %v2790, %v2792
  %v2794 = vrot.slane %v2786, %v2793
  %v2796 = vunpack.c.l.s4 1934713408
  %v2797 = vunpack.c.0.s8 %v2796
  %v2798 = vlaneseq
  %v2799 = vshrl.u32 %v2798, 7
  %v2800 = vsub.s32 %v2797, %v2799
  %v2801 = vrot.slane %v2787, %v2800
  %v2802 = vcombine.high %v2778, 0.0
  %v2803 = vcombine.high %v2785, 0.0
  %v2804 = vcombine.high %v2794, 0.0
  %v2805 = vcombine.high %v2801, 0.0
  %v2806 = vcombine.low %v1200, %v1691
  %v2807 = vcombine.high %v1200, %v1691
  %v2809 = vunpack.c.l.s4 1983009808
  %v2810 = vunpack.c.0.s8 %v2809
  %v2811 = vlaneseq
  %v2812 = vshrl.u32 %v2811, 7
  %v2813 = vsub.s32 %v2810, %v2812
  %v2814 = vrot.slane %v2806, %v2813
  %v2816 = vunpack.c.l.s4 1983009808
  %v2817 = vunpack.c.0.s8 %v2816
  %v2818 = vlaneseq
  %v2819 = vshrl.u32 %v2818, 7
  %v2820 = vsub.s32 %v2817, %v2819
  %v2821 = vrot.slane %v2807, %v2820
  %v2822 = vcombine.low %v1595, %v1787
  %v2823 = vcombine.high %v1595, %v1787
  %v2825 = vunpack.c.l.s4 1983009808
  %v2826 = vunpack.c.0.s8 %v2825
  %v2827 = vlaneseq
  %v2828 = vshrl.u32 %v2827, 7
  %v2829 = vsub.s32 %v2826, %v2828
  %v2830 = vrot.slane %v2822, %v2829
  %v2832 = vunpack.c.l.s4 1983009808
  %v2833 = vunpack.c.0.s8 %v2832
  %v2834 = vlaneseq
  %v2835 = vshrl.u32 %v2834, 7
  %v2836 = vsub.s32 %v2833, %v2835
  %v2837 = vrot.slane %v2823, %v2836
  %v2838 = vcombine.low %v2814, %v2830
  %v2839 = vcombine.high %v2814, %v2830
  %v2841 = vunpack.c.l.s4 1934713408
  %v2842 = vunpack.c.0.s8 %v2841
  %v2843 = vlaneseq
  %v2844 = vshrl.u32 %v2843, 7
  %v2845 = vsub.s32 %v2842, %v2844
  %v2846 = vrot.slane %v2838, %v2845
  %v2848 = vunpack.c.l.s4 1934713408
  %v2849 = vunpack.c.0.s8 %v2848
  %v2850 = vlaneseq
  %v2851 = vshrl.u32 %v2850, 7
  %v2852 = vsub.s32 %v2849, %v2851
  %v2853 = vrot.slane %v2839, %v2852
  %v2854 = vcombine.low %v2821, %v2837
  %v2855 = vcombine.high %v2821, %v2837
  %v2857 = vunpack.c.l.s4 1934713408
  %v2858 = vunpack.c.0.s8 %v2857
  %v2859 = vlaneseq
  %v2860 = vshrl.u32 %v2859, 7
  %v2861 = vsub.s32 %v2858, %v2860
  %v2862 = vrot.slane %v2854, %v2861
  %v2864 = vunpack.c.l.s4 1934713408
  %v2865 = vunpack.c.0.s8 %v2864
  %v2866 = vlaneseq
  %v2867 = vshrl.u32 %v2866, 7
  %v2868 = vsub.s32 %v2865, %v2867
  %v2869 = vrot.slane %v2855, %v2868
  %v2870 = vcombine.high %v2846, 0.0
  %v2871 = vcombine.high %v2853, 0.0
  %v2872 = vcombine.high %v2862, 0.0
  %v2873 = vcombine.high %v2869, 0.0
  %v2874 = vcombine.low %v1203, %v1693
  %v2875 = vcombine.high %v1203, %v1693
  %v2877 = vunpack.c.l.s4 1983009808
  %v2878 = vunpack.c.0.s8 %v2877
  %v2879 = vlaneseq
  %v2880 = vshrl.u32 %v2879, 7
  %v2881 = vsub.s32 %v2878, %v2880
  %v2882 = vrot.slane %v2874, %v2881
  %v2884 = vunpack.c.l.s4 1983009808
  %v2885 = vunpack.c.0.s8 %v2884
  %v2886 = vlaneseq
  %v2887 = vshrl.u32 %v2886, 7
  %v2888 = vsub.s32 %v2885, %v2887
  %v2889 = vrot.slane %v2875, %v2888
  %v2890 = vcombine.low %v1597, %v1789
  %v2891 = vcombine.high %v1597, %v1789
  %v2893 = vunpack.c.l.s4 1983009808
  %v2894 = vunpack.c.0.s8 %v2893
  %v2895 = vlaneseq
  %v2896 = vshrl.u32 %v2895, 7
  %v2897 = vsub.s32 %v2894, %v2896
  %v2898 = vrot.slane %v2890, %v2897
  %v2900 = vunpack.c.l.s4 1983009808
  %v2901 = vunpack.c.0.s8 %v2900
  %v2902 = vlaneseq
  %v2903 = vshrl.u32 %v2902, 7
  %v2904 = vsub.s32 %v2901, %v2903
  %v2905 = vrot.slane %v2891, %v2904
  %v2906 = vcombine.low %v2882, %v2898
  %v2907 = vcombine.high %v2882, %v2898
  %v2909 = vunpack.c.l.s4 1934713408
  %v2910 = vunpack.c.0.s8 %v2909
  %v2911 = vlaneseq
  %v2912 = vshrl.u32 %v2911, 7
  %v2913 = vsub.s32 %v2910, %v2912
  %v2914 = vrot.slane %v2906, %v2913
  %v2916 = vunpack.c.l.s4 1934713408
  %v2917 = vunpack.c.0.s8 %v2916
  %v2918 = vlaneseq
  %v2919 = vshrl.u32 %v2918, 7
  %v2920 = vsub.s32 %v2917, %v2919
  %v2921 = vrot.slane %v2907, %v2920
  %v2922 = vcombine.low %v2889, %v2905
  %v2923 = vcombine.high %v2889, %v2905
  %v2925 = vunpack.c.l.s4 1934713408
  %v2926 = vunpack.c.0.s8 %v2925
  %v2927 = vlaneseq
  %v2928 = vshrl.u32 %v2927, 7
  %v2929 = vsub.s32 %v2926, %v2928
  %v2930 = vrot.slane %v2922, %v2929
  %v2932 = vunpack.c.l.s4 1934713408
  %v2933 = vunpack.c.0.s8 %v2932
  %v2934 = vlaneseq
  %v2935 = vshrl.u32 %v2934, 7
  %v2936 = vsub.s32 %v2933, %v2935
  %v2937 = vrot.slane %v2923, %v2936
  %v2938 = vcombine.high %v2914, 0.0
  %v2939 = vcombine.high %v2921, 0.0
  %v2940 = vcombine.high %v2930, 0.0
  %v2941 = vcombine.high %v2937, 0.0
  %v2942 = vcombine.low %v1241, %v1695
  %v2943 = vcombine.high %v1241, %v1695
  %v2945 = vunpack.c.l.s4 1983009808
  %v2946 = vunpack.c.0.s8 %v2945
  %v2947 = vlaneseq
  %v2948 = vshrl.u32 %v2947, 7
  %v2949 = vsub.s32 %v2946, %v2948
  %v2950 = vrot.slane %v2942, %v2949
  %v2952 = vunpack.c.l.s4 1983009808
  %v2953 = vunpack.c.0.s8 %v2952
  %v2954 = vlaneseq
  %v2955 = vshrl.u32 %v2954, 7
  %v2956 = vsub.s32 %v2953, %v2955
  %v2957 = vrot.slane %v2943, %v2956
  %v2958 = vcombine.low %v1599, %v1791
  %v2959 = vcombine.high %v1599, %v1791
  %v2961 = vunpack.c.l.s4 1983009808
  %v2962 = vunpack.c.0.s8 %v2961
  %v2963 = vlaneseq
  %v2964 = vshrl.u32 %v2963, 7
  %v2965 = vsub.s32 %v2962, %v2964
  %v2966 = vrot.slane %v2958, %v2965
  %v2968 = vunpack.c.l.s4 1983009808
  %v2969 = vunpack.c.0.s8 %v2968
  %v2970 = vlaneseq
  %v2971 = vshrl.u32 %v2970, 7
  %v2972 = vsub.s32 %v2969, %v2971
  %v2973 = vrot.slane %v2959, %v2972
  %v2974 = vcombine.low %v2950, %v2966
  %v2975 = vcombine.high %v2950, %v2966
  %v2977 = vunpack.c.l.s4 1934713408
  %v2978 = vunpack.c.0.s8 %v2977
  %v2979 = vlaneseq
  %v2980 = vshrl.u32 %v2979, 7
  %v2981 = vsub.s32 %v2978, %v2980
  %v2982 = vrot.slane %v2974, %v2981
  %v2984 = vunpack.c.l.s4 1934713408
  %v2985 = vunpack.c.0.s8 %v2984
  %v2986 = vlaneseq
  %v2987 = vshrl.u32 %v2986, 7
  %v2988 = vsub.s32 %v2985, %v2987
  %v2989 = vrot.slane %v2975, %v2988
  %v2990 = vcombine.low %v2957, %v2973
  %v2991 = vcombine.high %v2957, %v2973
  %v2993 = vunpack.c.l.s4 1934713408
  %v2994 = vunpack.c.0.s8 %v2993
  %v2995 = vlaneseq
  %v2996 = vshrl.u32 %v2995, 7
  %v2997 = vsub.s32 %v2994, %v2996
  %v2998 = vrot.slane %v2990, %v2997
  %v3000 = vunpack.c.l.s4 1934713408
  %v3001 = vunpack.c.0.s8 %v3000
  %v3002 = vlaneseq
  %v3003 = vshrl.u32 %v3002, 7
  %v3004 = vsub.s32 %v3001, %v3003
  %v3005 = vrot.slane %v2991, %v3004
  %v3006 = vcombine.high %v2982, 0.0
  %v3007 = vcombine.high %v2989, 0.0
  %v3008 = vcombine.high %v2998, 0.0
  %v3009 = vcombine.high %v3005, 0.0
  %v3010 = vcombine.low %v1244, %v1697
  %v3011 = vcombine.high %v1244, %v1697
  %v3013 = vunpack.c.l.s4 1983009808
  %v3014 = vunpack.c.0.s8 %v3013
  %v3015 = vlaneseq
  %v3016 = vshrl.u32 %v3015, 7
  %v3017 = vsub.s32 %v3014, %v3016
  %v3018 = vrot.slane %v3010, %v3017
  %v3020 = vunpack.c.l.s4 1983009808
  %v3021 = vunpack.c.0.s8 %v3020
  %v3022 = vlaneseq
  %v3023 = vshrl.u32 %v3022, 7
  %v3024 = vsub.s32 %v3021, %v3023
  %v3025 = vrot.slane %v3011, %v3024
  %v3026 = vcombine.low %v1601, %v1793
  %v3027 = vcombine.high %v1601, %v1793
  %v3029 = vunpack.c.l.s4 1983009808
  %v3030 = vunpack.c.0.s8 %v3029
  %v3031 = vlaneseq
  %v3032 = vshrl.u32 %v3031, 7
  %v3033 = vsub.s32 %v3030, %v3032
  %v3034 = vrot.slane %v3026, %v3033
  %v3036 = vunpack.c.l.s4 1983009808
  %v3037 = vunpack.c.0.s8 %v3036
  %v3038 = vlaneseq
  %v3039 = vshrl.u32 %v3038, 7
  %v3040 = vsub.s32 %v3037, %v3039
  %v3041 = vrot.slane %v3027, %v3040
  %v3042 = vcombine.low %v3018, %v3034
  %v3043 = vcombine.high %v3018, %v3034
  %v3045 = vunpack.c.l.s4 1934713408
  %v3046 = vunpack.c.0.s8 %v3045
  %v3047 = vlaneseq
  %v3048 = vshrl.u32 %v3047, 7
  %v3049 = vsub.s32 %v3046, %v3048
  %v3050 = vrot.slane %v3042, %v3049
  %v3052 = vunpack.c.l.s4 1934713408
  %v3053 = vunpack.c.0.s8 %v3052
  %v3054 = vlaneseq
  %v3055 = vshrl.u32 %v3054, 7
  %v3056 = vsub.s32 %v3053, %v3055
  %v3057 = vrot.slane %v3043, %v3056
  %v3058 = vcombine.low %v3025, %v3041
  %v3059 = vcombine.high %v3025, %v3041
  %v3061 = vunpack.c.l.s4 1934713408
  %v3062 = vunpack.c.0.s8 %v3061
  %v3063 = vlaneseq
  %v3064 = vshrl.u32 %v3063, 7
  %v3065 = vsub.s32 %v3062, %v3064
  %v3066 = vrot.slane %v3058, %v3065
  %v3068 = vunpack.c.l.s4 1934713408
  %v3069 = vunpack.c.0.s8 %v3068
  %v3070 = vlaneseq
  %v3071 = vshrl.u32 %v3070, 7
  %v3072 = vsub.s32 %v3069, %v3071
  %v3073 = vrot.slane %v3059, %v3072
  %v3074 = vcombine.high %v3050, 0.0
  %v3075 = vcombine.high %v3057, 0.0
  %v3076 = vcombine.high %v3066, 0.0
  %v3077 = vcombine.high %v3073, 0.0
  %v3078 = vcombine.low %v1282, %v1699
  %v3079 = vcombine.high %v1282, %v1699
  %v3081 = vunpack.c.l.s4 1983009808
  %v3082 = vunpack.c.0.s8 %v3081
  %v3083 = vlaneseq
  %v3084 = vshrl.u32 %v3083, 7
  %v3085 = vsub.s32 %v3082, %v3084
  %v3086 = vrot.slane %v3078, %v3085
  %v3088 = vunpack.c.l.s4 1983009808
  %v3089 = vunpack.c.0.s8 %v3088
  %v3090 = vlaneseq
  %v3091 = vshrl.u32 %v3090, 7
  %v3092 = vsub.s32 %v3089, %v3091
  %v3093 = vrot.slane %v3079, %v3092
  %v3094 = vcombine.low %v1603, %v1795
  %v3095 = vcombine.high %v1603, %v1795
  %v3097 = vunpack.c.l.s4 1983009808
  %v3098 = vunpack.c.0.s8 %v3097
  %v3099 = vlaneseq
  %v3100 = vshrl.u32 %v3099, 7
  %v3101 = vsub.s32 %v3098, %v3100
  %v3102 = vrot.slane %v3094, %v3101
  %v3104 = vunpack.c.l.s4 1983009808
  %v3105 = vunpack.c.0.s8 %v3104
  %v3106 = vlaneseq
  %v3107 = vshrl.u32 %v3106, 7
  %v3108 = vsub.s32 %v3105, %v3107
  %v3109 = vrot.slane %v3095, %v3108
  %v3110 = vcombine.low %v3086, %v3102
  %v3111 = vcombine.high %v3086, %v3102
  %v3113 = vunpack.c.l.s4 1934713408
  %v3114 = vunpack.c.0.s8 %v3113
  %v3115 = vlaneseq
  %v3116 = vshrl.u32 %v3115, 7
  %v3117 = vsub.s32 %v3114, %v3116
  %v3118 = vrot.slane %v3110, %v3117
  %v3120 = vunpack.c.l.s4 1934713408
  %v3121 = vunpack.c.0.s8 %v3120
  %v3122 = vlaneseq
  %v3123 = vshrl.u32 %v3122, 7
  %v3124 = vsub.s32 %v3121, %v3123
  %v3125 = vrot.slane %v3111, %v3124
  %v3126 = vcombine.low %v3093, %v3109
  %v3127 = vcombine.high %v3093, %v3109
  %v3129 = vunpack.c.l.s4 1934713408
  %v3130 = vunpack.c.0.s8 %v3129
  %v3131 = vlaneseq
  %v3132 = vshrl.u32 %v3131, 7
  %v3133 = vsub.s32 %v3130, %v3132
  %v3134 = vrot.slane %v3126, %v3133
  %v3136 = vunpack.c.l.s4 1934713408
  %v3137 = vunpack.c.0.s8 %v3136
  %v3138 = vlaneseq
  %v3139 = vshrl.u32 %v3138, 7
  %v3140 = vsub.s32 %v3137, %v3139
  %v3141 = vrot.slane %v3127, %v3140
  %v3142 = vcombine.high %v3118, 0.0
  %v3143 = vcombine.high %v3125, 0.0
  %v3144 = vcombine.high %v3134, 0.0
  %v3145 = vcombine.high %v3141, 0.0
  %v3146 = vcombine.low %v1285, %v1701
  %v3147 = vcombine.high %v1285, %v1701
  %v3149 = vunpack.c.l.s4 1983009808
  %v3150 = vunpack.c.0.s8 %v3149
  %v3151 = vlaneseq
  %v3152 = vshrl.u32 %v3151, 7
  %v3153 = vsub.s32 %v3150, %v3152
  %v3154 = vrot.slane %v3146, %v3153
  %v3156 = vunpack.c.l.s4 1983009808
  %v3157 = vunpack.c.0.s8 %v3156
  %v3158 = vlaneseq
  %v3159 = vshrl.u32 %v3158, 7
  %v3160 = vsub.s32 %v3157, %v3159
  %v3161 = vrot.slane %v3147, %v3160
  %v3162 = vcombine.low %v1605, %v1797
  %v3163 = vcombine.high %v1605, %v1797
  %v3165 = vunpack.c.l.s4 1983009808
  %v3166 = vunpack.c.0.s8 %v3165
  %v3167 = vlaneseq
  %v3168 = vshrl.u32 %v3167, 7
  %v3169 = vsub.s32 %v3166, %v3168
  %v3170 = vrot.slane %v3162, %v3169
  %v3172 = vunpack.c.l.s4 1983009808
  %v3173 = vunpack.c.0.s8 %v3172
  %v3174 = vlaneseq
  %v3175 = vshrl.u32 %v3174, 7
  %v3176 = vsub.s32 %v3173, %v3175
  %v3177 = vrot.slane %v3163, %v3176
  %v3178 = vcombine.low %v3154, %v3170
  %v3179 = vcombine.high %v3154, %v3170
  %v3181 = vunpack.c.l.s4 1934713408
  %v3182 = vunpack.c.0.s8 %v3181
  %v3183 = vlaneseq
  %v3184 = vshrl.u32 %v3183, 7
  %v3185 = vsub.s32 %v3182, %v3184
  %v3186 = vrot.slane %v3178, %v3185
  %v3188 = vunpack.c.l.s4 1934713408
  %v3189 = vunpack.c.0.s8 %v3188
  %v3190 = vlaneseq
  %v3191 = vshrl.u32 %v3190, 7
  %v3192 = vsub.s32 %v3189, %v3191
  %v3193 = vrot.slane %v3179, %v3192
  %v3194 = vcombine.low %v3161, %v3177
  %v3195 = vcombine.high %v3161, %v3177
  %v3197 = vunpack.c.l.s4 1934713408
  %v3198 = vunpack.c.0.s8 %v3197
  %v3199 = vlaneseq
  %v3200 = vshrl.u32 %v3199, 7
  %v3201 = vsub.s32 %v3198, %v3200
  %v3202 = vrot.slane %v3194, %v3201
  %v3204 = vunpack.c.l.s4 1934713408
  %v3205 = vunpack.c.0.s8 %v3204
  %v3206 = vlaneseq
  %v3207 = vshrl.u32 %v3206, 7
  %v3208 = vsub.s32 %v3205, %v3207
  %v3209 = vrot.slane %v3195, %v3208
  %v3210 = vcombine.high %v3186, 0.0
  %v3211 = vcombine.high %v3193, 0.0
  %v3212 = vcombine.high %v3202, 0.0
  %v3213 = vcombine.high %v3209, 0.0
  %v3214 = vcombine.low %v1323, %v1703
  %v3215 = vcombine.high %v1323, %v1703
  %v3217 = vunpack.c.l.s4 1983009808
  %v3218 = vunpack.c.0.s8 %v3217
  %v3219 = vlaneseq
  %v3220 = vshrl.u32 %v3219, 7
  %v3221 = vsub.s32 %v3218, %v3220
  %v3222 = vrot.slane %v3214, %v3221
  %v3224 = vunpack.c.l.s4 1983009808
  %v3225 = vunpack.c.0.s8 %v3224
  %v3226 = vlaneseq
  %v3227 = vshrl.u32 %v3226, 7
  %v3228 = vsub.s32 %v3225, %v3227
  %v3229 = vrot.slane %v3215, %v3228
  %v3230 = vcombine.low %v1607, %v1799
  %v3231 = vcombine.high %v1607, %v1799
  %v3233 = vunpack.c.l.s4 1983009808
  %v3234 = vunpack.c.0.s8 %v3233
  %v3235 = vlaneseq
  %v3236 = vshrl.u32 %v3235, 7
  %v3237 = vsub.s32 %v3234, %v3236
  %v3238 = vrot.slane %v3230, %v3237
  %v3240 = vunpack.c.l.s4 1983009808
  %v3241 = vunpack.c.0.s8 %v3240
  %v3242 = vlaneseq
  %v3243 = vshrl.u32 %v3242, 7
  %v3244 = vsub.s32 %v3241, %v3243
  %v3245 = vrot.slane %v3231, %v3244
  %v3246 = vcombine.low %v3222, %v3238
  %v3247 = vcombine.high %v3222, %v3238
  %v3249 = vunpack.c.l.s4 1934713408
  %v3250 = vunpack.c.0.s8 %v3249
  %v3251 = vlaneseq
  %v3252 = vshrl.u32 %v3251, 7
  %v3253 = vsub.s32 %v3250, %v3252
  %v3254 = vrot.slane %v3246, %v3253
  %v3256 = vunpack.c.l.s4 1934713408
  %v3257 = vunpack.c.0.s8 %v3256
  %v3258 = vlaneseq
  %v3259 = vshrl.u32 %v3258, 7
  %v3260 = vsub.s32 %v3257, %v3259
  %v3261 = vrot.slane %v3247, %v3260
  %v3262 = vcombine.low %v3229, %v3245
  %v3263 = vcombine.high %v3229, %v3245
  %v3265 = vunpack.c.l.s4 1934713408
  %v3266 = vunpack.c.0.s8 %v3265
  %v3267 = vlaneseq
  %v3268 = vshrl.u32 %v3267, 7
  %v3269 = vsub.s32 %v3266, %v3268
  %v3270 = vrot.slane %v3262, %v3269
  %v3272 = vunpack.c.l.s4 1934713408
  %v3273 = vunpack.c.0.s8 %v3272
  %v3274 = vlaneseq
  %v3275 = vshrl.u32 %v3274, 7
  %v3276 = vsub.s32 %v3273, %v3275
  %v3277 = vrot.slane %v3263, %v3276
  %v3278 = vcombine.high %v3254, 0.0
  %v3279 = vcombine.high %v3261, 0.0
  %v3280 = vcombine.high %v3270, 0.0
  %v3281 = vcombine.high %v3277, 0.0
  %v3282 = vcombine.low %v1326, %v1705
  %v3283 = vcombine.high %v1326, %v1705
  %v3285 = vunpack.c.l.s4 1983009808
  %v3286 = vunpack.c.0.s8 %v3285
  %v3287 = vlaneseq
  %v3288 = vshrl.u32 %v3287, 7
  %v3289 = vsub.s32 %v3286, %v3288
  %v3290 = vrot.slane %v3282, %v3289
  %v3292 = vunpack.c.l.s4 1983009808
  %v3293 = vunpack.c.0.s8 %v3292
  %v3294 = vlaneseq
  %v3295 = vshrl.u32 %v3294, 7
  %v3296 = vsub.s32 %v3293, %v3295
  %v3297 = vrot.slane %v3283, %v3296
  %v3298 = vcombine.low %v1609, %v1801
  %v3299 = vcombine.high %v1609, %v1801
  %v3301 = vunpack.c.l.s4 1983009808
  %v3302 = vunpack.c.0.s8 %v3301
  %v3303 = vlaneseq
  %v3304 = vshrl.u32 %v3303, 7
  %v3305 = vsub.s32 %v3302, %v3304
  %v3306 = vrot.slane %v3298, %v3305
  %v3308 = vunpack.c.l.s4 1983009808
  %v3309 = vunpack.c.0.s8 %v3308
  %v3310 = vlaneseq
  %v3311 = vshrl.u32 %v3310, 7
  %v3312 = vsub.s32 %v3309, %v3311
  %v3313 = vrot.slane %v3299, %v3312
  %v3314 = vcombine.low %v3290, %v3306
  %v3315 = vcombine.high %v3290, %v3306
  %v3317 = vunpack.c.l.s4 1934713408
  %v3318 = vunpack.c.0.s8 %v3317
  %v3319 = vlaneseq
  %v3320 = vshrl.u32 %v3319, 7
  %v3321 = vsub.s32 %v3318, %v3320
  %v3322 = vrot.slane %v3314, %v3321
  %v3324 = vunpack.c.l.s4 1934713408
  %v3325 = vunpack.c.0.s8 %v3324
  %v3326 = vlaneseq
  %v3327 = vshrl.u32 %v3326, 7
  %v3328 = vsub.s32 %v3325, %v3327
  %v3329 = vrot.slane %v3315, %v3328
  %v3330 = vcombine.low %v3297, %v3313
  %v3331 = vcombine.high %v3297, %v3313
  %v3333 = vunpack.c.l.s4 1934713408
  %v3334 = vunpack.c.0.s8 %v3333
  %v3335 = vlaneseq
  %v3336 = vshrl.u32 %v3335, 7
  %v3337 = vsub.s32 %v3334, %v3336
  %v3338 = vrot.slane %v3330, %v3337
  %v3340 = vunpack.c.l.s4 1934713408
  %v3341 = vunpack.c.0.s8 %v3340
  %v3342 = vlaneseq
  %v3343 = vshrl.u32 %v3342, 7
  %v3344 = vsub.s32 %v3341, %v3343
  %v3345 = vrot.slane %v3331, %v3344
  %v3346 = vcombine.high %v3322, 0.0
  %v3347 = vcombine.high %v3329, 0.0
  %v3348 = vcombine.high %v3338, 0.0
  %v3349 = vcombine.high %v3345, 0.0
  %v3350 = vcombine.low %v1364, %v1707
  %v3351 = vcombine.high %v1364, %v1707
  %v3353 = vunpack.c.l.s4 1983009808
  %v3354 = vunpack.c.0.s8 %v3353
  %v3355 = vlaneseq
  %v3356 = vshrl.u32 %v3355, 7
  %v3357 = vsub.s32 %v3354, %v3356
  %v3358 = vrot.slane %v3350, %v3357
  %v3360 = vunpack.c.l.s4 1983009808
  %v3361 = vunpack.c.0.s8 %v3360
  %v3362 = vlaneseq
  %v3363 = vshrl.u32 %v3362, 7
  %v3364 = vsub.s32 %v3361, %v3363
  %v3365 = vrot.slane %v3351, %v3364
  %v3366 = vcombine.low %v1611, %v1803
  %v3367 = vcombine.high %v1611, %v1803
  %v3369 = vunpack.c.l.s4 1983009808
  %v3370 = vunpack.c.0.s8 %v3369
  %v3371 = vlaneseq
  %v3372 = vshrl.u32 %v3371, 7
  %v3373 = vsub.s32 %v3370, %v3372
  %v3374 = vrot.slane %v3366, %v3373
  %v3376 = vunpack.c.l.s4 1983009808
  %v3377 = vunpack.c.0.s8 %v3376
  %v3378 = vlaneseq
  %v3379 = vshrl.u32 %v3378, 7
  %v3380 = vsub.s32 %v3377, %v3379
  %v3381 = vrot.slane %v3367, %v3380
  %v3382 = vcombine.low %v3358, %v3374
  %v3383 = vcombine.high %v3358, %v3374
  %v3385 = vunpack.c.l.s4 1934713408
  %v3386 = vunpack.c.0.s8 %v3385
  %v3387 = vlaneseq
  %v3388 = vshrl.u32 %v3387, 7
  %v3389 = vsub.s32 %v3386, %v3388
  %v3390 = vrot.slane %v3382, %v3389
  %v3392 = vunpack.c.l.s4 1934713408
  %v3393 = vunpack.c.0.s8 %v3392
  %v3394 = vlaneseq
  %v3395 = vshrl.u32 %v3394, 7
  %v3396 = vsub.s32 %v3393, %v3395
  %v3397 = vrot.slane %v3383, %v3396
  %v3398 = vcombine.low %v3365, %v3381
  %v3399 = vcombine.high %v3365, %v3381
  %v3401 = vunpack.c.l.s4 1934713408
  %v3402 = vunpack.c.0.s8 %v3401
  %v3403 = vlaneseq
  %v3404 = vshrl.u32 %v3403, 7
  %v3405 = vsub.s32 %v3402, %v3404
  %v3406 = vrot.slane %v3398, %v3405
  %v3408 = vunpack.c.l.s4 1934713408
  %v3409 = vunpack.c.0.s8 %v3408
  %v3410 = vlaneseq
  %v3411 = vshrl.u32 %v3410, 7
  %v3412 = vsub.s32 %v3409, %v3411
  %v3413 = vrot.slane %v3399, %v3412
  %v3414 = vcombine.high %v3390, 0.0
  %v3415 = vcombine.high %v3397, 0.0
  %v3416 = vcombine.high %v3406, 0.0
  %v3417 = vcombine.high %v3413, 0.0
  %v3418 = vcombine.low %v1367, %v1709
  %v3419 = vcombine.high %v1367, %v1709
  %v3421 = vunpack.c.l.s4 1983009808
  %v3422 = vunpack.c.0.s8 %v3421
  %v3423 = vlaneseq
  %v3424 = vshrl.u32 %v3423, 7
  %v3425 = vsub.s32 %v3422, %v3424
  %v3426 = vrot.slane %v3418, %v3425
  %v3428 = vunpack.c.l.s4 1983009808
  %v3429 = vunpack.c.0.s8 %v3428
  %v3430 = vlaneseq
  %v3431 = vshrl.u32 %v3430, 7
  %v3432 = vsub.s32 %v3429, %v3431
  %v3433 = vrot.slane %v3419, %v3432
  %v3434 = vcombine.low %v1613, %v1805
  %v3435 = vcombine.high %v1613, %v1805
  %v3437 = vunpack.c.l.s4 1983009808
  %v3438 = vunpack.c.0.s8 %v3437
  %v3439 = vlaneseq
  %v3440 = vshrl.u32 %v3439, 7
  %v3441 = vsub.s32 %v3438, %v3440
  %v3442 = vrot.slane %v3434, %v3441
  %v3444 = vunpack.c.l.s4 1983009808
  %v3445 = vunpack.c.0.s8 %v3444
  %v3446 = vlaneseq
  %v3447 = vshrl.u32 %v3446, 7
  %v3448 = vsub.s32 %v3445, %v3447
  %v3449 = vrot.slane %v3435, %v3448
  %v3450 = vcombine.low %v3426, %v3442
  %v3451 = vcombine.high %v3426, %v3442
  %v3453 = vunpack.c.l.s4 1934713408
  %v3454 = vunpack.c.0.s8 %v3453
  %v3455 = vlaneseq
  %v3456 = vshrl.u32 %v3455, 7
  %v3457 = vsub.s32 %v3454, %v3456
  %v3458 = vrot.slane %v3450, %v3457
  %v3460 = vunpack.c.l.s4 1934713408
  %v3461 = vunpack.c.0.s8 %v3460
  %v3462 = vlaneseq
  %v3463 = vshrl.u32 %v3462, 7
  %v3464 = vsub.s32 %v3461, %v3463
  %v3465 = vrot.slane %v3451, %v3464
  %v3466 = vcombine.low %v3433, %v3449
  %v3467 = vcombine.high %v3433, %v3449
  %v3469 = vunpack.c.l.s4 1934713408
  %v3470 = vunpack.c.0.s8 %v3469
  %v3471 = vlaneseq
  %v3472 = vshrl.u32 %v3471, 7
  %v3473 = vsub.s32 %v3470, %v3472
  %v3474 = vrot.slane %v3466, %v3473
  %v3476 = vunpack.c.l.s4 1934713408
  %v3477 = vunpack.c.0.s8 %v3476
  %v3478 = vlaneseq
  %v3479 = vshrl.u32 %v3478, 7
  %v3480 = vsub.s32 %v3477, %v3479
  %v3481 = vrot.slane %v3467, %v3480
  %v3482 = vcombine.high %v3458, 0.0
  %v3483 = vcombine.high %v3465, 0.0
  %v3484 = vcombine.high %v3474, 0.0
  %v3485 = vcombine.high %v3481, 0.0
  %v3486 = vcombine.low %v1405, %v1711
  %v3487 = vcombine.high %v1405, %v1711
  %v3489 = vunpack.c.l.s4 1983009808
  %v3490 = vunpack.c.0.s8 %v3489
  %v3491 = vlaneseq
  %v3492 = vshrl.u32 %v3491, 7
  %v3493 = vsub.s32 %v3490, %v3492
  %v3494 = vrot.slane %v3486, %v3493
  %v3496 = vunpack.c.l.s4 1983009808
  %v3497 = vunpack.c.0.s8 %v3496
  %v3498 = vlaneseq
  %v3499 = vshrl.u32 %v3498, 7
  %v3500 = vsub.s32 %v3497, %v3499
  %v3501 = vrot.slane %v3487, %v3500
  %v3502 = vcombine.low %v1615, %v1807
  %v3503 = vcombine.high %v1615, %v1807
  %v3505 = vunpack.c.l.s4 1983009808
  %v3506 = vunpack.c.0.s8 %v3505
  %v3507 = vlaneseq
  %v3508 = vshrl.u32 %v3507, 7
  %v3509 = vsub.s32 %v3506, %v3508
  %v3510 = vrot.slane %v3502, %v3509
  %v3512 = vunpack.c.l.s4 1983009808
  %v3513 = vunpack.c.0.s8 %v3512
  %v3514 = vlaneseq
  %v3515 = vshrl.u32 %v3514, 7
  %v3516 = vsub.s32 %v3513, %v3515
  %v3517 = vrot.slane %v3503, %v3516
  %v3518 = vcombine.low %v3494, %v3510
  %v3519 = vcombine.high %v3494, %v3510
  %v3521 = vunpack.c.l.s4 1934713408
  %v3522 = vunpack.c.0.s8 %v3521
  %v3523 = vlaneseq
  %v3524 = vshrl.u32 %v3523, 7
  %v3525 = vsub.s32 %v3522, %v3524
  %v3526 = vrot.slane %v3518, %v3525
  %v3528 = vunpack.c.l.s4 1934713408
  %v3529 = vunpack.c.0.s8 %v3528
  %v3530 = vlaneseq
  %v3531 = vshrl.u32 %v3530, 7
  %v3532 = vsub.s32 %v3529, %v3531
  %v3533 = vrot.slane %v3519, %v3532
  %v3534 = vcombine.low %v3501, %v3517
  %v3535 = vcombine.high %v3501, %v3517
  %v3537 = vunpack.c.l.s4 1934713408
  %v3538 = vunpack.c.0.s8 %v3537
  %v3539 = vlaneseq
  %v3540 = vshrl.u32 %v3539, 7
  %v3541 = vsub.s32 %v3538, %v3540
  %v3542 = vrot.slane %v3534, %v3541
  %v3544 = vunpack.c.l.s4 1934713408
  %v3545 = vunpack.c.0.s8 %v3544
  %v3546 = vlaneseq
  %v3547 = vshrl.u32 %v3546, 7
  %v3548 = vsub.s32 %v3545, %v3547
  %v3549 = vrot.slane %v3535, %v3548
  %v3550 = vcombine.high %v3526, 0.0
  %v3551 = vcombine.high %v3533, 0.0
  %v3552 = vcombine.high %v3542, 0.0
  %v3553 = vcombine.high %v3549, 0.0
  %v3554 = vcombine.low %v1408, %v1713
  %v3555 = vcombine.high %v1408, %v1713
  %v3557 = vunpack.c.l.s4 1983009808
  %v3558 = vunpack.c.0.s8 %v3557
  %v3559 = vlaneseq
  %v3560 = vshrl.u32 %v3559, 7
  %v3561 = vsub.s32 %v3558, %v3560
  %v3562 = vrot.slane %v3554, %v3561
  %v3564 = vunpack.c.l.s4 1983009808
  %v3565 = vunpack.c.0.s8 %v3564
  %v3566 = vlaneseq
  %v3567 = vshrl.u32 %v3566, 7
  %v3568 = vsub.s32 %v3565, %v3567
  %v3569 = vrot.slane %v3555, %v3568
  %v3570 = vcombine.low %v1617, %v1809
  %v3571 = vcombine.high %v1617, %v1809
  %v3573 = vunpack.c.l.s4 1983009808
  %v3574 = vunpack.c.0.s8 %v3573
  %v3575 = vlaneseq
  %v3576 = vshrl.u32 %v3575, 7
  %v3577 = vsub.s32 %v3574, %v3576
  %v3578 = vrot.slane %v3570, %v3577
  %v3580 = vunpack.c.l.s4 1983009808
  %v3581 = vunpack.c.0.s8 %v3580
  %v3582 = vlaneseq
  %v3583 = vshrl.u32 %v3582, 7
  %v3584 = vsub.s32 %v3581, %v3583
  %v3585 = vrot.slane %v3571, %v3584
  %v3586 = vcombine.low %v3562, %v3578
  %v3587 = vcombine.high %v3562, %v3578
  %v3589 = vunpack.c.l.s4 1934713408
  %v3590 = vunpack.c.0.s8 %v3589
  %v3591 = vlaneseq
  %v3592 = vshrl.u32 %v3591, 7
  %v3593 = vsub.s32 %v3590, %v3592
  %v3594 = vrot.slane %v3586, %v3593
  %v3596 = vunpack.c.l.s4 1934713408
  %v3597 = vunpack.c.0.s8 %v3596
  %v3598 = vlaneseq
  %v3599 = vshrl.u32 %v3598, 7
  %v3600 = vsub.s32 %v3597, %v3599
  %v3601 = vrot.slane %v3587, %v3600
  %v3602 = vcombine.low %v3569, %v3585
  %v3603 = vcombine.high %v3569, %v3585
  %v3605 = vunpack.c.l.s4 1934713408
  %v3606 = vunpack.c.0.s8 %v3605
  %v3607 = vlaneseq
  %v3608 = vshrl.u32 %v3607, 7
  %v3609 = vsub.s32 %v3606, %v3608
  %v3610 = vrot.slane %v3602, %v3609
  %v3612 = vunpack.c.l.s4 1934713408
  %v3613 = vunpack.c.0.s8 %v3612
  %v3614 = vlaneseq
  %v3615 = vshrl.u32 %v3614, 7
  %v3616 = vsub.s32 %v3613, %v3615
  %v3617 = vrot.slane %v3603, %v3616
  %v3618 = vcombine.high %v3594, 0.0
  %v3619 = vcombine.high %v3601, 0.0
  %v3620 = vcombine.high %v3610, 0.0
  %v3621 = vcombine.high %v3617, 0.0
  %v3622 = vcombine.low %v1446, %v1715
  %v3623 = vcombine.high %v1446, %v1715
  %v3625 = vunpack.c.l.s4 1983009808
  %v3626 = vunpack.c.0.s8 %v3625
  %v3627 = vlaneseq
  %v3628 = vshrl.u32 %v3627, 7
  %v3629 = vsub.s32 %v3626, %v3628
  %v3630 = vrot.slane %v3622, %v3629
  %v3632 = vunpack.c.l.s4 1983009808
  %v3633 = vunpack.c.0.s8 %v3632
  %v3634 = vlaneseq
  %v3635 = vshrl.u32 %v3634, 7
  %v3636 = vsub.s32 %v3633, %v3635
  %v3637 = vrot.slane %v3623, %v3636
  %v3638 = vcombine.low %v1619, %v1811
  %v3639 = vcombine.high %v1619, %v1811
  %v3641 = vunpack.c.l.s4 1983009808
  %v3642 = vunpack.c.0.s8 %v3641
  %v3643 = vlaneseq
  %v3644 = vshrl.u32 %v3643, 7
  %v3645 = vsub.s32 %v3642, %v3644
  %v3646 = vrot.slane %v3638, %v3645
  %v3648 = vunpack.c.l.s4 1983009808
  %v3649 = vunpack.c.0.s8 %v3648
  %v3650 = vlaneseq
  %v3651 = vshrl.u32 %v3650, 7
  %v3652 = vsub.s32 %v3649, %v3651
  %v3653 = vrot.slane %v3639, %v3652
  %v3654 = vcombine.low %v3630, %v3646
  %v3655 = vcombine.high %v3630, %v3646
  %v3657 = vunpack.c.l.s4 1934713408
  %v3658 = vunpack.c.0.s8 %v3657
  %v3659 = vlaneseq
  %v3660 = vshrl.u32 %v3659, 7
  %v3661 = vsub.s32 %v3658, %v3660
  %v3662 = vrot.slane %v3654, %v3661
  %v3664 = vunpack.c.l.s4 1934713408
  %v3665 = vunpack.c.0.s8 %v3664
  %v3666 = vlaneseq
  %v3667 = vshrl.u32 %v3666, 7
  %v3668 = vsub.s32 %v3665, %v3667
  %v3669 = vrot.slane %v3655, %v3668
  %v3670 = vcombine.low %v3637, %v3653
  %v3671 = vcombine.high %v3637, %v3653
  %v3673 = vunpack.c.l.s4 1934713408
  %v3674 = vunpack.c.0.s8 %v3673
  %v3675 = vlaneseq
  %v3676 = vshrl.u32 %v3675, 7
  %v3677 = vsub.s32 %v3674, %v3676
  %v3678 = vrot.slane %v3670, %v3677
  %v3680 = vunpack.c.l.s4 1934713408
  %v3681 = vunpack.c.0.s8 %v3680
  %v3682 = vlaneseq
  %v3683 = vshrl.u32 %v3682, 7
  %v3684 = vsub.s32 %v3681, %v3683
  %v3685 = vrot.slane %v3671, %v3684
  %v3686 = vcombine.high %v3662, 0.0
  %v3687 = vcombine.high %v3669, 0.0
  %v3688 = vcombine.high %v3678, 0.0
  %v3689 = vcombine.high %v3685, 0.0
  %v3690 = vcombine.low %v1449, %v1717
  %v3691 = vcombine.high %v1449, %v1717
  %v3693 = vunpack.c.l.s4 1983009808
  %v3694 = vunpack.c.0.s8 %v3693
  %v3695 = vlaneseq
  %v3696 = vshrl.u32 %v3695, 7
  %v3697 = vsub.s32 %v3694, %v3696
  %v3698 = vrot.slane %v3690, %v3697
  %v3700 = vunpack.c.l.s4 1983009808
  %v3701 = vunpack.c.0.s8 %v3700
  %v3702 = vlaneseq
  %v3703 = vshrl.u32 %v3702, 7
  %v3704 = vsub.s32 %v3701, %v3703
  %v3705 = vrot.slane %v3691, %v3704
  %v3706 = vcombine.low %v1621, %v1813
  %v3707 = vcombine.high %v1621, %v1813
  %v3709 = vunpack.c.l.s4 1983009808
  %v3710 = vunpack.c.0.s8 %v3709
  %v3711 = vlaneseq
  %v3712 = vshrl.u32 %v3711, 7
  %v3713 = vsub.s32 %v3710, %v3712
  %v3714 = vrot.slane %v3706, %v3713
  %v3716 = vunpack.c.l.s4 1983009808
  %v3717 = vunpack.c.0.s8 %v3716
  %v3718 = vlaneseq
  %v3719 = vshrl.u32 %v3718, 7
  %v3720 = vsub.s32 %v3717, %v3719
  %v3721 = vrot.slane %v3707, %v3720
  %v3722 = vcombine.low %v3698, %v3714
  %v3723 = vcombine.high %v3698, %v3714
  %v3725 = vunpack.c.l.s4 1934713408
  %v3726 = vunpack.c.0.s8 %v3725
  %v3727 = vlaneseq
  %v3728 = vshrl.u32 %v3727, 7
  %v3729 = vsub.s32 %v3726, %v3728
  %v3730 = vrot.slane %v3722, %v3729
  %v3732 = vunpack.c.l.s4 1934713408
  %v3733 = vunpack.c.0.s8 %v3732
  %v3734 = vlaneseq
  %v3735 = vshrl.u32 %v3734, 7
  %v3736 = vsub.s32 %v3733, %v3735
  %v3737 = vrot.slane %v3723, %v3736
  %v3738 = vcombine.low %v3705, %v3721
  %v3739 = vcombine.high %v3705, %v3721
  %v3741 = vunpack.c.l.s4 1934713408
  %v3742 = vunpack.c.0.s8 %v3741
  %v3743 = vlaneseq
  %v3744 = vshrl.u32 %v3743, 7
  %v3745 = vsub.s32 %v3742, %v3744
  %v3746 = vrot.slane %v3738, %v3745
  %v3748 = vunpack.c.l.s4 1934713408
  %v3749 = vunpack.c.0.s8 %v3748
  %v3750 = vlaneseq
  %v3751 = vshrl.u32 %v3750, 7
  %v3752 = vsub.s32 %v3749, %v3751
  %v3753 = vrot.slane %v3739, %v3752
  %v3754 = vcombine.high %v3730, 0.0
  %v3755 = vcombine.high %v3737, 0.0
  %v3756 = vcombine.high %v3746, 0.0
  %v3757 = vcombine.high %v3753, 0.0
  %v3758 = vcombine.low %v1487, %v1719
  %v3759 = vcombine.high %v1487, %v1719
  %v3761 = vunpack.c.l.s4 1983009808
  %v3762 = vunpack.c.0.s8 %v3761
  %v3763 = vlaneseq
  %v3764 = vshrl.u32 %v3763, 7
  %v3765 = vsub.s32 %v3762, %v3764
  %v3766 = vrot.slane %v3758, %v3765
  %v3768 = vunpack.c.l.s4 1983009808
  %v3769 = vunpack.c.0.s8 %v3768
  %v3770 = vlaneseq
  %v3771 = vshrl.u32 %v3770, 7
  %v3772 = vsub.s32 %v3769, %v3771
  %v3773 = vrot.slane %v3759, %v3772
  %v3774 = vcombine.low %v1623, %v1815
  %v3775 = vcombine.high %v1623, %v1815
  %v3777 = vunpack.c.l.s4 1983009808
  %v3778 = vunpack.c.0.s8 %v3777
  %v3779 = vlaneseq
  %v3780 = vshrl.u32 %v3779, 7
  %v3781 = vsub.s32 %v3778, %v3780
  %v3782 = vrot.slane %v3774, %v3781
  %v3784 = vunpack.c.l.s4 1983009808
  %v3785 = vunpack.c.0.s8 %v3784
  %v3786 = vlaneseq
  %v3787 = vshrl.u32 %v3786, 7
  %v3788 = vsub.s32 %v3785, %v3787
  %v3789 = vrot.slane %v3775, %v3788
  %v3790 = vcombine.low %v3766, %v3782
  %v3791 = vcombine.high %v3766, %v3782
  %v3793 = vunpack.c.l.s4 1934713408
  %v3794 = vunpack.c.0.s8 %v3793
  %v3795 = vlaneseq
  %v3796 = vshrl.u32 %v3795, 7
  %v3797 = vsub.s32 %v3794, %v3796
  %v3798 = vrot.slane %v3790, %v3797
  %v3800 = vunpack.c.l.s4 1934713408
  %v3801 = vunpack.c.0.s8 %v3800
  %v3802 = vlaneseq
  %v3803 = vshrl.u32 %v3802, 7
  %v3804 = vsub.s32 %v3801, %v3803
  %v3805 = vrot.slane %v3791, %v3804
  %v3806 = vcombine.low %v3773, %v3789
  %v3807 = vcombine.high %v3773, %v3789
  %v3809 = vunpack.c.l.s4 1934713408
  %v3810 = vunpack.c.0.s8 %v3809
  %v3811 = vlaneseq
  %v3812 = vshrl.u32 %v3811, 7
  %v3813 = vsub.s32 %v3810, %v3812
  %v3814 = vrot.slane %v3806, %v3813
  %v3816 = vunpack.c.l.s4 1934713408
  %v3817 = vunpack.c.0.s8 %v3816
  %v3818 = vlaneseq
  %v3819 = vshrl.u32 %v3818, 7
  %v3820 = vsub.s32 %v3817, %v3819
  %v3821 = vrot.slane %v3807, %v3820
  %v3822 = vcombine.high %v3798, 0.0
  %v3823 = vcombine.high %v3805, 0.0
  %v3824 = vcombine.high %v3814, 0.0
  %v3825 = vcombine.high %v3821, 0.0
  %v3826 = vcombine.low %v1490, %v1721
  %v3827 = vcombine.high %v1490, %v1721
  %v3829 = vunpack.c.l.s4 1983009808
  %v3830 = vunpack.c.0.s8 %v3829
  %v3831 = vlaneseq
  %v3832 = vshrl.u32 %v3831, 7
  %v3833 = vsub.s32 %v3830, %v3832
  %v3834 = vrot.slane %v3826, %v3833
  %v3836 = vunpack.c.l.s4 1983009808
  %v3837 = vunpack.c.0.s8 %v3836
  %v3838 = vlaneseq
  %v3839 = vshrl.u32 %v3838, 7
  %v3840 = vsub.s32 %v3837, %v3839
  %v3841 = vrot.slane %v3827, %v3840
  %v3842 = vcombine.low %v1625, %v1817
  %v3843 = vcombine.high %v1625, %v1817
  %v3845 = vunpack.c.l.s4 1983009808
  %v3846 = vunpack.c.0.s8 %v3845
  %v3847 = vlaneseq
  %v3848 = vshrl.u32 %v3847, 7
  %v3849 = vsub.s32 %v3846, %v3848
  %v3850 = vrot.slane %v3842, %v3849
  %v3852 = vunpack.c.l.s4 1983009808
  %v3853 = vunpack.c.0.s8 %v3852
  %v3854 = vlaneseq
  %v3855 = vshrl.u32 %v3854, 7
  %v3856 = vsub.s32 %v3853, %v3855
  %v3857 = vrot.slane %v3843, %v3856
  %v3858 = vcombine.low %v3834, %v3850
  %v3859 = vcombine.high %v3834, %v3850
  %v3861 = vunpack.c.l.s4 1934713408
  %v3862 = vunpack.c.0.s8 %v3861
  %v3863 = vlaneseq
  %v3864 = vshrl.u32 %v3863, 7
  %v3865 = vsub.s32 %v3862, %v3864
  %v3866 = vrot.slane %v3858, %v3865
  %v3868 = vunpack.c.l.s4 1934713408
  %v3869 = vunpack.c.0.s8 %v3868
  %v3870 = vlaneseq
  %v3871 = vshrl.u32 %v3870, 7
  %v3872 = vsub.s32 %v3869, %v3871
  %v3873 = vrot.slane %v3859, %v3872
  %v3874 = vcombine.low %v3841, %v3857
  %v3875 = vcombine.high %v3841, %v3857
  %v3877 = vunpack.c.l.s4 1934713408
  %v3878 = vunpack.c.0.s8 %v3877
  %v3879 = vlaneseq
  %v3880 = vshrl.u32 %v3879, 7
  %v3881 = vsub.s32 %v3878, %v3880
  %v3882 = vrot.slane %v3874, %v3881
  %v3884 = vunpack.c.l.s4 1934713408
  %v3885 = vunpack.c.0.s8 %v3884
  %v3886 = vlaneseq
  %v3887 = vshrl.u32 %v3886, 7
  %v3888 = vsub.s32 %v3885, %v3887
  %v3889 = vrot.slane %v3875, %v3888
  %v3890 = vcombine.high %v3866, 0.0
  %v3891 = vcombine.high %v3873, 0.0
  %v3892 = vcombine.high %v3882, 0.0
  %v3893 = vcombine.high %v3889, 0.0
  %v3894 = vcombine.low %v1528, %v1723
  %v3895 = vcombine.high %v1528, %v1723
  %v3897 = vunpack.c.l.s4 1983009808
  %v3898 = vunpack.c.0.s8 %v3897
  %v3899 = vlaneseq
  %v3900 = vshrl.u32 %v3899, 7
  %v3901 = vsub.s32 %v3898, %v3900
  %v3902 = vrot.slane %v3894, %v3901
  %v3904 = vunpack.c.l.s4 1983009808
  %v3905 = vunpack.c.0.s8 %v3904
  %v3906 = vlaneseq
  %v3907 = vshrl.u32 %v3906, 7
  %v3908 = vsub.s32 %v3905, %v3907
  %v3909 = vrot.slane %v3895, %v3908
  %v3910 = vcombine.low %v1627, %v1819
  %v3911 = vcombine.high %v1627, %v1819
  %v3913 = vunpack.c.l.s4 1983009808
  %v3914 = vunpack.c.0.s8 %v3913
  %v3915 = vlaneseq
  %v3916 = vshrl.u32 %v3915, 7
  %v3917 = vsub.s32 %v3914, %v3916
  %v3918 = vrot.slane %v3910, %v3917
  %v3920 = vunpack.c.l.s4 1983009808
  %v3921 = vunpack.c.0.s8 %v3920
  %v3922 = vlaneseq
  %v3923 = vshrl.u32 %v3922, 7
  %v3924 = vsub.s32 %v3921, %v3923
  %v3925 = vrot.slane %v3911, %v3924
  %v3926 = vcombine.low %v3902, %v3918
  %v3927 = vcombine.high %v3902, %v3918
  %v3929 = vunpack.c.l.s4 1934713408
  %v3930 = vunpack.c.0.s8 %v3929
  %v3931 = vlaneseq
  %v3932 = vshrl.u32 %v3931, 7
  %v3933 = vsub.s32 %v3930, %v3932
  %v3934 = vrot.slane %v3926, %v3933
  %v3936 = vunpack.c.l.s4 1934713408
  %v3937 = vunpack.c.0.s8 %v3936
  %v3938 = vlaneseq
  %v3939 = vshrl.u32 %v3938, 7
  %v3940 = vsub.s32 %v3937, %v3939
  %v3941 = vrot.slane %v3927, %v3940
  %v3942 = vcombine.low %v3909, %v3925
  %v3943 = vcombine.high %v3909, %v3925
  %v3945 = vunpack.c.l.s4 1934713408
  %v3946 = vunpack.c.0.s8 %v3945
  %v3947 = vlaneseq
  %v3948 = vshrl.u32 %v3947, 7
  %v3949 = vsub.s32 %v3946, %v3948
  %v3950 = vrot.slane %v3942, %v3949
  %v3952 = vunpack.c.l.s4 1934713408
  %v3953 = vunpack.c.0.s8 %v3952
  %v3954 = vlaneseq
  %v3955 = vshrl.u32 %v3954, 7
  %v3956 = vsub.s32 %v3953, %v3955
  %v3957 = vrot.slane %v3943, %v3956
  %v3958 = vcombine.high %v3934, 0.0
  %v3959 = vcombine.high %v3941, 0.0
  %v3960 = vcombine.high %v3950, 0.0
  %v3961 = vcombine.high %v3957, 0.0
  %v3962 = vcombine.low %v1531, %v1725
  %v3963 = vcombine.high %v1531, %v1725
  %v3965 = vunpack.c.l.s4 1983009808
  %v3966 = vunpack.c.0.s8 %v3965
  %v3967 = vlaneseq
  %v3968 = vshrl.u32 %v3967, 7
  %v3969 = vsub.s32 %v3966, %v3968
  %v3970 = vrot.slane %v3962, %v3969
  %v3972 = vunpack.c.l.s4 1983009808
  %v3973 = vunpack.c.0.s8 %v3972
  %v3974 = vlaneseq
  %v3975 = vshrl.u32 %v3974, 7
  %v3976 = vsub.s32 %v3973, %v3975
  %v3977 = vrot.slane %v3963, %v3976
  %v3978 = vcombine.low %v1629, %v1821
  %v3979 = vcombine.high %v1629, %v1821
  %v3981 = vunpack.c.l.s4 1983009808
  %v3982 = vunpack.c.0.s8 %v3981
  %v3983 = vlaneseq
  %v3984 = vshrl.u32 %v3983, 7
  %v3985 = vsub.s32 %v3982, %v3984
  %v3986 = vrot.slane %v3978, %v3985
  %v3988 = vunpack.c.l.s4 1983009808
  %v3989 = vunpack.c.0.s8 %v3988
  %v3990 = vlaneseq
  %v3991 = vshrl.u32 %v3990, 7
  %v3992 = vsub.s32 %v3989, %v3991
  %v3993 = vrot.slane %v3979, %v3992
  %v3994 = vcombine.low %v3970, %v3986
  %v3995 = vcombine.high %v3970, %v3986
  %v3997 = vunpack.c.l.s4 1934713408
  %v3998 = vunpack.c.0.s8 %v3997
  %v3999 = vlaneseq
  %v4000 = vshrl.u32 %v3999, 7
  %v4001 = vsub.s32 %v3998, %v4000
  %v4002 = vrot.slane %v3994, %v4001
  %v4004 = vunpack.c.l.s4 1934713408
  %v4005 = vunpack.c.0.s8 %v4004
  %v4006 = vlaneseq
  %v4007 = vshrl.u32 %v4006, 7
  %v4008 = vsub.s32 %v4005, %v4007
  %v4009 = vrot.slane %v3995, %v4008
  %v4010 = vcombine.low %v3977, %v3993
  %v4011 = vcombine.high %v3977, %v3993
  %v4013 = vunpack.c.l.s4 1934713408
  %v4014 = vunpack.c.0.s8 %v4013
  %v4015 = vlaneseq
  %v4016 = vshrl.u32 %v4015, 7
  %v4017 = vsub.s32 %v4014, %v4016
  %v4018 = vrot.slane %v4010, %v4017
  %v4020 = vunpack.c.l.s4 1934713408
  %v4021 = vunpack.c.0.s8 %v4020
  %v4022 = vlaneseq
  %v4023 = vshrl.u32 %v4022, 7
  %v4024 = vsub.s32 %v4021, %v4023
  %v4025 = vrot.slane %v4011, %v4024
  %v4026 = vcombine.high %v4002, 0.0
  %v4027 = vcombine.high %v4009, 0.0
  %v4028 = vcombine.high %v4018, 0.0
  %v4029 = vcombine.high %v4025, 0.0
  %vm4030 = vcmask 60416
  %v4031 = vsel %vm4030, %v1894, -inf
  %4032 = vmax.xlane.f32.xlu0 %v4031
  %v4033 = vpop.xlane.xlu0 %4032
  %v4034 = vsel %vm4030, %v1918, -inf
  %4035 = vmax.xlane.f32.xlu0 %v4034
  %v4036 = vpop.xlane.xlu0 %4035
  %v4037 = vsel %vm4030, %v1901, -inf
  %4038 = vmax.xlane.f32.xlu0 %v4037
  %v4039 = vpop.xlane.xlu0 %4038
  %v4040 = vsel %vm4030, %v1919, -inf
  %4041 = vmax.xlane.f32.xlu0 %v4040
  %v4042 = vpop.xlane.xlu0 %4041
  %v4043 = vsel %vm4030, %v1910, -inf
  %4044 = vmax.xlane.f32.xlu0 %v4043
  %v4045 = vpop.xlane.xlu0 %4044
  %v4046 = vsel %vm4030, %v1920, -inf
  %4047 = vmax.xlane.f32.xlu0 %v4046
  %v4048 = vpop.xlane.xlu0 %4047
  %v4049 = vsel %vm4030, %v1917, -inf
  %4050 = vmax.xlane.f32.xlu0 %v4049
  %v4051 = vpop.xlane.xlu0 %4050
  %v4052 = vsel %vm4030, %v1921, -inf
  %4053 = vmax.xlane.f32.xlu0 %v4052
  %v4054 = vpop.xlane.xlu0 %4053
  %v4055 = vsel %vm4030, %v1962, -inf
  %4056 = vmax.xlane.f32.xlu0 %v4055
  %v4057 = vpop.xlane.xlu0 %4056
  %v4058 = vsel %vm4030, %v1986, -inf
  %4059 = vmax.xlane.f32.xlu0 %v4058
  %v4060 = vpop.xlane.xlu0 %4059
  %v4061 = vsel %vm4030, %v1969, -inf
  %4062 = vmax.xlane.f32.xlu0 %v4061
  %v4063 = vpop.xlane.xlu0 %4062
  %v4064 = vsel %vm4030, %v1987, -inf
  %4065 = vmax.xlane.f32.xlu0 %v4064
  %v4066 = vpop.xlane.xlu0 %4065
  %v4067 = vsel %vm4030, %v1978, -inf
  %4068 = vmax.xlane.f32.xlu0 %v4067
  %v4069 = vpop.xlane.xlu0 %4068
  %v4070 = vsel %vm4030, %v1988, -inf
  %4071 = vmax.xlane.f32.xlu0 %v4070
  %v4072 = vpop.xlane.xlu0 %4071
  %v4073 = vsel %vm4030, %v1985, -inf
  %4074 = vmax.xlane.f32.xlu0 %v4073
  %v4075 = vpop.xlane.xlu0 %4074
  %v4076 = vsel %vm4030, %v1989, -inf
  %4077 = vmax.xlane.f32.xlu0 %v4076
  %v4078 = vpop.xlane.xlu0 %4077
  %v4079 = vsel %vm4030, %v2030, -inf
  %4080 = vmax.xlane.f32.xlu0 %v4079
  %v4081 = vpop.xlane.xlu0 %4080
  %v4082 = vsel %vm4030, %v2054, -inf
  %4083 = vmax.xlane.f32.xlu0 %v4082
  %v4084 = vpop.xlane.xlu0 %4083
  %v4085 = vsel %vm4030, %v2037, -inf
  %4086 = vmax.xlane.f32.xlu0 %v4085
  %v4087 = vpop.xlane.xlu0 %4086
  %v4088 = vsel %vm4030, %v2055, -inf
  %4089 = vmax.xlane.f32.xlu0 %v4088
  %v4090 = vpop.xlane.xlu0 %4089
  %v4091 = vsel %vm4030, %v2046, -inf
  %4092 = vmax.xlane.f32.xlu0 %v4091
  %v4093 = vpop.xlane.xlu0 %4092
  %v4094 = vsel %vm4030, %v2056, -inf
  %4095 = vmax.xlane.f32.xlu0 %v4094
  %v4096 = vpop.xlane.xlu0 %4095
  %v4097 = vsel %vm4030, %v2053, -inf
  %4098 = vmax.xlane.f32.xlu0 %v4097
  %v4099 = vpop.xlane.xlu0 %4098
  %v4100 = vsel %vm4030, %v2057, -inf
  %4101 = vmax.xlane.f32.xlu0 %v4100
  %v4102 = vpop.xlane.xlu0 %4101
  %v4103 = vsel %vm4030, %v2098, -inf
  %4104 = vmax.xlane.f32.xlu0 %v4103
  %v4105 = vpop.xlane.xlu0 %4104
  %v4106 = vsel %vm4030, %v2122, -inf
  %4107 = vmax.xlane.f32.xlu0 %v4106
  %v4108 = vpop.xlane.xlu0 %4107
  %v4109 = vsel %vm4030, %v2105, -inf
  %4110 = vmax.xlane.f32.xlu0 %v4109
  %v4111 = vpop.xlane.xlu0 %4110
  %v4112 = vsel %vm4030, %v2123, -inf
  %4113 = vmax.xlane.f32.xlu0 %v4112
  %v4114 = vpop.xlane.xlu0 %4113
  %v4115 = vsel %vm4030, %v2114, -inf
  %4116 = vmax.xlane.f32.xlu0 %v4115
  %v4117 = vpop.xlane.xlu0 %4116
  %v4118 = vsel %vm4030, %v2124, -inf
  %4119 = vmax.xlane.f32.xlu0 %v4118
  %v4120 = vpop.xlane.xlu0 %4119
  %v4121 = vsel %vm4030, %v2121, -inf
  %4122 = vmax.xlane.f32.xlu0 %v4121
  %v4123 = vpop.xlane.xlu0 %4122
  %v4124 = vsel %vm4030, %v2125, -inf
  %4125 = vmax.xlane.f32.xlu0 %v4124
  %v4126 = vpop.xlane.xlu0 %4125
  %v4127 = vsel %vm4030, %v2166, -inf
  %4128 = vmax.xlane.f32.xlu0 %v4127
  %v4129 = vpop.xlane.xlu0 %4128
  %v4130 = vsel %vm4030, %v2190, -inf
  %4131 = vmax.xlane.f32.xlu0 %v4130
  %v4132 = vpop.xlane.xlu0 %4131
  %v4133 = vsel %vm4030, %v2173, -inf
  %4134 = vmax.xlane.f32.xlu0 %v4133
  %v4135 = vpop.xlane.xlu0 %4134
  %v4136 = vsel %vm4030, %v2191, -inf
  %4137 = vmax.xlane.f32.xlu0 %v4136
  %v4138 = vpop.xlane.xlu0 %4137
  %v4139 = vsel %vm4030, %v2182, -inf
  %4140 = vmax.xlane.f32.xlu0 %v4139
  %v4141 = vpop.xlane.xlu0 %4140
  %v4142 = vsel %vm4030, %v2192, -inf
  %4143 = vmax.xlane.f32.xlu0 %v4142
  %v4144 = vpop.xlane.xlu0 %4143
  %v4145 = vsel %vm4030, %v2189, -inf
  %4146 = vmax.xlane.f32.xlu0 %v4145
  %v4147 = vpop.xlane.xlu0 %4146
  %v4148 = vsel %vm4030, %v2193, -inf
  %4149 = vmax.xlane.f32.xlu0 %v4148
  %v4150 = vpop.xlane.xlu0 %4149
  %v4151 = vsel %vm4030, %v2234, -inf
  %4152 = vmax.xlane.f32.xlu0 %v4151
  %v4153 = vpop.xlane.xlu0 %4152
  %v4154 = vsel %vm4030, %v2258, -inf
  %4155 = vmax.xlane.f32.xlu0 %v4154
  %v4156 = vpop.xlane.xlu0 %4155
  %v4157 = vsel %vm4030, %v2241, -inf
  %4158 = vmax.xlane.f32.xlu0 %v4157
  %v4159 = vpop.xlane.xlu0 %4158
  %v4160 = vsel %vm4030, %v2259, -inf
  %4161 = vmax.xlane.f32.xlu0 %v4160
  %v4162 = vpop.xlane.xlu0 %4161
  %v4163 = vsel %vm4030, %v2250, -inf
  %4164 = vmax.xlane.f32.xlu0 %v4163
  %v4165 = vpop.xlane.xlu0 %4164
  %v4166 = vsel %vm4030, %v2260, -inf
  %4167 = vmax.xlane.f32.xlu0 %v4166
  %v4168 = vpop.xlane.xlu0 %4167
  %v4169 = vsel %vm4030, %v2257, -inf
  %4170 = vmax.xlane.f32.xlu0 %v4169
  %v4171 = vpop.xlane.xlu0 %4170
  %v4172 = vsel %vm4030, %v2261, -inf
  %4173 = vmax.xlane.f32.xlu0 %v4172
  %v4174 = vpop.xlane.xlu0 %4173
  %v4175 = vsel %vm4030, %v2302, -inf
  %4176 = vmax.xlane.f32.xlu0 %v4175
  %v4177 = vpop.xlane.xlu0 %4176
  %v4178 = vsel %vm4030, %v2326, -inf
  %4179 = vmax.xlane.f32.xlu0 %v4178
  %v4180 = vpop.xlane.xlu0 %4179
  %v4181 = vsel %vm4030, %v2309, -inf
  %4182 = vmax.xlane.f32.xlu0 %v4181
  %v4183 = vpop.xlane.xlu0 %4182
  %v4184 = vsel %vm4030, %v2327, -inf
  %4185 = vmax.xlane.f32.xlu0 %v4184
  %v4186 = vpop.xlane.xlu0 %4185
  %v4187 = vsel %vm4030, %v2318, -inf
  %4188 = vmax.xlane.f32.xlu0 %v4187
  %v4189 = vpop.xlane.xlu0 %4188
  %v4190 = vsel %vm4030, %v2328, -inf
  %4191 = vmax.xlane.f32.xlu0 %v4190
  %v4192 = vpop.xlane.xlu0 %4191
  %v4193 = vsel %vm4030, %v2325, -inf
  %4194 = vmax.xlane.f32.xlu0 %v4193
  %v4195 = vpop.xlane.xlu0 %4194
  %v4196 = vsel %vm4030, %v2329, -inf
  %4197 = vmax.xlane.f32.xlu0 %v4196
  %v4198 = vpop.xlane.xlu0 %4197
  %v4199 = vsel %vm4030, %v2370, -inf
  %4200 = vmax.xlane.f32.xlu0 %v4199
  %v4201 = vpop.xlane.xlu0 %4200
  %v4202 = vsel %vm4030, %v2394, -inf
  %4203 = vmax.xlane.f32.xlu0 %v4202
  %v4204 = vpop.xlane.xlu0 %4203
  %v4205 = vsel %vm4030, %v2377, -inf
  %4206 = vmax.xlane.f32.xlu0 %v4205
  %v4207 = vpop.xlane.xlu0 %4206
  %v4208 = vsel %vm4030, %v2395, -inf
  %4209 = vmax.xlane.f32.xlu0 %v4208
  %v4210 = vpop.xlane.xlu0 %4209
  %v4211 = vsel %vm4030, %v2386, -inf
  %4212 = vmax.xlane.f32.xlu0 %v4211
  %v4213 = vpop.xlane.xlu0 %4212
  %v4214 = vsel %vm4030, %v2396, -inf
  %4215 = vmax.xlane.f32.xlu0 %v4214
  %v4216 = vpop.xlane.xlu0 %4215
  %v4217 = vsel %vm4030, %v2393, -inf
  %4218 = vmax.xlane.f32.xlu0 %v4217
  %v4219 = vpop.xlane.xlu0 %4218
  %v4220 = vsel %vm4030, %v2397, -inf
  %4221 = vmax.xlane.f32.xlu0 %v4220
  %v4222 = vpop.xlane.xlu0 %4221
  %v4223 = vsel %vm4030, %v2438, -inf
  %4224 = vmax.xlane.f32.xlu0 %v4223
  %v4225 = vpop.xlane.xlu0 %4224
  %v4226 = vsel %vm4030, %v2462, -inf
  %4227 = vmax.xlane.f32.xlu0 %v4226
  %v4228 = vpop.xlane.xlu0 %4227
  %v4229 = vsel %vm4030, %v2445, -inf
  %4230 = vmax.xlane.f32.xlu0 %v4229
  %v4231 = vpop.xlane.xlu0 %4230
  %v4232 = vsel %vm4030, %v2463, -inf
  %4233 = vmax.xlane.f32.xlu0 %v4232
  %v4234 = vpop.xlane.xlu0 %4233
  %v4235 = vsel %vm4030, %v2454, -inf
  %4236 = vmax.xlane.f32.xlu0 %v4235
  %v4237 = vpop.xlane.xlu0 %4236
  %v4238 = vsel %vm4030, %v2464, -inf
  %4239 = vmax.xlane.f32.xlu0 %v4238
  %v4240 = vpop.xlane.xlu0 %4239
  %v4241 = vsel %vm4030, %v2461, -inf
  %4242 = vmax.xlane.f32.xlu0 %v4241
  %v4243 = vpop.xlane.xlu0 %4242
  %v4244 = vsel %vm4030, %v2465, -inf
  %4245 = vmax.xlane.f32.xlu0 %v4244
  %v4246 = vpop.xlane.xlu0 %4245
  %v4247 = vsel %vm4030, %v2506, -inf
  %4248 = vmax.xlane.f32.xlu0 %v4247
  %v4249 = vpop.xlane.xlu0 %4248
  %v4250 = vsel %vm4030, %v2530, -inf
  %4251 = vmax.xlane.f32.xlu0 %v4250
  %v4252 = vpop.xlane.xlu0 %4251
  %v4253 = vsel %vm4030, %v2513, -inf
  %4254 = vmax.xlane.f32.xlu0 %v4253
  %v4255 = vpop.xlane.xlu0 %4254
  %v4256 = vsel %vm4030, %v2531, -inf
  %4257 = vmax.xlane.f32.xlu0 %v4256
  %v4258 = vpop.xlane.xlu0 %4257
  %v4259 = vsel %vm4030, %v2522, -inf
  %4260 = vmax.xlane.f32.xlu0 %v4259
  %v4261 = vpop.xlane.xlu0 %4260
  %v4262 = vsel %vm4030, %v2532, -inf
  %4263 = vmax.xlane.f32.xlu0 %v4262
  %v4264 = vpop.xlane.xlu0 %4263
  %v4265 = vsel %vm4030, %v2529, -inf
  %4266 = vmax.xlane.f32.xlu0 %v4265
  %v4267 = vpop.xlane.xlu0 %4266
  %v4268 = vsel %vm4030, %v2533, -inf
  %4269 = vmax.xlane.f32.xlu0 %v4268
  %v4270 = vpop.xlane.xlu0 %4269
  %v4271 = vsel %vm4030, %v2574, -inf
  %4272 = vmax.xlane.f32.xlu0 %v4271
  %v4273 = vpop.xlane.xlu0 %4272
  %v4274 = vsel %vm4030, %v2598, -inf
  %4275 = vmax.xlane.f32.xlu0 %v4274
  %v4276 = vpop.xlane.xlu0 %4275
  %v4277 = vsel %vm4030, %v2581, -inf
  %4278 = vmax.xlane.f32.xlu0 %v4277
  %v4279 = vpop.xlane.xlu0 %4278
  %v4280 = vsel %vm4030, %v2599, -inf
  %4281 = vmax.xlane.f32.xlu0 %v4280
  %v4282 = vpop.xlane.xlu0 %4281
  %v4283 = vsel %vm4030, %v2590, -inf
  %4284 = vmax.xlane.f32.xlu0 %v4283
  %v4285 = vpop.xlane.xlu0 %4284
  %v4286 = vsel %vm4030, %v2600, -inf
  %4287 = vmax.xlane.f32.xlu0 %v4286
  %v4288 = vpop.xlane.xlu0 %4287
  %v4289 = vsel %vm4030, %v2597, -inf
  %4290 = vmax.xlane.f32.xlu0 %v4289
  %v4291 = vpop.xlane.xlu0 %4290
  %v4292 = vsel %vm4030, %v2601, -inf
  %4293 = vmax.xlane.f32.xlu0 %v4292
  %v4294 = vpop.xlane.xlu0 %4293
  %v4295 = vsel %vm4030, %v2642, -inf
  %4296 = vmax.xlane.f32.xlu0 %v4295
  %v4297 = vpop.xlane.xlu0 %4296
  %v4298 = vsel %vm4030, %v2666, -inf
  %4299 = vmax.xlane.f32.xlu0 %v4298
  %v4300 = vpop.xlane.xlu0 %4299
  %v4301 = vsel %vm4030, %v2649, -inf
  %4302 = vmax.xlane.f32.xlu0 %v4301
  %v4303 = vpop.xlane.xlu0 %4302
  %v4304 = vsel %vm4030, %v2667, -inf
  %4305 = vmax.xlane.f32.xlu0 %v4304
  %v4306 = vpop.xlane.xlu0 %4305
  %v4307 = vsel %vm4030, %v2658, -inf
  %4308 = vmax.xlane.f32.xlu0 %v4307
  %v4309 = vpop.xlane.xlu0 %4308
  %v4310 = vsel %vm4030, %v2668, -inf
  %4311 = vmax.xlane.f32.xlu0 %v4310
  %v4312 = vpop.xlane.xlu0 %4311
  %v4313 = vsel %vm4030, %v2665, -inf
  %4314 = vmax.xlane.f32.xlu0 %v4313
  %v4315 = vpop.xlane.xlu0 %4314
  %v4316 = vsel %vm4030, %v2669, -inf
  %4317 = vmax.xlane.f32.xlu0 %v4316
  %v4318 = vpop.xlane.xlu0 %4317
  %v4319 = vsel %vm4030, %v2710, -inf
  %4320 = vmax.xlane.f32.xlu0 %v4319
  %v4321 = vpop.xlane.xlu0 %4320
  %v4322 = vsel %vm4030, %v2734, -inf
  %4323 = vmax.xlane.f32.xlu0 %v4322
  %v4324 = vpop.xlane.xlu0 %4323
  %v4325 = vsel %vm4030, %v2717, -inf
  %4326 = vmax.xlane.f32.xlu0 %v4325
  %v4327 = vpop.xlane.xlu0 %4326
  %v4328 = vsel %vm4030, %v2735, -inf
  %4329 = vmax.xlane.f32.xlu0 %v4328
  %v4330 = vpop.xlane.xlu0 %4329
  %v4331 = vsel %vm4030, %v2726, -inf
  %4332 = vmax.xlane.f32.xlu0 %v4331
  %v4333 = vpop.xlane.xlu0 %4332
  %v4334 = vsel %vm4030, %v2736, -inf
  %4335 = vmax.xlane.f32.xlu0 %v4334
  %v4336 = vpop.xlane.xlu0 %4335
  %v4337 = vsel %vm4030, %v2733, -inf
  %4338 = vmax.xlane.f32.xlu0 %v4337
  %v4339 = vpop.xlane.xlu0 %4338
  %v4340 = vsel %vm4030, %v2737, -inf
  %4341 = vmax.xlane.f32.xlu0 %v4340
  %v4342 = vpop.xlane.xlu0 %4341
  %v4343 = vsel %vm4030, %v2778, -inf
  %4344 = vmax.xlane.f32.xlu0 %v4343
  %v4345 = vpop.xlane.xlu0 %4344
  %v4346 = vsel %vm4030, %v2802, -inf
  %4347 = vmax.xlane.f32.xlu0 %v4346
  %v4348 = vpop.xlane.xlu0 %4347
  %v4349 = vsel %vm4030, %v2785, -inf
  %4350 = vmax.xlane.f32.xlu0 %v4349
  %v4351 = vpop.xlane.xlu0 %4350
  %v4352 = vsel %vm4030, %v2803, -inf
  %4353 = vmax.xlane.f32.xlu0 %v4352
  %v4354 = vpop.xlane.xlu0 %4353
  %v4355 = vsel %vm4030, %v2794, -inf
  %4356 = vmax.xlane.f32.xlu0 %v4355
  %v4357 = vpop.xlane.xlu0 %4356
  %v4358 = vsel %vm4030, %v2804, -inf
  %4359 = vmax.xlane.f32.xlu0 %v4358
  %v4360 = vpop.xlane.xlu0 %4359
  %v4361 = vsel %vm4030, %v2801, -inf
  %4362 = vmax.xlane.f32.xlu0 %v4361
  %v4363 = vpop.xlane.xlu0 %4362
  %v4364 = vsel %vm4030, %v2805, -inf
  %4365 = vmax.xlane.f32.xlu0 %v4364
  %v4366 = vpop.xlane.xlu0 %4365
  %v4367 = vsel %vm4030, %v2846, -inf
  %4368 = vmax.xlane.f32.xlu0 %v4367
  %v4369 = vpop.xlane.xlu0 %4368
  %v4370 = vsel %vm4030, %v2870, -inf
  %4371 = vmax.xlane.f32.xlu0 %v4370
  %v4372 = vpop.xlane.xlu0 %4371
  %v4373 = vsel %vm4030, %v2853, -inf
  %4374 = vmax.xlane.f32.xlu0 %v4373
  %v4375 = vpop.xlane.xlu0 %4374
  %v4376 = vsel %vm4030, %v2871, -inf
  %4377 = vmax.xlane.f32.xlu0 %v4376
  %v4378 = vpop.xlane.xlu0 %4377
  %v4379 = vsel %vm4030, %v2862, -inf
  %4380 = vmax.xlane.f32.xlu0 %v4379
  %v4381 = vpop.xlane.xlu0 %4380
  %v4382 = vsel %vm4030, %v2872, -inf
  %4383 = vmax.xlane.f32.xlu0 %v4382
  %v4384 = vpop.xlane.xlu0 %4383
  %v4385 = vsel %vm4030, %v2869, -inf
  %4386 = vmax.xlane.f32.xlu0 %v4385
  %v4387 = vpop.xlane.xlu0 %4386
  %v4388 = vsel %vm4030, %v2873, -inf
  %4389 = vmax.xlane.f32.xlu0 %v4388
  %v4390 = vpop.xlane.xlu0 %4389
  %v4391 = vsel %vm4030, %v2914, -inf
  %4392 = vmax.xlane.f32.xlu0 %v4391
  %v4393 = vpop.xlane.xlu0 %4392
  %v4394 = vsel %vm4030, %v2938, -inf
  %4395 = vmax.xlane.f32.xlu0 %v4394
  %v4396 = vpop.xlane.xlu0 %4395
  %v4397 = vsel %vm4030, %v2921, -inf
  %4398 = vmax.xlane.f32.xlu0 %v4397
  %v4399 = vpop.xlane.xlu0 %4398
  %v4400 = vsel %vm4030, %v2939, -inf
  %4401 = vmax.xlane.f32.xlu0 %v4400
  %v4402 = vpop.xlane.xlu0 %4401
  %v4403 = vsel %vm4030, %v2930, -inf
  %4404 = vmax.xlane.f32.xlu0 %v4403
  %v4405 = vpop.xlane.xlu0 %4404
  %v4406 = vsel %vm4030, %v2940, -inf
  %4407 = vmax.xlane.f32.xlu0 %v4406
  %v4408 = vpop.xlane.xlu0 %4407
  %v4409 = vsel %vm4030, %v2937, -inf
  %4410 = vmax.xlane.f32.xlu0 %v4409
  %v4411 = vpop.xlane.xlu0 %4410
  %v4412 = vsel %vm4030, %v2941, -inf
  %4413 = vmax.xlane.f32.xlu0 %v4412
  %v4414 = vpop.xlane.xlu0 %4413
  %v4415 = vsel %vm4030, %v2982, -inf
  %4416 = vmax.xlane.f32.xlu0 %v4415
  %v4417 = vpop.xlane.xlu0 %4416
  %v4418 = vsel %vm4030, %v3006, -inf
  %4419 = vmax.xlane.f32.xlu0 %v4418
  %v4420 = vpop.xlane.xlu0 %4419
  %v4421 = vsel %vm4030, %v2989, -inf
  %4422 = vmax.xlane.f32.xlu0 %v4421
  %v4423 = vpop.xlane.xlu0 %4422
  %v4424 = vsel %vm4030, %v3007, -inf
  %4425 = vmax.xlane.f32.xlu0 %v4424
  %v4426 = vpop.xlane.xlu0 %4425
  %v4427 = vsel %vm4030, %v2998, -inf
  %4428 = vmax.xlane.f32.xlu0 %v4427
  %v4429 = vpop.xlane.xlu0 %4428
  %v4430 = vsel %vm4030, %v3008, -inf
  %4431 = vmax.xlane.f32.xlu0 %v4430
  %v4432 = vpop.xlane.xlu0 %4431
  %v4433 = vsel %vm4030, %v3005, -inf
  %4434 = vmax.xlane.f32.xlu0 %v4433
  %v4435 = vpop.xlane.xlu0 %4434
  %v4436 = vsel %vm4030, %v3009, -inf
  %4437 = vmax.xlane.f32.xlu0 %v4436
  %v4438 = vpop.xlane.xlu0 %4437
  %v4439 = vsel %vm4030, %v3050, -inf
  %4440 = vmax.xlane.f32.xlu0 %v4439
  %v4441 = vpop.xlane.xlu0 %4440
  %v4442 = vsel %vm4030, %v3074, -inf
  %4443 = vmax.xlane.f32.xlu0 %v4442
  %v4444 = vpop.xlane.xlu0 %4443
  %v4445 = vsel %vm4030, %v3057, -inf
  %4446 = vmax.xlane.f32.xlu0 %v4445
  %v4447 = vpop.xlane.xlu0 %4446
  %v4448 = vsel %vm4030, %v3075, -inf
  %4449 = vmax.xlane.f32.xlu0 %v4448
  %v4450 = vpop.xlane.xlu0 %4449
  %v4451 = vsel %vm4030, %v3066, -inf
  %4452 = vmax.xlane.f32.xlu0 %v4451
  %v4453 = vpop.xlane.xlu0 %4452
  %v4454 = vsel %vm4030, %v3076, -inf
  %4455 = vmax.xlane.f32.xlu0 %v4454
  %v4456 = vpop.xlane.xlu0 %4455
  %v4457 = vsel %vm4030, %v3073, -inf
  %4458 = vmax.xlane.f32.xlu0 %v4457
  %v4459 = vpop.xlane.xlu0 %4458
  %v4460 = vsel %vm4030, %v3077, -inf
  %4461 = vmax.xlane.f32.xlu0 %v4460
  %v4462 = vpop.xlane.xlu0 %4461
  %v4463 = vsel %vm4030, %v3118, -inf
  %4464 = vmax.xlane.f32.xlu0 %v4463
  %v4465 = vpop.xlane.xlu0 %4464
  %v4466 = vsel %vm4030, %v3142, -inf
  %4467 = vmax.xlane.f32.xlu0 %v4466
  %v4468 = vpop.xlane.xlu0 %4467
  %v4469 = vsel %vm4030, %v3125, -inf
  %4470 = vmax.xlane.f32.xlu0 %v4469
  %v4471 = vpop.xlane.xlu0 %4470
  %v4472 = vsel %vm4030, %v3143, -inf
  %4473 = vmax.xlane.f32.xlu0 %v4472
  %v4474 = vpop.xlane.xlu0 %4473
  %v4475 = vsel %vm4030, %v3134, -inf
  %4476 = vmax.xlane.f32.xlu0 %v4475
  %v4477 = vpop.xlane.xlu0 %4476
  %v4478 = vsel %vm4030, %v3144, -inf
  %4479 = vmax.xlane.f32.xlu0 %v4478
  %v4480 = vpop.xlane.xlu0 %4479
  %v4481 = vsel %vm4030, %v3141, -inf
  %4482 = vmax.xlane.f32.xlu0 %v4481
  %v4483 = vpop.xlane.xlu0 %4482
  %v4484 = vsel %vm4030, %v3145, -inf
  %4485 = vmax.xlane.f32.xlu0 %v4484
  %v4486 = vpop.xlane.xlu0 %4485
  %v4487 = vsel %vm4030, %v3186, -inf
  %4488 = vmax.xlane.f32.xlu0 %v4487
  %v4489 = vpop.xlane.xlu0 %4488
  %v4490 = vsel %vm4030, %v3210, -inf
  %4491 = vmax.xlane.f32.xlu0 %v4490
  %v4492 = vpop.xlane.xlu0 %4491
  %v4493 = vsel %vm4030, %v3193, -inf
  %4494 = vmax.xlane.f32.xlu0 %v4493
  %v4495 = vpop.xlane.xlu0 %4494
  %v4496 = vsel %vm4030, %v3211, -inf
  %4497 = vmax.xlane.f32.xlu0 %v4496
  %v4498 = vpop.xlane.xlu0 %4497
  %v4499 = vsel %vm4030, %v3202, -inf
  %4500 = vmax.xlane.f32.xlu0 %v4499
  %v4501 = vpop.xlane.xlu0 %4500
  %v4502 = vsel %vm4030, %v3212, -inf
  %4503 = vmax.xlane.f32.xlu0 %v4502
  %v4504 = vpop.xlane.xlu0 %4503
  %v4505 = vsel %vm4030, %v3209, -inf
  %4506 = vmax.xlane.f32.xlu0 %v4505
  %v4507 = vpop.xlane.xlu0 %4506
  %v4508 = vsel %vm4030, %v3213, -inf
  %4509 = vmax.xlane.f32.xlu0 %v4508
  %v4510 = vpop.xlane.xlu0 %4509
  %v4511 = vsel %vm4030, %v3254, -inf
  %4512 = vmax.xlane.f32.xlu0 %v4511
  %v4513 = vpop.xlane.xlu0 %4512
  %v4514 = vsel %vm4030, %v3278, -inf
  %4515 = vmax.xlane.f32.xlu0 %v4514
  %v4516 = vpop.xlane.xlu0 %4515
  %v4517 = vsel %vm4030, %v3261, -inf
  %4518 = vmax.xlane.f32.xlu0 %v4517
  %v4519 = vpop.xlane.xlu0 %4518
  %v4520 = vsel %vm4030, %v3279, -inf
  %4521 = vmax.xlane.f32.xlu0 %v4520
  %v4522 = vpop.xlane.xlu0 %4521
  %v4523 = vsel %vm4030, %v3270, -inf
  %4524 = vmax.xlane.f32.xlu0 %v4523
  %v4525 = vpop.xlane.xlu0 %4524
  %v4526 = vsel %vm4030, %v3280, -inf
  %4527 = vmax.xlane.f32.xlu0 %v4526
  %v4528 = vpop.xlane.xlu0 %4527
  %v4529 = vsel %vm4030, %v3277, -inf
  %4530 = vmax.xlane.f32.xlu0 %v4529
  %v4531 = vpop.xlane.xlu0 %4530
  %v4532 = vsel %vm4030, %v3281, -inf
  %4533 = vmax.xlane.f32.xlu0 %v4532
  %v4534 = vpop.xlane.xlu0 %4533
  %v4535 = vsel %vm4030, %v3322, -inf
  %4536 = vmax.xlane.f32.xlu0 %v4535
  %v4537 = vpop.xlane.xlu0 %4536
  %v4538 = vsel %vm4030, %v3346, -inf
  %4539 = vmax.xlane.f32.xlu0 %v4538
  %v4540 = vpop.xlane.xlu0 %4539
  %v4541 = vsel %vm4030, %v3329, -inf
  %4542 = vmax.xlane.f32.xlu0 %v4541
  %v4543 = vpop.xlane.xlu0 %4542
  %v4544 = vsel %vm4030, %v3347, -inf
  %4545 = vmax.xlane.f32.xlu0 %v4544
  %v4546 = vpop.xlane.xlu0 %4545
  %v4547 = vsel %vm4030, %v3338, -inf
  %4548 = vmax.xlane.f32.xlu0 %v4547
  %v4549 = vpop.xlane.xlu0 %4548
  %v4550 = vsel %vm4030, %v3348, -inf
  %4551 = vmax.xlane.f32.xlu0 %v4550
  %v4552 = vpop.xlane.xlu0 %4551
  %v4553 = vsel %vm4030, %v3345, -inf
  %4554 = vmax.xlane.f32.xlu0 %v4553
  %v4555 = vpop.xlane.xlu0 %4554
  %v4556 = vsel %vm4030, %v3349, -inf
  %4557 = vmax.xlane.f32.xlu0 %v4556
  %v4558 = vpop.xlane.xlu0 %4557
  %v4559 = vsel %vm4030, %v3390, -inf
  %4560 = vmax.xlane.f32.xlu0 %v4559
  %v4561 = vpop.xlane.xlu0 %4560
  %v4562 = vsel %vm4030, %v3414, -inf
  %4563 = vmax.xlane.f32.xlu0 %v4562
  %v4564 = vpop.xlane.xlu0 %4563
  %v4565 = vsel %vm4030, %v3397, -inf
  %4566 = vmax.xlane.f32.xlu0 %v4565
  %v4567 = vpop.xlane.xlu0 %4566
  %v4568 = vsel %vm4030, %v3415, -inf
  %4569 = vmax.xlane.f32.xlu0 %v4568
  %v4570 = vpop.xlane.xlu0 %4569
  %v4571 = vsel %vm4030, %v3406, -inf
  %4572 = vmax.xlane.f32.xlu0 %v4571
  %v4573 = vpop.xlane.xlu0 %4572
  %v4574 = vsel %vm4030, %v3416, -inf
  %4575 = vmax.xlane.f32.xlu0 %v4574
  %v4576 = vpop.xlane.xlu0 %4575
  %v4577 = vsel %vm4030, %v3413, -inf
  %4578 = vmax.xlane.f32.xlu0 %v4577
  %v4579 = vpop.xlane.xlu0 %4578
  %v4580 = vsel %vm4030, %v3417, -inf
  %4581 = vmax.xlane.f32.xlu0 %v4580
  %v4582 = vpop.xlane.xlu0 %4581
  %v4583 = vsel %vm4030, %v3458, -inf
  %4584 = vmax.xlane.f32.xlu0 %v4583
  %v4585 = vpop.xlane.xlu0 %4584
  %v4586 = vsel %vm4030, %v3482, -inf
  %4587 = vmax.xlane.f32.xlu0 %v4586
  %v4588 = vpop.xlane.xlu0 %4587
  %v4589 = vsel %vm4030, %v3465, -inf
  %4590 = vmax.xlane.f32.xlu0 %v4589
  %v4591 = vpop.xlane.xlu0 %4590
  %v4592 = vsel %vm4030, %v3483, -inf
  %4593 = vmax.xlane.f32.xlu0 %v4592
  %v4594 = vpop.xlane.xlu0 %4593
  %v4595 = vsel %vm4030, %v3474, -inf
  %4596 = vmax.xlane.f32.xlu0 %v4595
  %v4597 = vpop.xlane.xlu0 %4596
  %v4598 = vsel %vm4030, %v3484, -inf
  %4599 = vmax.xlane.f32.xlu0 %v4598
  %v4600 = vpop.xlane.xlu0 %4599
  %v4601 = vsel %vm4030, %v3481, -inf
  %4602 = vmax.xlane.f32.xlu0 %v4601
  %v4603 = vpop.xlane.xlu0 %4602
  %v4604 = vsel %vm4030, %v3485, -inf
  %4605 = vmax.xlane.f32.xlu0 %v4604
  %v4606 = vpop.xlane.xlu0 %4605
  %v4607 = vsel %vm4030, %v3526, -inf
  %4608 = vmax.xlane.f32.xlu0 %v4607
  %v4609 = vpop.xlane.xlu0 %4608
  %v4610 = vsel %vm4030, %v3550, -inf
  %4611 = vmax.xlane.f32.xlu0 %v4610
  %v4612 = vpop.xlane.xlu0 %4611
  %v4613 = vsel %vm4030, %v3533, -inf
  %4614 = vmax.xlane.f32.xlu0 %v4613
  %v4615 = vpop.xlane.xlu0 %4614
  %v4616 = vsel %vm4030, %v3551, -inf
  %4617 = vmax.xlane.f32.xlu0 %v4616
  %v4618 = vpop.xlane.xlu0 %4617
  %v4619 = vsel %vm4030, %v3542, -inf
  %4620 = vmax.xlane.f32.xlu0 %v4619
  %v4621 = vpop.xlane.xlu0 %4620
  %v4622 = vsel %vm4030, %v3552, -inf
  %4623 = vmax.xlane.f32.xlu0 %v4622
  %v4624 = vpop.xlane.xlu0 %4623
  %v4625 = vsel %vm4030, %v3549, -inf
  %4626 = vmax.xlane.f32.xlu0 %v4625
  %v4627 = vpop.xlane.xlu0 %4626
  %v4628 = vsel %vm4030, %v3553, -inf
  %4629 = vmax.xlane.f32.xlu0 %v4628
  %v4630 = vpop.xlane.xlu0 %4629
  %v4631 = vsel %vm4030, %v3594, -inf
  %4632 = vmax.xlane.f32.xlu0 %v4631
  %v4633 = vpop.xlane.xlu0 %4632
  %v4634 = vsel %vm4030, %v3618, -inf
  %4635 = vmax.xlane.f32.xlu0 %v4634
  %v4636 = vpop.xlane.xlu0 %4635
  %v4637 = vsel %vm4030, %v3601, -inf
  %4638 = vmax.xlane.f32.xlu0 %v4637
  %v4639 = vpop.xlane.xlu0 %4638
  %v4640 = vsel %vm4030, %v3619, -inf
  %4641 = vmax.xlane.f32.xlu0 %v4640
  %v4642 = vpop.xlane.xlu0 %4641
  %v4643 = vsel %vm4030, %v3610, -inf
  %4644 = vmax.xlane.f32.xlu0 %v4643
  %v4645 = vpop.xlane.xlu0 %4644
  %v4646 = vsel %vm4030, %v3620, -inf
  %4647 = vmax.xlane.f32.xlu0 %v4646
  %v4648 = vpop.xlane.xlu0 %4647
  %v4649 = vsel %vm4030, %v3617, -inf
  %4650 = vmax.xlane.f32.xlu0 %v4649
  %v4651 = vpop.xlane.xlu0 %4650
  %v4652 = vsel %vm4030, %v3621, -inf
  %4653 = vmax.xlane.f32.xlu0 %v4652
  %v4654 = vpop.xlane.xlu0 %4653
  %v4655 = vsel %vm4030, %v3662, -inf
  %4656 = vmax.xlane.f32.xlu0 %v4655
  %v4657 = vpop.xlane.xlu0 %4656
  %v4658 = vsel %vm4030, %v3686, -inf
  %4659 = vmax.xlane.f32.xlu0 %v4658
  %v4660 = vpop.xlane.xlu0 %4659
  %v4661 = vsel %vm4030, %v3669, -inf
  %4662 = vmax.xlane.f32.xlu0 %v4661
  %v4663 = vpop.xlane.xlu0 %4662
  %v4664 = vsel %vm4030, %v3687, -inf
  %4665 = vmax.xlane.f32.xlu0 %v4664
  %v4666 = vpop.xlane.xlu0 %4665
  %v4667 = vsel %vm4030, %v3678, -inf
  %4668 = vmax.xlane.f32.xlu0 %v4667
  %v4669 = vpop.xlane.xlu0 %4668
  %v4670 = vsel %vm4030, %v3688, -inf
  %4671 = vmax.xlane.f32.xlu0 %v4670
  %v4672 = vpop.xlane.xlu0 %4671
  %v4673 = vsel %vm4030, %v3685, -inf
  %4674 = vmax.xlane.f32.xlu0 %v4673
  %v4675 = vpop.xlane.xlu0 %4674
  %v4676 = vsel %vm4030, %v3689, -inf
  %4677 = vmax.xlane.f32.xlu0 %v4676
  %v4678 = vpop.xlane.xlu0 %4677
  %v4679 = vsel %vm4030, %v3730, -inf
  %4680 = vmax.xlane.f32.xlu0 %v4679
  %v4681 = vpop.xlane.xlu0 %4680
  %v4682 = vsel %vm4030, %v3754, -inf
  %4683 = vmax.xlane.f32.xlu0 %v4682
  %v4684 = vpop.xlane.xlu0 %4683
  %v4685 = vsel %vm4030, %v3737, -inf
  %4686 = vmax.xlane.f32.xlu0 %v4685
  %v4687 = vpop.xlane.xlu0 %4686
  %v4688 = vsel %vm4030, %v3755, -inf
  %4689 = vmax.xlane.f32.xlu0 %v4688
  %v4690 = vpop.xlane.xlu0 %4689
  %v4691 = vsel %vm4030, %v3746, -inf
  %4692 = vmax.xlane.f32.xlu0 %v4691
  %v4693 = vpop.xlane.xlu0 %4692
  %v4694 = vsel %vm4030, %v3756, -inf
  %4695 = vmax.xlane.f32.xlu0 %v4694
  %v4696 = vpop.xlane.xlu0 %4695
  %v4697 = vsel %vm4030, %v3753, -inf
  %4698 = vmax.xlane.f32.xlu0 %v4697
  %v4699 = vpop.xlane.xlu0 %4698
  %v4700 = vsel %vm4030, %v3757, -inf
  %4701 = vmax.xlane.f32.xlu0 %v4700
  %v4702 = vpop.xlane.xlu0 %4701
  %v4703 = vsel %vm4030, %v3798, -inf
  %4704 = vmax.xlane.f32.xlu0 %v4703
  %v4705 = vpop.xlane.xlu0 %4704
  %v4706 = vsel %vm4030, %v3822, -inf
  %4707 = vmax.xlane.f32.xlu0 %v4706
  %v4708 = vpop.xlane.xlu0 %4707
  %v4709 = vsel %vm4030, %v3805, -inf
  %4710 = vmax.xlane.f32.xlu0 %v4709
  %v4711 = vpop.xlane.xlu0 %4710
  %v4712 = vsel %vm4030, %v3823, -inf
  %4713 = vmax.xlane.f32.xlu0 %v4712
  %v4714 = vpop.xlane.xlu0 %4713
  %v4715 = vsel %vm4030, %v3814, -inf
  %4716 = vmax.xlane.f32.xlu0 %v4715
  %v4717 = vpop.xlane.xlu0 %4716
  %v4718 = vsel %vm4030, %v3824, -inf
  %4719 = vmax.xlane.f32.xlu0 %v4718
  %v4720 = vpop.xlane.xlu0 %4719
  %v4721 = vsel %vm4030, %v3821, -inf
  %4722 = vmax.xlane.f32.xlu0 %v4721
  %v4723 = vpop.xlane.xlu0 %4722
  %v4724 = vsel %vm4030, %v3825, -inf
  %4725 = vmax.xlane.f32.xlu0 %v4724
  %v4726 = vpop.xlane.xlu0 %4725
  %v4727 = vsel %vm4030, %v3866, -inf
  %4728 = vmax.xlane.f32.xlu0 %v4727
  %v4729 = vpop.xlane.xlu0 %4728
  %v4730 = vsel %vm4030, %v3890, -inf
  %4731 = vmax.xlane.f32.xlu0 %v4730
  %v4732 = vpop.xlane.xlu0 %4731
  %v4733 = vsel %vm4030, %v3873, -inf
  %4734 = vmax.xlane.f32.xlu0 %v4733
  %v4735 = vpop.xlane.xlu0 %4734
  %v4736 = vsel %vm4030, %v3891, -inf
  %4737 = vmax.xlane.f32.xlu0 %v4736
  %v4738 = vpop.xlane.xlu0 %4737
  %v4739 = vsel %vm4030, %v3882, -inf
  %4740 = vmax.xlane.f32.xlu0 %v4739
  %v4741 = vpop.xlane.xlu0 %4740
  %v4742 = vsel %vm4030, %v3892, -inf
  %4743 = vmax.xlane.f32.xlu0 %v4742
  %v4744 = vpop.xlane.xlu0 %4743
  %v4745 = vsel %vm4030, %v3889, -inf
  %4746 = vmax.xlane.f32.xlu0 %v4745
  %v4747 = vpop.xlane.xlu0 %4746
  %v4748 = vsel %vm4030, %v3893, -inf
  %4749 = vmax.xlane.f32.xlu0 %v4748
  %v4750 = vpop.xlane.xlu0 %4749
  %v4751 = vsel %vm4030, %v3934, -inf
  %4752 = vmax.xlane.f32.xlu0 %v4751
  %v4753 = vpop.xlane.xlu0 %4752
  %v4754 = vsel %vm4030, %v3958, -inf
  %4755 = vmax.xlane.f32.xlu0 %v4754
  %v4756 = vpop.xlane.xlu0 %4755
  %v4757 = vsel %vm4030, %v3941, -inf
  %4758 = vmax.xlane.f32.xlu0 %v4757
  %v4759 = vpop.xlane.xlu0 %4758
  %v4760 = vsel %vm4030, %v3959, -inf
  %4761 = vmax.xlane.f32.xlu0 %v4760
  %v4762 = vpop.xlane.xlu0 %4761
  %v4763 = vsel %vm4030, %v3950, -inf
  %4764 = vmax.xlane.f32.xlu0 %v4763
  %v4765 = vpop.xlane.xlu0 %4764
  %v4766 = vsel %vm4030, %v3960, -inf
  %4767 = vmax.xlane.f32.xlu0 %v4766
  %v4768 = vpop.xlane.xlu0 %4767
  %v4769 = vsel %vm4030, %v3957, -inf
  %4770 = vmax.xlane.f32.xlu0 %v4769
  %v4771 = vpop.xlane.xlu0 %4770
  %v4772 = vsel %vm4030, %v3961, -inf
  %4773 = vmax.xlane.f32.xlu0 %v4772
  %v4774 = vpop.xlane.xlu0 %4773
  %v4775 = vsel %vm4030, %v4002, -inf
  %4776 = vmax.xlane.f32.xlu0 %v4775
  %v4777 = vpop.xlane.xlu0 %4776
  %v4778 = vsel %vm4030, %v4026, -inf
  %4779 = vmax.xlane.f32.xlu0 %v4778
  %v4780 = vpop.xlane.xlu0 %4779
  %v4781 = vsel %vm4030, %v4009, -inf
  %4782 = vmax.xlane.f32.xlu0 %v4781
  %v4783 = vpop.xlane.xlu0 %4782
  %v4784 = vsel %vm4030, %v4027, -inf
  %4785 = vmax.xlane.f32.xlu0 %v4784
  %v4786 = vpop.xlane.xlu0 %4785
  %v4787 = vsel %vm4030, %v4018, -inf
  %4788 = vmax.xlane.f32.xlu0 %v4787
  %v4789 = vpop.xlane.xlu0 %4788
  %v4790 = vsel %vm4030, %v4028, -inf
  %4791 = vmax.xlane.f32.xlu0 %v4790
  %v4792 = vpop.xlane.xlu0 %4791
  %v4793 = vsel %vm4030, %v4025, -inf
  %4794 = vmax.xlane.f32.xlu0 %v4793
  %v4795 = vpop.xlane.xlu0 %4794
  %v4796 = vsel %vm4030, %v4029, -inf
  %4797 = vmax.xlane.f32.xlu0 %v4796
  %v4798 = vpop.xlane.xlu0 %4797
  %v4799 = vsub.f32 %v1894, %v4033
  %v4800 = vsub.f32 %v1918, %v4036
  %v4801 = vsub.f32 %v1901, %v4039
  %v4802 = vsub.f32 %v1919, %v4042
  %v4803 = vsub.f32 %v1910, %v4045
  %v4804 = vsub.f32 %v1920, %v4048
  %v4805 = vsub.f32 %v1917, %v4051
  %v4806 = vsub.f32 %v1921, %v4054
  %v4807 = vsub.f32 %v1962, %v4057
  %v4808 = vsub.f32 %v1986, %v4060
  %v4809 = vsub.f32 %v1969, %v4063
  %v4810 = vsub.f32 %v1987, %v4066
  %v4811 = vsub.f32 %v1978, %v4069
  %v4812 = vsub.f32 %v1988, %v4072
  %v4813 = vsub.f32 %v1985, %v4075
  %v4814 = vsub.f32 %v1989, %v4078
  %v4815 = vsub.f32 %v2030, %v4081
  %v4816 = vsub.f32 %v2054, %v4084
  %v4817 = vsub.f32 %v2037, %v4087
  %v4818 = vsub.f32 %v2055, %v4090
  %v4819 = vsub.f32 %v2046, %v4093
  %v4820 = vsub.f32 %v2056, %v4096
  %v4821 = vsub.f32 %v2053, %v4099
  %v4822 = vsub.f32 %v2057, %v4102
  %v4823 = vsub.f32 %v2098, %v4105
  %v4824 = vsub.f32 %v2122, %v4108
  %v4825 = vsub.f32 %v2105, %v4111
  %v4826 = vsub.f32 %v2123, %v4114
  %v4827 = vsub.f32 %v2114, %v4117
  %v4828 = vsub.f32 %v2124, %v4120
  %v4829 = vsub.f32 %v2121, %v4123
  %v4830 = vsub.f32 %v2125, %v4126
  %v4831 = vsub.f32 %v2166, %v4129
  %v4832 = vsub.f32 %v2190, %v4132
  %v4833 = vsub.f32 %v2173, %v4135
  %v4834 = vsub.f32 %v2191, %v4138
  %v4835 = vsub.f32 %v2182, %v4141
  %v4836 = vsub.f32 %v2192, %v4144
  %v4837 = vsub.f32 %v2189, %v4147
  %v4838 = vsub.f32 %v2193, %v4150
  %v4839 = vsub.f32 %v2234, %v4153
  %v4840 = vsub.f32 %v2258, %v4156
  %v4841 = vsub.f32 %v2241, %v4159
  %v4842 = vsub.f32 %v2259, %v4162
  %v4843 = vsub.f32 %v2250, %v4165
  %v4844 = vsub.f32 %v2260, %v4168
  %v4845 = vsub.f32 %v2257, %v4171
  %v4846 = vsub.f32 %v2261, %v4174
  %v4847 = vsub.f32 %v2302, %v4177
  %v4848 = vsub.f32 %v2326, %v4180
  %v4849 = vsub.f32 %v2309, %v4183
  %v4850 = vsub.f32 %v2327, %v4186
  %v4851 = vsub.f32 %v2318, %v4189
  %v4852 = vsub.f32 %v2328, %v4192
  %v4853 = vsub.f32 %v2325, %v4195
  %v4854 = vsub.f32 %v2329, %v4198
  %v4855 = vsub.f32 %v2370, %v4201
  %v4856 = vsub.f32 %v2394, %v4204
  %v4857 = vsub.f32 %v2377, %v4207
  %v4858 = vsub.f32 %v2395, %v4210
  %v4859 = vsub.f32 %v2386, %v4213
  %v4860 = vsub.f32 %v2396, %v4216
  %v4861 = vsub.f32 %v2393, %v4219
  %v4862 = vsub.f32 %v2397, %v4222
  %v4863 = vsub.f32 %v2438, %v4225
  %v4864 = vsub.f32 %v2462, %v4228
  %v4865 = vsub.f32 %v2445, %v4231
  %v4866 = vsub.f32 %v2463, %v4234
  %v4867 = vsub.f32 %v2454, %v4237
  %v4868 = vsub.f32 %v2464, %v4240
  %v4869 = vsub.f32 %v2461, %v4243
  %v4870 = vsub.f32 %v2465, %v4246
  %v4871 = vsub.f32 %v2506, %v4249
  %v4872 = vsub.f32 %v2530, %v4252
  %v4873 = vsub.f32 %v2513, %v4255
  %v4874 = vsub.f32 %v2531, %v4258
  %v4875 = vsub.f32 %v2522, %v4261
  %v4876 = vsub.f32 %v2532, %v4264
  %v4877 = vsub.f32 %v2529, %v4267
  %v4878 = vsub.f32 %v2533, %v4270
  %v4879 = vsub.f32 %v2574, %v4273
  %v4880 = vsub.f32 %v2598, %v4276
  %v4881 = vsub.f32 %v2581, %v4279
  %v4882 = vsub.f32 %v2599, %v4282
  %v4883 = vsub.f32 %v2590, %v4285
  %v4884 = vsub.f32 %v2600, %v4288
  %v4885 = vsub.f32 %v2597, %v4291
  %v4886 = vsub.f32 %v2601, %v4294
  %v4887 = vsub.f32 %v2642, %v4297
  %v4888 = vsub.f32 %v2666, %v4300
  %v4889 = vsub.f32 %v2649, %v4303
  %v4890 = vsub.f32 %v2667, %v4306
  %v4891 = vsub.f32 %v2658, %v4309
  %v4892 = vsub.f32 %v2668, %v4312
  %v4893 = vsub.f32 %v2665, %v4315
  %v4894 = vsub.f32 %v2669, %v4318
  %v4895 = vsub.f32 %v2710, %v4321
  %v4896 = vsub.f32 %v2734, %v4324
  %v4897 = vsub.f32 %v2717, %v4327
  %v4898 = vsub.f32 %v2735, %v4330
  %v4899 = vsub.f32 %v2726, %v4333
  %v4900 = vsub.f32 %v2736, %v4336
  %v4901 = vsub.f32 %v2733, %v4339
  %v4902 = vsub.f32 %v2737, %v4342
  %v4903 = vsub.f32 %v2778, %v4345
  %v4904 = vsub.f32 %v2802, %v4348
  %v4905 = vsub.f32 %v2785, %v4351
  %v4906 = vsub.f32 %v2803, %v4354
  %v4907 = vsub.f32 %v2794, %v4357
  %v4908 = vsub.f32 %v2804, %v4360
  %v4909 = vsub.f32 %v2801, %v4363
  %v4910 = vsub.f32 %v2805, %v4366
  %v4911 = vsub.f32 %v2846, %v4369
  %v4912 = vsub.f32 %v2870, %v4372
  %v4913 = vsub.f32 %v2853, %v4375
  %v4914 = vsub.f32 %v2871, %v4378
  %v4915 = vsub.f32 %v2862, %v4381
  %v4916 = vsub.f32 %v2872, %v4384
  %v4917 = vsub.f32 %v2869, %v4387
  %v4918 = vsub.f32 %v2873, %v4390
  %v4919 = vsub.f32 %v2914, %v4393
  %v4920 = vsub.f32 %v2938, %v4396
  %v4921 = vsub.f32 %v2921, %v4399
  %v4922 = vsub.f32 %v2939, %v4402
  %v4923 = vsub.f32 %v2930, %v4405
  %v4924 = vsub.f32 %v2940, %v4408
  %v4925 = vsub.f32 %v2937, %v4411
  %v4926 = vsub.f32 %v2941, %v4414
  %v4927 = vsub.f32 %v2982, %v4417
  %v4928 = vsub.f32 %v3006, %v4420
  %v4929 = vsub.f32 %v2989, %v4423
  %v4930 = vsub.f32 %v3007, %v4426
  %v4931 = vsub.f32 %v2998, %v4429
  %v4932 = vsub.f32 %v3008, %v4432
  %v4933 = vsub.f32 %v3005, %v4435
  %v4934 = vsub.f32 %v3009, %v4438
  %v4935 = vsub.f32 %v3050, %v4441
  %v4936 = vsub.f32 %v3074, %v4444
  %v4937 = vsub.f32 %v3057, %v4447
  %v4938 = vsub.f32 %v3075, %v4450
  %v4939 = vsub.f32 %v3066, %v4453
  %v4940 = vsub.f32 %v3076, %v4456
  %v4941 = vsub.f32 %v3073, %v4459
  %v4942 = vsub.f32 %v3077, %v4462
  %v4943 = vsub.f32 %v3118, %v4465
  %v4944 = vsub.f32 %v3142, %v4468
  %v4945 = vsub.f32 %v3125, %v4471
  %v4946 = vsub.f32 %v3143, %v4474
  %v4947 = vsub.f32 %v3134, %v4477
  %v4948 = vsub.f32 %v3144, %v4480
  %v4949 = vsub.f32 %v3141, %v4483
  %v4950 = vsub.f32 %v3145, %v4486
  %v4951 = vsub.f32 %v3186, %v4489
  %v4952 = vsub.f32 %v3210, %v4492
  %v4953 = vsub.f32 %v3193, %v4495
  %v4954 = vsub.f32 %v3211, %v4498
  %v4955 = vsub.f32 %v3202, %v4501
  %v4956 = vsub.f32 %v3212, %v4504
  %v4957 = vsub.f32 %v3209, %v4507
  %v4958 = vsub.f32 %v3213, %v4510
  %v4959 = vsub.f32 %v3254, %v4513
  %v4960 = vsub.f32 %v3278, %v4516
  %v4961 = vsub.f32 %v3261, %v4519
  %v4962 = vsub.f32 %v3279, %v4522
  %v4963 = vsub.f32 %v3270, %v4525
  %v4964 = vsub.f32 %v3280, %v4528
  %v4965 = vsub.f32 %v3277, %v4531
  %v4966 = vsub.f32 %v3281, %v4534
  %v4967 = vsub.f32 %v3322, %v4537
  %v4968 = vsub.f32 %v3346, %v4540
  %v4969 = vsub.f32 %v3329, %v4543
  %v4970 = vsub.f32 %v3347, %v4546
  %v4971 = vsub.f32 %v3338, %v4549
  %v4972 = vsub.f32 %v3348, %v4552
  %v4973 = vsub.f32 %v3345, %v4555
  %v4974 = vsub.f32 %v3349, %v4558
  %v4975 = vsub.f32 %v3390, %v4561
  %v4976 = vsub.f32 %v3414, %v4564
  %v4977 = vsub.f32 %v3397, %v4567
  %v4978 = vsub.f32 %v3415, %v4570
  %v4979 = vsub.f32 %v3406, %v4573
  %v4980 = vsub.f32 %v3416, %v4576
  %v4981 = vsub.f32 %v3413, %v4579
  %v4982 = vsub.f32 %v3417, %v4582
  %v4983 = vsub.f32 %v3458, %v4585
  %v4984 = vsub.f32 %v3482, %v4588
  %v4985 = vsub.f32 %v3465, %v4591
  %v4986 = vsub.f32 %v3483, %v4594
  %v4987 = vsub.f32 %v3474, %v4597
  %v4988 = vsub.f32 %v3484, %v4600
  %v4989 = vsub.f32 %v3481, %v4603
  %v4990 = vsub.f32 %v3485, %v4606
  %v4991 = vsub.f32 %v3526, %v4609
  %v4992 = vsub.f32 %v3550, %v4612
  %v4993 = vsub.f32 %v3533, %v4615
  %v4994 = vsub.f32 %v3551, %v4618
  %v4995 = vsub.f32 %v3542, %v4621
  %v4996 = vsub.f32 %v3552, %v4624
  %v4997 = vsub.f32 %v3549, %v4627
  %v4998 = vsub.f32 %v3553, %v4630
  %v4999 = vsub.f32 %v3594, %v4633
  %v5000 = vsub.f32 %v3618, %v4636
  %v5001 = vsub.f32 %v3601, %v4639
  %v5002 = vsub.f32 %v3619, %v4642
  %v5003 = vsub.f32 %v3610, %v4645
  %v5004 = vsub.f32 %v3620, %v4648
  %v5005 = vsub.f32 %v3617, %v4651
  %v5006 = vsub.f32 %v3621, %v4654
  %v5007 = vsub.f32 %v3662, %v4657
  %v5008 = vsub.f32 %v3686, %v4660
  %v5009 = vsub.f32 %v3669, %v4663
  %v5010 = vsub.f32 %v3687, %v4666
  %v5011 = vsub.f32 %v3678, %v4669
  %v5012 = vsub.f32 %v3688, %v4672
  %v5013 = vsub.f32 %v3685, %v4675
  %v5014 = vsub.f32 %v3689, %v4678
  %v5015 = vsub.f32 %v3730, %v4681
  %v5016 = vsub.f32 %v3754, %v4684
  %v5017 = vsub.f32 %v3737, %v4687
  %v5018 = vsub.f32 %v3755, %v4690
  %v5019 = vsub.f32 %v3746, %v4693
  %v5020 = vsub.f32 %v3756, %v4696
  %v5021 = vsub.f32 %v3753, %v4699
  %v5022 = vsub.f32 %v3757, %v4702
  %v5023 = vsub.f32 %v3798, %v4705
  %v5024 = vsub.f32 %v3822, %v4708
  %v5025 = vsub.f32 %v3805, %v4711
  %v5026 = vsub.f32 %v3823, %v4714
  %v5027 = vsub.f32 %v3814, %v4717
  %v5028 = vsub.f32 %v3824, %v4720
  %v5029 = vsub.f32 %v3821, %v4723
  %v5030 = vsub.f32 %v3825, %v4726
  %v5031 = vsub.f32 %v3866, %v4729
  %v5032 = vsub.f32 %v3890, %v4732
  %v5033 = vsub.f32 %v3873, %v4735
  %v5034 = vsub.f32 %v3891, %v4738
  %v5035 = vsub.f32 %v3882, %v4741
  %v5036 = vsub.f32 %v3892, %v4744
  %v5037 = vsub.f32 %v3889, %v4747
  %v5038 = vsub.f32 %v3893, %v4750
  %v5039 = vsub.f32 %v3934, %v4753
  %v5040 = vsub.f32 %v3958, %v4756
  %v5041 = vsub.f32 %v3941, %v4759
  %v5042 = vsub.f32 %v3959, %v4762
  %v5043 = vsub.f32 %v3950, %v4765
  %v5044 = vsub.f32 %v3960, %v4768
  %v5045 = vsub.f32 %v3957, %v4771
  %v5046 = vsub.f32 %v3961, %v4774
  %v5047 = vsub.f32 %v4002, %v4777
  %v5048 = vsub.f32 %v4026, %v4780
  %v5049 = vsub.f32 %v4009, %v4783
  %v5050 = vsub.f32 %v4027, %v4786
  %v5051 = vsub.f32 %v4018, %v4789
  %v5052 = vsub.f32 %v4028, %v4792
  %v5053 = vsub.f32 %v4025, %v4795
  %v5054 = vsub.f32 %v4029, %v4798
  %v5055 = vmul.f32 %v4799, 1.442695
  %v5056 = vpow.pop %v5055
  %v5057 = vmul.f32 %v4800, 1.442695
  %v5058 = vpow.pop %v5057
  %v5059 = vmul.f32 %v4801, 1.442695
  %v5060 = vpow.pop %v5059
  %v5061 = vmul.f32 %v4802, 1.442695
  %v5062 = vpow.pop %v5061
  %v5063 = vmul.f32 %v4803, 1.442695
  %v5064 = vpow.pop %v5063
  %v5065 = vmul.f32 %v4804, 1.442695
  %v5066 = vpow.pop %v5065
  %v5067 = vmul.f32 %v4805, 1.442695
  %v5068 = vpow.pop %v5067
  %v5069 = vmul.f32 %v4806, 1.442695
  %v5070 = vpow.pop %v5069
  %v5071 = vmul.f32 %v4807, 1.442695
  %v5072 = vpow.pop %v5071
  %v5073 = vmul.f32 %v4808, 1.442695
  %v5074 = vpow.pop %v5073
  %v5075 = vmul.f32 %v4809, 1.442695
  %v5076 = vpow.pop %v5075
  %v5077 = vmul.f32 %v4810, 1.442695
  %v5078 = vpow.pop %v5077
  %v5079 = vmul.f32 %v4811, 1.442695
  %v5080 = vpow.pop %v5079
  %v5081 = vmul.f32 %v4812, 1.442695
  %v5082 = vpow.pop %v5081
  %v5083 = vmul.f32 %v4813, 1.442695
  %v5084 = vpow.pop %v5083
  %v5085 = vmul.f32 %v4814, 1.442695
  %v5086 = vpow.pop %v5085
  %v5087 = vmul.f32 %v4815, 1.442695
  %v5088 = vpow.pop %v5087
  %v5089 = vmul.f32 %v4816, 1.442695
  %v5090 = vpow.pop %v5089
  %v5091 = vmul.f32 %v4817, 1.442695
  %v5092 = vpow.pop %v5091
  %v5093 = vmul.f32 %v4818, 1.442695
  %v5094 = vpow.pop %v5093
  %v5095 = vmul.f32 %v4819, 1.442695
  %v5096 = vpow.pop %v5095
  %v5097 = vmul.f32 %v4820, 1.442695
  %v5098 = vpow.pop %v5097
  %v5099 = vmul.f32 %v4821, 1.442695
  %v5100 = vpow.pop %v5099
  %v5101 = vmul.f32 %v4822, 1.442695
  %v5102 = vpow.pop %v5101
  %v5103 = vmul.f32 %v4823, 1.442695
  %v5104 = vpow.pop %v5103
  %v5105 = vmul.f32 %v4824, 1.442695
  %v5106 = vpow.pop %v5105
  %v5107 = vmul.f32 %v4825, 1.442695
  %v5108 = vpow.pop %v5107
  %v5109 = vmul.f32 %v4826, 1.442695
  %v5110 = vpow.pop %v5109
  %v5111 = vmul.f32 %v4827, 1.442695
  %v5112 = vpow.pop %v5111
  %v5113 = vmul.f32 %v4828, 1.442695
  %v5114 = vpow.pop %v5113
  %v5115 = vmul.f32 %v4829, 1.442695
  %v5116 = vpow.pop %v5115
  %v5117 = vmul.f32 %v4830, 1.442695
  %v5118 = vpow.pop %v5117
  %v5119 = vmul.f32 %v4831, 1.442695
  %v5120 = vpow.pop %v5119
  %v5121 = vmul.f32 %v4832, 1.442695
  %v5122 = vpow.pop %v5121
  %v5123 = vmul.f32 %v4833, 1.442695
  %v5124 = vpow.pop %v5123
  %v5125 = vmul.f32 %v4834, 1.442695
  %v5126 = vpow.pop %v5125
  %v5127 = vmul.f32 %v4835, 1.442695
  %v5128 = vpow.pop %v5127
  %v5129 = vmul.f32 %v4836, 1.442695
  %v5130 = vpow.pop %v5129
  %v5131 = vmul.f32 %v4837, 1.442695
  %v5132 = vpow.pop %v5131
  %v5133 = vmul.f32 %v4838, 1.442695
  %v5134 = vpow.pop %v5133
  %v5135 = vmul.f32 %v4839, 1.442695
  %v5136 = vpow.pop %v5135
  %v5137 = vmul.f32 %v4840, 1.442695
  %v5138 = vpow.pop %v5137
  %v5139 = vmul.f32 %v4841, 1.442695
  %v5140 = vpow.pop %v5139
  %v5141 = vmul.f32 %v4842, 1.442695
  %v5142 = vpow.pop %v5141
  %v5143 = vmul.f32 %v4843, 1.442695
  %v5144 = vpow.pop %v5143
  %v5145 = vmul.f32 %v4844, 1.442695
  %v5146 = vpow.pop %v5145
  %v5147 = vmul.f32 %v4845, 1.442695
  %v5148 = vpow.pop %v5147
  %v5149 = vmul.f32 %v4846, 1.442695
  %v5150 = vpow.pop %v5149
  %v5151 = vmul.f32 %v4847, 1.442695
  %v5152 = vpow.pop %v5151
  %v5153 = vmul.f32 %v4848, 1.442695
  %v5154 = vpow.pop %v5153
  %v5155 = vmul.f32 %v4849, 1.442695
  %v5156 = vpow.pop %v5155
  %v5157 = vmul.f32 %v4850, 1.442695
  %v5158 = vpow.pop %v5157
  %v5159 = vmul.f32 %v4851, 1.442695
  %v5160 = vpow.pop %v5159
  %v5161 = vmul.f32 %v4852, 1.442695
  %v5162 = vpow.pop %v5161
  %v5163 = vmul.f32 %v4853, 1.442695
  %v5164 = vpow.pop %v5163
  %v5165 = vmul.f32 %v4854, 1.442695
  %v5166 = vpow.pop %v5165
  %v5167 = vmul.f32 %v4855, 1.442695
  %v5168 = vpow.pop %v5167
  %v5169 = vmul.f32 %v4856, 1.442695
  %v5170 = vpow.pop %v5169
  %v5171 = vmul.f32 %v4857, 1.442695
  %v5172 = vpow.pop %v5171
  %v5173 = vmul.f32 %v4858, 1.442695
  %v5174 = vpow.pop %v5173
  %v5175 = vmul.f32 %v4859, 1.442695
  %v5176 = vpow.pop %v5175
  %v5177 = vmul.f32 %v4860, 1.442695
  %v5178 = vpow.pop %v5177
  %v5179 = vmul.f32 %v4861, 1.442695
  %v5180 = vpow.pop %v5179
  %v5181 = vmul.f32 %v4862, 1.442695
  %v5182 = vpow.pop %v5181
  %v5183 = vmul.f32 %v4863, 1.442695
  %v5184 = vpow.pop %v5183
  %v5185 = vmul.f32 %v4864, 1.442695
  %v5186 = vpow.pop %v5185
  %v5187 = vmul.f32 %v4865, 1.442695
  %v5188 = vpow.pop %v5187
  %v5189 = vmul.f32 %v4866, 1.442695
  %v5190 = vpow.pop %v5189
  %v5191 = vmul.f32 %v4867, 1.442695
  %v5192 = vpow.pop %v5191
  %v5193 = vmul.f32 %v4868, 1.442695
  %v5194 = vpow.pop %v5193
  %v5195 = vmul.f32 %v4869, 1.442695
  %v5196 = vpow.pop %v5195
  %v5197 = vmul.f32 %v4870, 1.442695
  %v5198 = vpow.pop %v5197
  %v5199 = vmul.f32 %v4871, 1.442695
  %v5200 = vpow.pop %v5199
  %v5201 = vmul.f32 %v4872, 1.442695
  %v5202 = vpow.pop %v5201
  %v5203 = vmul.f32 %v4873, 1.442695
  %v5204 = vpow.pop %v5203
  %v5205 = vmul.f32 %v4874, 1.442695
  %v5206 = vpow.pop %v5205
  %v5207 = vmul.f32 %v4875, 1.442695
  %v5208 = vpow.pop %v5207
  %v5209 = vmul.f32 %v4876, 1.442695
  %v5210 = vpow.pop %v5209
  %v5211 = vmul.f32 %v4877, 1.442695
  %v5212 = vpow.pop %v5211
  %v5213 = vmul.f32 %v4878, 1.442695
  %v5214 = vpow.pop %v5213
  %v5215 = vmul.f32 %v4879, 1.442695
  %v5216 = vpow.pop %v5215
  %v5217 = vmul.f32 %v4880, 1.442695
  %v5218 = vpow.pop %v5217
  %v5219 = vmul.f32 %v4881, 1.442695
  %v5220 = vpow.pop %v5219
  %v5221 = vmul.f32 %v4882, 1.442695
  %v5222 = vpow.pop %v5221
  %v5223 = vmul.f32 %v4883, 1.442695
  %v5224 = vpow.pop %v5223
  %v5225 = vmul.f32 %v4884, 1.442695
  %v5226 = vpow.pop %v5225
  %v5227 = vmul.f32 %v4885, 1.442695
  %v5228 = vpow.pop %v5227
  %v5229 = vmul.f32 %v4886, 1.442695
  %v5230 = vpow.pop %v5229
  %v5231 = vmul.f32 %v4887, 1.442695
  %v5232 = vpow.pop %v5231
  %v5233 = vmul.f32 %v4888, 1.442695
  %v5234 = vpow.pop %v5233
  %v5235 = vmul.f32 %v4889, 1.442695
  %v5236 = vpow.pop %v5235
  %v5237 = vmul.f32 %v4890, 1.442695
  %v5238 = vpow.pop %v5237
  %v5239 = vmul.f32 %v4891, 1.442695
  %v5240 = vpow.pop %v5239
  %v5241 = vmul.f32 %v4892, 1.442695
  %v5242 = vpow.pop %v5241
  %v5243 = vmul.f32 %v4893, 1.442695
  %v5244 = vpow.pop %v5243
  %v5245 = vmul.f32 %v4894, 1.442695
  %v5246 = vpow.pop %v5245
  %v5247 = vmul.f32 %v4895, 1.442695
  %v5248 = vpow.pop %v5247
  %v5249 = vmul.f32 %v4896, 1.442695
  %v5250 = vpow.pop %v5249
  %v5251 = vmul.f32 %v4897, 1.442695
  %v5252 = vpow.pop %v5251
  %v5253 = vmul.f32 %v4898, 1.442695
  %v5254 = vpow.pop %v5253
  %v5255 = vmul.f32 %v4899, 1.442695
  %v5256 = vpow.pop %v5255
  %v5257 = vmul.f32 %v4900, 1.442695
  %v5258 = vpow.pop %v5257
  %v5259 = vmul.f32 %v4901, 1.442695
  %v5260 = vpow.pop %v5259
  %v5261 = vmul.f32 %v4902, 1.442695
  %v5262 = vpow.pop %v5261
  %v5263 = vmul.f32 %v4903, 1.442695
  %v5264 = vpow.pop %v5263
  %v5265 = vmul.f32 %v4904, 1.442695
  %v5266 = vpow.pop %v5265
  %v5267 = vmul.f32 %v4905, 1.442695
  %v5268 = vpow.pop %v5267
  %v5269 = vmul.f32 %v4906, 1.442695
  %v5270 = vpow.pop %v5269
  %v5271 = vmul.f32 %v4907, 1.442695
  %v5272 = vpow.pop %v5271
  %v5273 = vmul.f32 %v4908, 1.442695
  %v5274 = vpow.pop %v5273
  %v5275 = vmul.f32 %v4909, 1.442695
  %v5276 = vpow.pop %v5275
  %v5277 = vmul.f32 %v4910, 1.442695
  %v5278 = vpow.pop %v5277
  %v5279 = vmul.f32 %v4911, 1.442695
  %v5280 = vpow.pop %v5279
  %v5281 = vmul.f32 %v4912, 1.442695
  %v5282 = vpow.pop %v5281
  %v5283 = vmul.f32 %v4913, 1.442695
  %v5284 = vpow.pop %v5283
  %v5285 = vmul.f32 %v4914, 1.442695
  %v5286 = vpow.pop %v5285
  %v5287 = vmul.f32 %v4915, 1.442695
  %v5288 = vpow.pop %v5287
  %v5289 = vmul.f32 %v4916, 1.442695
  %v5290 = vpow.pop %v5289
  %v5291 = vmul.f32 %v4917, 1.442695
  %v5292 = vpow.pop %v5291
  %v5293 = vmul.f32 %v4918, 1.442695
  %v5294 = vpow.pop %v5293
  %v5295 = vmul.f32 %v4919, 1.442695
  %v5296 = vpow.pop %v5295
  %v5297 = vmul.f32 %v4920, 1.442695
  %v5298 = vpow.pop %v5297
  %v5299 = vmul.f32 %v4921, 1.442695
  %v5300 = vpow.pop %v5299
  %v5301 = vmul.f32 %v4922, 1.442695
  %v5302 = vpow.pop %v5301
  %v5303 = vmul.f32 %v4923, 1.442695
  %v5304 = vpow.pop %v5303
  %v5305 = vmul.f32 %v4924, 1.442695
  %v5306 = vpow.pop %v5305
  %v5307 = vmul.f32 %v4925, 1.442695
  %v5308 = vpow.pop %v5307
  %v5309 = vmul.f32 %v4926, 1.442695
  %v5310 = vpow.pop %v5309
  %v5311 = vmul.f32 %v4927, 1.442695
  %v5312 = vpow.pop %v5311
  %v5313 = vmul.f32 %v4928, 1.442695
  %v5314 = vpow.pop %v5313
  %v5315 = vmul.f32 %v4929, 1.442695
  %v5316 = vpow.pop %v5315
  %v5317 = vmul.f32 %v4930, 1.442695
  %v5318 = vpow.pop %v5317
  %v5319 = vmul.f32 %v4931, 1.442695
  %v5320 = vpow.pop %v5319
  %v5321 = vmul.f32 %v4932, 1.442695
  %v5322 = vpow.pop %v5321
  %v5323 = vmul.f32 %v4933, 1.442695
  %v5324 = vpow.pop %v5323
  %v5325 = vmul.f32 %v4934, 1.442695
  %v5326 = vpow.pop %v5325
  %v5327 = vmul.f32 %v4935, 1.442695
  %v5328 = vpow.pop %v5327
  %v5329 = vmul.f32 %v4936, 1.442695
  %v5330 = vpow.pop %v5329
  %v5331 = vmul.f32 %v4937, 1.442695
  %v5332 = vpow.pop %v5331
  %v5333 = vmul.f32 %v4938, 1.442695
  %v5334 = vpow.pop %v5333
  %v5335 = vmul.f32 %v4939, 1.442695
  %v5336 = vpow.pop %v5335
  %v5337 = vmul.f32 %v4940, 1.442695
  %v5338 = vpow.pop %v5337
  %v5339 = vmul.f32 %v4941, 1.442695
  %v5340 = vpow.pop %v5339
  %v5341 = vmul.f32 %v4942, 1.442695
  %v5342 = vpow.pop %v5341
  %v5343 = vmul.f32 %v4943, 1.442695
  %v5344 = vpow.pop %v5343
  %v5345 = vmul.f32 %v4944, 1.442695
  %v5346 = vpow.pop %v5345
  %v5347 = vmul.f32 %v4945, 1.442695
  %v5348 = vpow.pop %v5347
  %v5349 = vmul.f32 %v4946, 1.442695
  %v5350 = vpow.pop %v5349
  %v5351 = vmul.f32 %v4947, 1.442695
  %v5352 = vpow.pop %v5351
  %v5353 = vmul.f32 %v4948, 1.442695
  %v5354 = vpow.pop %v5353
  %v5355 = vmul.f32 %v4949, 1.442695
  %v5356 = vpow.pop %v5355
  %v5357 = vmul.f32 %v4950, 1.442695
  %v5358 = vpow.pop %v5357
  %v5359 = vmul.f32 %v4951, 1.442695
  %v5360 = vpow.pop %v5359
  %v5361 = vmul.f32 %v4952, 1.442695
  %v5362 = vpow.pop %v5361
  %v5363 = vmul.f32 %v4953, 1.442695
  %v5364 = vpow.pop %v5363
  %v5365 = vmul.f32 %v4954, 1.442695
  %v5366 = vpow.pop %v5365
  %v5367 = vmul.f32 %v4955, 1.442695
  %v5368 = vpow.pop %v5367
  %v5369 = vmul.f32 %v4956, 1.442695
  %v5370 = vpow.pop %v5369
  %v5371 = vmul.f32 %v4957, 1.442695
  %v5372 = vpow.pop %v5371
  %v5373 = vmul.f32 %v4958, 1.442695
  %v5374 = vpow.pop %v5373
  %v5375 = vmul.f32 %v4959, 1.442695
  %v5376 = vpow.pop %v5375
  %v5377 = vmul.f32 %v4960, 1.442695
  %v5378 = vpow.pop %v5377
  %v5379 = vmul.f32 %v4961, 1.442695
  %v5380 = vpow.pop %v5379
  %v5381 = vmul.f32 %v4962, 1.442695
  %v5382 = vpow.pop %v5381
  %v5383 = vmul.f32 %v4963, 1.442695
  %v5384 = vpow.pop %v5383
  %v5385 = vmul.f32 %v4964, 1.442695
  %v5386 = vpow.pop %v5385
  %v5387 = vmul.f32 %v4965, 1.442695
  %v5388 = vpow.pop %v5387
  %v5389 = vmul.f32 %v4966, 1.442695
  %v5390 = vpow.pop %v5389
  %v5391 = vmul.f32 %v4967, 1.442695
  %v5392 = vpow.pop %v5391
  %v5393 = vmul.f32 %v4968, 1.442695
  %v5394 = vpow.pop %v5393
  %v5395 = vmul.f32 %v4969, 1.442695
  %v5396 = vpow.pop %v5395
  %v5397 = vmul.f32 %v4970, 1.442695
  %v5398 = vpow.pop %v5397
  %v5399 = vmul.f32 %v4971, 1.442695
  %v5400 = vpow.pop %v5399
  %v5401 = vmul.f32 %v4972, 1.442695
  %v5402 = vpow.pop %v5401
  %v5403 = vmul.f32 %v4973, 1.442695
  %v5404 = vpow.pop %v5403
  %v5405 = vmul.f32 %v4974, 1.442695
  %v5406 = vpow.pop %v5405
  %v5407 = vmul.f32 %v4975, 1.442695
  %v5408 = vpow.pop %v5407
  %v5409 = vmul.f32 %v4976, 1.442695
  %v5410 = vpow.pop %v5409
  %v5411 = vmul.f32 %v4977, 1.442695
  %v5412 = vpow.pop %v5411
  %v5413 = vmul.f32 %v4978, 1.442695
  %v5414 = vpow.pop %v5413
  %v5415 = vmul.f32 %v4979, 1.442695
  %v5416 = vpow.pop %v5415
  %v5417 = vmul.f32 %v4980, 1.442695
  %v5418 = vpow.pop %v5417
  %v5419 = vmul.f32 %v4981, 1.442695
  %v5420 = vpow.pop %v5419
  %v5421 = vmul.f32 %v4982, 1.442695
  %v5422 = vpow.pop %v5421
  %v5423 = vmul.f32 %v4983, 1.442695
  %v5424 = vpow.pop %v5423
  %v5425 = vmul.f32 %v4984, 1.442695
  %v5426 = vpow.pop %v5425
  %v5427 = vmul.f32 %v4985, 1.442695
  %v5428 = vpow.pop %v5427
  %v5429 = vmul.f32 %v4986, 1.442695
  %v5430 = vpow.pop %v5429
  %v5431 = vmul.f32 %v4987, 1.442695
  %v5432 = vpow.pop %v5431
  %v5433 = vmul.f32 %v4988, 1.442695
  %v5434 = vpow.pop %v5433
  %v5435 = vmul.f32 %v4989, 1.442695
  %v5436 = vpow.pop %v5435
  %v5437 = vmul.f32 %v4990, 1.442695
  %v5438 = vpow.pop %v5437
  %v5439 = vmul.f32 %v4991, 1.442695
  %v5440 = vpow.pop %v5439
  %v5441 = vmul.f32 %v4992, 1.442695
  %v5442 = vpow.pop %v5441
  %v5443 = vmul.f32 %v4993, 1.442695
  %v5444 = vpow.pop %v5443
  %v5445 = vmul.f32 %v4994, 1.442695
  %v5446 = vpow.pop %v5445
  %v5447 = vmul.f32 %v4995, 1.442695
  %v5448 = vpow.pop %v5447
  %v5449 = vmul.f32 %v4996, 1.442695
  %v5450 = vpow.pop %v5449
  %v5451 = vmul.f32 %v4997, 1.442695
  %v5452 = vpow.pop %v5451
  %v5453 = vmul.f32 %v4998, 1.442695
  %v5454 = vpow.pop %v5453
  %v5455 = vmul.f32 %v4999, 1.442695
  %v5456 = vpow.pop %v5455
  %v5457 = vmul.f32 %v5000, 1.442695
  %v5458 = vpow.pop %v5457
  %v5459 = vmul.f32 %v5001, 1.442695
  %v5460 = vpow.pop %v5459
  %v5461 = vmul.f32 %v5002, 1.442695
  %v5462 = vpow.pop %v5461
  %v5463 = vmul.f32 %v5003, 1.442695
  %v5464 = vpow.pop %v5463
  %v5465 = vmul.f32 %v5004, 1.442695
  %v5466 = vpow.pop %v5465
  %v5467 = vmul.f32 %v5005, 1.442695
  %v5468 = vpow.pop %v5467
  %v5469 = vmul.f32 %v5006, 1.442695
  %v5470 = vpow.pop %v5469
  %v5471 = vmul.f32 %v5007, 1.442695
  %v5472 = vpow.pop %v5471
  %v5473 = vmul.f32 %v5008, 1.442695
  %v5474 = vpow.pop %v5473
  %v5475 = vmul.f32 %v5009, 1.442695
  %v5476 = vpow.pop %v5475
  %v5477 = vmul.f32 %v5010, 1.442695
  %v5478 = vpow.pop %v5477
  %v5479 = vmul.f32 %v5011, 1.442695
  %v5480 = vpow.pop %v5479
  %v5481 = vmul.f32 %v5012, 1.442695
  %v5482 = vpow.pop %v5481
  %v5483 = vmul.f32 %v5013, 1.442695
  %v5484 = vpow.pop %v5483
  %v5485 = vmul.f32 %v5014, 1.442695
  %v5486 = vpow.pop %v5485
  %v5487 = vmul.f32 %v5015, 1.442695
  %v5488 = vpow.pop %v5487
  %v5489 = vmul.f32 %v5016, 1.442695
  %v5490 = vpow.pop %v5489
  %v5491 = vmul.f32 %v5017, 1.442695
  %v5492 = vpow.pop %v5491
  %v5493 = vmul.f32 %v5018, 1.442695
  %v5494 = vpow.pop %v5493
  %v5495 = vmul.f32 %v5019, 1.442695
  %v5496 = vpow.pop %v5495
  %v5497 = vmul.f32 %v5020, 1.442695
  %v5498 = vpow.pop %v5497
  %v5499 = vmul.f32 %v5021, 1.442695
  %v5500 = vpow.pop %v5499
  %v5501 = vmul.f32 %v5022, 1.442695
  %v5502 = vpow.pop %v5501
  %v5503 = vmul.f32 %v5023, 1.442695
  %v5504 = vpow.pop %v5503
  %v5505 = vmul.f32 %v5024, 1.442695
  %v5506 = vpow.pop %v5505
  %v5507 = vmul.f32 %v5025, 1.442695
  %v5508 = vpow.pop %v5507
  %v5509 = vmul.f32 %v5026, 1.442695
  %v5510 = vpow.pop %v5509
  %v5511 = vmul.f32 %v5027, 1.442695
  %v5512 = vpow.pop %v5511
  %v5513 = vmul.f32 %v5028, 1.442695
  %v5514 = vpow.pop %v5513
  %v5515 = vmul.f32 %v5029, 1.442695
  %v5516 = vpow.pop %v5515
  %v5517 = vmul.f32 %v5030, 1.442695
  %v5518 = vpow.pop %v5517
  %v5519 = vmul.f32 %v5031, 1.442695
  %v5520 = vpow.pop %v5519
  %v5521 = vmul.f32 %v5032, 1.442695
  %v5522 = vpow.pop %v5521
  %v5523 = vmul.f32 %v5033, 1.442695
  %v5524 = vpow.pop %v5523
  %v5525 = vmul.f32 %v5034, 1.442695
  %v5526 = vpow.pop %v5525
  %v5527 = vmul.f32 %v5035, 1.442695
  %v5528 = vpow.pop %v5527
  %v5529 = vmul.f32 %v5036, 1.442695
  %v5530 = vpow.pop %v5529
  %v5531 = vmul.f32 %v5037, 1.442695
  %v5532 = vpow.pop %v5531
  %v5533 = vmul.f32 %v5038, 1.442695
  %v5534 = vpow.pop %v5533
  %v5535 = vmul.f32 %v5039, 1.442695
  %v5536 = vpow.pop %v5535
  %v5537 = vmul.f32 %v5040, 1.442695
  %v5538 = vpow.pop %v5537
  %v5539 = vmul.f32 %v5041, 1.442695
  %v5540 = vpow.pop %v5539
  %v5541 = vmul.f32 %v5042, 1.442695
  %v5542 = vpow.pop %v5541
  %v5543 = vmul.f32 %v5043, 1.442695
  %v5544 = vpow.pop %v5543
  %v5545 = vmul.f32 %v5044, 1.442695
  %v5546 = vpow.pop %v5545
  %v5547 = vmul.f32 %v5045, 1.442695
  %v5548 = vpow.pop %v5547
  %v5549 = vmul.f32 %v5046, 1.442695
  %v5550 = vpow.pop %v5549
  %v5551 = vmul.f32 %v5047, 1.442695
  %v5552 = vpow.pop %v5551
  %v5553 = vmul.f32 %v5048, 1.442695
  %v5554 = vpow.pop %v5553
  %v5555 = vmul.f32 %v5049, 1.442695
  %v5556 = vpow.pop %v5555
  %v5557 = vmul.f32 %v5050, 1.442695
  %v5558 = vpow.pop %v5557
  %v5559 = vmul.f32 %v5051, 1.442695
  %v5560 = vpow.pop %v5559
  %v5561 = vmul.f32 %v5052, 1.442695
  %v5562 = vpow.pop %v5561
  %v5563 = vmul.f32 %v5053, 1.442695
  %v5564 = vpow.pop %v5563
  %v5565 = vmul.f32 %v5054, 1.442695
  %v5566 = vpow.pop %v5565
  %v5567 = vsel %vm4030, %v5056, 0.0
  %5568 = vadd.xlane.f32.xlu0 %v5567
  %v5569 = vpop.xlane.xlu0 %5568
  %v5570 = vsel %vm4030, %v5058, 0.0
  %5571 = vadd.xlane.f32.xlu0 %v5570
  %v5572 = vpop.xlane.xlu0 %5571
  %v5573 = vsel %vm4030, %v5060, 0.0
  %5574 = vadd.xlane.f32.xlu0 %v5573
  %v5575 = vpop.xlane.xlu0 %5574
  %v5576 = vsel %vm4030, %v5062, 0.0
  %5577 = vadd.xlane.f32.xlu0 %v5576
  %v5578 = vpop.xlane.xlu0 %5577
  %v5579 = vsel %vm4030, %v5064, 0.0
  %5580 = vadd.xlane.f32.xlu0 %v5579
  %v5581 = vpop.xlane.xlu0 %5580
  %v5582 = vsel %vm4030, %v5066, 0.0
  %5583 = vadd.xlane.f32.xlu0 %v5582
  %v5584 = vpop.xlane.xlu0 %5583
  %v5585 = vsel %vm4030, %v5068, 0.0
  %5586 = vadd.xlane.f32.xlu0 %v5585
  %v5587 = vpop.xlane.xlu0 %5586
  %v5588 = vsel %vm4030, %v5070, 0.0
  %5589 = vadd.xlane.f32.xlu0 %v5588
  %v5590 = vpop.xlane.xlu0 %5589
  %v5591 = vsel %vm4030, %v5072, 0.0
  %5592 = vadd.xlane.f32.xlu0 %v5591
  %v5593 = vpop.xlane.xlu0 %5592
  %v5594 = vsel %vm4030, %v5074, 0.0
  %5595 = vadd.xlane.f32.xlu0 %v5594
  %v5596 = vpop.xlane.xlu0 %5595
  %v5597 = vsel %vm4030, %v5076, 0.0
  %5598 = vadd.xlane.f32.xlu0 %v5597
  %v5599 = vpop.xlane.xlu0 %5598
  %v5600 = vsel %vm4030, %v5078, 0.0
  %5601 = vadd.xlane.f32.xlu0 %v5600
  %v5602 = vpop.xlane.xlu0 %5601
  %v5603 = vsel %vm4030, %v5080, 0.0
  %5604 = vadd.xlane.f32.xlu0 %v5603
  %v5605 = vpop.xlane.xlu0 %5604
  %v5606 = vsel %vm4030, %v5082, 0.0
  %5607 = vadd.xlane.f32.xlu0 %v5606
  %v5608 = vpop.xlane.xlu0 %5607
  %v5609 = vsel %vm4030, %v5084, 0.0
  %5610 = vadd.xlane.f32.xlu0 %v5609
  %v5611 = vpop.xlane.xlu0 %5610
  %v5612 = vsel %vm4030, %v5086, 0.0
  %5613 = vadd.xlane.f32.xlu0 %v5612
  %v5614 = vpop.xlane.xlu0 %5613
  %v5615 = vsel %vm4030, %v5088, 0.0
  %5616 = vadd.xlane.f32.xlu0 %v5615
  %v5617 = vpop.xlane.xlu0 %5616
  %v5618 = vsel %vm4030, %v5090, 0.0
  %5619 = vadd.xlane.f32.xlu0 %v5618
  %v5620 = vpop.xlane.xlu0 %5619
  %v5621 = vsel %vm4030, %v5092, 0.0
  %5622 = vadd.xlane.f32.xlu0 %v5621
  %v5623 = vpop.xlane.xlu0 %5622
  %v5624 = vsel %vm4030, %v5094, 0.0
  %5625 = vadd.xlane.f32.xlu0 %v5624
  %v5626 = vpop.xlane.xlu0 %5625
  %v5627 = vsel %vm4030, %v5096, 0.0
  %5628 = vadd.xlane.f32.xlu0 %v5627
  %v5629 = vpop.xlane.xlu0 %5628
  %v5630 = vsel %vm4030, %v5098, 0.0
  %5631 = vadd.xlane.f32.xlu0 %v5630
  %v5632 = vpop.xlane.xlu0 %5631
  %v5633 = vsel %vm4030, %v5100, 0.0
  %5634 = vadd.xlane.f32.xlu0 %v5633
  %v5635 = vpop.xlane.xlu0 %5634
  %v5636 = vsel %vm4030, %v5102, 0.0
  %5637 = vadd.xlane.f32.xlu0 %v5636
  %v5638 = vpop.xlane.xlu0 %5637
  %v5639 = vsel %vm4030, %v5104, 0.0
  %5640 = vadd.xlane.f32.xlu0 %v5639
  %v5641 = vpop.xlane.xlu0 %5640
  %v5642 = vsel %vm4030, %v5106, 0.0
  %5643 = vadd.xlane.f32.xlu0 %v5642
  %v5644 = vpop.xlane.xlu0 %5643
  %v5645 = vsel %vm4030, %v5108, 0.0
  %5646 = vadd.xlane.f32.xlu0 %v5645
  %v5647 = vpop.xlane.xlu0 %5646
  %v5648 = vsel %vm4030, %v5110, 0.0
  %5649 = vadd.xlane.f32.xlu0 %v5648
  %v5650 = vpop.xlane.xlu0 %5649
  %v5651 = vsel %vm4030, %v5112, 0.0
  %5652 = vadd.xlane.f32.xlu0 %v5651
  %v5653 = vpop.xlane.xlu0 %5652
  %v5654 = vsel %vm4030, %v5114, 0.0
  %5655 = vadd.xlane.f32.xlu0 %v5654
  %v5656 = vpop.xlane.xlu0 %5655
  %v5657 = vsel %vm4030, %v5116, 0.0
  %5658 = vadd.xlane.f32.xlu0 %v5657
  %v5659 = vpop.xlane.xlu0 %5658
  %v5660 = vsel %vm4030, %v5118, 0.0
  %5661 = vadd.xlane.f32.xlu0 %v5660
  %v5662 = vpop.xlane.xlu0 %5661
  %v5663 = vsel %vm4030, %v5120, 0.0
  %5664 = vadd.xlane.f32.xlu0 %v5663
  %v5665 = vpop.xlane.xlu0 %5664
  %v5666 = vsel %vm4030, %v5122, 0.0
  %5667 = vadd.xlane.f32.xlu0 %v5666
  %v5668 = vpop.xlane.xlu0 %5667
  %v5669 = vsel %vm4030, %v5124, 0.0
  %5670 = vadd.xlane.f32.xlu0 %v5669
  %v5671 = vpop.xlane.xlu0 %5670
  %v5672 = vsel %vm4030, %v5126, 0.0
  %5673 = vadd.xlane.f32.xlu0 %v5672
  %v5674 = vpop.xlane.xlu0 %5673
  %v5675 = vsel %vm4030, %v5128, 0.0
  %5676 = vadd.xlane.f32.xlu0 %v5675
  %v5677 = vpop.xlane.xlu0 %5676
  %v5678 = vsel %vm4030, %v5130, 0.0
  %5679 = vadd.xlane.f32.xlu0 %v5678
  %v5680 = vpop.xlane.xlu0 %5679
  %v5681 = vsel %vm4030, %v5132, 0.0
  %5682 = vadd.xlane.f32.xlu0 %v5681
  %v5683 = vpop.xlane.xlu0 %5682
  %v5684 = vsel %vm4030, %v5134, 0.0
  %5685 = vadd.xlane.f32.xlu0 %v5684
  %v5686 = vpop.xlane.xlu0 %5685
  %v5687 = vsel %vm4030, %v5136, 0.0
  %5688 = vadd.xlane.f32.xlu0 %v5687
  %v5689 = vpop.xlane.xlu0 %5688
  %v5690 = vsel %vm4030, %v5138, 0.0
  %5691 = vadd.xlane.f32.xlu0 %v5690
  %v5692 = vpop.xlane.xlu0 %5691
  %v5693 = vsel %vm4030, %v5140, 0.0
  %5694 = vadd.xlane.f32.xlu0 %v5693
  %v5695 = vpop.xlane.xlu0 %5694
  %v5696 = vsel %vm4030, %v5142, 0.0
  %5697 = vadd.xlane.f32.xlu0 %v5696
  %v5698 = vpop.xlane.xlu0 %5697
  %v5699 = vsel %vm4030, %v5144, 0.0
  %5700 = vadd.xlane.f32.xlu0 %v5699
  %v5701 = vpop.xlane.xlu0 %5700
  %v5702 = vsel %vm4030, %v5146, 0.0
  %5703 = vadd.xlane.f32.xlu0 %v5702
  %v5704 = vpop.xlane.xlu0 %5703
  %v5705 = vsel %vm4030, %v5148, 0.0
  %5706 = vadd.xlane.f32.xlu0 %v5705
  %v5707 = vpop.xlane.xlu0 %5706
  %v5708 = vsel %vm4030, %v5150, 0.0
  %5709 = vadd.xlane.f32.xlu0 %v5708
  %v5710 = vpop.xlane.xlu0 %5709
  %v5711 = vsel %vm4030, %v5152, 0.0
  %5712 = vadd.xlane.f32.xlu0 %v5711
  %v5713 = vpop.xlane.xlu0 %5712
  %v5714 = vsel %vm4030, %v5154, 0.0
  %5715 = vadd.xlane.f32.xlu0 %v5714
  %v5716 = vpop.xlane.xlu0 %5715
  %v5717 = vsel %vm4030, %v5156, 0.0
  %5718 = vadd.xlane.f32.xlu0 %v5717
  %v5719 = vpop.xlane.xlu0 %5718
  %v5720 = vsel %vm4030, %v5158, 0.0
  %5721 = vadd.xlane.f32.xlu0 %v5720
  %v5722 = vpop.xlane.xlu0 %5721
  %v5723 = vsel %vm4030, %v5160, 0.0
  %5724 = vadd.xlane.f32.xlu0 %v5723
  %v5725 = vpop.xlane.xlu0 %5724
  %v5726 = vsel %vm4030, %v5162, 0.0
  %5727 = vadd.xlane.f32.xlu0 %v5726
  %v5728 = vpop.xlane.xlu0 %5727
  %v5729 = vsel %vm4030, %v5164, 0.0
  %5730 = vadd.xlane.f32.xlu0 %v5729
  %v5731 = vpop.xlane.xlu0 %5730
  %v5732 = vsel %vm4030, %v5166, 0.0
  %5733 = vadd.xlane.f32.xlu0 %v5732
  %v5734 = vpop.xlane.xlu0 %5733
  %v5735 = vsel %vm4030, %v5168, 0.0
  %5736 = vadd.xlane.f32.xlu0 %v5735
  %v5737 = vpop.xlane.xlu0 %5736
  %v5738 = vsel %vm4030, %v5170, 0.0
  %5739 = vadd.xlane.f32.xlu0 %v5738
  %v5740 = vpop.xlane.xlu0 %5739
  %v5741 = vsel %vm4030, %v5172, 0.0
  %5742 = vadd.xlane.f32.xlu0 %v5741
  %v5743 = vpop.xlane.xlu0 %5742
  %v5744 = vsel %vm4030, %v5174, 0.0
  %5745 = vadd.xlane.f32.xlu0 %v5744
  %v5746 = vpop.xlane.xlu0 %5745
  %v5747 = vsel %vm4030, %v5176, 0.0
  %5748 = vadd.xlane.f32.xlu0 %v5747
  %v5749 = vpop.xlane.xlu0 %5748
  %v5750 = vsel %vm4030, %v5178, 0.0
  %5751 = vadd.xlane.f32.xlu0 %v5750
  %v5752 = vpop.xlane.xlu0 %5751
  %v5753 = vsel %vm4030, %v5180, 0.0
  %5754 = vadd.xlane.f32.xlu0 %v5753
  %v5755 = vpop.xlane.xlu0 %5754
  %v5756 = vsel %vm4030, %v5182, 0.0
  %5757 = vadd.xlane.f32.xlu0 %v5756
  %v5758 = vpop.xlane.xlu0 %5757
  %v5759 = vsel %vm4030, %v5184, 0.0
  %5760 = vadd.xlane.f32.xlu0 %v5759
  %v5761 = vpop.xlane.xlu0 %5760
  %v5762 = vsel %vm4030, %v5186, 0.0
  %5763 = vadd.xlane.f32.xlu0 %v5762
  %v5764 = vpop.xlane.xlu0 %5763
  %v5765 = vsel %vm4030, %v5188, 0.0
  %5766 = vadd.xlane.f32.xlu0 %v5765
  %v5767 = vpop.xlane.xlu0 %5766
  %v5768 = vsel %vm4030, %v5190, 0.0
  %5769 = vadd.xlane.f32.xlu0 %v5768
  %v5770 = vpop.xlane.xlu0 %5769
  %v5771 = vsel %vm4030, %v5192, 0.0
  %5772 = vadd.xlane.f32.xlu0 %v5771
  %v5773 = vpop.xlane.xlu0 %5772
  %v5774 = vsel %vm4030, %v5194, 0.0
  %5775 = vadd.xlane.f32.xlu0 %v5774
  %v5776 = vpop.xlane.xlu0 %5775
  %v5777 = vsel %vm4030, %v5196, 0.0
  %5778 = vadd.xlane.f32.xlu0 %v5777
  %v5779 = vpop.xlane.xlu0 %5778
  %v5780 = vsel %vm4030, %v5198, 0.0
  %5781 = vadd.xlane.f32.xlu0 %v5780
  %v5782 = vpop.xlane.xlu0 %5781
  %v5783 = vsel %vm4030, %v5200, 0.0
  %5784 = vadd.xlane.f32.xlu0 %v5783
  %v5785 = vpop.xlane.xlu0 %5784
  %v5786 = vsel %vm4030, %v5202, 0.0
  %5787 = vadd.xlane.f32.xlu0 %v5786
  %v5788 = vpop.xlane.xlu0 %5787
  %v5789 = vsel %vm4030, %v5204, 0.0
  %5790 = vadd.xlane.f32.xlu0 %v5789
  %v5791 = vpop.xlane.xlu0 %5790
  %v5792 = vsel %vm4030, %v5206, 0.0
  %5793 = vadd.xlane.f32.xlu0 %v5792
  %v5794 = vpop.xlane.xlu0 %5793
  %v5795 = vsel %vm4030, %v5208, 0.0
  %5796 = vadd.xlane.f32.xlu0 %v5795
  %v5797 = vpop.xlane.xlu0 %5796
  %v5798 = vsel %vm4030, %v5210, 0.0
  %5799 = vadd.xlane.f32.xlu0 %v5798
  %v5800 = vpop.xlane.xlu0 %5799
  %v5801 = vsel %vm4030, %v5212, 0.0
  %5802 = vadd.xlane.f32.xlu0 %v5801
  %v5803 = vpop.xlane.xlu0 %5802
  %v5804 = vsel %vm4030, %v5214, 0.0
  %5805 = vadd.xlane.f32.xlu0 %v5804
  %v5806 = vpop.xlane.xlu0 %5805
  %v5807 = vsel %vm4030, %v5216, 0.0
  %5808 = vadd.xlane.f32.xlu0 %v5807
  %v5809 = vpop.xlane.xlu0 %5808
  %v5810 = vsel %vm4030, %v5218, 0.0
  %5811 = vadd.xlane.f32.xlu0 %v5810
  %v5812 = vpop.xlane.xlu0 %5811
  %v5813 = vsel %vm4030, %v5220, 0.0
  %5814 = vadd.xlane.f32.xlu0 %v5813
  %v5815 = vpop.xlane.xlu0 %5814
  %v5816 = vsel %vm4030, %v5222, 0.0
  %5817 = vadd.xlane.f32.xlu0 %v5816
  %v5818 = vpop.xlane.xlu0 %5817
  %v5819 = vsel %vm4030, %v5224, 0.0
  %5820 = vadd.xlane.f32.xlu0 %v5819
  %v5821 = vpop.xlane.xlu0 %5820
  %v5822 = vsel %vm4030, %v5226, 0.0
  %5823 = vadd.xlane.f32.xlu0 %v5822
  %v5824 = vpop.xlane.xlu0 %5823
  %v5825 = vsel %vm4030, %v5228, 0.0
  %5826 = vadd.xlane.f32.xlu0 %v5825
  %v5827 = vpop.xlane.xlu0 %5826
  %v5828 = vsel %vm4030, %v5230, 0.0
  %5829 = vadd.xlane.f32.xlu0 %v5828
  %v5830 = vpop.xlane.xlu0 %5829
  %v5831 = vsel %vm4030, %v5232, 0.0
  %5832 = vadd.xlane.f32.xlu0 %v5831
  %v5833 = vpop.xlane.xlu0 %5832
  %v5834 = vsel %vm4030, %v5234, 0.0
  %5835 = vadd.xlane.f32.xlu0 %v5834
  %v5836 = vpop.xlane.xlu0 %5835
  %v5837 = vsel %vm4030, %v5236, 0.0
  %5838 = vadd.xlane.f32.xlu0 %v5837
  %v5839 = vpop.xlane.xlu0 %5838
  %v5840 = vsel %vm4030, %v5238, 0.0
  %5841 = vadd.xlane.f32.xlu0 %v5840
  %v5842 = vpop.xlane.xlu0 %5841
  %v5843 = vsel %vm4030, %v5240, 0.0
  %5844 = vadd.xlane.f32.xlu0 %v5843
  %v5845 = vpop.xlane.xlu0 %5844
  %v5846 = vsel %vm4030, %v5242, 0.0
  %5847 = vadd.xlane.f32.xlu0 %v5846
  %v5848 = vpop.xlane.xlu0 %5847
  %v5849 = vsel %vm4030, %v5244, 0.0
  %5850 = vadd.xlane.f32.xlu0 %v5849
  %v5851 = vpop.xlane.xlu0 %5850
  %v5852 = vsel %vm4030, %v5246, 0.0
  %5853 = vadd.xlane.f32.xlu0 %v5852
  %v5854 = vpop.xlane.xlu0 %5853
  %v5855 = vsel %vm4030, %v5248, 0.0
  %5856 = vadd.xlane.f32.xlu0 %v5855
  %v5857 = vpop.xlane.xlu0 %5856
  %v5858 = vsel %vm4030, %v5250, 0.0
  %5859 = vadd.xlane.f32.xlu0 %v5858
  %v5860 = vpop.xlane.xlu0 %5859
  %v5861 = vsel %vm4030, %v5252, 0.0
  %5862 = vadd.xlane.f32.xlu0 %v5861
  %v5863 = vpop.xlane.xlu0 %5862
  %v5864 = vsel %vm4030, %v5254, 0.0
  %5865 = vadd.xlane.f32.xlu0 %v5864
  %v5866 = vpop.xlane.xlu0 %5865
  %v5867 = vsel %vm4030, %v5256, 0.0
  %5868 = vadd.xlane.f32.xlu0 %v5867
  %v5869 = vpop.xlane.xlu0 %5868
  %v5870 = vsel %vm4030, %v5258, 0.0
  %5871 = vadd.xlane.f32.xlu0 %v5870
  %v5872 = vpop.xlane.xlu0 %5871
  %v5873 = vsel %vm4030, %v5260, 0.0
  %5874 = vadd.xlane.f32.xlu0 %v5873
  %v5875 = vpop.xlane.xlu0 %5874
  %v5876 = vsel %vm4030, %v5262, 0.0
  %5877 = vadd.xlane.f32.xlu0 %v5876
  %v5878 = vpop.xlane.xlu0 %5877
  %v5879 = vsel %vm4030, %v5264, 0.0
  %5880 = vadd.xlane.f32.xlu0 %v5879
  %v5881 = vpop.xlane.xlu0 %5880
  %v5882 = vsel %vm4030, %v5266, 0.0
  %5883 = vadd.xlane.f32.xlu0 %v5882
  %v5884 = vpop.xlane.xlu0 %5883
  %v5885 = vsel %vm4030, %v5268, 0.0
  %5886 = vadd.xlane.f32.xlu0 %v5885
  %v5887 = vpop.xlane.xlu0 %5886
  %v5888 = vsel %vm4030, %v5270, 0.0
  %5889 = vadd.xlane.f32.xlu0 %v5888
  %v5890 = vpop.xlane.xlu0 %5889
  %v5891 = vsel %vm4030, %v5272, 0.0
  %5892 = vadd.xlane.f32.xlu0 %v5891
  %v5893 = vpop.xlane.xlu0 %5892
  %v5894 = vsel %vm4030, %v5274, 0.0
  %5895 = vadd.xlane.f32.xlu0 %v5894
  %v5896 = vpop.xlane.xlu0 %5895
  %v5897 = vsel %vm4030, %v5276, 0.0
  %5898 = vadd.xlane.f32.xlu0 %v5897
  %v5899 = vpop.xlane.xlu0 %5898
  %v5900 = vsel %vm4030, %v5278, 0.0
  %5901 = vadd.xlane.f32.xlu0 %v5900
  %v5902 = vpop.xlane.xlu0 %5901
  %v5903 = vsel %vm4030, %v5280, 0.0
  %5904 = vadd.xlane.f32.xlu0 %v5903
  %v5905 = vpop.xlane.xlu0 %5904
  %v5906 = vsel %vm4030, %v5282, 0.0
  %5907 = vadd.xlane.f32.xlu0 %v5906
  %v5908 = vpop.xlane.xlu0 %5907
  %v5909 = vsel %vm4030, %v5284, 0.0
  %5910 = vadd.xlane.f32.xlu0 %v5909
  %v5911 = vpop.xlane.xlu0 %5910
  %v5912 = vsel %vm4030, %v5286, 0.0
  %5913 = vadd.xlane.f32.xlu0 %v5912
  %v5914 = vpop.xlane.xlu0 %5913
  %v5915 = vsel %vm4030, %v5288, 0.0
  %5916 = vadd.xlane.f32.xlu0 %v5915
  %v5917 = vpop.xlane.xlu0 %5916
  %v5918 = vsel %vm4030, %v5290, 0.0
  %5919 = vadd.xlane.f32.xlu0 %v5918
  %v5920 = vpop.xlane.xlu0 %5919
  %v5921 = vsel %vm4030, %v5292, 0.0
  %5922 = vadd.xlane.f32.xlu0 %v5921
  %v5923 = vpop.xlane.xlu0 %5922
  %v5924 = vsel %vm4030, %v5294, 0.0
  %5925 = vadd.xlane.f32.xlu0 %v5924
  %v5926 = vpop.xlane.xlu0 %5925
  %v5927 = vsel %vm4030, %v5296, 0.0
  %5928 = vadd.xlane.f32.xlu0 %v5927
  %v5929 = vpop.xlane.xlu0 %5928
  %v5930 = vsel %vm4030, %v5298, 0.0
  %5931 = vadd.xlane.f32.xlu0 %v5930
  %v5932 = vpop.xlane.xlu0 %5931
  %v5933 = vsel %vm4030, %v5300, 0.0
  %5934 = vadd.xlane.f32.xlu0 %v5933
  %v5935 = vpop.xlane.xlu0 %5934
  %v5936 = vsel %vm4030, %v5302, 0.0
  %5937 = vadd.xlane.f32.xlu0 %v5936
  %v5938 = vpop.xlane.xlu0 %5937
  %v5939 = vsel %vm4030, %v5304, 0.0
  %5940 = vadd.xlane.f32.xlu0 %v5939
  %v5941 = vpop.xlane.xlu0 %5940
  %v5942 = vsel %vm4030, %v5306, 0.0
  %5943 = vadd.xlane.f32.xlu0 %v5942
  %v5944 = vpop.xlane.xlu0 %5943
  %v5945 = vsel %vm4030, %v5308, 0.0
  %5946 = vadd.xlane.f32.xlu0 %v5945
  %v5947 = vpop.xlane.xlu0 %5946
  %v5948 = vsel %vm4030, %v5310, 0.0
  %5949 = vadd.xlane.f32.xlu0 %v5948
  %v5950 = vpop.xlane.xlu0 %5949
  %v5951 = vsel %vm4030, %v5312, 0.0
  %5952 = vadd.xlane.f32.xlu0 %v5951
  %v5953 = vpop.xlane.xlu0 %5952
  %v5954 = vsel %vm4030, %v5314, 0.0
  %5955 = vadd.xlane.f32.xlu0 %v5954
  %v5956 = vpop.xlane.xlu0 %5955
  %v5957 = vsel %vm4030, %v5316, 0.0
  %5958 = vadd.xlane.f32.xlu0 %v5957
  %v5959 = vpop.xlane.xlu0 %5958
  %v5960 = vsel %vm4030, %v5318, 0.0
  %5961 = vadd.xlane.f32.xlu0 %v5960
  %v5962 = vpop.xlane.xlu0 %5961
  %v5963 = vsel %vm4030, %v5320, 0.0
  %5964 = vadd.xlane.f32.xlu0 %v5963
  %v5965 = vpop.xlane.xlu0 %5964
  %v5966 = vsel %vm4030, %v5322, 0.0
  %5967 = vadd.xlane.f32.xlu0 %v5966
  %v5968 = vpop.xlane.xlu0 %5967
  %v5969 = vsel %vm4030, %v5324, 0.0
  %5970 = vadd.xlane.f32.xlu0 %v5969
  %v5971 = vpop.xlane.xlu0 %5970
  %v5972 = vsel %vm4030, %v5326, 0.0
  %5973 = vadd.xlane.f32.xlu0 %v5972
  %v5974 = vpop.xlane.xlu0 %5973
  %v5975 = vsel %vm4030, %v5328, 0.0
  %5976 = vadd.xlane.f32.xlu0 %v5975
  %v5977 = vpop.xlane.xlu0 %5976
  %v5978 = vsel %vm4030, %v5330, 0.0
  %5979 = vadd.xlane.f32.xlu0 %v5978
  %v5980 = vpop.xlane.xlu0 %5979
  %v5981 = vsel %vm4030, %v5332, 0.0
  %5982 = vadd.xlane.f32.xlu0 %v5981
  %v5983 = vpop.xlane.xlu0 %5982
  %v5984 = vsel %vm4030, %v5334, 0.0
  %5985 = vadd.xlane.f32.xlu0 %v5984
  %v5986 = vpop.xlane.xlu0 %5985
  %v5987 = vsel %vm4030, %v5336, 0.0
  %5988 = vadd.xlane.f32.xlu0 %v5987
  %v5989 = vpop.xlane.xlu0 %5988
  %v5990 = vsel %vm4030, %v5338, 0.0
  %5991 = vadd.xlane.f32.xlu0 %v5990
  %v5992 = vpop.xlane.xlu0 %5991
  %v5993 = vsel %vm4030, %v5340, 0.0
  %5994 = vadd.xlane.f32.xlu0 %v5993
  %v5995 = vpop.xlane.xlu0 %5994
  %v5996 = vsel %vm4030, %v5342, 0.0
  %5997 = vadd.xlane.f32.xlu0 %v5996
  %v5998 = vpop.xlane.xlu0 %5997
  %v5999 = vsel %vm4030, %v5344, 0.0
  %6000 = vadd.xlane.f32.xlu0 %v5999
  %v6001 = vpop.xlane.xlu0 %6000
  %v6002 = vsel %vm4030, %v5346, 0.0
  %6003 = vadd.xlane.f32.xlu0 %v6002
  %v6004 = vpop.xlane.xlu0 %6003
  %v6005 = vsel %vm4030, %v5348, 0.0
  %6006 = vadd.xlane.f32.xlu0 %v6005
  %v6007 = vpop.xlane.xlu0 %6006
  %v6008 = vsel %vm4030, %v5350, 0.0
  %6009 = vadd.xlane.f32.xlu0 %v6008
  %v6010 = vpop.xlane.xlu0 %6009
  %v6011 = vsel %vm4030, %v5352, 0.0
  %6012 = vadd.xlane.f32.xlu0 %v6011
  %v6013 = vpop.xlane.xlu0 %6012
  %v6014 = vsel %vm4030, %v5354, 0.0
  %6015 = vadd.xlane.f32.xlu0 %v6014
  %v6016 = vpop.xlane.xlu0 %6015
  %v6017 = vsel %vm4030, %v5356, 0.0
  %6018 = vadd.xlane.f32.xlu0 %v6017
  %v6019 = vpop.xlane.xlu0 %6018
  %v6020 = vsel %vm4030, %v5358, 0.0
  %6021 = vadd.xlane.f32.xlu0 %v6020
  %v6022 = vpop.xlane.xlu0 %6021
  %v6023 = vsel %vm4030, %v5360, 0.0
  %6024 = vadd.xlane.f32.xlu0 %v6023
  %v6025 = vpop.xlane.xlu0 %6024
  %v6026 = vsel %vm4030, %v5362, 0.0
  %6027 = vadd.xlane.f32.xlu0 %v6026
  %v6028 = vpop.xlane.xlu0 %6027
  %v6029 = vsel %vm4030, %v5364, 0.0
  %6030 = vadd.xlane.f32.xlu0 %v6029
  %v6031 = vpop.xlane.xlu0 %6030
  %v6032 = vsel %vm4030, %v5366, 0.0
  %6033 = vadd.xlane.f32.xlu0 %v6032
  %v6034 = vpop.xlane.xlu0 %6033
  %v6035 = vsel %vm4030, %v5368, 0.0
  %6036 = vadd.xlane.f32.xlu0 %v6035
  %v6037 = vpop.xlane.xlu0 %6036
  %v6038 = vsel %vm4030, %v5370, 0.0
  %6039 = vadd.xlane.f32.xlu0 %v6038
  %v6040 = vpop.xlane.xlu0 %6039
  %v6041 = vsel %vm4030, %v5372, 0.0
  %6042 = vadd.xlane.f32.xlu0 %v6041
  %v6043 = vpop.xlane.xlu0 %6042
  %v6044 = vsel %vm4030, %v5374, 0.0
  %6045 = vadd.xlane.f32.xlu0 %v6044
  %v6046 = vpop.xlane.xlu0 %6045
  %v6047 = vsel %vm4030, %v5376, 0.0
  %6048 = vadd.xlane.f32.xlu0 %v6047
  %v6049 = vpop.xlane.xlu0 %6048
  %v6050 = vsel %vm4030, %v5378, 0.0
  %6051 = vadd.xlane.f32.xlu0 %v6050
  %v6052 = vpop.xlane.xlu0 %6051
  %v6053 = vsel %vm4030, %v5380, 0.0
  %6054 = vadd.xlane.f32.xlu0 %v6053
  %v6055 = vpop.xlane.xlu0 %6054
  %v6056 = vsel %vm4030, %v5382, 0.0
  %6057 = vadd.xlane.f32.xlu0 %v6056
  %v6058 = vpop.xlane.xlu0 %6057
  %v6059 = vsel %vm4030, %v5384, 0.0
  %6060 = vadd.xlane.f32.xlu0 %v6059
  %v6061 = vpop.xlane.xlu0 %6060
  %v6062 = vsel %vm4030, %v5386, 0.0
  %6063 = vadd.xlane.f32.xlu0 %v6062
  %v6064 = vpop.xlane.xlu0 %6063
  %v6065 = vsel %vm4030, %v5388, 0.0
  %6066 = vadd.xlane.f32.xlu0 %v6065
  %v6067 = vpop.xlane.xlu0 %6066
  %v6068 = vsel %vm4030, %v5390, 0.0
  %6069 = vadd.xlane.f32.xlu0 %v6068
  %v6070 = vpop.xlane.xlu0 %6069
  %v6071 = vsel %vm4030, %v5392, 0.0
  %6072 = vadd.xlane.f32.xlu0 %v6071
  %v6073 = vpop.xlane.xlu0 %6072
  %v6074 = vsel %vm4030, %v5394, 0.0
  %6075 = vadd.xlane.f32.xlu0 %v6074
  %v6076 = vpop.xlane.xlu0 %6075
  %v6077 = vsel %vm4030, %v5396, 0.0
  %6078 = vadd.xlane.f32.xlu0 %v6077
  %v6079 = vpop.xlane.xlu0 %6078
  %v6080 = vsel %vm4030, %v5398, 0.0
  %6081 = vadd.xlane.f32.xlu0 %v6080
  %v6082 = vpop.xlane.xlu0 %6081
  %v6083 = vsel %vm4030, %v5400, 0.0
  %6084 = vadd.xlane.f32.xlu0 %v6083
  %v6085 = vpop.xlane.xlu0 %6084
  %v6086 = vsel %vm4030, %v5402, 0.0
  %6087 = vadd.xlane.f32.xlu0 %v6086
  %v6088 = vpop.xlane.xlu0 %6087
  %v6089 = vsel %vm4030, %v5404, 0.0
  %6090 = vadd.xlane.f32.xlu0 %v6089
  %v6091 = vpop.xlane.xlu0 %6090
  %v6092 = vsel %vm4030, %v5406, 0.0
  %6093 = vadd.xlane.f32.xlu0 %v6092
  %v6094 = vpop.xlane.xlu0 %6093
  %v6095 = vsel %vm4030, %v5408, 0.0
  %6096 = vadd.xlane.f32.xlu0 %v6095
  %v6097 = vpop.xlane.xlu0 %6096
  %v6098 = vsel %vm4030, %v5410, 0.0
  %6099 = vadd.xlane.f32.xlu0 %v6098
  %v6100 = vpop.xlane.xlu0 %6099
  %v6101 = vsel %vm4030, %v5412, 0.0
  %6102 = vadd.xlane.f32.xlu0 %v6101
  %v6103 = vpop.xlane.xlu0 %6102
  %v6104 = vsel %vm4030, %v5414, 0.0
  %6105 = vadd.xlane.f32.xlu0 %v6104
  %v6106 = vpop.xlane.xlu0 %6105
  %v6107 = vsel %vm4030, %v5416, 0.0
  %6108 = vadd.xlane.f32.xlu0 %v6107
  %v6109 = vpop.xlane.xlu0 %6108
  %v6110 = vsel %vm4030, %v5418, 0.0
  %6111 = vadd.xlane.f32.xlu0 %v6110
  %v6112 = vpop.xlane.xlu0 %6111
  %v6113 = vsel %vm4030, %v5420, 0.0
  %6114 = vadd.xlane.f32.xlu0 %v6113
  %v6115 = vpop.xlane.xlu0 %6114
  %v6116 = vsel %vm4030, %v5422, 0.0
  %6117 = vadd.xlane.f32.xlu0 %v6116
  %v6118 = vpop.xlane.xlu0 %6117
  %v6119 = vsel %vm4030, %v5424, 0.0
  %6120 = vadd.xlane.f32.xlu0 %v6119
  %v6121 = vpop.xlane.xlu0 %6120
  %v6122 = vsel %vm4030, %v5426, 0.0
  %6123 = vadd.xlane.f32.xlu0 %v6122
  %v6124 = vpop.xlane.xlu0 %6123
  %v6125 = vsel %vm4030, %v5428, 0.0
  %6126 = vadd.xlane.f32.xlu0 %v6125
  %v6127 = vpop.xlane.xlu0 %6126
  %v6128 = vsel %vm4030, %v5430, 0.0
  %6129 = vadd.xlane.f32.xlu0 %v6128
  %v6130 = vpop.xlane.xlu0 %6129
  %v6131 = vsel %vm4030, %v5432, 0.0
  %6132 = vadd.xlane.f32.xlu0 %v6131
  %v6133 = vpop.xlane.xlu0 %6132
  %v6134 = vsel %vm4030, %v5434, 0.0
  %6135 = vadd.xlane.f32.xlu0 %v6134
  %v6136 = vpop.xlane.xlu0 %6135
  %v6137 = vsel %vm4030, %v5436, 0.0
  %6138 = vadd.xlane.f32.xlu0 %v6137
  %v6139 = vpop.xlane.xlu0 %6138
  %v6140 = vsel %vm4030, %v5438, 0.0
  %6141 = vadd.xlane.f32.xlu0 %v6140
  %v6142 = vpop.xlane.xlu0 %6141
  %v6143 = vsel %vm4030, %v5440, 0.0
  %6144 = vadd.xlane.f32.xlu0 %v6143
  %v6145 = vpop.xlane.xlu0 %6144
  %v6146 = vsel %vm4030, %v5442, 0.0
  %6147 = vadd.xlane.f32.xlu0 %v6146
  %v6148 = vpop.xlane.xlu0 %6147
  %v6149 = vsel %vm4030, %v5444, 0.0
  %6150 = vadd.xlane.f32.xlu0 %v6149
  %v6151 = vpop.xlane.xlu0 %6150
  %v6152 = vsel %vm4030, %v5446, 0.0
  %6153 = vadd.xlane.f32.xlu0 %v6152
  %v6154 = vpop.xlane.xlu0 %6153
  %v6155 = vsel %vm4030, %v5448, 0.0
  %6156 = vadd.xlane.f32.xlu0 %v6155
  %v6157 = vpop.xlane.xlu0 %6156
  %v6158 = vsel %vm4030, %v5450, 0.0
  %6159 = vadd.xlane.f32.xlu0 %v6158
  %v6160 = vpop.xlane.xlu0 %6159
  %v6161 = vsel %vm4030, %v5452, 0.0
  %6162 = vadd.xlane.f32.xlu0 %v6161
  %v6163 = vpop.xlane.xlu0 %6162
  %v6164 = vsel %vm4030, %v5454, 0.0
  %6165 = vadd.xlane.f32.xlu0 %v6164
  %v6166 = vpop.xlane.xlu0 %6165
  %v6167 = vsel %vm4030, %v5456, 0.0
  %6168 = vadd.xlane.f32.xlu0 %v6167
  %v6169 = vpop.xlane.xlu0 %6168
  %v6170 = vsel %vm4030, %v5458, 0.0
  %6171 = vadd.xlane.f32.xlu0 %v6170
  %v6172 = vpop.xlane.xlu0 %6171
  %v6173 = vsel %vm4030, %v5460, 0.0
  %6174 = vadd.xlane.f32.xlu0 %v6173
  %v6175 = vpop.xlane.xlu0 %6174
  %v6176 = vsel %vm4030, %v5462, 0.0
  %6177 = vadd.xlane.f32.xlu0 %v6176
  %v6178 = vpop.xlane.xlu0 %6177
  %v6179 = vsel %vm4030, %v5464, 0.0
  %6180 = vadd.xlane.f32.xlu0 %v6179
  %v6181 = vpop.xlane.xlu0 %6180
  %v6182 = vsel %vm4030, %v5466, 0.0
  %6183 = vadd.xlane.f32.xlu0 %v6182
  %v6184 = vpop.xlane.xlu0 %6183
  %v6185 = vsel %vm4030, %v5468, 0.0
  %6186 = vadd.xlane.f32.xlu0 %v6185
  %v6187 = vpop.xlane.xlu0 %6186
  %v6188 = vsel %vm4030, %v5470, 0.0
  %6189 = vadd.xlane.f32.xlu0 %v6188
  %v6190 = vpop.xlane.xlu0 %6189
  %v6191 = vsel %vm4030, %v5472, 0.0
  %6192 = vadd.xlane.f32.xlu0 %v6191
  %v6193 = vpop.xlane.xlu0 %6192
  %v6194 = vsel %vm4030, %v5474, 0.0
  %6195 = vadd.xlane.f32.xlu0 %v6194
  %v6196 = vpop.xlane.xlu0 %6195
  %v6197 = vsel %vm4030, %v5476, 0.0
  %6198 = vadd.xlane.f32.xlu0 %v6197
  %v6199 = vpop.xlane.xlu0 %6198
  %v6200 = vsel %vm4030, %v5478, 0.0
  %6201 = vadd.xlane.f32.xlu0 %v6200
  %v6202 = vpop.xlane.xlu0 %6201
  %v6203 = vsel %vm4030, %v5480, 0.0
  %6204 = vadd.xlane.f32.xlu0 %v6203
  %v6205 = vpop.xlane.xlu0 %6204
  %v6206 = vsel %vm4030, %v5482, 0.0
  %6207 = vadd.xlane.f32.xlu0 %v6206
  %v6208 = vpop.xlane.xlu0 %6207
  %v6209 = vsel %vm4030, %v5484, 0.0
  %6210 = vadd.xlane.f32.xlu0 %v6209
  %v6211 = vpop.xlane.xlu0 %6210
  %v6212 = vsel %vm4030, %v5486, 0.0
  %6213 = vadd.xlane.f32.xlu0 %v6212
  %v6214 = vpop.xlane.xlu0 %6213
  %v6215 = vsel %vm4030, %v5488, 0.0
  %6216 = vadd.xlane.f32.xlu0 %v6215
  %v6217 = vpop.xlane.xlu0 %6216
  %v6218 = vsel %vm4030, %v5490, 0.0
  %6219 = vadd.xlane.f32.xlu0 %v6218
  %v6220 = vpop.xlane.xlu0 %6219
  %v6221 = vsel %vm4030, %v5492, 0.0
  %6222 = vadd.xlane.f32.xlu0 %v6221
  %v6223 = vpop.xlane.xlu0 %6222
  %v6224 = vsel %vm4030, %v5494, 0.0
  %6225 = vadd.xlane.f32.xlu0 %v6224
  %v6226 = vpop.xlane.xlu0 %6225
  %v6227 = vsel %vm4030, %v5496, 0.0
  %6228 = vadd.xlane.f32.xlu0 %v6227
  %v6229 = vpop.xlane.xlu0 %6228
  %v6230 = vsel %vm4030, %v5498, 0.0
  %6231 = vadd.xlane.f32.xlu0 %v6230
  %v6232 = vpop.xlane.xlu0 %6231
  %v6233 = vsel %vm4030, %v5500, 0.0
  %6234 = vadd.xlane.f32.xlu0 %v6233
  %v6235 = vpop.xlane.xlu0 %6234
  %v6236 = vsel %vm4030, %v5502, 0.0
  %6237 = vadd.xlane.f32.xlu0 %v6236
  %v6238 = vpop.xlane.xlu0 %6237
  %v6239 = vsel %vm4030, %v5504, 0.0
  %6240 = vadd.xlane.f32.xlu0 %v6239
  %v6241 = vpop.xlane.xlu0 %6240
  %v6242 = vsel %vm4030, %v5506, 0.0
  %6243 = vadd.xlane.f32.xlu0 %v6242
  %v6244 = vpop.xlane.xlu0 %6243
  %v6245 = vsel %vm4030, %v5508, 0.0
  %6246 = vadd.xlane.f32.xlu0 %v6245
  %v6247 = vpop.xlane.xlu0 %6246
  %v6248 = vsel %vm4030, %v5510, 0.0
  %6249 = vadd.xlane.f32.xlu0 %v6248
  %v6250 = vpop.xlane.xlu0 %6249
  %v6251 = vsel %vm4030, %v5512, 0.0
  %6252 = vadd.xlane.f32.xlu0 %v6251
  %v6253 = vpop.xlane.xlu0 %6252
  %v6254 = vsel %vm4030, %v5514, 0.0
  %6255 = vadd.xlane.f32.xlu0 %v6254
  %v6256 = vpop.xlane.xlu0 %6255
  %v6257 = vsel %vm4030, %v5516, 0.0
  %6258 = vadd.xlane.f32.xlu0 %v6257
  %v6259 = vpop.xlane.xlu0 %6258
  %v6260 = vsel %vm4030, %v5518, 0.0
  %6261 = vadd.xlane.f32.xlu0 %v6260
  %v6262 = vpop.xlane.xlu0 %6261
  %v6263 = vsel %vm4030, %v5520, 0.0
  %6264 = vadd.xlane.f32.xlu0 %v6263
  %v6265 = vpop.xlane.xlu0 %6264
  %v6266 = vsel %vm4030, %v5522, 0.0
  %6267 = vadd.xlane.f32.xlu0 %v6266
  %v6268 = vpop.xlane.xlu0 %6267
  %v6269 = vsel %vm4030, %v5524, 0.0
  %6270 = vadd.xlane.f32.xlu0 %v6269
  %v6271 = vpop.xlane.xlu0 %6270
  %v6272 = vsel %vm4030, %v5526, 0.0
  %6273 = vadd.xlane.f32.xlu0 %v6272
  %v6274 = vpop.xlane.xlu0 %6273
  %v6275 = vsel %vm4030, %v5528, 0.0
  %6276 = vadd.xlane.f32.xlu0 %v6275
  %v6277 = vpop.xlane.xlu0 %6276
  %v6278 = vsel %vm4030, %v5530, 0.0
  %6279 = vadd.xlane.f32.xlu0 %v6278
  %v6280 = vpop.xlane.xlu0 %6279
  %v6281 = vsel %vm4030, %v5532, 0.0
  %6282 = vadd.xlane.f32.xlu0 %v6281
  %v6283 = vpop.xlane.xlu0 %6282
  %v6284 = vsel %vm4030, %v5534, 0.0
  %6285 = vadd.xlane.f32.xlu0 %v6284
  %v6286 = vpop.xlane.xlu0 %6285
  %v6287 = vsel %vm4030, %v5536, 0.0
  %6288 = vadd.xlane.f32.xlu0 %v6287
  %v6289 = vpop.xlane.xlu0 %6288
  %v6290 = vsel %vm4030, %v5538, 0.0
  %6291 = vadd.xlane.f32.xlu0 %v6290
  %v6292 = vpop.xlane.xlu0 %6291
  %v6293 = vsel %vm4030, %v5540, 0.0
  %6294 = vadd.xlane.f32.xlu0 %v6293
  %v6295 = vpop.xlane.xlu0 %6294
  %v6296 = vsel %vm4030, %v5542, 0.0
  %6297 = vadd.xlane.f32.xlu0 %v6296
  %v6298 = vpop.xlane.xlu0 %6297
  %v6299 = vsel %vm4030, %v5544, 0.0
  %6300 = vadd.xlane.f32.xlu0 %v6299
  %v6301 = vpop.xlane.xlu0 %6300
  %v6302 = vsel %vm4030, %v5546, 0.0
  %6303 = vadd.xlane.f32.xlu0 %v6302
  %v6304 = vpop.xlane.xlu0 %6303
  %v6305 = vsel %vm4030, %v5548, 0.0
  %6306 = vadd.xlane.f32.xlu0 %v6305
  %v6307 = vpop.xlane.xlu0 %6306
  %v6308 = vsel %vm4030, %v5550, 0.0
  %6309 = vadd.xlane.f32.xlu0 %v6308
  %v6310 = vpop.xlane.xlu0 %6309
  %v6311 = vsel %vm4030, %v5552, 0.0
  %6312 = vadd.xlane.f32.xlu0 %v6311
  %v6313 = vpop.xlane.xlu0 %6312
  %v6314 = vsel %vm4030, %v5554, 0.0
  %6315 = vadd.xlane.f32.xlu0 %v6314
  %v6316 = vpop.xlane.xlu0 %6315
  %v6317 = vsel %vm4030, %v5556, 0.0
  %6318 = vadd.xlane.f32.xlu0 %v6317
  %v6319 = vpop.xlane.xlu0 %6318
  %v6320 = vsel %vm4030, %v5558, 0.0
  %6321 = vadd.xlane.f32.xlu0 %v6320
  %v6322 = vpop.xlane.xlu0 %6321
  %v6323 = vsel %vm4030, %v5560, 0.0
  %6324 = vadd.xlane.f32.xlu0 %v6323
  %v6325 = vpop.xlane.xlu0 %6324
  %v6326 = vsel %vm4030, %v5562, 0.0
  %6327 = vadd.xlane.f32.xlu0 %v6326
  %v6328 = vpop.xlane.xlu0 %6327
  %v6329 = vsel %vm4030, %v5564, 0.0
  %6330 = vadd.xlane.f32.xlu0 %v6329
  %v6331 = vpop.xlane.xlu0 %6330
  %v6332 = vsel %vm4030, %v5566, 0.0
  %6333 = vadd.xlane.f32.xlu0 %v6332
  %v6334 = vpop.xlane.xlu0 %6333
  %v6335 = vrcp.pop %v5569
  %v6336 = vrcp.pop %v5572
  %v6337 = vrcp.pop %v5575
  %v6338 = vrcp.pop %v5578
  %v6339 = vrcp.pop %v5581
  %v6340 = vrcp.pop %v5584
  %v6341 = vrcp.pop %v5587
  %v6342 = vrcp.pop %v5590
  %v6343 = vrcp.pop %v5593
  %v6344 = vrcp.pop %v5596
  %v6345 = vrcp.pop %v5599
  %v6346 = vrcp.pop %v5602
  %v6347 = vrcp.pop %v5605
  %v6348 = vrcp.pop %v5608
  %v6349 = vrcp.pop %v5611
  %v6350 = vrcp.pop %v5614
  %v6351 = vrcp.pop %v5617
  %v6352 = vrcp.pop %v5620
  %v6353 = vrcp.pop %v5623
  %v6354 = vrcp.pop %v5626
  %v6355 = vrcp.pop %v5629
  %v6356 = vrcp.pop %v5632
  %v6357 = vrcp.pop %v5635
  %v6358 = vrcp.pop %v5638
  %v6359 = vrcp.pop %v5641
  %v6360 = vrcp.pop %v5644
  %v6361 = vrcp.pop %v5647
  %v6362 = vrcp.pop %v5650
  %v6363 = vrcp.pop %v5653
  %v6364 = vrcp.pop %v5656
  %v6365 = vrcp.pop %v5659
  %v6366 = vrcp.pop %v5662
  %v6367 = vrcp.pop %v5665
  %v6368 = vrcp.pop %v5668
  %v6369 = vrcp.pop %v5671
  %v6370 = vrcp.pop %v5674
  %v6371 = vrcp.pop %v5677
  %v6372 = vrcp.pop %v5680
  %v6373 = vrcp.pop %v5683
  %v6374 = vrcp.pop %v5686
  %v6375 = vrcp.pop %v5689
  %v6376 = vrcp.pop %v5692
  %v6377 = vrcp.pop %v5695
  %v6378 = vrcp.pop %v5698
  %v6379 = vrcp.pop %v5701
  %v6380 = vrcp.pop %v5704
  %v6381 = vrcp.pop %v5707
  %v6382 = vrcp.pop %v5710
  %v6383 = vrcp.pop %v5713
  %v6384 = vrcp.pop %v5716
  %v6385 = vrcp.pop %v5719
  %v6386 = vrcp.pop %v5722
  %v6387 = vrcp.pop %v5725
  %v6388 = vrcp.pop %v5728
  %v6389 = vrcp.pop %v5731
  %v6390 = vrcp.pop %v5734
  %v6391 = vrcp.pop %v5737
  %v6392 = vrcp.pop %v5740
  %v6393 = vrcp.pop %v5743
  %v6394 = vrcp.pop %v5746
  %v6395 = vrcp.pop %v5749
  %v6396 = vrcp.pop %v5752
  %v6397 = vrcp.pop %v5755
  %v6398 = vrcp.pop %v5758
  %v6399 = vrcp.pop %v5761
  %v6400 = vrcp.pop %v5764
  %v6401 = vrcp.pop %v5767
  %v6402 = vrcp.pop %v5770
  %v6403 = vrcp.pop %v5773
  %v6404 = vrcp.pop %v5776
  %v6405 = vrcp.pop %v5779
  %v6406 = vrcp.pop %v5782
  %v6407 = vrcp.pop %v5785
  %v6408 = vrcp.pop %v5788
  %v6409 = vrcp.pop %v5791
  %v6410 = vrcp.pop %v5794
  %v6411 = vrcp.pop %v5797
  %v6412 = vrcp.pop %v5800
  %v6413 = vrcp.pop %v5803
  %v6414 = vrcp.pop %v5806
  %v6415 = vrcp.pop %v5809
  %v6416 = vrcp.pop %v5812
  %v6417 = vrcp.pop %v5815
  %v6418 = vrcp.pop %v5818
  %v6419 = vrcp.pop %v5821
  %v6420 = vrcp.pop %v5824
  %v6421 = vrcp.pop %v5827
  %v6422 = vrcp.pop %v5830
  %v6423 = vrcp.pop %v5833
  %v6424 = vrcp.pop %v5836
  %v6425 = vrcp.pop %v5839
  %v6426 = vrcp.pop %v5842
  %v6427 = vrcp.pop %v5845
  %v6428 = vrcp.pop %v5848
  %v6429 = vrcp.pop %v5851
  %v6430 = vrcp.pop %v5854
  %v6431 = vrcp.pop %v5857
  %v6432 = vrcp.pop %v5860
  %v6433 = vrcp.pop %v5863
  %v6434 = vrcp.pop %v5866
  %v6435 = vrcp.pop %v5869
  %v6436 = vrcp.pop %v5872
  %v6437 = vrcp.pop %v5875
  %v6438 = vrcp.pop %v5878
  %v6439 = vrcp.pop %v5881
  %v6440 = vrcp.pop %v5884
  %v6441 = vrcp.pop %v5887
  %v6442 = vrcp.pop %v5890
  %v6443 = vrcp.pop %v5893
  %v6444 = vrcp.pop %v5896
  %v6445 = vrcp.pop %v5899
  %v6446 = vrcp.pop %v5902
  %v6447 = vrcp.pop %v5905
  %v6448 = vrcp.pop %v5908
  %v6449 = vrcp.pop %v5911
  %v6450 = vrcp.pop %v5914
  %v6451 = vrcp.pop %v5917
  %v6452 = vrcp.pop %v5920
  %v6453 = vrcp.pop %v5923
  %v6454 = vrcp.pop %v5926
  %v6455 = vrcp.pop %v5929
  %v6456 = vrcp.pop %v5932
  %v6457 = vrcp.pop %v5935
  %v6458 = vrcp.pop %v5938
  %v6459 = vrcp.pop %v5941
  %v6460 = vrcp.pop %v5944
  %v6461 = vrcp.pop %v5947
  %v6462 = vrcp.pop %v5950
  %v6463 = vrcp.pop %v5953
  %v6464 = vrcp.pop %v5956
  %v6465 = vrcp.pop %v5959
  %v6466 = vrcp.pop %v5962
  %v6467 = vrcp.pop %v5965
  %v6468 = vrcp.pop %v5968
  %v6469 = vrcp.pop %v5971
  %v6470 = vrcp.pop %v5974
  %v6471 = vrcp.pop %v5977
  %v6472 = vrcp.pop %v5980
  %v6473 = vrcp.pop %v5983
  %v6474 = vrcp.pop %v5986
  %v6475 = vrcp.pop %v5989
  %v6476 = vrcp.pop %v5992
  %v6477 = vrcp.pop %v5995
  %v6478 = vrcp.pop %v5998
  %v6479 = vrcp.pop %v6001
  %v6480 = vrcp.pop %v6004
  %v6481 = vrcp.pop %v6007
  %v6482 = vrcp.pop %v6010
  %v6483 = vrcp.pop %v6013
  %v6484 = vrcp.pop %v6016
  %v6485 = vrcp.pop %v6019
  %v6486 = vrcp.pop %v6022
  %v6487 = vrcp.pop %v6025
  %v6488 = vrcp.pop %v6028
  %v6489 = vrcp.pop %v6031
  %v6490 = vrcp.pop %v6034
  %v6491 = vrcp.pop %v6037
  %v6492 = vrcp.pop %v6040
  %v6493 = vrcp.pop %v6043
  %v6494 = vrcp.pop %v6046
  %v6495 = vrcp.pop %v6049
  %v6496 = vrcp.pop %v6052
  %v6497 = vrcp.pop %v6055
  %v6498 = vrcp.pop %v6058
  %v6499 = vrcp.pop %v6061
  %v6500 = vrcp.pop %v6064
  %v6501 = vrcp.pop %v6067
  %v6502 = vrcp.pop %v6070
  %v6503 = vrcp.pop %v6073
  %v6504 = vrcp.pop %v6076
  %v6505 = vrcp.pop %v6079
  %v6506 = vrcp.pop %v6082
  %v6507 = vrcp.pop %v6085
  %v6508 = vrcp.pop %v6088
  %v6509 = vrcp.pop %v6091
  %v6510 = vrcp.pop %v6094
  %v6511 = vrcp.pop %v6097
  %v6512 = vrcp.pop %v6100
  %v6513 = vrcp.pop %v6103
  %v6514 = vrcp.pop %v6106
  %v6515 = vrcp.pop %v6109
  %v6516 = vrcp.pop %v6112
  %v6517 = vrcp.pop %v6115
  %v6518 = vrcp.pop %v6118
  %v6519 = vrcp.pop %v6121
  %v6520 = vrcp.pop %v6124
  %v6521 = vrcp.pop %v6127
  %v6522 = vrcp.pop %v6130
  %v6523 = vrcp.pop %v6133
  %v6524 = vrcp.pop %v6136
  %v6525 = vrcp.pop %v6139
  %v6526 = vrcp.pop %v6142
  %v6527 = vrcp.pop %v6145
  %v6528 = vrcp.pop %v6148
  %v6529 = vrcp.pop %v6151
  %v6530 = vrcp.pop %v6154
  %v6531 = vrcp.pop %v6157
  %v6532 = vrcp.pop %v6160
  %v6533 = vrcp.pop %v6163
  %v6534 = vrcp.pop %v6166
  %v6535 = vrcp.pop %v6169
  %v6536 = vrcp.pop %v6172
  %v6537 = vrcp.pop %v6175
  %v6538 = vrcp.pop %v6178
  %v6539 = vrcp.pop %v6181
  %v6540 = vrcp.pop %v6184
  %v6541 = vrcp.pop %v6187
  %v6542 = vrcp.pop %v6190
  %v6543 = vrcp.pop %v6193
  %v6544 = vrcp.pop %v6196
  %v6545 = vrcp.pop %v6199
  %v6546 = vrcp.pop %v6202
  %v6547 = vrcp.pop %v6205
  %v6548 = vrcp.pop %v6208
  %v6549 = vrcp.pop %v6211
  %v6550 = vrcp.pop %v6214
  %v6551 = vrcp.pop %v6217
  %v6552 = vrcp.pop %v6220
  %v6553 = vrcp.pop %v6223
  %v6554 = vrcp.pop %v6226
  %v6555 = vrcp.pop %v6229
  %v6556 = vrcp.pop %v6232
  %v6557 = vrcp.pop %v6235
  %v6558 = vrcp.pop %v6238
  %v6559 = vrcp.pop %v6241
  %v6560 = vrcp.pop %v6244
  %v6561 = vrcp.pop %v6247
  %v6562 = vrcp.pop %v6250
  %v6563 = vrcp.pop %v6253
  %v6564 = vrcp.pop %v6256
  %v6565 = vrcp.pop %v6259
  %v6566 = vrcp.pop %v6262
  %v6567 = vrcp.pop %v6265
  %v6568 = vrcp.pop %v6268
  %v6569 = vrcp.pop %v6271
  %v6570 = vrcp.pop %v6274
  %v6571 = vrcp.pop %v6277
  %v6572 = vrcp.pop %v6280
  %v6573 = vrcp.pop %v6283
  %v6574 = vrcp.pop %v6286
  %v6575 = vrcp.pop %v6289
  %v6576 = vrcp.pop %v6292
  %v6577 = vrcp.pop %v6295
  %v6578 = vrcp.pop %v6298
  %v6579 = vrcp.pop %v6301
  %v6580 = vrcp.pop %v6304
  %v6581 = vrcp.pop %v6307
  %v6582 = vrcp.pop %v6310
  %v6583 = vrcp.pop %v6313
  %v6584 = vrcp.pop %v6316
  %v6585 = vrcp.pop %v6319
  %v6586 = vrcp.pop %v6322
  %v6587 = vrcp.pop %v6325
  %v6588 = vrcp.pop %v6328
  %v6589 = vrcp.pop %v6331
  %v6590 = vrcp.pop %v6334
  %v6591 = vmul.f32 %v5056, %v6335
  %v6592 = vmul.f32 %v5058, %v6336
  %v6593 = vmul.f32 %v5060, %v6337
  %v6594 = vmul.f32 %v5062, %v6338
  %v6595 = vmul.f32 %v5064, %v6339
  %v6596 = vmul.f32 %v5066, %v6340
  %v6597 = vmul.f32 %v5068, %v6341
  %v6598 = vmul.f32 %v5070, %v6342
  %v6599 = vmul.f32 %v5072, %v6343
  %v6600 = vmul.f32 %v5074, %v6344
  %v6601 = vmul.f32 %v5076, %v6345
  %v6602 = vmul.f32 %v5078, %v6346
  %v6603 = vmul.f32 %v5080, %v6347
  %v6604 = vmul.f32 %v5082, %v6348
  %v6605 = vmul.f32 %v5084, %v6349
  %v6606 = vmul.f32 %v5086, %v6350
  %v6607 = vmul.f32 %v5088, %v6351
  %v6608 = vmul.f32 %v5090, %v6352
  %v6609 = vmul.f32 %v5092, %v6353
  %v6610 = vmul.f32 %v5094, %v6354
  %v6611 = vmul.f32 %v5096, %v6355
  %v6612 = vmul.f32 %v5098, %v6356
  %v6613 = vmul.f32 %v5100, %v6357
  %v6614 = vmul.f32 %v5102, %v6358
  %v6615 = vmul.f32 %v5104, %v6359
  %v6616 = vmul.f32 %v5106, %v6360
  %v6617 = vmul.f32 %v5108, %v6361
  %v6618 = vmul.f32 %v5110, %v6362
  %v6619 = vmul.f32 %v5112, %v6363
  %v6620 = vmul.f32 %v5114, %v6364
  %v6621 = vmul.f32 %v5116, %v6365
  %v6622 = vmul.f32 %v5118, %v6366
  %v6623 = vmul.f32 %v5120, %v6367
  %v6624 = vmul.f32 %v5122, %v6368
  %v6625 = vmul.f32 %v5124, %v6369
  %v6626 = vmul.f32 %v5126, %v6370
  %v6627 = vmul.f32 %v5128, %v6371
  %v6628 = vmul.f32 %v5130, %v6372
  %v6629 = vmul.f32 %v5132, %v6373
  %v6630 = vmul.f32 %v5134, %v6374
  %v6631 = vmul.f32 %v5136, %v6375
  %v6632 = vmul.f32 %v5138, %v6376
  %v6633 = vmul.f32 %v5140, %v6377
  %v6634 = vmul.f32 %v5142, %v6378
  %v6635 = vmul.f32 %v5144, %v6379
  %v6636 = vmul.f32 %v5146, %v6380
  %v6637 = vmul.f32 %v5148, %v6381
  %v6638 = vmul.f32 %v5150, %v6382
  %v6639 = vmul.f32 %v5152, %v6383
  %v6640 = vmul.f32 %v5154, %v6384
  %v6641 = vmul.f32 %v5156, %v6385
  %v6642 = vmul.f32 %v5158, %v6386
  %v6643 = vmul.f32 %v5160, %v6387
  %v6644 = vmul.f32 %v5162, %v6388
  %v6645 = vmul.f32 %v5164, %v6389
  %v6646 = vmul.f32 %v5166, %v6390
  %v6647 = vmul.f32 %v5168, %v6391
  %v6648 = vmul.f32 %v5170, %v6392
  %v6649 = vmul.f32 %v5172, %v6393
  %v6650 = vmul.f32 %v5174, %v6394
  %v6651 = vmul.f32 %v5176, %v6395
  %v6652 = vmul.f32 %v5178, %v6396
  %v6653 = vmul.f32 %v5180, %v6397
  %v6654 = vmul.f32 %v5182, %v6398
  %v6655 = vmul.f32 %v5184, %v6399
  %v6656 = vmul.f32 %v5186, %v6400
  %v6657 = vmul.f32 %v5188, %v6401
  %v6658 = vmul.f32 %v5190, %v6402
  %v6659 = vmul.f32 %v5192, %v6403
  %v6660 = vmul.f32 %v5194, %v6404
  %v6661 = vmul.f32 %v5196, %v6405
  %v6662 = vmul.f32 %v5198, %v6406
  %v6663 = vmul.f32 %v5200, %v6407
  %v6664 = vmul.f32 %v5202, %v6408
  %v6665 = vmul.f32 %v5204, %v6409
  %v6666 = vmul.f32 %v5206, %v6410
  %v6667 = vmul.f32 %v5208, %v6411
  %v6668 = vmul.f32 %v5210, %v6412
  %v6669 = vmul.f32 %v5212, %v6413
  %v6670 = vmul.f32 %v5214, %v6414
  %v6671 = vmul.f32 %v5216, %v6415
  %v6672 = vmul.f32 %v5218, %v6416
  %v6673 = vmul.f32 %v5220, %v6417
  %v6674 = vmul.f32 %v5222, %v6418
  %v6675 = vmul.f32 %v5224, %v6419
  %v6676 = vmul.f32 %v5226, %v6420
  %v6677 = vmul.f32 %v5228, %v6421
  %v6678 = vmul.f32 %v5230, %v6422
  %v6679 = vmul.f32 %v5232, %v6423
  %v6680 = vmul.f32 %v5234, %v6424
  %v6681 = vmul.f32 %v5236, %v6425
  %v6682 = vmul.f32 %v5238, %v6426
  %v6683 = vmul.f32 %v5240, %v6427
  %v6684 = vmul.f32 %v5242, %v6428
  %v6685 = vmul.f32 %v5244, %v6429
  %v6686 = vmul.f32 %v5246, %v6430
  %v6687 = vmul.f32 %v5248, %v6431
  %v6688 = vmul.f32 %v5250, %v6432
  %v6689 = vmul.f32 %v5252, %v6433
  %v6690 = vmul.f32 %v5254, %v6434
  %v6691 = vmul.f32 %v5256, %v6435
  %v6692 = vmul.f32 %v5258, %v6436
  %v6693 = vmul.f32 %v5260, %v6437
  %v6694 = vmul.f32 %v5262, %v6438
  %v6695 = vmul.f32 %v5264, %v6439
  %v6696 = vmul.f32 %v5266, %v6440
  %v6697 = vmul.f32 %v5268, %v6441
  %v6698 = vmul.f32 %v5270, %v6442
  %v6699 = vmul.f32 %v5272, %v6443
  %v6700 = vmul.f32 %v5274, %v6444
  %v6701 = vmul.f32 %v5276, %v6445
  %v6702 = vmul.f32 %v5278, %v6446
  %v6703 = vmul.f32 %v5280, %v6447
  %v6704 = vmul.f32 %v5282, %v6448
  %v6705 = vmul.f32 %v5284, %v6449
  %v6706 = vmul.f32 %v5286, %v6450
  %v6707 = vmul.f32 %v5288, %v6451
  %v6708 = vmul.f32 %v5290, %v6452
  %v6709 = vmul.f32 %v5292, %v6453
  %v6710 = vmul.f32 %v5294, %v6454
  %v6711 = vmul.f32 %v5296, %v6455
  %v6712 = vmul.f32 %v5298, %v6456
  %v6713 = vmul.f32 %v5300, %v6457
  %v6714 = vmul.f32 %v5302, %v6458
  %v6715 = vmul.f32 %v5304, %v6459
  %v6716 = vmul.f32 %v5306, %v6460
  %v6717 = vmul.f32 %v5308, %v6461
  %v6718 = vmul.f32 %v5310, %v6462
  %v6719 = vmul.f32 %v5312, %v6463
  %v6720 = vmul.f32 %v5314, %v6464
  %v6721 = vmul.f32 %v5316, %v6465
  %v6722 = vmul.f32 %v5318, %v6466
  %v6723 = vmul.f32 %v5320, %v6467
  %v6724 = vmul.f32 %v5322, %v6468
  %v6725 = vmul.f32 %v5324, %v6469
  %v6726 = vmul.f32 %v5326, %v6470
  %v6727 = vmul.f32 %v5328, %v6471
  %v6728 = vmul.f32 %v5330, %v6472
  %v6729 = vmul.f32 %v5332, %v6473
  %v6730 = vmul.f32 %v5334, %v6474
  %v6731 = vmul.f32 %v5336, %v6475
  %v6732 = vmul.f32 %v5338, %v6476
  %v6733 = vmul.f32 %v5340, %v6477
  %v6734 = vmul.f32 %v5342, %v6478
  %v6735 = vmul.f32 %v5344, %v6479
  %v6736 = vmul.f32 %v5346, %v6480
  %v6737 = vmul.f32 %v5348, %v6481
  %v6738 = vmul.f32 %v5350, %v6482
  %v6739 = vmul.f32 %v5352, %v6483
  %v6740 = vmul.f32 %v5354, %v6484
  %v6741 = vmul.f32 %v5356, %v6485
  %v6742 = vmul.f32 %v5358, %v6486
  %v6743 = vmul.f32 %v5360, %v6487
  %v6744 = vmul.f32 %v5362, %v6488
  %v6745 = vmul.f32 %v5364, %v6489
  %v6746 = vmul.f32 %v5366, %v6490
  %v6747 = vmul.f32 %v5368, %v6491
  %v6748 = vmul.f32 %v5370, %v6492
  %v6749 = vmul.f32 %v5372, %v6493
  %v6750 = vmul.f32 %v5374, %v6494
  %v6751 = vmul.f32 %v5376, %v6495
  %v6752 = vmul.f32 %v5378, %v6496
  %v6753 = vmul.f32 %v5380, %v6497
  %v6754 = vmul.f32 %v5382, %v6498
  %v6755 = vmul.f32 %v5384, %v6499
  %v6756 = vmul.f32 %v5386, %v6500
  %v6757 = vmul.f32 %v5388, %v6501
  %v6758 = vmul.f32 %v5390, %v6502
  %v6759 = vmul.f32 %v5392, %v6503
  %v6760 = vmul.f32 %v5394, %v6504
  %v6761 = vmul.f32 %v5396, %v6505
  %v6762 = vmul.f32 %v5398, %v6506
  %v6763 = vmul.f32 %v5400, %v6507
  %v6764 = vmul.f32 %v5402, %v6508
  %v6765 = vmul.f32 %v5404, %v6509
  %v6766 = vmul.f32 %v5406, %v6510
  %v6767 = vmul.f32 %v5408, %v6511
  %v6768 = vmul.f32 %v5410, %v6512
  %v6769 = vmul.f32 %v5412, %v6513
  %v6770 = vmul.f32 %v5414, %v6514
  %v6771 = vmul.f32 %v5416, %v6515
  %v6772 = vmul.f32 %v5418, %v6516
  %v6773 = vmul.f32 %v5420, %v6517
  %v6774 = vmul.f32 %v5422, %v6518
  %v6775 = vmul.f32 %v5424, %v6519
  %v6776 = vmul.f32 %v5426, %v6520
  %v6777 = vmul.f32 %v5428, %v6521
  %v6778 = vmul.f32 %v5430, %v6522
  %v6779 = vmul.f32 %v5432, %v6523
  %v6780 = vmul.f32 %v5434, %v6524
  %v6781 = vmul.f32 %v5436, %v6525
  %v6782 = vmul.f32 %v5438, %v6526
  %v6783 = vmul.f32 %v5440, %v6527
  %v6784 = vmul.f32 %v5442, %v6528
  %v6785 = vmul.f32 %v5444, %v6529
  %v6786 = vmul.f32 %v5446, %v6530
  %v6787 = vmul.f32 %v5448, %v6531
  %v6788 = vmul.f32 %v5450, %v6532
  %v6789 = vmul.f32 %v5452, %v6533
  %v6790 = vmul.f32 %v5454, %v6534
  %v6791 = vmul.f32 %v5456, %v6535
  %v6792 = vmul.f32 %v5458, %v6536
  %v6793 = vmul.f32 %v5460, %v6537
  %v6794 = vmul.f32 %v5462, %v6538
  %v6795 = vmul.f32 %v5464, %v6539
  %v6796 = vmul.f32 %v5466, %v6540
  %v6797 = vmul.f32 %v5468, %v6541
  %v6798 = vmul.f32 %v5470, %v6542
  %v6799 = vmul.f32 %v5472, %v6543
  %v6800 = vmul.f32 %v5474, %v6544
  %v6801 = vmul.f32 %v5476, %v6545
  %v6802 = vmul.f32 %v5478, %v6546
  %v6803 = vmul.f32 %v5480, %v6547
  %v6804 = vmul.f32 %v5482, %v6548
  %v6805 = vmul.f32 %v5484, %v6549
  %v6806 = vmul.f32 %v5486, %v6550
  %v6807 = vmul.f32 %v5488, %v6551
  %v6808 = vmul.f32 %v5490, %v6552
  %v6809 = vmul.f32 %v5492, %v6553
  %v6810 = vmul.f32 %v5494, %v6554
  %v6811 = vmul.f32 %v5496, %v6555
  %v6812 = vmul.f32 %v5498, %v6556
  %v6813 = vmul.f32 %v5500, %v6557
  %v6814 = vmul.f32 %v5502, %v6558
  %v6815 = vmul.f32 %v5504, %v6559
  %v6816 = vmul.f32 %v5506, %v6560
  %v6817 = vmul.f32 %v5508, %v6561
  %v6818 = vmul.f32 %v5510, %v6562
  %v6819 = vmul.f32 %v5512, %v6563
  %v6820 = vmul.f32 %v5514, %v6564
  %v6821 = vmul.f32 %v5516, %v6565
  %v6822 = vmul.f32 %v5518, %v6566
  %v6823 = vmul.f32 %v5520, %v6567
  %v6824 = vmul.f32 %v5522, %v6568
  %v6825 = vmul.f32 %v5524, %v6569
  %v6826 = vmul.f32 %v5526, %v6570
  %v6827 = vmul.f32 %v5528, %v6571
  %v6828 = vmul.f32 %v5530, %v6572
  %v6829 = vmul.f32 %v5532, %v6573
  %v6830 = vmul.f32 %v5534, %v6574
  %v6831 = vmul.f32 %v5536, %v6575
  %v6832 = vmul.f32 %v5538, %v6576
  %v6833 = vmul.f32 %v5540, %v6577
  %v6834 = vmul.f32 %v5542, %v6578
  %v6835 = vmul.f32 %v5544, %v6579
  %v6836 = vmul.f32 %v5546, %v6580
  %v6837 = vmul.f32 %v5548, %v6581
  %v6838 = vmul.f32 %v5550, %v6582
  %v6839 = vmul.f32 %v5552, %v6583
  %v6840 = vmul.f32 %v5554, %v6584
  %v6841 = vmul.f32 %v5556, %v6585
  %v6842 = vmul.f32 %v5558, %v6586
  %v6843 = vmul.f32 %v5560, %v6587
  %v6844 = vmul.f32 %v5562, %v6588
  %v6845 = vmul.f32 %v5564, %v6589
  %v6846 = vmul.f32 %v5566, %v6590
  %v6847 = vcombine.low %v6591, %v6593
  %v6849 = vunpack.c.l.s4 1983009808
  %v6850 = vunpack.c.0.s8 %v6849
  %v6851 = vlaneseq
  %v6852 = vshrl.u32 %v6851, 7
  %v6853 = vsub.s32 %v6850, %v6852
  %v6854 = vrot.slane %v6847, %v6853
  %v6855 = vcombine.low %v6592, %v6594
  %v6857 = vunpack.c.l.s4 1983009808
  %v6858 = vunpack.c.0.s8 %v6857
  %v6859 = vlaneseq
  %v6860 = vshrl.u32 %v6859, 7
  %v6861 = vsub.s32 %v6858, %v6860
  %v6862 = vrot.slane %v6855, %v6861
  %v6863 = vcombine.low %v6595, %v6597
  %v6865 = vunpack.c.l.s4 1983009808
  %v6866 = vunpack.c.0.s8 %v6865
  %v6867 = vlaneseq
  %v6868 = vshrl.u32 %v6867, 7
  %v6869 = vsub.s32 %v6866, %v6868
  %v6870 = vrot.slane %v6863, %v6869
  %v6871 = vcombine.low %v6596, %v6598
  %v6873 = vunpack.c.l.s4 1983009808
  %v6874 = vunpack.c.0.s8 %v6873
  %v6875 = vlaneseq
  %v6876 = vshrl.u32 %v6875, 7
  %v6877 = vsub.s32 %v6874, %v6876
  %v6878 = vrot.slane %v6871, %v6877
  %v6879 = vcombine.low %v6854, %v6862
  %v6880 = vcombine.high %v6854, %v6862
  %v6882 = vunpack.c.l.s4 1934713408
  %v6883 = vunpack.c.0.s8 %v6882
  %v6884 = vlaneseq
  %v6885 = vshrl.u32 %v6884, 7
  %v6886 = vsub.s32 %v6883, %v6885
  %v6887 = vrot.slane %v6879, %v6886
  %v6889 = vunpack.c.l.s4 1934713408
  %v6890 = vunpack.c.0.s8 %v6889
  %v6891 = vlaneseq
  %v6892 = vshrl.u32 %v6891, 7
  %v6893 = vsub.s32 %v6890, %v6892
  %v6894 = vrot.slane %v6880, %v6893
  %v6895 = vcombine.low %v6870, %v6878
  %v6896 = vcombine.high %v6870, %v6878
  %v6898 = vunpack.c.l.s4 1934713408
  %v6899 = vunpack.c.0.s8 %v6898
  %v6900 = vlaneseq
  %v6901 = vshrl.u32 %v6900, 7
  %v6902 = vsub.s32 %v6899, %v6901
  %v6903 = vrot.slane %v6895, %v6902
  %v6905 = vunpack.c.l.s4 1934713408
  %v6906 = vunpack.c.0.s8 %v6905
  %v6907 = vlaneseq
  %v6908 = vshrl.u32 %v6907, 7
  %v6909 = vsub.s32 %v6906, %v6908
  %v6910 = vrot.slane %v6896, %v6909
  %v6911 = vcombine.low %v6887, %v6903
  %v6912 = vcombine.high %v6887, %v6903
  %v6913 = vcombine.low %v6894, %v6910
  %v6914 = vcombine.high %v6894, %v6910
  %v6915 = vcombine.low %v6599, %v6601
  %v6917 = vunpack.c.l.s4 1983009808
  %v6918 = vunpack.c.0.s8 %v6917
  %v6919 = vlaneseq
  %v6920 = vshrl.u32 %v6919, 7
  %v6921 = vsub.s32 %v6918, %v6920
  %v6922 = vrot.slane %v6915, %v6921
  %v6923 = vcombine.low %v6600, %v6602
  %v6925 = vunpack.c.l.s4 1983009808
  %v6926 = vunpack.c.0.s8 %v6925
  %v6927 = vlaneseq
  %v6928 = vshrl.u32 %v6927, 7
  %v6929 = vsub.s32 %v6926, %v6928
  %v6930 = vrot.slane %v6923, %v6929
  %v6931 = vcombine.low %v6603, %v6605
  %v6933 = vunpack.c.l.s4 1983009808
  %v6934 = vunpack.c.0.s8 %v6933
  %v6935 = vlaneseq
  %v6936 = vshrl.u32 %v6935, 7
  %v6937 = vsub.s32 %v6934, %v6936
  %v6938 = vrot.slane %v6931, %v6937
  %v6939 = vcombine.low %v6604, %v6606
  %v6941 = vunpack.c.l.s4 1983009808
  %v6942 = vunpack.c.0.s8 %v6941
  %v6943 = vlaneseq
  %v6944 = vshrl.u32 %v6943, 7
  %v6945 = vsub.s32 %v6942, %v6944
  %v6946 = vrot.slane %v6939, %v6945
  %v6947 = vcombine.low %v6922, %v6930
  %v6948 = vcombine.high %v6922, %v6930
  %v6950 = vunpack.c.l.s4 1934713408
  %v6951 = vunpack.c.0.s8 %v6950
  %v6952 = vlaneseq
  %v6953 = vshrl.u32 %v6952, 7
  %v6954 = vsub.s32 %v6951, %v6953
  %v6955 = vrot.slane %v6947, %v6954
  %v6957 = vunpack.c.l.s4 1934713408
  %v6958 = vunpack.c.0.s8 %v6957
  %v6959 = vlaneseq
  %v6960 = vshrl.u32 %v6959, 7
  %v6961 = vsub.s32 %v6958, %v6960
  %v6962 = vrot.slane %v6948, %v6961
  %v6963 = vcombine.low %v6938, %v6946
  %v6964 = vcombine.high %v6938, %v6946
  %v6966 = vunpack.c.l.s4 1934713408
  %v6967 = vunpack.c.0.s8 %v6966
  %v6968 = vlaneseq
  %v6969 = vshrl.u32 %v6968, 7
  %v6970 = vsub.s32 %v6967, %v6969
  %v6971 = vrot.slane %v6963, %v6970
  %v6973 = vunpack.c.l.s4 1934713408
  %v6974 = vunpack.c.0.s8 %v6973
  %v6975 = vlaneseq
  %v6976 = vshrl.u32 %v6975, 7
  %v6977 = vsub.s32 %v6974, %v6976
  %v6978 = vrot.slane %v6964, %v6977
  %v6979 = vcombine.low %v6955, %v6971
  %v6980 = vcombine.high %v6955, %v6971
  %v6981 = vcombine.low %v6962, %v6978
  %v6982 = vcombine.high %v6962, %v6978
  %v6983 = vcombine.low %v6607, %v6609
  %v6985 = vunpack.c.l.s4 1983009808
  %v6986 = vunpack.c.0.s8 %v6985
  %v6987 = vlaneseq
  %v6988 = vshrl.u32 %v6987, 7
  %v6989 = vsub.s32 %v6986, %v6988
  %v6990 = vrot.slane %v6983, %v6989
  %v6991 = vcombine.low %v6608, %v6610
  %v6993 = vunpack.c.l.s4 1983009808
  %v6994 = vunpack.c.0.s8 %v6993
  %v6995 = vlaneseq
  %v6996 = vshrl.u32 %v6995, 7
  %v6997 = vsub.s32 %v6994, %v6996
  %v6998 = vrot.slane %v6991, %v6997
  %v6999 = vcombine.low %v6611, %v6613
  %v7001 = vunpack.c.l.s4 1983009808
  %v7002 = vunpack.c.0.s8 %v7001
  %v7003 = vlaneseq
  %v7004 = vshrl.u32 %v7003, 7
  %v7005 = vsub.s32 %v7002, %v7004
  %v7006 = vrot.slane %v6999, %v7005
  %v7007 = vcombine.low %v6612, %v6614
  %v7009 = vunpack.c.l.s4 1983009808
  %v7010 = vunpack.c.0.s8 %v7009
  %v7011 = vlaneseq
  %v7012 = vshrl.u32 %v7011, 7
  %v7013 = vsub.s32 %v7010, %v7012
  %v7014 = vrot.slane %v7007, %v7013
  %v7015 = vcombine.low %v6990, %v6998
  %v7016 = vcombine.high %v6990, %v6998
  %v7018 = vunpack.c.l.s4 1934713408
  %v7019 = vunpack.c.0.s8 %v7018
  %v7020 = vlaneseq
  %v7021 = vshrl.u32 %v7020, 7
  %v7022 = vsub.s32 %v7019, %v7021
  %v7023 = vrot.slane %v7015, %v7022
  %v7025 = vunpack.c.l.s4 1934713408
  %v7026 = vunpack.c.0.s8 %v7025
  %v7027 = vlaneseq
  %v7028 = vshrl.u32 %v7027, 7
  %v7029 = vsub.s32 %v7026, %v7028
  %v7030 = vrot.slane %v7016, %v7029
  %v7031 = vcombine.low %v7006, %v7014
  %v7032 = vcombine.high %v7006, %v7014
  %v7034 = vunpack.c.l.s4 1934713408
  %v7035 = vunpack.c.0.s8 %v7034
  %v7036 = vlaneseq
  %v7037 = vshrl.u32 %v7036, 7
  %v7038 = vsub.s32 %v7035, %v7037
  %v7039 = vrot.slane %v7031, %v7038
  %v7041 = vunpack.c.l.s4 1934713408
  %v7042 = vunpack.c.0.s8 %v7041
  %v7043 = vlaneseq
  %v7044 = vshrl.u32 %v7043, 7
  %v7045 = vsub.s32 %v7042, %v7044
  %v7046 = vrot.slane %v7032, %v7045
  %v7047 = vcombine.low %v7023, %v7039
  %v7048 = vcombine.high %v7023, %v7039
  %v7049 = vcombine.low %v7030, %v7046
  %v7050 = vcombine.high %v7030, %v7046
  %v7051 = vcombine.low %v6615, %v6617
  %v7053 = vunpack.c.l.s4 1983009808
  %v7054 = vunpack.c.0.s8 %v7053
  %v7055 = vlaneseq
  %v7056 = vshrl.u32 %v7055, 7
  %v7057 = vsub.s32 %v7054, %v7056
  %v7058 = vrot.slane %v7051, %v7057
  %v7059 = vcombine.low %v6616, %v6618
  %v7061 = vunpack.c.l.s4 1983009808
  %v7062 = vunpack.c.0.s8 %v7061
  %v7063 = vlaneseq
  %v7064 = vshrl.u32 %v7063, 7
  %v7065 = vsub.s32 %v7062, %v7064
  %v7066 = vrot.slane %v7059, %v7065
  %v7067 = vcombine.low %v6619, %v6621
  %v7069 = vunpack.c.l.s4 1983009808
  %v7070 = vunpack.c.0.s8 %v7069
  %v7071 = vlaneseq
  %v7072 = vshrl.u32 %v7071, 7
  %v7073 = vsub.s32 %v7070, %v7072
  %v7074 = vrot.slane %v7067, %v7073
  %v7075 = vcombine.low %v6620, %v6622
  %v7077 = vunpack.c.l.s4 1983009808
  %v7078 = vunpack.c.0.s8 %v7077
  %v7079 = vlaneseq
  %v7080 = vshrl.u32 %v7079, 7
  %v7081 = vsub.s32 %v7078, %v7080
  %v7082 = vrot.slane %v7075, %v7081
  %v7083 = vcombine.low %v7058, %v7066
  %v7084 = vcombine.high %v7058, %v7066
  %v7086 = vunpack.c.l.s4 1934713408
  %v7087 = vunpack.c.0.s8 %v7086
  %v7088 = vlaneseq
  %v7089 = vshrl.u32 %v7088, 7
  %v7090 = vsub.s32 %v7087, %v7089
  %v7091 = vrot.slane %v7083, %v7090
  %v7093 = vunpack.c.l.s4 1934713408
  %v7094 = vunpack.c.0.s8 %v7093
  %v7095 = vlaneseq
  %v7096 = vshrl.u32 %v7095, 7
  %v7097 = vsub.s32 %v7094, %v7096
  %v7098 = vrot.slane %v7084, %v7097
  %v7099 = vcombine.low %v7074, %v7082
  %v7100 = vcombine.high %v7074, %v7082
  %v7102 = vunpack.c.l.s4 1934713408
  %v7103 = vunpack.c.0.s8 %v7102
  %v7104 = vlaneseq
  %v7105 = vshrl.u32 %v7104, 7
  %v7106 = vsub.s32 %v7103, %v7105
  %v7107 = vrot.slane %v7099, %v7106
  %v7109 = vunpack.c.l.s4 1934713408
  %v7110 = vunpack.c.0.s8 %v7109
  %v7111 = vlaneseq
  %v7112 = vshrl.u32 %v7111, 7
  %v7113 = vsub.s32 %v7110, %v7112
  %v7114 = vrot.slane %v7100, %v7113
  %v7115 = vcombine.low %v7091, %v7107
  %v7116 = vcombine.high %v7091, %v7107
  %v7117 = vcombine.low %v7098, %v7114
  %v7118 = vcombine.high %v7098, %v7114
  %v7119 = vcombine.low %v6623, %v6625
  %v7121 = vunpack.c.l.s4 1983009808
  %v7122 = vunpack.c.0.s8 %v7121
  %v7123 = vlaneseq
  %v7124 = vshrl.u32 %v7123, 7
  %v7125 = vsub.s32 %v7122, %v7124
  %v7126 = vrot.slane %v7119, %v7125
  %v7127 = vcombine.low %v6624, %v6626
  %v7129 = vunpack.c.l.s4 1983009808
  %v7130 = vunpack.c.0.s8 %v7129
  %v7131 = vlaneseq
  %v7132 = vshrl.u32 %v7131, 7
  %v7133 = vsub.s32 %v7130, %v7132
  %v7134 = vrot.slane %v7127, %v7133
  %v7135 = vcombine.low %v6627, %v6629
  %v7137 = vunpack.c.l.s4 1983009808
  %v7138 = vunpack.c.0.s8 %v7137
  %v7139 = vlaneseq
  %v7140 = vshrl.u32 %v7139, 7
  %v7141 = vsub.s32 %v7138, %v7140
  %v7142 = vrot.slane %v7135, %v7141
  %v7143 = vcombine.low %v6628, %v6630
  %v7145 = vunpack.c.l.s4 1983009808
  %v7146 = vunpack.c.0.s8 %v7145
  %v7147 = vlaneseq
  %v7148 = vshrl.u32 %v7147, 7
  %v7149 = vsub.s32 %v7146, %v7148
  %v7150 = vrot.slane %v7143, %v7149
  %v7151 = vcombine.low %v7126, %v7134
  %v7152 = vcombine.high %v7126, %v7134
  %v7154 = vunpack.c.l.s4 1934713408
  %v7155 = vunpack.c.0.s8 %v7154
  %v7156 = vlaneseq
  %v7157 = vshrl.u32 %v7156, 7
  %v7158 = vsub.s32 %v7155, %v7157
  %v7159 = vrot.slane %v7151, %v7158
  %v7161 = vunpack.c.l.s4 1934713408
  %v7162 = vunpack.c.0.s8 %v7161
  %v7163 = vlaneseq
  %v7164 = vshrl.u32 %v7163, 7
  %v7165 = vsub.s32 %v7162, %v7164
  %v7166 = vrot.slane %v7152, %v7165
  %v7167 = vcombine.low %v7142, %v7150
  %v7168 = vcombine.high %v7142, %v7150
  %v7170 = vunpack.c.l.s4 1934713408
  %v7171 = vunpack.c.0.s8 %v7170
  %v7172 = vlaneseq
  %v7173 = vshrl.u32 %v7172, 7
  %v7174 = vsub.s32 %v7171, %v7173
  %v7175 = vrot.slane %v7167, %v7174
  %v7177 = vunpack.c.l.s4 1934713408
  %v7178 = vunpack.c.0.s8 %v7177
  %v7179 = vlaneseq
  %v7180 = vshrl.u32 %v7179, 7
  %v7181 = vsub.s32 %v7178, %v7180
  %v7182 = vrot.slane %v7168, %v7181
  %v7183 = vcombine.low %v7159, %v7175
  %v7184 = vcombine.high %v7159, %v7175
  %v7185 = vcombine.low %v7166, %v7182
  %v7186 = vcombine.high %v7166, %v7182
  %v7187 = vcombine.low %v6631, %v6633
  %v7189 = vunpack.c.l.s4 1983009808
  %v7190 = vunpack.c.0.s8 %v7189
  %v7191 = vlaneseq
  %v7192 = vshrl.u32 %v7191, 7
  %v7193 = vsub.s32 %v7190, %v7192
  %v7194 = vrot.slane %v7187, %v7193
  %v7195 = vcombine.low %v6632, %v6634
  %v7197 = vunpack.c.l.s4 1983009808
  %v7198 = vunpack.c.0.s8 %v7197
  %v7199 = vlaneseq
  %v7200 = vshrl.u32 %v7199, 7
  %v7201 = vsub.s32 %v7198, %v7200
  %v7202 = vrot.slane %v7195, %v7201
  %v7203 = vcombine.low %v6635, %v6637
  %v7205 = vunpack.c.l.s4 1983009808
  %v7206 = vunpack.c.0.s8 %v7205
  %v7207 = vlaneseq
  %v7208 = vshrl.u32 %v7207, 7
  %v7209 = vsub.s32 %v7206, %v7208
  %v7210 = vrot.slane %v7203, %v7209
  %v7211 = vcombine.low %v6636, %v6638
  %v7213 = vunpack.c.l.s4 1983009808
  %v7214 = vunpack.c.0.s8 %v7213
  %v7215 = vlaneseq
  %v7216 = vshrl.u32 %v7215, 7
  %v7217 = vsub.s32 %v7214, %v7216
  %v7218 = vrot.slane %v7211, %v7217
  %v7219 = vcombine.low %v7194, %v7202
  %v7220 = vcombine.high %v7194, %v7202
  %v7222 = vunpack.c.l.s4 1934713408
  %v7223 = vunpack.c.0.s8 %v7222
  %v7224 = vlaneseq
  %v7225 = vshrl.u32 %v7224, 7
  %v7226 = vsub.s32 %v7223, %v7225
  %v7227 = vrot.slane %v7219, %v7226
  %v7229 = vunpack.c.l.s4 1934713408
  %v7230 = vunpack.c.0.s8 %v7229
  %v7231 = vlaneseq
  %v7232 = vshrl.u32 %v7231, 7
  %v7233 = vsub.s32 %v7230, %v7232
  %v7234 = vrot.slane %v7220, %v7233
  %v7235 = vcombine.low %v7210, %v7218
  %v7236 = vcombine.high %v7210, %v7218
  %v7238 = vunpack.c.l.s4 1934713408
  %v7239 = vunpack.c.0.s8 %v7238
  %v7240 = vlaneseq
  %v7241 = vshrl.u32 %v7240, 7
  %v7242 = vsub.s32 %v7239, %v7241
  %v7243 = vrot.slane %v7235, %v7242
  %v7245 = vunpack.c.l.s4 1934713408
  %v7246 = vunpack.c.0.s8 %v7245
  %v7247 = vlaneseq
  %v7248 = vshrl.u32 %v7247, 7
  %v7249 = vsub.s32 %v7246, %v7248
  %v7250 = vrot.slane %v7236, %v7249
  %v7251 = vcombine.low %v7227, %v7243
  %v7252 = vcombine.high %v7227, %v7243
  %v7253 = vcombine.low %v7234, %v7250
  %v7254 = vcombine.high %v7234, %v7250
  %v7255 = vcombine.low %v6639, %v6641
  %v7257 = vunpack.c.l.s4 1983009808
  %v7258 = vunpack.c.0.s8 %v7257
  %v7259 = vlaneseq
  %v7260 = vshrl.u32 %v7259, 7
  %v7261 = vsub.s32 %v7258, %v7260
  %v7262 = vrot.slane %v7255, %v7261
  %v7263 = vcombine.low %v6640, %v6642
  %v7265 = vunpack.c.l.s4 1983009808
  %v7266 = vunpack.c.0.s8 %v7265
  %v7267 = vlaneseq
  %v7268 = vshrl.u32 %v7267, 7
  %v7269 = vsub.s32 %v7266, %v7268
  %v7270 = vrot.slane %v7263, %v7269
  %v7271 = vcombine.low %v6643, %v6645
  %v7273 = vunpack.c.l.s4 1983009808
  %v7274 = vunpack.c.0.s8 %v7273
  %v7275 = vlaneseq
  %v7276 = vshrl.u32 %v7275, 7
  %v7277 = vsub.s32 %v7274, %v7276
  %v7278 = vrot.slane %v7271, %v7277
  %v7279 = vcombine.low %v6644, %v6646
  %v7281 = vunpack.c.l.s4 1983009808
  %v7282 = vunpack.c.0.s8 %v7281
  %v7283 = vlaneseq
  %v7284 = vshrl.u32 %v7283, 7
  %v7285 = vsub.s32 %v7282, %v7284
  %v7286 = vrot.slane %v7279, %v7285
  %v7287 = vcombine.low %v7262, %v7270
  %v7288 = vcombine.high %v7262, %v7270
  %v7290 = vunpack.c.l.s4 1934713408
  %v7291 = vunpack.c.0.s8 %v7290
  %v7292 = vlaneseq
  %v7293 = vshrl.u32 %v7292, 7
  %v7294 = vsub.s32 %v7291, %v7293
  %v7295 = vrot.slane %v7287, %v7294
  %v7297 = vunpack.c.l.s4 1934713408
  %v7298 = vunpack.c.0.s8 %v7297
  %v7299 = vlaneseq
  %v7300 = vshrl.u32 %v7299, 7
  %v7301 = vsub.s32 %v7298, %v7300
  %v7302 = vrot.slane %v7288, %v7301
  %v7303 = vcombine.low %v7278, %v7286
  %v7304 = vcombine.high %v7278, %v7286
  %v7306 = vunpack.c.l.s4 1934713408
  %v7307 = vunpack.c.0.s8 %v7306
  %v7308 = vlaneseq
  %v7309 = vshrl.u32 %v7308, 7
  %v7310 = vsub.s32 %v7307, %v7309
  %v7311 = vrot.slane %v7303, %v7310
  %v7313 = vunpack.c.l.s4 1934713408
  %v7314 = vunpack.c.0.s8 %v7313
  %v7315 = vlaneseq
  %v7316 = vshrl.u32 %v7315, 7
  %v7317 = vsub.s32 %v7314, %v7316
  %v7318 = vrot.slane %v7304, %v7317
  %v7319 = vcombine.low %v7295, %v7311
  %v7320 = vcombine.high %v7295, %v7311
  %v7321 = vcombine.low %v7302, %v7318
  %v7322 = vcombine.high %v7302, %v7318
  %v7323 = vcombine.low %v6647, %v6649
  %v7325 = vunpack.c.l.s4 1983009808
  %v7326 = vunpack.c.0.s8 %v7325
  %v7327 = vlaneseq
  %v7328 = vshrl.u32 %v7327, 7
  %v7329 = vsub.s32 %v7326, %v7328
  %v7330 = vrot.slane %v7323, %v7329
  %v7331 = vcombine.low %v6648, %v6650
  %v7333 = vunpack.c.l.s4 1983009808
  %v7334 = vunpack.c.0.s8 %v7333
  %v7335 = vlaneseq
  %v7336 = vshrl.u32 %v7335, 7
  %v7337 = vsub.s32 %v7334, %v7336
  %v7338 = vrot.slane %v7331, %v7337
  %v7339 = vcombine.low %v6651, %v6653
  %v7341 = vunpack.c.l.s4 1983009808
  %v7342 = vunpack.c.0.s8 %v7341
  %v7343 = vlaneseq
  %v7344 = vshrl.u32 %v7343, 7
  %v7345 = vsub.s32 %v7342, %v7344
  %v7346 = vrot.slane %v7339, %v7345
  %v7347 = vcombine.low %v6652, %v6654
  %v7349 = vunpack.c.l.s4 1983009808
  %v7350 = vunpack.c.0.s8 %v7349
  %v7351 = vlaneseq
  %v7352 = vshrl.u32 %v7351, 7
  %v7353 = vsub.s32 %v7350, %v7352
  %v7354 = vrot.slane %v7347, %v7353
  %v7355 = vcombine.low %v7330, %v7338
  %v7356 = vcombine.high %v7330, %v7338
  %v7358 = vunpack.c.l.s4 1934713408
  %v7359 = vunpack.c.0.s8 %v7358
  %v7360 = vlaneseq
  %v7361 = vshrl.u32 %v7360, 7
  %v7362 = vsub.s32 %v7359, %v7361
  %v7363 = vrot.slane %v7355, %v7362
  %v7365 = vunpack.c.l.s4 1934713408
  %v7366 = vunpack.c.0.s8 %v7365
  %v7367 = vlaneseq
  %v7368 = vshrl.u32 %v7367, 7
  %v7369 = vsub.s32 %v7366, %v7368
  %v7370 = vrot.slane %v7356, %v7369
  %v7371 = vcombine.low %v7346, %v7354
  %v7372 = vcombine.high %v7346, %v7354
  %v7374 = vunpack.c.l.s4 1934713408
  %v7375 = vunpack.c.0.s8 %v7374
  %v7376 = vlaneseq
  %v7377 = vshrl.u32 %v7376, 7
  %v7378 = vsub.s32 %v7375, %v7377
  %v7379 = vrot.slane %v7371, %v7378
  %v7381 = vunpack.c.l.s4 1934713408
  %v7382 = vunpack.c.0.s8 %v7381
  %v7383 = vlaneseq
  %v7384 = vshrl.u32 %v7383, 7
  %v7385 = vsub.s32 %v7382, %v7384
  %v7386 = vrot.slane %v7372, %v7385
  %v7387 = vcombine.low %v7363, %v7379
  %v7388 = vcombine.high %v7363, %v7379
  %v7389 = vcombine.low %v7370, %v7386
  %v7390 = vcombine.high %v7370, %v7386
  %v7391 = vcombine.low %v6655, %v6657
  %v7393 = vunpack.c.l.s4 1983009808
  %v7394 = vunpack.c.0.s8 %v7393
  %v7395 = vlaneseq
  %v7396 = vshrl.u32 %v7395, 7
  %v7397 = vsub.s32 %v7394, %v7396
  %v7398 = vrot.slane %v7391, %v7397
  %v7399 = vcombine.low %v6656, %v6658
  %v7401 = vunpack.c.l.s4 1983009808
  %v7402 = vunpack.c.0.s8 %v7401
  %v7403 = vlaneseq
  %v7404 = vshrl.u32 %v7403, 7
  %v7405 = vsub.s32 %v7402, %v7404
  %v7406 = vrot.slane %v7399, %v7405
  %v7407 = vcombine.low %v6659, %v6661
  %v7409 = vunpack.c.l.s4 1983009808
  %v7410 = vunpack.c.0.s8 %v7409
  %v7411 = vlaneseq
  %v7412 = vshrl.u32 %v7411, 7
  %v7413 = vsub.s32 %v7410, %v7412
  %v7414 = vrot.slane %v7407, %v7413
  %v7415 = vcombine.low %v6660, %v6662
  %v7417 = vunpack.c.l.s4 1983009808
  %v7418 = vunpack.c.0.s8 %v7417
  %v7419 = vlaneseq
  %v7420 = vshrl.u32 %v7419, 7
  %v7421 = vsub.s32 %v7418, %v7420
  %v7422 = vrot.slane %v7415, %v7421
  %v7423 = vcombine.low %v7398, %v7406
  %v7424 = vcombine.high %v7398, %v7406
  %v7426 = vunpack.c.l.s4 1934713408
  %v7427 = vunpack.c.0.s8 %v7426
  %v7428 = vlaneseq
  %v7429 = vshrl.u32 %v7428, 7
  %v7430 = vsub.s32 %v7427, %v7429
  %v7431 = vrot.slane %v7423, %v7430
  %v7433 = vunpack.c.l.s4 1934713408
  %v7434 = vunpack.c.0.s8 %v7433
  %v7435 = vlaneseq
  %v7436 = vshrl.u32 %v7435, 7
  %v7437 = vsub.s32 %v7434, %v7436
  %v7438 = vrot.slane %v7424, %v7437
  %v7439 = vcombine.low %v7414, %v7422
  %v7440 = vcombine.high %v7414, %v7422
  %v7442 = vunpack.c.l.s4 1934713408
  %v7443 = vunpack.c.0.s8 %v7442
  %v7444 = vlaneseq
  %v7445 = vshrl.u32 %v7444, 7
  %v7446 = vsub.s32 %v7443, %v7445
  %v7447 = vrot.slane %v7439, %v7446
  %v7449 = vunpack.c.l.s4 1934713408
  %v7450 = vunpack.c.0.s8 %v7449
  %v7451 = vlaneseq
  %v7452 = vshrl.u32 %v7451, 7
  %v7453 = vsub.s32 %v7450, %v7452
  %v7454 = vrot.slane %v7440, %v7453
  %v7455 = vcombine.low %v7431, %v7447
  %v7456 = vcombine.high %v7431, %v7447
  %v7457 = vcombine.low %v7438, %v7454
  %v7458 = vcombine.high %v7438, %v7454
  %v7459 = vcombine.low %v6663, %v6665
  %v7461 = vunpack.c.l.s4 1983009808
  %v7462 = vunpack.c.0.s8 %v7461
  %v7463 = vlaneseq
  %v7464 = vshrl.u32 %v7463, 7
  %v7465 = vsub.s32 %v7462, %v7464
  %v7466 = vrot.slane %v7459, %v7465
  %v7467 = vcombine.low %v6664, %v6666
  %v7469 = vunpack.c.l.s4 1983009808
  %v7470 = vunpack.c.0.s8 %v7469
  %v7471 = vlaneseq
  %v7472 = vshrl.u32 %v7471, 7
  %v7473 = vsub.s32 %v7470, %v7472
  %v7474 = vrot.slane %v7467, %v7473
  %v7475 = vcombine.low %v6667, %v6669
  %v7477 = vunpack.c.l.s4 1983009808
  %v7478 = vunpack.c.0.s8 %v7477
  %v7479 = vlaneseq
  %v7480 = vshrl.u32 %v7479, 7
  %v7481 = vsub.s32 %v7478, %v7480
  %v7482 = vrot.slane %v7475, %v7481
  %v7483 = vcombine.low %v6668, %v6670
  %v7485 = vunpack.c.l.s4 1983009808
  %v7486 = vunpack.c.0.s8 %v7485
  %v7487 = vlaneseq
  %v7488 = vshrl.u32 %v7487, 7
  %v7489 = vsub.s32 %v7486, %v7488
  %v7490 = vrot.slane %v7483, %v7489
  %v7491 = vcombine.low %v7466, %v7474
  %v7492 = vcombine.high %v7466, %v7474
  %v7494 = vunpack.c.l.s4 1934713408
  %v7495 = vunpack.c.0.s8 %v7494
  %v7496 = vlaneseq
  %v7497 = vshrl.u32 %v7496, 7
  %v7498 = vsub.s32 %v7495, %v7497
  %v7499 = vrot.slane %v7491, %v7498
  %v7501 = vunpack.c.l.s4 1934713408
  %v7502 = vunpack.c.0.s8 %v7501
  %v7503 = vlaneseq
  %v7504 = vshrl.u32 %v7503, 7
  %v7505 = vsub.s32 %v7502, %v7504
  %v7506 = vrot.slane %v7492, %v7505
  %v7507 = vcombine.low %v7482, %v7490
  %v7508 = vcombine.high %v7482, %v7490
  %v7510 = vunpack.c.l.s4 1934713408
  %v7511 = vunpack.c.0.s8 %v7510
  %v7512 = vlaneseq
  %v7513 = vshrl.u32 %v7512, 7
  %v7514 = vsub.s32 %v7511, %v7513
  %v7515 = vrot.slane %v7507, %v7514
  %v7517 = vunpack.c.l.s4 1934713408
  %v7518 = vunpack.c.0.s8 %v7517
  %v7519 = vlaneseq
  %v7520 = vshrl.u32 %v7519, 7
  %v7521 = vsub.s32 %v7518, %v7520
  %v7522 = vrot.slane %v7508, %v7521
  %v7523 = vcombine.low %v7499, %v7515
  %v7524 = vcombine.high %v7499, %v7515
  %v7525 = vcombine.low %v7506, %v7522
  %v7526 = vcombine.high %v7506, %v7522
  %v7527 = vcombine.low %v6671, %v6673
  %v7529 = vunpack.c.l.s4 1983009808
  %v7530 = vunpack.c.0.s8 %v7529
  %v7531 = vlaneseq
  %v7532 = vshrl.u32 %v7531, 7
  %v7533 = vsub.s32 %v7530, %v7532
  %v7534 = vrot.slane %v7527, %v7533
  %v7535 = vcombine.low %v6672, %v6674
  %v7537 = vunpack.c.l.s4 1983009808
  %v7538 = vunpack.c.0.s8 %v7537
  %v7539 = vlaneseq
  %v7540 = vshrl.u32 %v7539, 7
  %v7541 = vsub.s32 %v7538, %v7540
  %v7542 = vrot.slane %v7535, %v7541
  %v7543 = vcombine.low %v6675, %v6677
  %v7545 = vunpack.c.l.s4 1983009808
  %v7546 = vunpack.c.0.s8 %v7545
  %v7547 = vlaneseq
  %v7548 = vshrl.u32 %v7547, 7
  %v7549 = vsub.s32 %v7546, %v7548
  %v7550 = vrot.slane %v7543, %v7549
  %v7551 = vcombine.low %v6676, %v6678
  %v7553 = vunpack.c.l.s4 1983009808
  %v7554 = vunpack.c.0.s8 %v7553
  %v7555 = vlaneseq
  %v7556 = vshrl.u32 %v7555, 7
  %v7557 = vsub.s32 %v7554, %v7556
  %v7558 = vrot.slane %v7551, %v7557
  %v7559 = vcombine.low %v7534, %v7542
  %v7560 = vcombine.high %v7534, %v7542
  %v7562 = vunpack.c.l.s4 1934713408
  %v7563 = vunpack.c.0.s8 %v7562
  %v7564 = vlaneseq
  %v7565 = vshrl.u32 %v7564, 7
  %v7566 = vsub.s32 %v7563, %v7565
  %v7567 = vrot.slane %v7559, %v7566
  %v7569 = vunpack.c.l.s4 1934713408
  %v7570 = vunpack.c.0.s8 %v7569
  %v7571 = vlaneseq
  %v7572 = vshrl.u32 %v7571, 7
  %v7573 = vsub.s32 %v7570, %v7572
  %v7574 = vrot.slane %v7560, %v7573
  %v7575 = vcombine.low %v7550, %v7558
  %v7576 = vcombine.high %v7550, %v7558
  %v7578 = vunpack.c.l.s4 1934713408
  %v7579 = vunpack.c.0.s8 %v7578
  %v7580 = vlaneseq
  %v7581 = vshrl.u32 %v7580, 7
  %v7582 = vsub.s32 %v7579, %v7581
  %v7583 = vrot.slane %v7575, %v7582
  %v7585 = vunpack.c.l.s4 1934713408
  %v7586 = vunpack.c.0.s8 %v7585
  %v7587 = vlaneseq
  %v7588 = vshrl.u32 %v7587, 7
  %v7589 = vsub.s32 %v7586, %v7588
  %v7590 = vrot.slane %v7576, %v7589
  %v7591 = vcombine.low %v7567, %v7583
  %v7592 = vcombine.high %v7567, %v7583
  %v7593 = vcombine.low %v7574, %v7590
  %v7594 = vcombine.high %v7574, %v7590
  %v7595 = vcombine.low %v6679, %v6681
  %v7597 = vunpack.c.l.s4 1983009808
  %v7598 = vunpack.c.0.s8 %v7597
  %v7599 = vlaneseq
  %v7600 = vshrl.u32 %v7599, 7
  %v7601 = vsub.s32 %v7598, %v7600
  %v7602 = vrot.slane %v7595, %v7601
  %v7603 = vcombine.low %v6680, %v6682
  %v7605 = vunpack.c.l.s4 1983009808
  %v7606 = vunpack.c.0.s8 %v7605
  %v7607 = vlaneseq
  %v7608 = vshrl.u32 %v7607, 7
  %v7609 = vsub.s32 %v7606, %v7608
  %v7610 = vrot.slane %v7603, %v7609
  %v7611 = vcombine.low %v6683, %v6685
  %v7613 = vunpack.c.l.s4 1983009808
  %v7614 = vunpack.c.0.s8 %v7613
  %v7615 = vlaneseq
  %v7616 = vshrl.u32 %v7615, 7
  %v7617 = vsub.s32 %v7614, %v7616
  %v7618 = vrot.slane %v7611, %v7617
  %v7619 = vcombine.low %v6684, %v6686
  %v7621 = vunpack.c.l.s4 1983009808
  %v7622 = vunpack.c.0.s8 %v7621
  %v7623 = vlaneseq
  %v7624 = vshrl.u32 %v7623, 7
  %v7625 = vsub.s32 %v7622, %v7624
  %v7626 = vrot.slane %v7619, %v7625
  %v7627 = vcombine.low %v7602, %v7610
  %v7628 = vcombine.high %v7602, %v7610
  %v7630 = vunpack.c.l.s4 1934713408
  %v7631 = vunpack.c.0.s8 %v7630
  %v7632 = vlaneseq
  %v7633 = vshrl.u32 %v7632, 7
  %v7634 = vsub.s32 %v7631, %v7633
  %v7635 = vrot.slane %v7627, %v7634
  %v7637 = vunpack.c.l.s4 1934713408
  %v7638 = vunpack.c.0.s8 %v7637
  %v7639 = vlaneseq
  %v7640 = vshrl.u32 %v7639, 7
  %v7641 = vsub.s32 %v7638, %v7640
  %v7642 = vrot.slane %v7628, %v7641
  %v7643 = vcombine.low %v7618, %v7626
  %v7644 = vcombine.high %v7618, %v7626
  %v7646 = vunpack.c.l.s4 1934713408
  %v7647 = vunpack.c.0.s8 %v7646
  %v7648 = vlaneseq
  %v7649 = vshrl.u32 %v7648, 7
  %v7650 = vsub.s32 %v7647, %v7649
  %v7651 = vrot.slane %v7643, %v7650
  %v7653 = vunpack.c.l.s4 1934713408
  %v7654 = vunpack.c.0.s8 %v7653
  %v7655 = vlaneseq
  %v7656 = vshrl.u32 %v7655, 7
  %v7657 = vsub.s32 %v7654, %v7656
  %v7658 = vrot.slane %v7644, %v7657
  %v7659 = vcombine.low %v7635, %v7651
  %v7660 = vcombine.high %v7635, %v7651
  %v7661 = vcombine.low %v7642, %v7658
  %v7662 = vcombine.high %v7642, %v7658
  %v7663 = vcombine.low %v6687, %v6689
  %v7665 = vunpack.c.l.s4 1983009808
  %v7666 = vunpack.c.0.s8 %v7665
  %v7667 = vlaneseq
  %v7668 = vshrl.u32 %v7667, 7
  %v7669 = vsub.s32 %v7666, %v7668
  %v7670 = vrot.slane %v7663, %v7669
  %v7671 = vcombine.low %v6688, %v6690
  %v7673 = vunpack.c.l.s4 1983009808
  %v7674 = vunpack.c.0.s8 %v7673
  %v7675 = vlaneseq
  %v7676 = vshrl.u32 %v7675, 7
  %v7677 = vsub.s32 %v7674, %v7676
  %v7678 = vrot.slane %v7671, %v7677
  %v7679 = vcombine.low %v6691, %v6693
  %v7681 = vunpack.c.l.s4 1983009808
  %v7682 = vunpack.c.0.s8 %v7681
  %v7683 = vlaneseq
  %v7684 = vshrl.u32 %v7683, 7
  %v7685 = vsub.s32 %v7682, %v7684
  %v7686 = vrot.slane %v7679, %v7685
  %v7687 = vcombine.low %v6692, %v6694
  %v7689 = vunpack.c.l.s4 1983009808
  %v7690 = vunpack.c.0.s8 %v7689
  %v7691 = vlaneseq
  %v7692 = vshrl.u32 %v7691, 7
  %v7693 = vsub.s32 %v7690, %v7692
  %v7694 = vrot.slane %v7687, %v7693
  %v7695 = vcombine.low %v7670, %v7678
  %v7696 = vcombine.high %v7670, %v7678
  %v7698 = vunpack.c.l.s4 1934713408
  %v7699 = vunpack.c.0.s8 %v7698
  %v7700 = vlaneseq
  %v7701 = vshrl.u32 %v7700, 7
  %v7702 = vsub.s32 %v7699, %v7701
  %v7703 = vrot.slane %v7695, %v7702
  %v7705 = vunpack.c.l.s4 1934713408
  %v7706 = vunpack.c.0.s8 %v7705
  %v7707 = vlaneseq
  %v7708 = vshrl.u32 %v7707, 7
  %v7709 = vsub.s32 %v7706, %v7708
  %v7710 = vrot.slane %v7696, %v7709
  %v7711 = vcombine.low %v7686, %v7694
  %v7712 = vcombine.high %v7686, %v7694
  %v7714 = vunpack.c.l.s4 1934713408
  %v7715 = vunpack.c.0.s8 %v7714
  %v7716 = vlaneseq
  %v7717 = vshrl.u32 %v7716, 7
  %v7718 = vsub.s32 %v7715, %v7717
  %v7719 = vrot.slane %v7711, %v7718
  %v7721 = vunpack.c.l.s4 1934713408
  %v7722 = vunpack.c.0.s8 %v7721
  %v7723 = vlaneseq
  %v7724 = vshrl.u32 %v7723, 7
  %v7725 = vsub.s32 %v7722, %v7724
  %v7726 = vrot.slane %v7712, %v7725
  %v7727 = vcombine.low %v7703, %v7719
  %v7728 = vcombine.high %v7703, %v7719
  %v7729 = vcombine.low %v7710, %v7726
  %v7730 = vcombine.high %v7710, %v7726
  %v7731 = vcombine.low %v6695, %v6697
  %v7733 = vunpack.c.l.s4 1983009808
  %v7734 = vunpack.c.0.s8 %v7733
  %v7735 = vlaneseq
  %v7736 = vshrl.u32 %v7735, 7
  %v7737 = vsub.s32 %v7734, %v7736
  %v7738 = vrot.slane %v7731, %v7737
  %v7739 = vcombine.low %v6696, %v6698
  %v7741 = vunpack.c.l.s4 1983009808
  %v7742 = vunpack.c.0.s8 %v7741
  %v7743 = vlaneseq
  %v7744 = vshrl.u32 %v7743, 7
  %v7745 = vsub.s32 %v7742, %v7744
  %v7746 = vrot.slane %v7739, %v7745
  %v7747 = vcombine.low %v6699, %v6701
  %v7749 = vunpack.c.l.s4 1983009808
  %v7750 = vunpack.c.0.s8 %v7749
  %v7751 = vlaneseq
  %v7752 = vshrl.u32 %v7751, 7
  %v7753 = vsub.s32 %v7750, %v7752
  %v7754 = vrot.slane %v7747, %v7753
  %v7755 = vcombine.low %v6700, %v6702
  %v7757 = vunpack.c.l.s4 1983009808
  %v7758 = vunpack.c.0.s8 %v7757
  %v7759 = vlaneseq
  %v7760 = vshrl.u32 %v7759, 7
  %v7761 = vsub.s32 %v7758, %v7760
  %v7762 = vrot.slane %v7755, %v7761
  %v7763 = vcombine.low %v7738, %v7746
  %v7764 = vcombine.high %v7738, %v7746
  %v7766 = vunpack.c.l.s4 1934713408
  %v7767 = vunpack.c.0.s8 %v7766
  %v7768 = vlaneseq
  %v7769 = vshrl.u32 %v7768, 7
  %v7770 = vsub.s32 %v7767, %v7769
  %v7771 = vrot.slane %v7763, %v7770
  %v7773 = vunpack.c.l.s4 1934713408
  %v7774 = vunpack.c.0.s8 %v7773
  %v7775 = vlaneseq
  %v7776 = vshrl.u32 %v7775, 7
  %v7777 = vsub.s32 %v7774, %v7776
  %v7778 = vrot.slane %v7764, %v7777
  %v7779 = vcombine.low %v7754, %v7762
  %v7780 = vcombine.high %v7754, %v7762
  %v7782 = vunpack.c.l.s4 1934713408
  %v7783 = vunpack.c.0.s8 %v7782
  %v7784 = vlaneseq
  %v7785 = vshrl.u32 %v7784, 7
  %v7786 = vsub.s32 %v7783, %v7785
  %v7787 = vrot.slane %v7779, %v7786
  %v7789 = vunpack.c.l.s4 1934713408
  %v7790 = vunpack.c.0.s8 %v7789
  %v7791 = vlaneseq
  %v7792 = vshrl.u32 %v7791, 7
  %v7793 = vsub.s32 %v7790, %v7792
  %v7794 = vrot.slane %v7780, %v7793
  %v7795 = vcombine.low %v7771, %v7787
  %v7796 = vcombine.high %v7771, %v7787
  %v7797 = vcombine.low %v7778, %v7794
  %v7798 = vcombine.high %v7778, %v7794
  %v7799 = vcombine.low %v6703, %v6705
  %v7801 = vunpack.c.l.s4 1983009808
  %v7802 = vunpack.c.0.s8 %v7801
  %v7803 = vlaneseq
  %v7804 = vshrl.u32 %v7803, 7
  %v7805 = vsub.s32 %v7802, %v7804
  %v7806 = vrot.slane %v7799, %v7805
  %v7807 = vcombine.low %v6704, %v6706
  %v7809 = vunpack.c.l.s4 1983009808
  %v7810 = vunpack.c.0.s8 %v7809
  %v7811 = vlaneseq
  %v7812 = vshrl.u32 %v7811, 7
  %v7813 = vsub.s32 %v7810, %v7812
  %v7814 = vrot.slane %v7807, %v7813
  %v7815 = vcombine.low %v6707, %v6709
  %v7817 = vunpack.c.l.s4 1983009808
  %v7818 = vunpack.c.0.s8 %v7817
  %v7819 = vlaneseq
  %v7820 = vshrl.u32 %v7819, 7
  %v7821 = vsub.s32 %v7818, %v7820
  %v7822 = vrot.slane %v7815, %v7821
  %v7823 = vcombine.low %v6708, %v6710
  %v7825 = vunpack.c.l.s4 1983009808
  %v7826 = vunpack.c.0.s8 %v7825
  %v7827 = vlaneseq
  %v7828 = vshrl.u32 %v7827, 7
  %v7829 = vsub.s32 %v7826, %v7828
  %v7830 = vrot.slane %v7823, %v7829
  %v7831 = vcombine.low %v7806, %v7814
  %v7832 = vcombine.high %v7806, %v7814
  %v7834 = vunpack.c.l.s4 1934713408
  %v7835 = vunpack.c.0.s8 %v7834
  %v7836 = vlaneseq
  %v7837 = vshrl.u32 %v7836, 7
  %v7838 = vsub.s32 %v7835, %v7837
  %v7839 = vrot.slane %v7831, %v7838
  %v7841 = vunpack.c.l.s4 1934713408
  %v7842 = vunpack.c.0.s8 %v7841
  %v7843 = vlaneseq
  %v7844 = vshrl.u32 %v7843, 7
  %v7845 = vsub.s32 %v7842, %v7844
  %v7846 = vrot.slane %v7832, %v7845
  %v7847 = vcombine.low %v7822, %v7830
  %v7848 = vcombine.high %v7822, %v7830
  %v7850 = vunpack.c.l.s4 1934713408
  %v7851 = vunpack.c.0.s8 %v7850
  %v7852 = vlaneseq
  %v7853 = vshrl.u32 %v7852, 7
  %v7854 = vsub.s32 %v7851, %v7853
  %v7855 = vrot.slane %v7847, %v7854
  %v7857 = vunpack.c.l.s4 1934713408
  %v7858 = vunpack.c.0.s8 %v7857
  %v7859 = vlaneseq
  %v7860 = vshrl.u32 %v7859, 7
  %v7861 = vsub.s32 %v7858, %v7860
  %v7862 = vrot.slane %v7848, %v7861
  %v7863 = vcombine.low %v7839, %v7855
  %v7864 = vcombine.high %v7839, %v7855
  %v7865 = vcombine.low %v7846, %v7862
  %v7866 = vcombine.high %v7846, %v7862
  %v7867 = vcombine.low %v6711, %v6713
  %v7869 = vunpack.c.l.s4 1983009808
  %v7870 = vunpack.c.0.s8 %v7869
  %v7871 = vlaneseq
  %v7872 = vshrl.u32 %v7871, 7
  %v7873 = vsub.s32 %v7870, %v7872
  %v7874 = vrot.slane %v7867, %v7873
  %v7875 = vcombine.low %v6712, %v6714
  %v7877 = vunpack.c.l.s4 1983009808
  %v7878 = vunpack.c.0.s8 %v7877
  %v7879 = vlaneseq
  %v7880 = vshrl.u32 %v7879, 7
  %v7881 = vsub.s32 %v7878, %v7880
  %v7882 = vrot.slane %v7875, %v7881
  %v7883 = vcombine.low %v6715, %v6717
  %v7885 = vunpack.c.l.s4 1983009808
  %v7886 = vunpack.c.0.s8 %v7885
  %v7887 = vlaneseq
  %v7888 = vshrl.u32 %v7887, 7
  %v7889 = vsub.s32 %v7886, %v7888
  %v7890 = vrot.slane %v7883, %v7889
  %v7891 = vcombine.low %v6716, %v6718
  %v7893 = vunpack.c.l.s4 1983009808
  %v7894 = vunpack.c.0.s8 %v7893
  %v7895 = vlaneseq
  %v7896 = vshrl.u32 %v7895, 7
  %v7897 = vsub.s32 %v7894, %v7896
  %v7898 = vrot.slane %v7891, %v7897
  %v7899 = vcombine.low %v7874, %v7882
  %v7900 = vcombine.high %v7874, %v7882
  %v7902 = vunpack.c.l.s4 1934713408
  %v7903 = vunpack.c.0.s8 %v7902
  %v7904 = vlaneseq
  %v7905 = vshrl.u32 %v7904, 7
  %v7906 = vsub.s32 %v7903, %v7905
  %v7907 = vrot.slane %v7899, %v7906
  %v7909 = vunpack.c.l.s4 1934713408
  %v7910 = vunpack.c.0.s8 %v7909
  %v7911 = vlaneseq
  %v7912 = vshrl.u32 %v7911, 7
  %v7913 = vsub.s32 %v7910, %v7912
  %v7914 = vrot.slane %v7900, %v7913
  %v7915 = vcombine.low %v7890, %v7898
  %v7916 = vcombine.high %v7890, %v7898
  %v7918 = vunpack.c.l.s4 1934713408
  %v7919 = vunpack.c.0.s8 %v7918
  %v7920 = vlaneseq
  %v7921 = vshrl.u32 %v7920, 7
  %v7922 = vsub.s32 %v7919, %v7921
  %v7923 = vrot.slane %v7915, %v7922
  %v7925 = vunpack.c.l.s4 1934713408
  %v7926 = vunpack.c.0.s8 %v7925
  %v7927 = vlaneseq
  %v7928 = vshrl.u32 %v7927, 7
  %v7929 = vsub.s32 %v7926, %v7928
  %v7930 = vrot.slane %v7916, %v7929
  %v7931 = vcombine.low %v7907, %v7923
  %v7932 = vcombine.high %v7907, %v7923
  %v7933 = vcombine.low %v7914, %v7930
  %v7934 = vcombine.high %v7914, %v7930
  %v7935 = vcombine.low %v6719, %v6721
  %v7937 = vunpack.c.l.s4 1983009808
  %v7938 = vunpack.c.0.s8 %v7937
  %v7939 = vlaneseq
  %v7940 = vshrl.u32 %v7939, 7
  %v7941 = vsub.s32 %v7938, %v7940
  %v7942 = vrot.slane %v7935, %v7941
  %v7943 = vcombine.low %v6720, %v6722
  %v7945 = vunpack.c.l.s4 1983009808
  %v7946 = vunpack.c.0.s8 %v7945
  %v7947 = vlaneseq
  %v7948 = vshrl.u32 %v7947, 7
  %v7949 = vsub.s32 %v7946, %v7948
  %v7950 = vrot.slane %v7943, %v7949
  %v7951 = vcombine.low %v6723, %v6725
  %v7953 = vunpack.c.l.s4 1983009808
  %v7954 = vunpack.c.0.s8 %v7953
  %v7955 = vlaneseq
  %v7956 = vshrl.u32 %v7955, 7
  %v7957 = vsub.s32 %v7954, %v7956
  %v7958 = vrot.slane %v7951, %v7957
  %v7959 = vcombine.low %v6724, %v6726
  %v7961 = vunpack.c.l.s4 1983009808
  %v7962 = vunpack.c.0.s8 %v7961
  %v7963 = vlaneseq
  %v7964 = vshrl.u32 %v7963, 7
  %v7965 = vsub.s32 %v7962, %v7964
  %v7966 = vrot.slane %v7959, %v7965
  %v7967 = vcombine.low %v7942, %v7950
  %v7968 = vcombine.high %v7942, %v7950
  %v7970 = vunpack.c.l.s4 1934713408
  %v7971 = vunpack.c.0.s8 %v7970
  %v7972 = vlaneseq
  %v7973 = vshrl.u32 %v7972, 7
  %v7974 = vsub.s32 %v7971, %v7973
  %v7975 = vrot.slane %v7967, %v7974
  %v7977 = vunpack.c.l.s4 1934713408
  %v7978 = vunpack.c.0.s8 %v7977
  %v7979 = vlaneseq
  %v7980 = vshrl.u32 %v7979, 7
  %v7981 = vsub.s32 %v7978, %v7980
  %v7982 = vrot.slane %v7968, %v7981
  %v7983 = vcombine.low %v7958, %v7966
  %v7984 = vcombine.high %v7958, %v7966
  %v7986 = vunpack.c.l.s4 1934713408
  %v7987 = vunpack.c.0.s8 %v7986
  %v7988 = vlaneseq
  %v7989 = vshrl.u32 %v7988, 7
  %v7990 = vsub.s32 %v7987, %v7989
  %v7991 = vrot.slane %v7983, %v7990
  %v7993 = vunpack.c.l.s4 1934713408
  %v7994 = vunpack.c.0.s8 %v7993
  %v7995 = vlaneseq
  %v7996 = vshrl.u32 %v7995, 7
  %v7997 = vsub.s32 %v7994, %v7996
  %v7998 = vrot.slane %v7984, %v7997
  %v7999 = vcombine.low %v7975, %v7991
  %v8000 = vcombine.high %v7975, %v7991
  %v8001 = vcombine.low %v7982, %v7998
  %v8002 = vcombine.high %v7982, %v7998
  %v8003 = vcombine.low %v6727, %v6729
  %v8005 = vunpack.c.l.s4 1983009808
  %v8006 = vunpack.c.0.s8 %v8005
  %v8007 = vlaneseq
  %v8008 = vshrl.u32 %v8007, 7
  %v8009 = vsub.s32 %v8006, %v8008
  %v8010 = vrot.slane %v8003, %v8009
  %v8011 = vcombine.low %v6728, %v6730
  %v8013 = vunpack.c.l.s4 1983009808
  %v8014 = vunpack.c.0.s8 %v8013
  %v8015 = vlaneseq
  %v8016 = vshrl.u32 %v8015, 7
  %v8017 = vsub.s32 %v8014, %v8016
  %v8018 = vrot.slane %v8011, %v8017
  %v8019 = vcombine.low %v6731, %v6733
  %v8021 = vunpack.c.l.s4 1983009808
  %v8022 = vunpack.c.0.s8 %v8021
  %v8023 = vlaneseq
  %v8024 = vshrl.u32 %v8023, 7
  %v8025 = vsub.s32 %v8022, %v8024
  %v8026 = vrot.slane %v8019, %v8025
  %v8027 = vcombine.low %v6732, %v6734
  %v8029 = vunpack.c.l.s4 1983009808
  %v8030 = vunpack.c.0.s8 %v8029
  %v8031 = vlaneseq
  %v8032 = vshrl.u32 %v8031, 7
  %v8033 = vsub.s32 %v8030, %v8032
  %v8034 = vrot.slane %v8027, %v8033
  %v8035 = vcombine.low %v8010, %v8018
  %v8036 = vcombine.high %v8010, %v8018
  %v8038 = vunpack.c.l.s4 1934713408
  %v8039 = vunpack.c.0.s8 %v8038
  %v8040 = vlaneseq
  %v8041 = vshrl.u32 %v8040, 7
  %v8042 = vsub.s32 %v8039, %v8041
  %v8043 = vrot.slane %v8035, %v8042
  %v8045 = vunpack.c.l.s4 1934713408
  %v8046 = vunpack.c.0.s8 %v8045
  %v8047 = vlaneseq
  %v8048 = vshrl.u32 %v8047, 7
  %v8049 = vsub.s32 %v8046, %v8048
  %v8050 = vrot.slane %v8036, %v8049
  %v8051 = vcombine.low %v8026, %v8034
  %v8052 = vcombine.high %v8026, %v8034
  %v8054 = vunpack.c.l.s4 1934713408
  %v8055 = vunpack.c.0.s8 %v8054
  %v8056 = vlaneseq
  %v8057 = vshrl.u32 %v8056, 7
  %v8058 = vsub.s32 %v8055, %v8057
  %v8059 = vrot.slane %v8051, %v8058
  %v8061 = vunpack.c.l.s4 1934713408
  %v8062 = vunpack.c.0.s8 %v8061
  %v8063 = vlaneseq
  %v8064 = vshrl.u32 %v8063, 7
  %v8065 = vsub.s32 %v8062, %v8064
  %v8066 = vrot.slane %v8052, %v8065
  %v8067 = vcombine.low %v8043, %v8059
  %v8068 = vcombine.high %v8043, %v8059
  %v8069 = vcombine.low %v8050, %v8066
  %v8070 = vcombine.high %v8050, %v8066
  %v8071 = vcombine.low %v6735, %v6737
  %v8073 = vunpack.c.l.s4 1983009808
  %v8074 = vunpack.c.0.s8 %v8073
  %v8075 = vlaneseq
  %v8076 = vshrl.u32 %v8075, 7
  %v8077 = vsub.s32 %v8074, %v8076
  %v8078 = vrot.slane %v8071, %v8077
  %v8079 = vcombine.low %v6736, %v6738
  %v8081 = vunpack.c.l.s4 1983009808
  %v8082 = vunpack.c.0.s8 %v8081
  %v8083 = vlaneseq
  %v8084 = vshrl.u32 %v8083, 7
  %v8085 = vsub.s32 %v8082, %v8084
  %v8086 = vrot.slane %v8079, %v8085
  %v8087 = vcombine.low %v6739, %v6741
  %v8089 = vunpack.c.l.s4 1983009808
  %v8090 = vunpack.c.0.s8 %v8089
  %v8091 = vlaneseq
  %v8092 = vshrl.u32 %v8091, 7
  %v8093 = vsub.s32 %v8090, %v8092
  %v8094 = vrot.slane %v8087, %v8093
  %v8095 = vcombine.low %v6740, %v6742
  %v8097 = vunpack.c.l.s4 1983009808
  %v8098 = vunpack.c.0.s8 %v8097
  %v8099 = vlaneseq
  %v8100 = vshrl.u32 %v8099, 7
  %v8101 = vsub.s32 %v8098, %v8100
  %v8102 = vrot.slane %v8095, %v8101
  %v8103 = vcombine.low %v8078, %v8086
  %v8104 = vcombine.high %v8078, %v8086
  %v8106 = vunpack.c.l.s4 1934713408
  %v8107 = vunpack.c.0.s8 %v8106
  %v8108 = vlaneseq
  %v8109 = vshrl.u32 %v8108, 7
  %v8110 = vsub.s32 %v8107, %v8109
  %v8111 = vrot.slane %v8103, %v8110
  %v8113 = vunpack.c.l.s4 1934713408
  %v8114 = vunpack.c.0.s8 %v8113
  %v8115 = vlaneseq
  %v8116 = vshrl.u32 %v8115, 7
  %v8117 = vsub.s32 %v8114, %v8116
  %v8118 = vrot.slane %v8104, %v8117
  %v8119 = vcombine.low %v8094, %v8102
  %v8120 = vcombine.high %v8094, %v8102
  %v8122 = vunpack.c.l.s4 1934713408
  %v8123 = vunpack.c.0.s8 %v8122
  %v8124 = vlaneseq
  %v8125 = vshrl.u32 %v8124, 7
  %v8126 = vsub.s32 %v8123, %v8125
  %v8127 = vrot.slane %v8119, %v8126
  %v8129 = vunpack.c.l.s4 1934713408
  %v8130 = vunpack.c.0.s8 %v8129
  %v8131 = vlaneseq
  %v8132 = vshrl.u32 %v8131, 7
  %v8133 = vsub.s32 %v8130, %v8132
  %v8134 = vrot.slane %v8120, %v8133
  %v8135 = vcombine.low %v8111, %v8127
  %v8136 = vcombine.high %v8111, %v8127
  %v8137 = vcombine.low %v8118, %v8134
  %v8138 = vcombine.high %v8118, %v8134
  %v8139 = vcombine.low %v6743, %v6745
  %v8141 = vunpack.c.l.s4 1983009808
  %v8142 = vunpack.c.0.s8 %v8141
  %v8143 = vlaneseq
  %v8144 = vshrl.u32 %v8143, 7
  %v8145 = vsub.s32 %v8142, %v8144
  %v8146 = vrot.slane %v8139, %v8145
  %v8147 = vcombine.low %v6744, %v6746
  %v8149 = vunpack.c.l.s4 1983009808
  %v8150 = vunpack.c.0.s8 %v8149
  %v8151 = vlaneseq
  %v8152 = vshrl.u32 %v8151, 7
  %v8153 = vsub.s32 %v8150, %v8152
  %v8154 = vrot.slane %v8147, %v8153
  %v8155 = vcombine.low %v6747, %v6749
  %v8157 = vunpack.c.l.s4 1983009808
  %v8158 = vunpack.c.0.s8 %v8157
  %v8159 = vlaneseq
  %v8160 = vshrl.u32 %v8159, 7
  %v8161 = vsub.s32 %v8158, %v8160
  %v8162 = vrot.slane %v8155, %v8161
  %v8163 = vcombine.low %v6748, %v6750
  %v8165 = vunpack.c.l.s4 1983009808
  %v8166 = vunpack.c.0.s8 %v8165
  %v8167 = vlaneseq
  %v8168 = vshrl.u32 %v8167, 7
  %v8169 = vsub.s32 %v8166, %v8168
  %v8170 = vrot.slane %v8163, %v8169
  %v8171 = vcombine.low %v8146, %v8154
  %v8172 = vcombine.high %v8146, %v8154
  %v8174 = vunpack.c.l.s4 1934713408
  %v8175 = vunpack.c.0.s8 %v8174
  %v8176 = vlaneseq
  %v8177 = vshrl.u32 %v8176, 7
  %v8178 = vsub.s32 %v8175, %v8177
  %v8179 = vrot.slane %v8171, %v8178
  %v8181 = vunpack.c.l.s4 1934713408
  %v8182 = vunpack.c.0.s8 %v8181
  %v8183 = vlaneseq
  %v8184 = vshrl.u32 %v8183, 7
  %v8185 = vsub.s32 %v8182, %v8184
  %v8186 = vrot.slane %v8172, %v8185
  %v8187 = vcombine.low %v8162, %v8170
  %v8188 = vcombine.high %v8162, %v8170
  %v8190 = vunpack.c.l.s4 1934713408
  %v8191 = vunpack.c.0.s8 %v8190
  %v8192 = vlaneseq
  %v8193 = vshrl.u32 %v8192, 7
  %v8194 = vsub.s32 %v8191, %v8193
  %v8195 = vrot.slane %v8187, %v8194
  %v8197 = vunpack.c.l.s4 1934713408
  %v8198 = vunpack.c.0.s8 %v8197
  %v8199 = vlaneseq
  %v8200 = vshrl.u32 %v8199, 7
  %v8201 = vsub.s32 %v8198, %v8200
  %v8202 = vrot.slane %v8188, %v8201
  %v8203 = vcombine.low %v8179, %v8195
  %v8204 = vcombine.high %v8179, %v8195
  %v8205 = vcombine.low %v8186, %v8202
  %v8206 = vcombine.high %v8186, %v8202
  %v8207 = vcombine.low %v6751, %v6753
  %v8209 = vunpack.c.l.s4 1983009808
  %v8210 = vunpack.c.0.s8 %v8209
  %v8211 = vlaneseq
  %v8212 = vshrl.u32 %v8211, 7
  %v8213 = vsub.s32 %v8210, %v8212
  %v8214 = vrot.slane %v8207, %v8213
  %v8215 = vcombine.low %v6752, %v6754
  %v8217 = vunpack.c.l.s4 1983009808
  %v8218 = vunpack.c.0.s8 %v8217
  %v8219 = vlaneseq
  %v8220 = vshrl.u32 %v8219, 7
  %v8221 = vsub.s32 %v8218, %v8220
  %v8222 = vrot.slane %v8215, %v8221
  %v8223 = vcombine.low %v6755, %v6757
  %v8225 = vunpack.c.l.s4 1983009808
  %v8226 = vunpack.c.0.s8 %v8225
  %v8227 = vlaneseq
  %v8228 = vshrl.u32 %v8227, 7
  %v8229 = vsub.s32 %v8226, %v8228
  %v8230 = vrot.slane %v8223, %v8229
  %v8231 = vcombine.low %v6756, %v6758
  %v8233 = vunpack.c.l.s4 1983009808
  %v8234 = vunpack.c.0.s8 %v8233
  %v8235 = vlaneseq
  %v8236 = vshrl.u32 %v8235, 7
  %v8237 = vsub.s32 %v8234, %v8236
  %v8238 = vrot.slane %v8231, %v8237
  %v8239 = vcombine.low %v8214, %v8222
  %v8240 = vcombine.high %v8214, %v8222
  %v8242 = vunpack.c.l.s4 1934713408
  %v8243 = vunpack.c.0.s8 %v8242
  %v8244 = vlaneseq
  %v8245 = vshrl.u32 %v8244, 7
  %v8246 = vsub.s32 %v8243, %v8245
  %v8247 = vrot.slane %v8239, %v8246
  %v8249 = vunpack.c.l.s4 1934713408
  %v8250 = vunpack.c.0.s8 %v8249
  %v8251 = vlaneseq
  %v8252 = vshrl.u32 %v8251, 7
  %v8253 = vsub.s32 %v8250, %v8252
  %v8254 = vrot.slane %v8240, %v8253
  %v8255 = vcombine.low %v8230, %v8238
  %v8256 = vcombine.high %v8230, %v8238
  %v8258 = vunpack.c.l.s4 1934713408
  %v8259 = vunpack.c.0.s8 %v8258
  %v8260 = vlaneseq
  %v8261 = vshrl.u32 %v8260, 7
  %v8262 = vsub.s32 %v8259, %v8261
  %v8263 = vrot.slane %v8255, %v8262
  %v8265 = vunpack.c.l.s4 1934713408
  %v8266 = vunpack.c.0.s8 %v8265
  %v8267 = vlaneseq
  %v8268 = vshrl.u32 %v8267, 7
  %v8269 = vsub.s32 %v8266, %v8268
  %v8270 = vrot.slane %v8256, %v8269
  %v8271 = vcombine.low %v8247, %v8263
  %v8272 = vcombine.high %v8247, %v8263
  %v8273 = vcombine.low %v8254, %v8270
  %v8274 = vcombine.high %v8254, %v8270
  %v8275 = vcombine.low %v6759, %v6761
  %v8277 = vunpack.c.l.s4 1983009808
  %v8278 = vunpack.c.0.s8 %v8277
  %v8279 = vlaneseq
  %v8280 = vshrl.u32 %v8279, 7
  %v8281 = vsub.s32 %v8278, %v8280
  %v8282 = vrot.slane %v8275, %v8281
  %v8283 = vcombine.low %v6760, %v6762
  %v8285 = vunpack.c.l.s4 1983009808
  %v8286 = vunpack.c.0.s8 %v8285
  %v8287 = vlaneseq
  %v8288 = vshrl.u32 %v8287, 7
  %v8289 = vsub.s32 %v8286, %v8288
  %v8290 = vrot.slane %v8283, %v8289
  %v8291 = vcombine.low %v6763, %v6765
  %v8293 = vunpack.c.l.s4 1983009808
  %v8294 = vunpack.c.0.s8 %v8293
  %v8295 = vlaneseq
  %v8296 = vshrl.u32 %v8295, 7
  %v8297 = vsub.s32 %v8294, %v8296
  %v8298 = vrot.slane %v8291, %v8297
  %v8299 = vcombine.low %v6764, %v6766
  %v8301 = vunpack.c.l.s4 1983009808
  %v8302 = vunpack.c.0.s8 %v8301
  %v8303 = vlaneseq
  %v8304 = vshrl.u32 %v8303, 7
  %v8305 = vsub.s32 %v8302, %v8304
  %v8306 = vrot.slane %v8299, %v8305
  %v8307 = vcombine.low %v8282, %v8290
  %v8308 = vcombine.high %v8282, %v8290
  %v8310 = vunpack.c.l.s4 1934713408
  %v8311 = vunpack.c.0.s8 %v8310
  %v8312 = vlaneseq
  %v8313 = vshrl.u32 %v8312, 7
  %v8314 = vsub.s32 %v8311, %v8313
  %v8315 = vrot.slane %v8307, %v8314
  %v8317 = vunpack.c.l.s4 1934713408
  %v8318 = vunpack.c.0.s8 %v8317
  %v8319 = vlaneseq
  %v8320 = vshrl.u32 %v8319, 7
  %v8321 = vsub.s32 %v8318, %v8320
  %v8322 = vrot.slane %v8308, %v8321
  %v8323 = vcombine.low %v8298, %v8306
  %v8324 = vcombine.high %v8298, %v8306
  %v8326 = vunpack.c.l.s4 1934713408
  %v8327 = vunpack.c.0.s8 %v8326
  %v8328 = vlaneseq
  %v8329 = vshrl.u32 %v8328, 7
  %v8330 = vsub.s32 %v8327, %v8329
  %v8331 = vrot.slane %v8323, %v8330
  %v8333 = vunpack.c.l.s4 1934713408
  %v8334 = vunpack.c.0.s8 %v8333
  %v8335 = vlaneseq
  %v8336 = vshrl.u32 %v8335, 7
  %v8337 = vsub.s32 %v8334, %v8336
  %v8338 = vrot.slane %v8324, %v8337
  %v8339 = vcombine.low %v8315, %v8331
  %v8340 = vcombine.high %v8315, %v8331
  %v8341 = vcombine.low %v8322, %v8338
  %v8342 = vcombine.high %v8322, %v8338
  %v8343 = vcombine.low %v6767, %v6769
  %v8345 = vunpack.c.l.s4 1983009808
  %v8346 = vunpack.c.0.s8 %v8345
  %v8347 = vlaneseq
  %v8348 = vshrl.u32 %v8347, 7
  %v8349 = vsub.s32 %v8346, %v8348
  %v8350 = vrot.slane %v8343, %v8349
  %v8351 = vcombine.low %v6768, %v6770
  %v8353 = vunpack.c.l.s4 1983009808
  %v8354 = vunpack.c.0.s8 %v8353
  %v8355 = vlaneseq
  %v8356 = vshrl.u32 %v8355, 7
  %v8357 = vsub.s32 %v8354, %v8356
  %v8358 = vrot.slane %v8351, %v8357
  %v8359 = vcombine.low %v6771, %v6773
  %v8361 = vunpack.c.l.s4 1983009808
  %v8362 = vunpack.c.0.s8 %v8361
  %v8363 = vlaneseq
  %v8364 = vshrl.u32 %v8363, 7
  %v8365 = vsub.s32 %v8362, %v8364
  %v8366 = vrot.slane %v8359, %v8365
  %v8367 = vcombine.low %v6772, %v6774
  %v8369 = vunpack.c.l.s4 1983009808
  %v8370 = vunpack.c.0.s8 %v8369
  %v8371 = vlaneseq
  %v8372 = vshrl.u32 %v8371, 7
  %v8373 = vsub.s32 %v8370, %v8372
  %v8374 = vrot.slane %v8367, %v8373
  %v8375 = vcombine.low %v8350, %v8358
  %v8376 = vcombine.high %v8350, %v8358
  %v8378 = vunpack.c.l.s4 1934713408
  %v8379 = vunpack.c.0.s8 %v8378
  %v8380 = vlaneseq
  %v8381 = vshrl.u32 %v8380, 7
  %v8382 = vsub.s32 %v8379, %v8381
  %v8383 = vrot.slane %v8375, %v8382
  %v8385 = vunpack.c.l.s4 1934713408
  %v8386 = vunpack.c.0.s8 %v8385
  %v8387 = vlaneseq
  %v8388 = vshrl.u32 %v8387, 7
  %v8389 = vsub.s32 %v8386, %v8388
  %v8390 = vrot.slane %v8376, %v8389
  %v8391 = vcombine.low %v8366, %v8374
  %v8392 = vcombine.high %v8366, %v8374
  %v8394 = vunpack.c.l.s4 1934713408
  %v8395 = vunpack.c.0.s8 %v8394
  %v8396 = vlaneseq
  %v8397 = vshrl.u32 %v8396, 7
  %v8398 = vsub.s32 %v8395, %v8397
  %v8399 = vrot.slane %v8391, %v8398
  %v8401 = vunpack.c.l.s4 1934713408
  %v8402 = vunpack.c.0.s8 %v8401
  %v8403 = vlaneseq
  %v8404 = vshrl.u32 %v8403, 7
  %v8405 = vsub.s32 %v8402, %v8404
  %v8406 = vrot.slane %v8392, %v8405
  %v8407 = vcombine.low %v8383, %v8399
  %v8408 = vcombine.high %v8383, %v8399
  %v8409 = vcombine.low %v8390, %v8406
  %v8410 = vcombine.high %v8390, %v8406
  %v8411 = vcombine.low %v6775, %v6777
  %v8413 = vunpack.c.l.s4 1983009808
  %v8414 = vunpack.c.0.s8 %v8413
  %v8415 = vlaneseq
  %v8416 = vshrl.u32 %v8415, 7
  %v8417 = vsub.s32 %v8414, %v8416
  %v8418 = vrot.slane %v8411, %v8417
  %v8419 = vcombine.low %v6776, %v6778
  %v8421 = vunpack.c.l.s4 1983009808
  %v8422 = vunpack.c.0.s8 %v8421
  %v8423 = vlaneseq
  %v8424 = vshrl.u32 %v8423, 7
  %v8425 = vsub.s32 %v8422, %v8424
  %v8426 = vrot.slane %v8419, %v8425
  %v8427 = vcombine.low %v6779, %v6781
  %v8429 = vunpack.c.l.s4 1983009808
  %v8430 = vunpack.c.0.s8 %v8429
  %v8431 = vlaneseq
  %v8432 = vshrl.u32 %v8431, 7
  %v8433 = vsub.s32 %v8430, %v8432
  %v8434 = vrot.slane %v8427, %v8433
  %v8435 = vcombine.low %v6780, %v6782
  %v8437 = vunpack.c.l.s4 1983009808
  %v8438 = vunpack.c.0.s8 %v8437
  %v8439 = vlaneseq
  %v8440 = vshrl.u32 %v8439, 7
  %v8441 = vsub.s32 %v8438, %v8440
  %v8442 = vrot.slane %v8435, %v8441
  %v8443 = vcombine.low %v8418, %v8426
  %v8444 = vcombine.high %v8418, %v8426
  %v8446 = vunpack.c.l.s4 1934713408
  %v8447 = vunpack.c.0.s8 %v8446
  %v8448 = vlaneseq
  %v8449 = vshrl.u32 %v8448, 7
  %v8450 = vsub.s32 %v8447, %v8449
  %v8451 = vrot.slane %v8443, %v8450
  %v8453 = vunpack.c.l.s4 1934713408
  %v8454 = vunpack.c.0.s8 %v8453
  %v8455 = vlaneseq
  %v8456 = vshrl.u32 %v8455, 7
  %v8457 = vsub.s32 %v8454, %v8456
  %v8458 = vrot.slane %v8444, %v8457
  %v8459 = vcombine.low %v8434, %v8442
  %v8460 = vcombine.high %v8434, %v8442
  %v8462 = vunpack.c.l.s4 1934713408
  %v8463 = vunpack.c.0.s8 %v8462
  %v8464 = vlaneseq
  %v8465 = vshrl.u32 %v8464, 7
  %v8466 = vsub.s32 %v8463, %v8465
  %v8467 = vrot.slane %v8459, %v8466
  %v8469 = vunpack.c.l.s4 1934713408
  %v8470 = vunpack.c.0.s8 %v8469
  %v8471 = vlaneseq
  %v8472 = vshrl.u32 %v8471, 7
  %v8473 = vsub.s32 %v8470, %v8472
  %v8474 = vrot.slane %v8460, %v8473
  %v8475 = vcombine.low %v8451, %v8467
  %v8476 = vcombine.high %v8451, %v8467
  %v8477 = vcombine.low %v8458, %v8474
  %v8478 = vcombine.high %v8458, %v8474
  %v8479 = vcombine.low %v6783, %v6785
  %v8481 = vunpack.c.l.s4 1983009808
  %v8482 = vunpack.c.0.s8 %v8481
  %v8483 = vlaneseq
  %v8484 = vshrl.u32 %v8483, 7
  %v8485 = vsub.s32 %v8482, %v8484
  %v8486 = vrot.slane %v8479, %v8485
  %v8487 = vcombine.low %v6784, %v6786
  %v8489 = vunpack.c.l.s4 1983009808
  %v8490 = vunpack.c.0.s8 %v8489
  %v8491 = vlaneseq
  %v8492 = vshrl.u32 %v8491, 7
  %v8493 = vsub.s32 %v8490, %v8492
  %v8494 = vrot.slane %v8487, %v8493
  %v8495 = vcombine.low %v6787, %v6789
  %v8497 = vunpack.c.l.s4 1983009808
  %v8498 = vunpack.c.0.s8 %v8497
  %v8499 = vlaneseq
  %v8500 = vshrl.u32 %v8499, 7
  %v8501 = vsub.s32 %v8498, %v8500
  %v8502 = vrot.slane %v8495, %v8501
  %v8503 = vcombine.low %v6788, %v6790
  %v8505 = vunpack.c.l.s4 1983009808
  %v8506 = vunpack.c.0.s8 %v8505
  %v8507 = vlaneseq
  %v8508 = vshrl.u32 %v8507, 7
  %v8509 = vsub.s32 %v8506, %v8508
  %v8510 = vrot.slane %v8503, %v8509
  %v8511 = vcombine.low %v8486, %v8494
  %v8512 = vcombine.high %v8486, %v8494
  %v8514 = vunpack.c.l.s4 1934713408
  %v8515 = vunpack.c.0.s8 %v8514
  %v8516 = vlaneseq
  %v8517 = vshrl.u32 %v8516, 7
  %v8518 = vsub.s32 %v8515, %v8517
  %v8519 = vrot.slane %v8511, %v8518
  %v8521 = vunpack.c.l.s4 1934713408
  %v8522 = vunpack.c.0.s8 %v8521
  %v8523 = vlaneseq
  %v8524 = vshrl.u32 %v8523, 7
  %v8525 = vsub.s32 %v8522, %v8524
  %v8526 = vrot.slane %v8512, %v8525
  %v8527 = vcombine.low %v8502, %v8510
  %v8528 = vcombine.high %v8502, %v8510
  %v8530 = vunpack.c.l.s4 1934713408
  %v8531 = vunpack.c.0.s8 %v8530
  %v8532 = vlaneseq
  %v8533 = vshrl.u32 %v8532, 7
  %v8534 = vsub.s32 %v8531, %v8533
  %v8535 = vrot.slane %v8527, %v8534
  %v8537 = vunpack.c.l.s4 1934713408
  %v8538 = vunpack.c.0.s8 %v8537
  %v8539 = vlaneseq
  %v8540 = vshrl.u32 %v8539, 7
  %v8541 = vsub.s32 %v8538, %v8540
  %v8542 = vrot.slane %v8528, %v8541
  %v8543 = vcombine.low %v8519, %v8535
  %v8544 = vcombine.high %v8519, %v8535
  %v8545 = vcombine.low %v8526, %v8542
  %v8546 = vcombine.high %v8526, %v8542
  %v8547 = vcombine.low %v6791, %v6793
  %v8549 = vunpack.c.l.s4 1983009808
  %v8550 = vunpack.c.0.s8 %v8549
  %v8551 = vlaneseq
  %v8552 = vshrl.u32 %v8551, 7
  %v8553 = vsub.s32 %v8550, %v8552
  %v8554 = vrot.slane %v8547, %v8553
  %v8555 = vcombine.low %v6792, %v6794
  %v8557 = vunpack.c.l.s4 1983009808
  %v8558 = vunpack.c.0.s8 %v8557
  %v8559 = vlaneseq
  %v8560 = vshrl.u32 %v8559, 7
  %v8561 = vsub.s32 %v8558, %v8560
  %v8562 = vrot.slane %v8555, %v8561
  %v8563 = vcombine.low %v6795, %v6797
  %v8565 = vunpack.c.l.s4 1983009808
  %v8566 = vunpack.c.0.s8 %v8565
  %v8567 = vlaneseq
  %v8568 = vshrl.u32 %v8567, 7
  %v8569 = vsub.s32 %v8566, %v8568
  %v8570 = vrot.slane %v8563, %v8569
  %v8571 = vcombine.low %v6796, %v6798
  %v8573 = vunpack.c.l.s4 1983009808
  %v8574 = vunpack.c.0.s8 %v8573
  %v8575 = vlaneseq
  %v8576 = vshrl.u32 %v8575, 7
  %v8577 = vsub.s32 %v8574, %v8576
  %v8578 = vrot.slane %v8571, %v8577
  %v8579 = vcombine.low %v8554, %v8562
  %v8580 = vcombine.high %v8554, %v8562
  %v8582 = vunpack.c.l.s4 1934713408
  %v8583 = vunpack.c.0.s8 %v8582
  %v8584 = vlaneseq
  %v8585 = vshrl.u32 %v8584, 7
  %v8586 = vsub.s32 %v8583, %v8585
  %v8587 = vrot.slane %v8579, %v8586
  %v8589 = vunpack.c.l.s4 1934713408
  %v8590 = vunpack.c.0.s8 %v8589
  %v8591 = vlaneseq
  %v8592 = vshrl.u32 %v8591, 7
  %v8593 = vsub.s32 %v8590, %v8592
  %v8594 = vrot.slane %v8580, %v8593
  %v8595 = vcombine.low %v8570, %v8578
  %v8596 = vcombine.high %v8570, %v8578
  %v8598 = vunpack.c.l.s4 1934713408
  %v8599 = vunpack.c.0.s8 %v8598
  %v8600 = vlaneseq
  %v8601 = vshrl.u32 %v8600, 7
  %v8602 = vsub.s32 %v8599, %v8601
  %v8603 = vrot.slane %v8595, %v8602
  %v8605 = vunpack.c.l.s4 1934713408
  %v8606 = vunpack.c.0.s8 %v8605
  %v8607 = vlaneseq
  %v8608 = vshrl.u32 %v8607, 7
  %v8609 = vsub.s32 %v8606, %v8608
  %v8610 = vrot.slane %v8596, %v8609
  %v8611 = vcombine.low %v8587, %v8603
  %v8612 = vcombine.high %v8587, %v8603
  %v8613 = vcombine.low %v8594, %v8610
  %v8614 = vcombine.high %v8594, %v8610
  %v8615 = vcombine.low %v6799, %v6801
  %v8617 = vunpack.c.l.s4 1983009808
  %v8618 = vunpack.c.0.s8 %v8617
  %v8619 = vlaneseq
  %v8620 = vshrl.u32 %v8619, 7
  %v8621 = vsub.s32 %v8618, %v8620
  %v8622 = vrot.slane %v8615, %v8621
  %v8623 = vcombine.low %v6800, %v6802
  %v8625 = vunpack.c.l.s4 1983009808
  %v8626 = vunpack.c.0.s8 %v8625
  %v8627 = vlaneseq
  %v8628 = vshrl.u32 %v8627, 7
  %v8629 = vsub.s32 %v8626, %v8628
  %v8630 = vrot.slane %v8623, %v8629
  %v8631 = vcombine.low %v6803, %v6805
  %v8633 = vunpack.c.l.s4 1983009808
  %v8634 = vunpack.c.0.s8 %v8633
  %v8635 = vlaneseq
  %v8636 = vshrl.u32 %v8635, 7
  %v8637 = vsub.s32 %v8634, %v8636
  %v8638 = vrot.slane %v8631, %v8637
  %v8639 = vcombine.low %v6804, %v6806
  %v8641 = vunpack.c.l.s4 1983009808
  %v8642 = vunpack.c.0.s8 %v8641
  %v8643 = vlaneseq
  %v8644 = vshrl.u32 %v8643, 7
  %v8645 = vsub.s32 %v8642, %v8644
  %v8646 = vrot.slane %v8639, %v8645
  %v8647 = vcombine.low %v8622, %v8630
  %v8648 = vcombine.high %v8622, %v8630
  %v8650 = vunpack.c.l.s4 1934713408
  %v8651 = vunpack.c.0.s8 %v8650
  %v8652 = vlaneseq
  %v8653 = vshrl.u32 %v8652, 7
  %v8654 = vsub.s32 %v8651, %v8653
  %v8655 = vrot.slane %v8647, %v8654
  %v8657 = vunpack.c.l.s4 1934713408
  %v8658 = vunpack.c.0.s8 %v8657
  %v8659 = vlaneseq
  %v8660 = vshrl.u32 %v8659, 7
  %v8661 = vsub.s32 %v8658, %v8660
  %v8662 = vrot.slane %v8648, %v8661
  %v8663 = vcombine.low %v8638, %v8646
  %v8664 = vcombine.high %v8638, %v8646
  %v8666 = vunpack.c.l.s4 1934713408
  %v8667 = vunpack.c.0.s8 %v8666
  %v8668 = vlaneseq
  %v8669 = vshrl.u32 %v8668, 7
  %v8670 = vsub.s32 %v8667, %v8669
  %v8671 = vrot.slane %v8663, %v8670
  %v8673 = vunpack.c.l.s4 1934713408
  %v8674 = vunpack.c.0.s8 %v8673
  %v8675 = vlaneseq
  %v8676 = vshrl.u32 %v8675, 7
  %v8677 = vsub.s32 %v8674, %v8676
  %v8678 = vrot.slane %v8664, %v8677
  %v8679 = vcombine.low %v8655, %v8671
  %v8680 = vcombine.high %v8655, %v8671
  %v8681 = vcombine.low %v8662, %v8678
  %v8682 = vcombine.high %v8662, %v8678
  %v8683 = vcombine.low %v6807, %v6809
  %v8685 = vunpack.c.l.s4 1983009808
  %v8686 = vunpack.c.0.s8 %v8685
  %v8687 = vlaneseq
  %v8688 = vshrl.u32 %v8687, 7
  %v8689 = vsub.s32 %v8686, %v8688
  %v8690 = vrot.slane %v8683, %v8689
  %v8691 = vcombine.low %v6808, %v6810
  %v8693 = vunpack.c.l.s4 1983009808
  %v8694 = vunpack.c.0.s8 %v8693
  %v8695 = vlaneseq
  %v8696 = vshrl.u32 %v8695, 7
  %v8697 = vsub.s32 %v8694, %v8696
  %v8698 = vrot.slane %v8691, %v8697
  %v8699 = vcombine.low %v6811, %v6813
  %v8701 = vunpack.c.l.s4 1983009808
  %v8702 = vunpack.c.0.s8 %v8701
  %v8703 = vlaneseq
  %v8704 = vshrl.u32 %v8703, 7
  %v8705 = vsub.s32 %v8702, %v8704
  %v8706 = vrot.slane %v8699, %v8705
  %v8707 = vcombine.low %v6812, %v6814
  %v8709 = vunpack.c.l.s4 1983009808
  %v8710 = vunpack.c.0.s8 %v8709
  %v8711 = vlaneseq
  %v8712 = vshrl.u32 %v8711, 7
  %v8713 = vsub.s32 %v8710, %v8712
  %v8714 = vrot.slane %v8707, %v8713
  %v8715 = vcombine.low %v8690, %v8698
  %v8716 = vcombine.high %v8690, %v8698
  %v8718 = vunpack.c.l.s4 1934713408
  %v8719 = vunpack.c.0.s8 %v8718
  %v8720 = vlaneseq
  %v8721 = vshrl.u32 %v8720, 7
  %v8722 = vsub.s32 %v8719, %v8721
  %v8723 = vrot.slane %v8715, %v8722
  %v8725 = vunpack.c.l.s4 1934713408
  %v8726 = vunpack.c.0.s8 %v8725
  %v8727 = vlaneseq
  %v8728 = vshrl.u32 %v8727, 7
  %v8729 = vsub.s32 %v8726, %v8728
  %v8730 = vrot.slane %v8716, %v8729
  %v8731 = vcombine.low %v8706, %v8714
  %v8732 = vcombine.high %v8706, %v8714
  %v8734 = vunpack.c.l.s4 1934713408
  %v8735 = vunpack.c.0.s8 %v8734
  %v8736 = vlaneseq
  %v8737 = vshrl.u32 %v8736, 7
  %v8738 = vsub.s32 %v8735, %v8737
  %v8739 = vrot.slane %v8731, %v8738
  %v8741 = vunpack.c.l.s4 1934713408
  %v8742 = vunpack.c.0.s8 %v8741
  %v8743 = vlaneseq
  %v8744 = vshrl.u32 %v8743, 7
  %v8745 = vsub.s32 %v8742, %v8744
  %v8746 = vrot.slane %v8732, %v8745
  %v8747 = vcombine.low %v8723, %v8739
  %v8748 = vcombine.high %v8723, %v8739
  %v8749 = vcombine.low %v8730, %v8746
  %v8750 = vcombine.high %v8730, %v8746
  %v8751 = vcombine.low %v6815, %v6817
  %v8753 = vunpack.c.l.s4 1983009808
  %v8754 = vunpack.c.0.s8 %v8753
  %v8755 = vlaneseq
  %v8756 = vshrl.u32 %v8755, 7
  %v8757 = vsub.s32 %v8754, %v8756
  %v8758 = vrot.slane %v8751, %v8757
  %v8759 = vcombine.low %v6816, %v6818
  %v8761 = vunpack.c.l.s4 1983009808
  %v8762 = vunpack.c.0.s8 %v8761
  %v8763 = vlaneseq
  %v8764 = vshrl.u32 %v8763, 7
  %v8765 = vsub.s32 %v8762, %v8764
  %v8766 = vrot.slane %v8759, %v8765
  %v8767 = vcombine.low %v6819, %v6821
  %v8769 = vunpack.c.l.s4 1983009808
  %v8770 = vunpack.c.0.s8 %v8769
  %v8771 = vlaneseq
  %v8772 = vshrl.u32 %v8771, 7
  %v8773 = vsub.s32 %v8770, %v8772
  %v8774 = vrot.slane %v8767, %v8773
  %v8775 = vcombine.low %v6820, %v6822
  %v8777 = vunpack.c.l.s4 1983009808
  %v8778 = vunpack.c.0.s8 %v8777
  %v8779 = vlaneseq
  %v8780 = vshrl.u32 %v8779, 7
  %v8781 = vsub.s32 %v8778, %v8780
  %v8782 = vrot.slane %v8775, %v8781
  %v8783 = vcombine.low %v8758, %v8766
  %v8784 = vcombine.high %v8758, %v8766
  %v8786 = vunpack.c.l.s4 1934713408
  %v8787 = vunpack.c.0.s8 %v8786
  %v8788 = vlaneseq
  %v8789 = vshrl.u32 %v8788, 7
  %v8790 = vsub.s32 %v8787, %v8789
  %v8791 = vrot.slane %v8783, %v8790
  %v8793 = vunpack.c.l.s4 1934713408
  %v8794 = vunpack.c.0.s8 %v8793
  %v8795 = vlaneseq
  %v8796 = vshrl.u32 %v8795, 7
  %v8797 = vsub.s32 %v8794, %v8796
  %v8798 = vrot.slane %v8784, %v8797
  %v8799 = vcombine.low %v8774, %v8782
  %v8800 = vcombine.high %v8774, %v8782
  %v8802 = vunpack.c.l.s4 1934713408
  %v8803 = vunpack.c.0.s8 %v8802
  %v8804 = vlaneseq
  %v8805 = vshrl.u32 %v8804, 7
  %v8806 = vsub.s32 %v8803, %v8805
  %v8807 = vrot.slane %v8799, %v8806
  %v8809 = vunpack.c.l.s4 1934713408
  %v8810 = vunpack.c.0.s8 %v8809
  %v8811 = vlaneseq
  %v8812 = vshrl.u32 %v8811, 7
  %v8813 = vsub.s32 %v8810, %v8812
  %v8814 = vrot.slane %v8800, %v8813
  %v8815 = vcombine.low %v8791, %v8807
  %v8816 = vcombine.high %v8791, %v8807
  %v8817 = vcombine.low %v8798, %v8814
  %v8818 = vcombine.high %v8798, %v8814
  %v8819 = vcombine.low %v6823, %v6825
  %v8821 = vunpack.c.l.s4 1983009808
  %v8822 = vunpack.c.0.s8 %v8821
  %v8823 = vlaneseq
  %v8824 = vshrl.u32 %v8823, 7
  %v8825 = vsub.s32 %v8822, %v8824
  %v8826 = vrot.slane %v8819, %v8825
  %v8827 = vcombine.low %v6824, %v6826
  %v8829 = vunpack.c.l.s4 1983009808
  %v8830 = vunpack.c.0.s8 %v8829
  %v8831 = vlaneseq
  %v8832 = vshrl.u32 %v8831, 7
  %v8833 = vsub.s32 %v8830, %v8832
  %v8834 = vrot.slane %v8827, %v8833
  %v8835 = vcombine.low %v6827, %v6829
  %v8837 = vunpack.c.l.s4 1983009808
  %v8838 = vunpack.c.0.s8 %v8837
  %v8839 = vlaneseq
  %v8840 = vshrl.u32 %v8839, 7
  %v8841 = vsub.s32 %v8838, %v8840
  %v8842 = vrot.slane %v8835, %v8841
  %v8843 = vcombine.low %v6828, %v6830
  %v8845 = vunpack.c.l.s4 1983009808
  %v8846 = vunpack.c.0.s8 %v8845
  %v8847 = vlaneseq
  %v8848 = vshrl.u32 %v8847, 7
  %v8849 = vsub.s32 %v8846, %v8848
  %v8850 = vrot.slane %v8843, %v8849
  %v8851 = vcombine.low %v8826, %v8834
  %v8852 = vcombine.high %v8826, %v8834
  %v8854 = vunpack.c.l.s4 1934713408
  %v8855 = vunpack.c.0.s8 %v8854
  %v8856 = vlaneseq
  %v8857 = vshrl.u32 %v8856, 7
  %v8858 = vsub.s32 %v8855, %v8857
  %v8859 = vrot.slane %v8851, %v8858
  %v8861 = vunpack.c.l.s4 1934713408
  %v8862 = vunpack.c.0.s8 %v8861
  %v8863 = vlaneseq
  %v8864 = vshrl.u32 %v8863, 7
  %v8865 = vsub.s32 %v8862, %v8864
  %v8866 = vrot.slane %v8852, %v8865
  %v8867 = vcombine.low %v8842, %v8850
  %v8868 = vcombine.high %v8842, %v8850
  %v8870 = vunpack.c.l.s4 1934713408
  %v8871 = vunpack.c.0.s8 %v8870
  %v8872 = vlaneseq
  %v8873 = vshrl.u32 %v8872, 7
  %v8874 = vsub.s32 %v8871, %v8873
  %v8875 = vrot.slane %v8867, %v8874
  %v8877 = vunpack.c.l.s4 1934713408
  %v8878 = vunpack.c.0.s8 %v8877
  %v8879 = vlaneseq
  %v8880 = vshrl.u32 %v8879, 7
  %v8881 = vsub.s32 %v8878, %v8880
  %v8882 = vrot.slane %v8868, %v8881
  %v8883 = vcombine.low %v8859, %v8875
  %v8884 = vcombine.high %v8859, %v8875
  %v8885 = vcombine.low %v8866, %v8882
  %v8886 = vcombine.high %v8866, %v8882
  %v8887 = vcombine.low %v6831, %v6833
  %v8889 = vunpack.c.l.s4 1983009808
  %v8890 = vunpack.c.0.s8 %v8889
  %v8891 = vlaneseq
  %v8892 = vshrl.u32 %v8891, 7
  %v8893 = vsub.s32 %v8890, %v8892
  %v8894 = vrot.slane %v8887, %v8893
  %v8895 = vcombine.low %v6832, %v6834
  %v8897 = vunpack.c.l.s4 1983009808
  %v8898 = vunpack.c.0.s8 %v8897
  %v8899 = vlaneseq
  %v8900 = vshrl.u32 %v8899, 7
  %v8901 = vsub.s32 %v8898, %v8900
  %v8902 = vrot.slane %v8895, %v8901
  %v8903 = vcombine.low %v6835, %v6837
  %v8905 = vunpack.c.l.s4 1983009808
  %v8906 = vunpack.c.0.s8 %v8905
  %v8907 = vlaneseq
  %v8908 = vshrl.u32 %v8907, 7
  %v8909 = vsub.s32 %v8906, %v8908
  %v8910 = vrot.slane %v8903, %v8909
  %v8911 = vcombine.low %v6836, %v6838
  %v8913 = vunpack.c.l.s4 1983009808
  %v8914 = vunpack.c.0.s8 %v8913
  %v8915 = vlaneseq
  %v8916 = vshrl.u32 %v8915, 7
  %v8917 = vsub.s32 %v8914, %v8916
  %v8918 = vrot.slane %v8911, %v8917
  %v8919 = vcombine.low %v8894, %v8902
  %v8920 = vcombine.high %v8894, %v8902
  %v8922 = vunpack.c.l.s4 1934713408
  %v8923 = vunpack.c.0.s8 %v8922
  %v8924 = vlaneseq
  %v8925 = vshrl.u32 %v8924, 7
  %v8926 = vsub.s32 %v8923, %v8925
  %v8927 = vrot.slane %v8919, %v8926
  %v8929 = vunpack.c.l.s4 1934713408
  %v8930 = vunpack.c.0.s8 %v8929
  %v8931 = vlaneseq
  %v8932 = vshrl.u32 %v8931, 7
  %v8933 = vsub.s32 %v8930, %v8932
  %v8934 = vrot.slane %v8920, %v8933
  %v8935 = vcombine.low %v8910, %v8918
  %v8936 = vcombine.high %v8910, %v8918
  %v8938 = vunpack.c.l.s4 1934713408
  %v8939 = vunpack.c.0.s8 %v8938
  %v8940 = vlaneseq
  %v8941 = vshrl.u32 %v8940, 7
  %v8942 = vsub.s32 %v8939, %v8941
  %v8943 = vrot.slane %v8935, %v8942
  %v8945 = vunpack.c.l.s4 1934713408
  %v8946 = vunpack.c.0.s8 %v8945
  %v8947 = vlaneseq
  %v8948 = vshrl.u32 %v8947, 7
  %v8949 = vsub.s32 %v8946, %v8948
  %v8950 = vrot.slane %v8936, %v8949
  %v8951 = vcombine.low %v8927, %v8943
  %v8952 = vcombine.high %v8927, %v8943
  %v8953 = vcombine.low %v8934, %v8950
  %v8954 = vcombine.high %v8934, %v8950
  %v8955 = vcombine.low %v6839, %v6841
  %v8957 = vunpack.c.l.s4 1983009808
  %v8958 = vunpack.c.0.s8 %v8957
  %v8959 = vlaneseq
  %v8960 = vshrl.u32 %v8959, 7
  %v8961 = vsub.s32 %v8958, %v8960
  %v8962 = vrot.slane %v8955, %v8961
  %v8963 = vcombine.low %v6840, %v6842
  %v8965 = vunpack.c.l.s4 1983009808
  %v8966 = vunpack.c.0.s8 %v8965
  %v8967 = vlaneseq
  %v8968 = vshrl.u32 %v8967, 7
  %v8969 = vsub.s32 %v8966, %v8968
  %v8970 = vrot.slane %v8963, %v8969
  %v8971 = vcombine.low %v6843, %v6845
  %v8973 = vunpack.c.l.s4 1983009808
  %v8974 = vunpack.c.0.s8 %v8973
  %v8975 = vlaneseq
  %v8976 = vshrl.u32 %v8975, 7
  %v8977 = vsub.s32 %v8974, %v8976
  %v8978 = vrot.slane %v8971, %v8977
  %v8979 = vcombine.low %v6844, %v6846
  %v8981 = vunpack.c.l.s4 1983009808
  %v8982 = vunpack.c.0.s8 %v8981
  %v8983 = vlaneseq
  %v8984 = vshrl.u32 %v8983, 7
  %v8985 = vsub.s32 %v8982, %v8984
  %v8986 = vrot.slane %v8979, %v8985
  %v8987 = vcombine.low %v8962, %v8970
  %v8988 = vcombine.high %v8962, %v8970
  %v8990 = vunpack.c.l.s4 1934713408
  %v8991 = vunpack.c.0.s8 %v8990
  %v8992 = vlaneseq
  %v8993 = vshrl.u32 %v8992, 7
  %v8994 = vsub.s32 %v8991, %v8993
  %v8995 = vrot.slane %v8987, %v8994
  %v8997 = vunpack.c.l.s4 1934713408
  %v8998 = vunpack.c.0.s8 %v8997
  %v8999 = vlaneseq
  %v9000 = vshrl.u32 %v8999, 7
  %v9001 = vsub.s32 %v8998, %v9000
  %v9002 = vrot.slane %v8988, %v9001
  %v9003 = vcombine.low %v8978, %v8986
  %v9004 = vcombine.high %v8978, %v8986
  %v9006 = vunpack.c.l.s4 1934713408
  %v9007 = vunpack.c.0.s8 %v9006
  %v9008 = vlaneseq
  %v9009 = vshrl.u32 %v9008, 7
  %v9010 = vsub.s32 %v9007, %v9009
  %v9011 = vrot.slane %v9003, %v9010
  %v9013 = vunpack.c.l.s4 1934713408
  %v9014 = vunpack.c.0.s8 %v9013
  %v9015 = vlaneseq
  %v9016 = vshrl.u32 %v9015, 7
  %v9017 = vsub.s32 %v9014, %v9016
  %v9018 = vrot.slane %v9004, %v9017
  %v9019 = vcombine.low %v8995, %v9011
  %v9020 = vcombine.high %v8995, %v9011
  %v9021 = vcombine.low %v9002, %v9018
  %v9022 = vcombine.high %v9002, %v9018
  %9055 = vrot.lane.b32.xlu0 %v6912, 8
  %v9056 = vpop.permute.xlu0 %9055
  %9057 = vrot.lane.b32.xlu0 %v6980, 8
  %v9058 = vpop.permute.xlu0 %9057
  %9059 = vrot.lane.b32.xlu0 %v7048, 8
  %v9060 = vpop.permute.xlu0 %9059
  %9061 = vrot.lane.b32.xlu0 %v7116, 8
  %v9062 = vpop.permute.xlu0 %9061
  %9063 = vrot.lane.b32.xlu0 %v7184, 8
  %v9064 = vpop.permute.xlu0 %9063
  %9065 = vrot.lane.b32.xlu0 %v7252, 8
  %v9066 = vpop.permute.xlu0 %9065
  %9067 = vrot.lane.b32.xlu0 %v7320, 8
  %v9068 = vpop.permute.xlu0 %9067
  %9069 = vrot.lane.b32.xlu0 %v7388, 8
  %v9070 = vpop.permute.xlu0 %9069
  %9071 = vrot.lane.b32.xlu0 %v7456, 8
  %v9072 = vpop.permute.xlu0 %9071
  %9073 = vrot.lane.b32.xlu0 %v7524, 8
  %v9074 = vpop.permute.xlu0 %9073
  %9075 = vrot.lane.b32.xlu0 %v7592, 8
  %v9076 = vpop.permute.xlu0 %9075
  %9077 = vrot.lane.b32.xlu0 %v7660, 8
  %v9078 = vpop.permute.xlu0 %9077
  %9079 = vrot.lane.b32.xlu0 %v7728, 8
  %v9080 = vpop.permute.xlu0 %9079
  %9081 = vrot.lane.b32.xlu0 %v7796, 8
  %v9082 = vpop.permute.xlu0 %9081
  %9083 = vrot.lane.b32.xlu0 %v7864, 8
  %v9084 = vpop.permute.xlu0 %9083
  %9085 = vrot.lane.b32.xlu0 %v7932, 8
  %v9086 = vpop.permute.xlu0 %9085
  %9087 = vrot.lane.b32.xlu0 %v8000, 8
  %v9088 = vpop.permute.xlu0 %9087
  %9089 = vrot.lane.b32.xlu0 %v8068, 8
  %v9090 = vpop.permute.xlu0 %9089
  %9091 = vrot.lane.b32.xlu0 %v8136, 8
  %v9092 = vpop.permute.xlu0 %9091
  %9093 = vrot.lane.b32.xlu0 %v8204, 8
  %v9094 = vpop.permute.xlu0 %9093
  %9095 = vrot.lane.b32.xlu0 %v8272, 8
  %v9096 = vpop.permute.xlu0 %9095
  %9097 = vrot.lane.b32.xlu0 %v8340, 8
  %v9098 = vpop.permute.xlu0 %9097
  %9099 = vrot.lane.b32.xlu0 %v8408, 8
  %v9100 = vpop.permute.xlu0 %9099
  %9101 = vrot.lane.b32.xlu0 %v8476, 8
  %v9102 = vpop.permute.xlu0 %9101
  %9103 = vrot.lane.b32.xlu0 %v8544, 8
  %v9104 = vpop.permute.xlu0 %9103
  %9105 = vrot.lane.b32.xlu0 %v8612, 8
  %v9106 = vpop.permute.xlu0 %9105
  %9107 = vrot.lane.b32.xlu0 %v8680, 8
  %v9108 = vpop.permute.xlu0 %9107
  %9109 = vrot.lane.b32.xlu0 %v8748, 8
  %v9110 = vpop.permute.xlu0 %9109
  %9111 = vrot.lane.b32.xlu0 %v8816, 8
  %v9112 = vpop.permute.xlu0 %9111
  %9113 = vrot.lane.b32.xlu0 %v8884, 8
  %v9114 = vpop.permute.xlu0 %9113
  %9115 = vrot.lane.b32.xlu0 %v8952, 8
  %v9116 = vpop.permute.xlu0 %9115
  %9117 = vrot.lane.b32.xlu0 %v9020, 8
  %v9118 = vpop.permute.xlu0 %9117
  %9183 = vrot.lane.b32.xlu0 %v6913, 16
  %v9184 = vpop.permute.xlu0 %9183
  %9185 = vrot.lane.b32.xlu0 %v6981, 16
  %v9186 = vpop.permute.xlu0 %9185
  %9187 = vrot.lane.b32.xlu0 %v7049, 16
  %v9188 = vpop.permute.xlu0 %9187
  %9189 = vrot.lane.b32.xlu0 %v7117, 16
  %v9190 = vpop.permute.xlu0 %9189
  %9191 = vrot.lane.b32.xlu0 %v7185, 16
  %v9192 = vpop.permute.xlu0 %9191
  %9193 = vrot.lane.b32.xlu0 %v7253, 16
  %v9194 = vpop.permute.xlu0 %9193
  %9195 = vrot.lane.b32.xlu0 %v7321, 16
  %v9196 = vpop.permute.xlu0 %9195
  %9197 = vrot.lane.b32.xlu0 %v7389, 16
  %v9198 = vpop.permute.xlu0 %9197
  %9199 = vrot.lane.b32.xlu0 %v7457, 16
  %v9200 = vpop.permute.xlu0 %9199
  %9201 = vrot.lane.b32.xlu0 %v7525, 16
  %v9202 = vpop.permute.xlu0 %9201
  %9203 = vrot.lane.b32.xlu0 %v7593, 16
  %v9204 = vpop.permute.xlu0 %9203
  %9205 = vrot.lane.b32.xlu0 %v7661, 16
  %v9206 = vpop.permute.xlu0 %9205
  %9207 = vrot.lane.b32.xlu0 %v7729, 16
  %v9208 = vpop.permute.xlu0 %9207
  %9209 = vrot.lane.b32.xlu0 %v7797, 16
  %v9210 = vpop.permute.xlu0 %9209
  %9211 = vrot.lane.b32.xlu0 %v7865, 16
  %v9212 = vpop.permute.xlu0 %9211
  %9213 = vrot.lane.b32.xlu0 %v7933, 16
  %v9214 = vpop.permute.xlu0 %9213
  %9215 = vrot.lane.b32.xlu0 %v8001, 16
  %v9216 = vpop.permute.xlu0 %9215
  %9217 = vrot.lane.b32.xlu0 %v8069, 16
  %v9218 = vpop.permute.xlu0 %9217
  %9219 = vrot.lane.b32.xlu0 %v8137, 16
  %v9220 = vpop.permute.xlu0 %9219
  %9221 = vrot.lane.b32.xlu0 %v8205, 16
  %v9222 = vpop.permute.xlu0 %9221
  %9223 = vrot.lane.b32.xlu0 %v8273, 16
  %v9224 = vpop.permute.xlu0 %9223
  %9225 = vrot.lane.b32.xlu0 %v8341, 16
  %v9226 = vpop.permute.xlu0 %9225
  %9227 = vrot.lane.b32.xlu0 %v8409, 16
  %v9228 = vpop.permute.xlu0 %9227
  %9229 = vrot.lane.b32.xlu0 %v8477, 16
  %v9230 = vpop.permute.xlu0 %9229
  %9231 = vrot.lane.b32.xlu0 %v8545, 16
  %v9232 = vpop.permute.xlu0 %9231
  %9233 = vrot.lane.b32.xlu0 %v8613, 16
  %v9234 = vpop.permute.xlu0 %9233
  %9235 = vrot.lane.b32.xlu0 %v8681, 16
  %v9236 = vpop.permute.xlu0 %9235
  %9237 = vrot.lane.b32.xlu0 %v8749, 16
  %v9238 = vpop.permute.xlu0 %9237
  %9239 = vrot.lane.b32.xlu0 %v8817, 16
  %v9240 = vpop.permute.xlu0 %9239
  %9241 = vrot.lane.b32.xlu0 %v8885, 16
  %v9242 = vpop.permute.xlu0 %9241
  %9243 = vrot.lane.b32.xlu0 %v8953, 16
  %v9244 = vpop.permute.xlu0 %9243
  %9245 = vrot.lane.b32.xlu0 %v9021, 16
  %v9246 = vpop.permute.xlu0 %9245
  %9311 = vrot.lane.b32.xlu0 %v6914, 24
  %v9312 = vpop.permute.xlu0 %9311
  %9313 = vrot.lane.b32.xlu0 %v6982, 24
  %v9314 = vpop.permute.xlu0 %9313
  %9315 = vrot.lane.b32.xlu0 %v7050, 24
  %v9316 = vpop.permute.xlu0 %9315
  %9317 = vrot.lane.b32.xlu0 %v7118, 24
  %v9318 = vpop.permute.xlu0 %9317
  %9319 = vrot.lane.b32.xlu0 %v7186, 24
  %v9320 = vpop.permute.xlu0 %9319
  %9321 = vrot.lane.b32.xlu0 %v7254, 24
  %v9322 = vpop.permute.xlu0 %9321
  %9323 = vrot.lane.b32.xlu0 %v7322, 24
  %v9324 = vpop.permute.xlu0 %9323
  %9325 = vrot.lane.b32.xlu0 %v7390, 24
  %v9326 = vpop.permute.xlu0 %9325
  %9327 = vrot.lane.b32.xlu0 %v7458, 24
  %v9328 = vpop.permute.xlu0 %9327
  %9329 = vrot.lane.b32.xlu0 %v7526, 24
  %v9330 = vpop.permute.xlu0 %9329
  %9331 = vrot.lane.b32.xlu0 %v7594, 24
  %v9332 = vpop.permute.xlu0 %9331
  %9333 = vrot.lane.b32.xlu0 %v7662, 24
  %v9334 = vpop.permute.xlu0 %9333
  %9335 = vrot.lane.b32.xlu0 %v7730, 24
  %v9336 = vpop.permute.xlu0 %9335
  %9337 = vrot.lane.b32.xlu0 %v7798, 24
  %v9338 = vpop.permute.xlu0 %9337
  %9339 = vrot.lane.b32.xlu0 %v7866, 24
  %v9340 = vpop.permute.xlu0 %9339
  %9341 = vrot.lane.b32.xlu0 %v7934, 24
  %v9342 = vpop.permute.xlu0 %9341
  %9343 = vrot.lane.b32.xlu0 %v8002, 24
  %v9344 = vpop.permute.xlu0 %9343
  %9345 = vrot.lane.b32.xlu0 %v8070, 24
  %v9346 = vpop.permute.xlu0 %9345
  %9347 = vrot.lane.b32.xlu0 %v8138, 24
  %v9348 = vpop.permute.xlu0 %9347
  %9349 = vrot.lane.b32.xlu0 %v8206, 24
  %v9350 = vpop.permute.xlu0 %9349
  %9351 = vrot.lane.b32.xlu0 %v8274, 24
  %v9352 = vpop.permute.xlu0 %9351
  %9353 = vrot.lane.b32.xlu0 %v8342, 24
  %v9354 = vpop.permute.xlu0 %9353
  %9355 = vrot.lane.b32.xlu0 %v8410, 24
  %v9356 = vpop.permute.xlu0 %9355
  %9357 = vrot.lane.b32.xlu0 %v8478, 24
  %v9358 = vpop.permute.xlu0 %9357
  %9359 = vrot.lane.b32.xlu0 %v8546, 24
  %v9360 = vpop.permute.xlu0 %9359
  %9361 = vrot.lane.b32.xlu0 %v8614, 24
  %v9362 = vpop.permute.xlu0 %9361
  %9363 = vrot.lane.b32.xlu0 %v8682, 24
  %v9364 = vpop.permute.xlu0 %9363
  %9365 = vrot.lane.b32.xlu0 %v8750, 24
  %v9366 = vpop.permute.xlu0 %9365
  %9367 = vrot.lane.b32.xlu0 %v8818, 24
  %v9368 = vpop.permute.xlu0 %9367
  %9369 = vrot.lane.b32.xlu0 %v8886, 24
  %v9370 = vpop.permute.xlu0 %9369
  %9371 = vrot.lane.b32.xlu0 %v8954, 24
  %v9372 = vpop.permute.xlu0 %9371
  %9373 = vrot.lane.b32.xlu0 %v9022, 24
  %v9374 = vpop.permute.xlu0 %9373
  %vm9407 = vcmask 64512
  %v9408 = vsel %vm9407, %v6911, %v9056
  %v9409 = vsel %vm9407, %v6979, %v9058
  %v9410 = vsel %vm9407, %v7047, %v9060
  %v9411 = vsel %vm9407, %v7115, %v9062
  %v9412 = vsel %vm9407, %v7183, %v9064
  %v9413 = vsel %vm9407, %v7251, %v9066
  %v9414 = vsel %vm9407, %v7319, %v9068
  %v9415 = vsel %vm9407, %v7387, %v9070
  %v9416 = vsel %vm9407, %v7455, %v9072
  %v9417 = vsel %vm9407, %v7523, %v9074
  %v9418 = vsel %vm9407, %v7591, %v9076
  %v9419 = vsel %vm9407, %v7659, %v9078
  %v9420 = vsel %vm9407, %v7727, %v9080
  %v9421 = vsel %vm9407, %v7795, %v9082
  %v9422 = vsel %vm9407, %v7863, %v9084
  %v9423 = vsel %vm9407, %v7931, %v9086
  %v9424 = vsel %vm9407, %v7999, %v9088
  %v9425 = vsel %vm9407, %v8067, %v9090
  %v9426 = vsel %vm9407, %v8135, %v9092
  %v9427 = vsel %vm9407, %v8203, %v9094
  %v9428 = vsel %vm9407, %v8271, %v9096
  %v9429 = vsel %vm9407, %v8339, %v9098
  %v9430 = vsel %vm9407, %v8407, %v9100
  %v9431 = vsel %vm9407, %v8475, %v9102
  %v9432 = vsel %vm9407, %v8543, %v9104
  %v9433 = vsel %vm9407, %v8611, %v9106
  %v9434 = vsel %vm9407, %v8679, %v9108
  %v9435 = vsel %vm9407, %v8747, %v9110
  %v9436 = vsel %vm9407, %v8815, %v9112
  %v9437 = vsel %vm9407, %v8883, %v9114
  %v9438 = vsel %vm9407, %v8951, %v9116
  %v9439 = vsel %vm9407, %v9019, %v9118
  %vm9440 = vcmask 130048
  %v9441 = vsel %vm9440, %v9408, %v9184
  %v9442 = vsel %vm9440, %v9409, %v9186
  %v9443 = vsel %vm9440, %v9410, %v9188
  %v9444 = vsel %vm9440, %v9411, %v9190
  %v9445 = vsel %vm9440, %v9412, %v9192
  %v9446 = vsel %vm9440, %v9413, %v9194
  %v9447 = vsel %vm9440, %v9414, %v9196
  %v9448 = vsel %vm9440, %v9415, %v9198
  %v9449 = vsel %vm9440, %v9416, %v9200
  %v9450 = vsel %vm9440, %v9417, %v9202
  %v9451 = vsel %vm9440, %v9418, %v9204
  %v9452 = vsel %vm9440, %v9419, %v9206
  %v9453 = vsel %vm9440, %v9420, %v9208
  %v9454 = vsel %vm9440, %v9421, %v9210
  %v9455 = vsel %vm9440, %v9422, %v9212
  %v9456 = vsel %vm9440, %v9423, %v9214
  %v9457 = vsel %vm9440, %v9424, %v9216
  %v9458 = vsel %vm9440, %v9425, %v9218
  %v9459 = vsel %vm9440, %v9426, %v9220
  %v9460 = vsel %vm9440, %v9427, %v9222
  %v9461 = vsel %vm9440, %v9428, %v9224
  %v9462 = vsel %vm9440, %v9429, %v9226
  %v9463 = vsel %vm9440, %v9430, %v9228
  %v9464 = vsel %vm9440, %v9431, %v9230
  %v9465 = vsel %vm9440, %v9432, %v9232
  %v9466 = vsel %vm9440, %v9433, %v9234
  %v9467 = vsel %vm9440, %v9434, %v9236
  %v9468 = vsel %vm9440, %v9435, %v9238
  %v9469 = vsel %vm9440, %v9436, %v9240
  %v9470 = vsel %vm9440, %v9437, %v9242
  %v9471 = vsel %vm9440, %v9438, %v9244
  %v9472 = vsel %vm9440, %v9439, %v9246
  %vm9473 = vcmask 195584
  %v9474 = vsel %vm9473, %v9441, %v9312
  %v9475 = vsel %vm9473, %v9442, %v9314
  %v9476 = vsel %vm9473, %v9443, %v9316
  %v9477 = vsel %vm9473, %v9444, %v9318
  %v9478 = vsel %vm9473, %v9445, %v9320
  %v9479 = vsel %vm9473, %v9446, %v9322
  %v9480 = vsel %vm9473, %v9447, %v9324
  %v9481 = vsel %vm9473, %v9448, %v9326
  %v9482 = vsel %vm9473, %v9449, %v9328
  %v9483 = vsel %vm9473, %v9450, %v9330
  %v9484 = vsel %vm9473, %v9451, %v9332
  %v9485 = vsel %vm9473, %v9452, %v9334
  %v9486 = vsel %vm9473, %v9453, %v9336
  %v9487 = vsel %vm9473, %v9454, %v9338
  %v9488 = vsel %vm9473, %v9455, %v9340
  %v9489 = vsel %vm9473, %v9456, %v9342
  %v9490 = vsel %vm9473, %v9457, %v9344
  %v9491 = vsel %vm9473, %v9458, %v9346
  %v9492 = vsel %vm9473, %v9459, %v9348
  %v9493 = vsel %vm9473, %v9460, %v9350
  %v9494 = vsel %vm9473, %v9461, %v9352
  %v9495 = vsel %vm9473, %v9462, %v9354
  %v9496 = vsel %vm9473, %v9463, %v9356
  %v9497 = vsel %vm9473, %v9464, %v9358
  %v9498 = vsel %vm9473, %v9465, %v9360
  %v9499 = vsel %vm9473, %v9466, %v9362
  %v9500 = vsel %vm9473, %v9467, %v9364
  %v9501 = vsel %vm9473, %v9468, %v9366
  %v9502 = vsel %vm9473, %v9469, %v9368
  %v9503 = vsel %vm9473, %v9470, %v9370
  %v9504 = vsel %vm9473, %v9471, %v9372
  %v9505 = vsel %vm9473, %v9472, %v9374
  %v9506 = vpack.c.bf16 %v9475, %v9474
  %v9507 = vpack.c.bf16 %v9477, %v9476
  %v9508 = vpack.c.bf16 %v9479, %v9478
  %v9509 = vpack.c.bf16 %v9481, %v9480
  %v9510 = vpack.c.bf16 %v9483, %v9482
  %v9511 = vpack.c.bf16 %v9485, %v9484
  %v9512 = vpack.c.bf16 %v9487, %v9486
  %v9513 = vpack.c.bf16 %v9489, %v9488
  %v9514 = vpack.c.bf16 %v9491, %v9490
  %v9515 = vpack.c.bf16 %v9493, %v9492
  %v9516 = vpack.c.bf16 %v9495, %v9494
  %v9517 = vpack.c.bf16 %v9497, %v9496
  %v9518 = vpack.c.bf16 %v9499, %v9498
  %v9519 = vpack.c.bf16 %v9501, %v9500
  %v9520 = vpack.c.bf16 %v9503, %v9502
  %v9521 = vpack.c.bf16 %v9505, %v9504
  %v9523 = vsel %vm174, %v9506, 0
  %9525 = vmatprep.subr.bf16.mxu0 0
  %9526 = vmatpush1.bf16.msra.mxu0 0
  %9527 = vmatprep.subr.bf16.mxu0 0
  %9528 = vmatpush1.bf16.msra.mxu0 0
  %9529 = vmatprep.subr.bf16.mxu0 0
  %9530 = vmatpush1.bf16.msra.mxu0 0
  %9531 = vmatprep.subr.bf16.mxu0 0
  %9532 = vmatpush1.bf16.msra.mxu0 0
  %9533 = vmatprep.subr.bf16.mxu0 0
  %9534 = vmatpush1.bf16.msra.mxu0 0
  %9535 = vmatprep.subr.bf16.mxu0 0
  %9536 = vmatpush1.bf16.msra.mxu0 0
  %9537 = vmatprep.subr.bf16.mxu0 0
  %9538 = vmatpush1.bf16.msra.mxu0 %v847
  %9539 = vmatprep.subr.bf16.mxu0 0
  %9540 = vmatpush1.bf16.msra.mxu0 %v846
  %9541 = vmatprep.subr.bf16.mxu0 0
  %9542 = vmatpush2.bf16.msra.mxu0 0
  %9543 = vmatprep.subr.bf16.mxu0 0
  %9544 = vmatpush2.bf16.msra.mxu0 0
  %9545 = vmatprep.subr.bf16.mxu0 0
  %9546 = vmatpush2.bf16.msra.mxu0 0
  %9547 = vmatprep.subr.bf16.mxu0 0
  %9548 = vmatpush2.bf16.msra.mxu0 0
  %9549 = vmatprep.subr.bf16.mxu0 0
  %9550 = vmatpush2.bf16.msra.mxu0 0
  %9551 = vmatprep.subr.bf16.mxu0 0
  %9552 = vmatpush2.bf16.msra.mxu0 0
  %9553 = vmatprep.subr.bf16.mxu0 0
  %9554 = vmatpush2.bf16.msra.mxu0 0
  %9555 = vmatprep.subr.bf16.mxu0 0
  %9556 = vmatpush2.bf16.msra.mxu0 0
  %9557 = vmatprep.mubr.bf16.mxu0 0
  %9558 = vmatmul.mubr.bf16.gmra.mxu0 %v9523
  %v9559 = vpop.f32.mrf.mxu0
  %v9560 = vadd.f32 0.0, %v9559
  %v9561 = vpop.f32.mrf.mxu0
  %v9562 = vpop.f32.mrf.mxu0
  %v9563 = vadd.f32 0.0, %v9562
  %v9564 = vpop.f32.mrf.mxu0
  %9565 = vdwg.mxu0
  %v9567 = vsel %vm174, %v9507, 0
  %9569 = vmatprep.subr.bf16.mxu0 0
  %9570 = vmatpush1.bf16.msra.mxu0 0
  %9571 = vmatprep.subr.bf16.mxu0 0
  %9572 = vmatpush1.bf16.msra.mxu0 0
  %9573 = vmatprep.subr.bf16.mxu0 0
  %9574 = vmatpush1.bf16.msra.mxu0 0
  %9575 = vmatprep.subr.bf16.mxu0 0
  %9576 = vmatpush1.bf16.msra.mxu0 0
  %9577 = vmatprep.subr.bf16.mxu0 0
  %9578 = vmatpush1.bf16.msra.mxu0 0
  %9579 = vmatprep.subr.bf16.mxu0 0
  %9580 = vmatpush1.bf16.msra.mxu0 0
  %9581 = vmatprep.subr.bf16.mxu0 0
  %9582 = vmatpush1.bf16.msra.mxu0 %v849
  %9583 = vmatprep.subr.bf16.mxu0 0
  %9584 = vmatpush1.bf16.msra.mxu0 %v848
  %9585 = vmatprep.subr.bf16.mxu0 0
  %9586 = vmatpush2.bf16.msra.mxu0 0
  %9587 = vmatprep.subr.bf16.mxu0 0
  %9588 = vmatpush2.bf16.msra.mxu0 0
  %9589 = vmatprep.subr.bf16.mxu0 0
  %9590 = vmatpush2.bf16.msra.mxu0 0
  %9591 = vmatprep.subr.bf16.mxu0 0
  %9592 = vmatpush2.bf16.msra.mxu0 0
  %9593 = vmatprep.subr.bf16.mxu0 0
  %9594 = vmatpush2.bf16.msra.mxu0 0
  %9595 = vmatprep.subr.bf16.mxu0 0
  %9596 = vmatpush2.bf16.msra.mxu0 0
  %9597 = vmatprep.subr.bf16.mxu0 0
  %9598 = vmatpush2.bf16.msra.mxu0 0
  %9599 = vmatprep.subr.bf16.mxu0 0
  %9600 = vmatpush2.bf16.msra.mxu0 0
  %9601 = vmatprep.mubr.bf16.mxu0 0
  %9602 = vmatmul.mubr.bf16.gmra.mxu0 %v9567
  %v9603 = vpop.f32.mrf.mxu0
  %v9604 = vadd.f32 0.0, %v9603
  %v9605 = vpop.f32.mrf.mxu0
  %v9606 = vpop.f32.mrf.mxu0
  %v9607 = vadd.f32 0.0, %v9606
  %v9608 = vpop.f32.mrf.mxu0
  %9609 = vdwg.mxu0
  %v9611 = vsel %vm174, %v9508, 0
  %9613 = vmatprep.subr.bf16.mxu0 0
  %9614 = vmatpush1.bf16.msra.mxu0 0
  %9615 = vmatprep.subr.bf16.mxu0 0
  %9616 = vmatpush1.bf16.msra.mxu0 0
  %9617 = vmatprep.subr.bf16.mxu0 0
  %9618 = vmatpush1.bf16.msra.mxu0 0
  %9619 = vmatprep.subr.bf16.mxu0 0
  %9620 = vmatpush1.bf16.msra.mxu0 0
  %9621 = vmatprep.subr.bf16.mxu0 0
  %9622 = vmatpush1.bf16.msra.mxu0 0
  %9623 = vmatprep.subr.bf16.mxu0 0
  %9624 = vmatpush1.bf16.msra.mxu0 0
  %9625 = vmatprep.subr.bf16.mxu0 0
  %9626 = vmatpush1.bf16.msra.mxu0 %v851
  %9627 = vmatprep.subr.bf16.mxu0 0
  %9628 = vmatpush1.bf16.msra.mxu0 %v850
  %9629 = vmatprep.subr.bf16.mxu0 0
  %9630 = vmatpush2.bf16.msra.mxu0 0
  %9631 = vmatprep.subr.bf16.mxu0 0
  %9632 = vmatpush2.bf16.msra.mxu0 0
  %9633 = vmatprep.subr.bf16.mxu0 0
  %9634 = vmatpush2.bf16.msra.mxu0 0
  %9635 = vmatprep.subr.bf16.mxu0 0
  %9636 = vmatpush2.bf16.msra.mxu0 0
  %9637 = vmatprep.subr.bf16.mxu0 0
  %9638 = vmatpush2.bf16.msra.mxu0 0
  %9639 = vmatprep.subr.bf16.mxu0 0
  %9640 = vmatpush2.bf16.msra.mxu0 0
  %9641 = vmatprep.subr.bf16.mxu0 0
  %9642 = vmatpush2.bf16.msra.mxu0 0
  %9643 = vmatprep.subr.bf16.mxu0 0
  %9644 = vmatpush2.bf16.msra.mxu0 0
  %9645 = vmatprep.mubr.bf16.mxu0 0
  %9646 = vmatmul.mubr.bf16.gmra.mxu0 %v9611
  %v9647 = vpop.f32.mrf.mxu0
  %v9648 = vadd.f32 0.0, %v9647
  %v9649 = vpop.f32.mrf.mxu0
  %v9650 = vpop.f32.mrf.mxu0
  %v9651 = vadd.f32 0.0, %v9650
  %v9652 = vpop.f32.mrf.mxu0
  %9653 = vdwg.mxu0
  %v9655 = vsel %vm174, %v9509, 0
  %9657 = vmatprep.subr.bf16.mxu0 0
  %9658 = vmatpush1.bf16.msra.mxu0 0
  %9659 = vmatprep.subr.bf16.mxu0 0
  %9660 = vmatpush1.bf16.msra.mxu0 0
  %9661 = vmatprep.subr.bf16.mxu0 0
  %9662 = vmatpush1.bf16.msra.mxu0 0
  %9663 = vmatprep.subr.bf16.mxu0 0
  %9664 = vmatpush1.bf16.msra.mxu0 0
  %9665 = vmatprep.subr.bf16.mxu0 0
  %9666 = vmatpush1.bf16.msra.mxu0 0
  %9667 = vmatprep.subr.bf16.mxu0 0
  %9668 = vmatpush1.bf16.msra.mxu0 0
  %9669 = vmatprep.subr.bf16.mxu0 0
  %9670 = vmatpush1.bf16.msra.mxu0 %v853
  %9671 = vmatprep.subr.bf16.mxu0 0
  %9672 = vmatpush1.bf16.msra.mxu0 %v852
  %9673 = vmatprep.subr.bf16.mxu0 0
  %9674 = vmatpush2.bf16.msra.mxu0 0
  %9675 = vmatprep.subr.bf16.mxu0 0
  %9676 = vmatpush2.bf16.msra.mxu0 0
  %9677 = vmatprep.subr.bf16.mxu0 0
  %9678 = vmatpush2.bf16.msra.mxu0 0
  %9679 = vmatprep.subr.bf16.mxu0 0
  %9680 = vmatpush2.bf16.msra.mxu0 0
  %9681 = vmatprep.subr.bf16.mxu0 0
  %9682 = vmatpush2.bf16.msra.mxu0 0
  %9683 = vmatprep.subr.bf16.mxu0 0
  %9684 = vmatpush2.bf16.msra.mxu0 0
  %9685 = vmatprep.subr.bf16.mxu0 0
  %9686 = vmatpush2.bf16.msra.mxu0 0
  %9687 = vmatprep.subr.bf16.mxu0 0
  %9688 = vmatpush2.bf16.msra.mxu0 0
  %9689 = vmatprep.mubr.bf16.mxu0 0
  %9690 = vmatmul.mubr.bf16.gmra.mxu0 %v9655
  %v9691 = vpop.f32.mrf.mxu0
  %v9692 = vadd.f32 0.0, %v9691
  %v9693 = vpop.f32.mrf.mxu0
  %v9694 = vpop.f32.mrf.mxu0
  %v9695 = vadd.f32 0.0, %v9694
  %v9696 = vpop.f32.mrf.mxu0
  %9697 = vdwg.mxu0
  %v9699 = vsel %vm174, %v9510, 0
  %9701 = vmatprep.subr.bf16.mxu0 0
  %9702 = vmatpush1.bf16.msra.mxu0 0
  %9703 = vmatprep.subr.bf16.mxu0 0
  %9704 = vmatpush1.bf16.msra.mxu0 0
  %9705 = vmatprep.subr.bf16.mxu0 0
  %9706 = vmatpush1.bf16.msra.mxu0 0
  %9707 = vmatprep.subr.bf16.mxu0 0
  %9708 = vmatpush1.bf16.msra.mxu0 0
  %9709 = vmatprep.subr.bf16.mxu0 0
  %9710 = vmatpush1.bf16.msra.mxu0 0
  %9711 = vmatprep.subr.bf16.mxu0 0
  %9712 = vmatpush1.bf16.msra.mxu0 0
  %9713 = vmatprep.subr.bf16.mxu0 0
  %9714 = vmatpush1.bf16.msra.mxu0 %v855
  %9715 = vmatprep.subr.bf16.mxu0 0
  %9716 = vmatpush1.bf16.msra.mxu0 %v854
  %9717 = vmatprep.subr.bf16.mxu0 0
  %9718 = vmatpush2.bf16.msra.mxu0 0
  %9719 = vmatprep.subr.bf16.mxu0 0
  %9720 = vmatpush2.bf16.msra.mxu0 0
  %9721 = vmatprep.subr.bf16.mxu0 0
  %9722 = vmatpush2.bf16.msra.mxu0 0
  %9723 = vmatprep.subr.bf16.mxu0 0
  %9724 = vmatpush2.bf16.msra.mxu0 0
  %9725 = vmatprep.subr.bf16.mxu0 0
  %9726 = vmatpush2.bf16.msra.mxu0 0
  %9727 = vmatprep.subr.bf16.mxu0 0
  %9728 = vmatpush2.bf16.msra.mxu0 0
  %9729 = vmatprep.subr.bf16.mxu0 0
  %9730 = vmatpush2.bf16.msra.mxu0 0
  %9731 = vmatprep.subr.bf16.mxu0 0
  %9732 = vmatpush2.bf16.msra.mxu0 0
  %9733 = vmatprep.mubr.bf16.mxu0 0
  %9734 = vmatmul.mubr.bf16.gmra.mxu0 %v9699
  %v9735 = vpop.f32.mrf.mxu0
  %v9736 = vadd.f32 0.0, %v9735
  %v9737 = vpop.f32.mrf.mxu0
  %v9738 = vpop.f32.mrf.mxu0
  %v9739 = vadd.f32 0.0, %v9738
  %v9740 = vpop.f32.mrf.mxu0
  %9741 = vdwg.mxu0
  %v9743 = vsel %vm174, %v9511, 0
  %9745 = vmatprep.subr.bf16.mxu0 0
  %9746 = vmatpush1.bf16.msra.mxu0 0
  %9747 = vmatprep.subr.bf16.mxu0 0
  %9748 = vmatpush1.bf16.msra.mxu0 0
  %9749 = vmatprep.subr.bf16.mxu0 0
  %9750 = vmatpush1.bf16.msra.mxu0 0
  %9751 = vmatprep.subr.bf16.mxu0 0
  %9752 = vmatpush1.bf16.msra.mxu0 0
  %9753 = vmatprep.subr.bf16.mxu0 0
  %9754 = vmatpush1.bf16.msra.mxu0 0
  %9755 = vmatprep.subr.bf16.mxu0 0
  %9756 = vmatpush1.bf16.msra.mxu0 0
  %9757 = vmatprep.subr.bf16.mxu0 0
  %9758 = vmatpush1.bf16.msra.mxu0 %v857
  %9759 = vmatprep.subr.bf16.mxu0 0
  %9760 = vmatpush1.bf16.msra.mxu0 %v856
  %9761 = vmatprep.subr.bf16.mxu0 0
  %9762 = vmatpush2.bf16.msra.mxu0 0
  %9763 = vmatprep.subr.bf16.mxu0 0
  %9764 = vmatpush2.bf16.msra.mxu0 0
  %9765 = vmatprep.subr.bf16.mxu0 0
  %9766 = vmatpush2.bf16.msra.mxu0 0
  %9767 = vmatprep.subr.bf16.mxu0 0
  %9768 = vmatpush2.bf16.msra.mxu0 0
  %9769 = vmatprep.subr.bf16.mxu0 0
  %9770 = vmatpush2.bf16.msra.mxu0 0
  %9771 = vmatprep.subr.bf16.mxu0 0
  %9772 = vmatpush2.bf16.msra.mxu0 0
  %9773 = vmatprep.subr.bf16.mxu0 0
  %9774 = vmatpush2.bf16.msra.mxu0 0
  %9775 = vmatprep.subr.bf16.mxu0 0
  %9776 = vmatpush2.bf16.msra.mxu0 0
  %9777 = vmatprep.mubr.bf16.mxu0 0
  %9778 = vmatmul.mubr.bf16.gmra.mxu0 %v9743
  %v9779 = vpop.f32.mrf.mxu0
  %v9780 = vadd.f32 0.0, %v9779
  %v9781 = vpop.f32.mrf.mxu0
  %v9782 = vpop.f32.mrf.mxu0
  %v9783 = vadd.f32 0.0, %v9782
  %v9784 = vpop.f32.mrf.mxu0
  %9785 = vdwg.mxu0
  %v9787 = vsel %vm174, %v9512, 0
  %9789 = vmatprep.subr.bf16.mxu0 0
  %9790 = vmatpush1.bf16.msra.mxu0 0
  %9791 = vmatprep.subr.bf16.mxu0 0
  %9792 = vmatpush1.bf16.msra.mxu0 0
  %9793 = vmatprep.subr.bf16.mxu0 0
  %9794 = vmatpush1.bf16.msra.mxu0 0
  %9795 = vmatprep.subr.bf16.mxu0 0
  %9796 = vmatpush1.bf16.msra.mxu0 0
  %9797 = vmatprep.subr.bf16.mxu0 0
  %9798 = vmatpush1.bf16.msra.mxu0 0
  %9799 = vmatprep.subr.bf16.mxu0 0
  %9800 = vmatpush1.bf16.msra.mxu0 0
  %9801 = vmatprep.subr.bf16.mxu0 0
  %9802 = vmatpush1.bf16.msra.mxu0 %v859
  %9803 = vmatprep.subr.bf16.mxu0 0
  %9804 = vmatpush1.bf16.msra.mxu0 %v858
  %9805 = vmatprep.subr.bf16.mxu0 0
  %9806 = vmatpush2.bf16.msra.mxu0 0
  %9807 = vmatprep.subr.bf16.mxu0 0
  %9808 = vmatpush2.bf16.msra.mxu0 0
  %9809 = vmatprep.subr.bf16.mxu0 0
  %9810 = vmatpush2.bf16.msra.mxu0 0
  %9811 = vmatprep.subr.bf16.mxu0 0
  %9812 = vmatpush2.bf16.msra.mxu0 0
  %9813 = vmatprep.subr.bf16.mxu0 0
  %9814 = vmatpush2.bf16.msra.mxu0 0
  %9815 = vmatprep.subr.bf16.mxu0 0
  %9816 = vmatpush2.bf16.msra.mxu0 0
  %9817 = vmatprep.subr.bf16.mxu0 0
  %9818 = vmatpush2.bf16.msra.mxu0 0
  %9819 = vmatprep.subr.bf16.mxu0 0
  %9820 = vmatpush2.bf16.msra.mxu0 0
  %9821 = vmatprep.mubr.bf16.mxu0 0
  %9822 = vmatmul.mubr.bf16.gmra.mxu0 %v9787
  %v9823 = vpop.f32.mrf.mxu0
  %v9824 = vadd.f32 0.0, %v9823
  %v9825 = vpop.f32.mrf.mxu0
  %v9826 = vpop.f32.mrf.mxu0
  %v9827 = vadd.f32 0.0, %v9826
  %v9828 = vpop.f32.mrf.mxu0
  %9829 = vdwg.mxu0
  %v9831 = vsel %vm174, %v9513, 0
  %9833 = vmatprep.subr.bf16.mxu0 0
  %9834 = vmatpush1.bf16.msra.mxu0 0
  %9835 = vmatprep.subr.bf16.mxu0 0
  %9836 = vmatpush1.bf16.msra.mxu0 0
  %9837 = vmatprep.subr.bf16.mxu0 0
  %9838 = vmatpush1.bf16.msra.mxu0 0
  %9839 = vmatprep.subr.bf16.mxu0 0
  %9840 = vmatpush1.bf16.msra.mxu0 0
  %9841 = vmatprep.subr.bf16.mxu0 0
  %9842 = vmatpush1.bf16.msra.mxu0 0
  %9843 = vmatprep.subr.bf16.mxu0 0
  %9844 = vmatpush1.bf16.msra.mxu0 0
  %9845 = vmatprep.subr.bf16.mxu0 0
  %9846 = vmatpush1.bf16.msra.mxu0 %v861
  %9847 = vmatprep.subr.bf16.mxu0 0
  %9848 = vmatpush1.bf16.msra.mxu0 %v860
  %9849 = vmatprep.subr.bf16.mxu0 0
  %9850 = vmatpush2.bf16.msra.mxu0 0
  %9851 = vmatprep.subr.bf16.mxu0 0
  %9852 = vmatpush2.bf16.msra.mxu0 0
  %9853 = vmatprep.subr.bf16.mxu0 0
  %9854 = vmatpush2.bf16.msra.mxu0 0
  %9855 = vmatprep.subr.bf16.mxu0 0
  %9856 = vmatpush2.bf16.msra.mxu0 0
  %9857 = vmatprep.subr.bf16.mxu0 0
  %9858 = vmatpush2.bf16.msra.mxu0 0
  %9859 = vmatprep.subr.bf16.mxu0 0
  %9860 = vmatpush2.bf16.msra.mxu0 0
  %9861 = vmatprep.subr.bf16.mxu0 0
  %9862 = vmatpush2.bf16.msra.mxu0 0
  %9863 = vmatprep.subr.bf16.mxu0 0
  %9864 = vmatpush2.bf16.msra.mxu0 0
  %9865 = vmatprep.mubr.bf16.mxu0 0
  %9866 = vmatmul.mubr.bf16.gmra.mxu0 %v9831
  %v9867 = vpop.f32.mrf.mxu0
  %v9868 = vadd.f32 0.0, %v9867
  %v9869 = vpop.f32.mrf.mxu0
  %v9870 = vpop.f32.mrf.mxu0
  %v9871 = vadd.f32 0.0, %v9870
  %v9872 = vpop.f32.mrf.mxu0
  %9873 = vdwg.mxu0
  %v9875 = vsel %vm174, %v9514, 0
  %9877 = vmatprep.subr.bf16.mxu0 0
  %9878 = vmatpush1.bf16.msra.mxu0 0
  %9879 = vmatprep.subr.bf16.mxu0 0
  %9880 = vmatpush1.bf16.msra.mxu0 0
  %9881 = vmatprep.subr.bf16.mxu0 0
  %9882 = vmatpush1.bf16.msra.mxu0 0
  %9883 = vmatprep.subr.bf16.mxu0 0
  %9884 = vmatpush1.bf16.msra.mxu0 0
  %9885 = vmatprep.subr.bf16.mxu0 0
  %9886 = vmatpush1.bf16.msra.mxu0 0
  %9887 = vmatprep.subr.bf16.mxu0 0
  %9888 = vmatpush1.bf16.msra.mxu0 0
  %9889 = vmatprep.subr.bf16.mxu0 0
  %9890 = vmatpush1.bf16.msra.mxu0 %v863
  %9891 = vmatprep.subr.bf16.mxu0 0
  %9892 = vmatpush1.bf16.msra.mxu0 %v862
  %9893 = vmatprep.subr.bf16.mxu0 0
  %9894 = vmatpush2.bf16.msra.mxu0 0
  %9895 = vmatprep.subr.bf16.mxu0 0
  %9896 = vmatpush2.bf16.msra.mxu0 0
  %9897 = vmatprep.subr.bf16.mxu0 0
  %9898 = vmatpush2.bf16.msra.mxu0 0
  %9899 = vmatprep.subr.bf16.mxu0 0
  %9900 = vmatpush2.bf16.msra.mxu0 0
  %9901 = vmatprep.subr.bf16.mxu0 0
  %9902 = vmatpush2.bf16.msra.mxu0 0
  %9903 = vmatprep.subr.bf16.mxu0 0
  %9904 = vmatpush2.bf16.msra.mxu0 0
  %9905 = vmatprep.subr.bf16.mxu0 0
  %9906 = vmatpush2.bf16.msra.mxu0 0
  %9907 = vmatprep.subr.bf16.mxu0 0
  %9908 = vmatpush2.bf16.msra.mxu0 0
  %9909 = vmatprep.mubr.bf16.mxu0 0
  %9910 = vmatmul.mubr.bf16.gmra.mxu0 %v9875
  %v9911 = vpop.f32.mrf.mxu0
  %v9912 = vadd.f32 0.0, %v9911
  %v9913 = vpop.f32.mrf.mxu0
  %v9914 = vpop.f32.mrf.mxu0
  %v9915 = vadd.f32 0.0, %v9914
  %v9916 = vpop.f32.mrf.mxu0
  %9917 = vdwg.mxu0
  %v9919 = vsel %vm174, %v9515, 0
  %9921 = vmatprep.subr.bf16.mxu0 0
  %9922 = vmatpush1.bf16.msra.mxu0 0
  %9923 = vmatprep.subr.bf16.mxu0 0
  %9924 = vmatpush1.bf16.msra.mxu0 0
  %9925 = vmatprep.subr.bf16.mxu0 0
  %9926 = vmatpush1.bf16.msra.mxu0 0
  %9927 = vmatprep.subr.bf16.mxu0 0
  %9928 = vmatpush1.bf16.msra.mxu0 0
  %9929 = vmatprep.subr.bf16.mxu0 0
  %9930 = vmatpush1.bf16.msra.mxu0 0
  %9931 = vmatprep.subr.bf16.mxu0 0
  %9932 = vmatpush1.bf16.msra.mxu0 0
  %9933 = vmatprep.subr.bf16.mxu0 0
  %9934 = vmatpush1.bf16.msra.mxu0 %v865
  %9935 = vmatprep.subr.bf16.mxu0 0
  %9936 = vmatpush1.bf16.msra.mxu0 %v864
  %9937 = vmatprep.subr.bf16.mxu0 0
  %9938 = vmatpush2.bf16.msra.mxu0 0
  %9939 = vmatprep.subr.bf16.mxu0 0
  %9940 = vmatpush2.bf16.msra.mxu0 0
  %9941 = vmatprep.subr.bf16.mxu0 0
  %9942 = vmatpush2.bf16.msra.mxu0 0
  %9943 = vmatprep.subr.bf16.mxu0 0
  %9944 = vmatpush2.bf16.msra.mxu0 0
  %9945 = vmatprep.subr.bf16.mxu0 0
  %9946 = vmatpush2.bf16.msra.mxu0 0
  %9947 = vmatprep.subr.bf16.mxu0 0
  %9948 = vmatpush2.bf16.msra.mxu0 0
  %9949 = vmatprep.subr.bf16.mxu0 0
  %9950 = vmatpush2.bf16.msra.mxu0 0
  %9951 = vmatprep.subr.bf16.mxu0 0
  %9952 = vmatpush2.bf16.msra.mxu0 0
  %9953 = vmatprep.mubr.bf16.mxu0 0
  %9954 = vmatmul.mubr.bf16.gmra.mxu0 %v9919
  %v9955 = vpop.f32.mrf.mxu0
  %v9956 = vadd.f32 0.0, %v9955
  %v9957 = vpop.f32.mrf.mxu0
  %v9958 = vpop.f32.mrf.mxu0
  %v9959 = vadd.f32 0.0, %v9958
  %v9960 = vpop.f32.mrf.mxu0
  %9961 = vdwg.mxu0
  %v9963 = vsel %vm174, %v9516, 0
  %9965 = vmatprep.subr.bf16.mxu0 0
  %9966 = vmatpush1.bf16.msra.mxu0 0
  %9967 = vmatprep.subr.bf16.mxu0 0
  %9968 = vmatpush1.bf16.msra.mxu0 0
  %9969 = vmatprep.subr.bf16.mxu0 0
  %9970 = vmatpush1.bf16.msra.mxu0 0
  %9971 = vmatprep.subr.bf16.mxu0 0
  %9972 = vmatpush1.bf16.msra.mxu0 0
  %9973 = vmatprep.subr.bf16.mxu0 0
  %9974 = vmatpush1.bf16.msra.mxu0 0
  %9975 = vmatprep.subr.bf16.mxu0 0
  %9976 = vmatpush1.bf16.msra.mxu0 0
  %9977 = vmatprep.subr.bf16.mxu0 0
  %9978 = vmatpush1.bf16.msra.mxu0 %v867
  %9979 = vmatprep.subr.bf16.mxu0 0
  %9980 = vmatpush1.bf16.msra.mxu0 %v866
  %9981 = vmatprep.subr.bf16.mxu0 0
  %9982 = vmatpush2.bf16.msra.mxu0 0
  %9983 = vmatprep.subr.bf16.mxu0 0
  %9984 = vmatpush2.bf16.msra.mxu0 0
  %9985 = vmatprep.subr.bf16.mxu0 0
  %9986 = vmatpush2.bf16.msra.mxu0 0
  %9987 = vmatprep.subr.bf16.mxu0 0
  %9988 = vmatpush2.bf16.msra.mxu0 0
  %9989 = vmatprep.subr.bf16.mxu0 0
  %9990 = vmatpush2.bf16.msra.mxu0 0
  %9991 = vmatprep.subr.bf16.mxu0 0
  %9992 = vmatpush2.bf16.msra.mxu0 0
  %9993 = vmatprep.subr.bf16.mxu0 0
  %9994 = vmatpush2.bf16.msra.mxu0 0
  %9995 = vmatprep.subr.bf16.mxu0 0
  %9996 = vmatpush2.bf16.msra.mxu0 0
  %9997 = vmatprep.mubr.bf16.mxu0 0
  %9998 = vmatmul.mubr.bf16.gmra.mxu0 %v9963
  %v9999 = vpop.f32.mrf.mxu0
  %v10000 = vadd.f32 0.0, %v9999
  %v10001 = vpop.f32.mrf.mxu0
  %v10002 = vpop.f32.mrf.mxu0
  %v10003 = vadd.f32 0.0, %v10002
  %v10004 = vpop.f32.mrf.mxu0
  %10005 = vdwg.mxu0
  %v10007 = vsel %vm174, %v9517, 0
  %10009 = vmatprep.subr.bf16.mxu0 0
  %10010 = vmatpush1.bf16.msra.mxu0 0
  %10011 = vmatprep.subr.bf16.mxu0 0
  %10012 = vmatpush1.bf16.msra.mxu0 0
  %10013 = vmatprep.subr.bf16.mxu0 0
  %10014 = vmatpush1.bf16.msra.mxu0 0
  %10015 = vmatprep.subr.bf16.mxu0 0
  %10016 = vmatpush1.bf16.msra.mxu0 0
  %10017 = vmatprep.subr.bf16.mxu0 0
  %10018 = vmatpush1.bf16.msra.mxu0 0
  %10019 = vmatprep.subr.bf16.mxu0 0
  %10020 = vmatpush1.bf16.msra.mxu0 0
  %10021 = vmatprep.subr.bf16.mxu0 0
  %10022 = vmatpush1.bf16.msra.mxu0 %v869
  %10023 = vmatprep.subr.bf16.mxu0 0
  %10024 = vmatpush1.bf16.msra.mxu0 %v868
  %10025 = vmatprep.subr.bf16.mxu0 0
  %10026 = vmatpush2.bf16.msra.mxu0 0
  %10027 = vmatprep.subr.bf16.mxu0 0
  %10028 = vmatpush2.bf16.msra.mxu0 0
  %10029 = vmatprep.subr.bf16.mxu0 0
  %10030 = vmatpush2.bf16.msra.mxu0 0
  %10031 = vmatprep.subr.bf16.mxu0 0
  %10032 = vmatpush2.bf16.msra.mxu0 0
  %10033 = vmatprep.subr.bf16.mxu0 0
  %10034 = vmatpush2.bf16.msra.mxu0 0
  %10035 = vmatprep.subr.bf16.mxu0 0
  %10036 = vmatpush2.bf16.msra.mxu0 0
  %10037 = vmatprep.subr.bf16.mxu0 0
  %10038 = vmatpush2.bf16.msra.mxu0 0
  %10039 = vmatprep.subr.bf16.mxu0 0
  %10040 = vmatpush2.bf16.msra.mxu0 0
  %10041 = vmatprep.mubr.bf16.mxu0 0
  %10042 = vmatmul.mubr.bf16.gmra.mxu0 %v10007
  %v10043 = vpop.f32.mrf.mxu0
  %v10044 = vadd.f32 0.0, %v10043
  %v10045 = vpop.f32.mrf.mxu0
  %v10046 = vpop.f32.mrf.mxu0
  %v10047 = vadd.f32 0.0, %v10046
  %v10048 = vpop.f32.mrf.mxu0
  %10049 = vdwg.mxu0
  %v10051 = vsel %vm174, %v9518, 0
  %10053 = vmatprep.subr.bf16.mxu0 0
  %10054 = vmatpush1.bf16.msra.mxu0 0
  %10055 = vmatprep.subr.bf16.mxu0 0
  %10056 = vmatpush1.bf16.msra.mxu0 0
  %10057 = vmatprep.subr.bf16.mxu0 0
  %10058 = vmatpush1.bf16.msra.mxu0 0
  %10059 = vmatprep.subr.bf16.mxu0 0
  %10060 = vmatpush1.bf16.msra.mxu0 0
  %10061 = vmatprep.subr.bf16.mxu0 0
  %10062 = vmatpush1.bf16.msra.mxu0 0
  %10063 = vmatprep.subr.bf16.mxu0 0
  %10064 = vmatpush1.bf16.msra.mxu0 0
  %10065 = vmatprep.subr.bf16.mxu0 0
  %10066 = vmatpush1.bf16.msra.mxu0 %v871
  %10067 = vmatprep.subr.bf16.mxu0 0
  %10068 = vmatpush1.bf16.msra.mxu0 %v870
  %10069 = vmatprep.subr.bf16.mxu0 0
  %10070 = vmatpush2.bf16.msra.mxu0 0
  %10071 = vmatprep.subr.bf16.mxu0 0
  %10072 = vmatpush2.bf16.msra.mxu0 0
  %10073 = vmatprep.subr.bf16.mxu0 0
  %10074 = vmatpush2.bf16.msra.mxu0 0
  %10075 = vmatprep.subr.bf16.mxu0 0
  %10076 = vmatpush2.bf16.msra.mxu0 0
  %10077 = vmatprep.subr.bf16.mxu0 0
  %10078 = vmatpush2.bf16.msra.mxu0 0
  %10079 = vmatprep.subr.bf16.mxu0 0
  %10080 = vmatpush2.bf16.msra.mxu0 0
  %10081 = vmatprep.subr.bf16.mxu0 0
  %10082 = vmatpush2.bf16.msra.mxu0 0
  %10083 = vmatprep.subr.bf16.mxu0 0
  %10084 = vmatpush2.bf16.msra.mxu0 0
  %10085 = vmatprep.mubr.bf16.mxu0 0
  %10086 = vmatmul.mubr.bf16.gmra.mxu0 %v10051
  %v10087 = vpop.f32.mrf.mxu0
  %v10088 = vadd.f32 0.0, %v10087
  %v10089 = vpop.f32.mrf.mxu0
  %v10090 = vpop.f32.mrf.mxu0
  %v10091 = vadd.f32 0.0, %v10090
  %v10092 = vpop.f32.mrf.mxu0
  %10093 = vdwg.mxu0
  %v10095 = vsel %vm174, %v9519, 0
  %10097 = vmatprep.subr.bf16.mxu0 0
  %10098 = vmatpush1.bf16.msra.mxu0 0
  %10099 = vmatprep.subr.bf16.mxu0 0
  %10100 = vmatpush1.bf16.msra.mxu0 0
  %10101 = vmatprep.subr.bf16.mxu0 0
  %10102 = vmatpush1.bf16.msra.mxu0 0
  %10103 = vmatprep.subr.bf16.mxu0 0
  %10104 = vmatpush1.bf16.msra.mxu0 0
  %10105 = vmatprep.subr.bf16.mxu0 0
  %10106 = vmatpush1.bf16.msra.mxu0 0
  %10107 = vmatprep.subr.bf16.mxu0 0
  %10108 = vmatpush1.bf16.msra.mxu0 0
  %10109 = vmatprep.subr.bf16.mxu0 0
  %10110 = vmatpush1.bf16.msra.mxu0 %v873
  %10111 = vmatprep.subr.bf16.mxu0 0
  %10112 = vmatpush1.bf16.msra.mxu0 %v872
  %10113 = vmatprep.subr.bf16.mxu0 0
  %10114 = vmatpush2.bf16.msra.mxu0 0
  %10115 = vmatprep.subr.bf16.mxu0 0
  %10116 = vmatpush2.bf16.msra.mxu0 0
  %10117 = vmatprep.subr.bf16.mxu0 0
  %10118 = vmatpush2.bf16.msra.mxu0 0
  %10119 = vmatprep.subr.bf16.mxu0 0
  %10120 = vmatpush2.bf16.msra.mxu0 0
  %10121 = vmatprep.subr.bf16.mxu0 0
  %10122 = vmatpush2.bf16.msra.mxu0 0
  %10123 = vmatprep.subr.bf16.mxu0 0
  %10124 = vmatpush2.bf16.msra.mxu0 0
  %10125 = vmatprep.subr.bf16.mxu0 0
  %10126 = vmatpush2.bf16.msra.mxu0 0
  %10127 = vmatprep.subr.bf16.mxu0 0
  %10128 = vmatpush2.bf16.msra.mxu0 0
  %10129 = vmatprep.mubr.bf16.mxu0 0
  %10130 = vmatmul.mubr.bf16.gmra.mxu0 %v10095
  %v10131 = vpop.f32.mrf.mxu0
  %v10132 = vadd.f32 0.0, %v10131
  %v10133 = vpop.f32.mrf.mxu0
  %v10134 = vpop.f32.mrf.mxu0
  %v10135 = vadd.f32 0.0, %v10134
  %v10136 = vpop.f32.mrf.mxu0
  %10137 = vdwg.mxu0
  %v10139 = vsel %vm174, %v9520, 0
  %10141 = vmatprep.subr.bf16.mxu0 0
  %10142 = vmatpush1.bf16.msra.mxu0 0
  %10143 = vmatprep.subr.bf16.mxu0 0
  %10144 = vmatpush1.bf16.msra.mxu0 0
  %10145 = vmatprep.subr.bf16.mxu0 0
  %10146 = vmatpush1.bf16.msra.mxu0 0
  %10147 = vmatprep.subr.bf16.mxu0 0
  %10148 = vmatpush1.bf16.msra.mxu0 0
  %10149 = vmatprep.subr.bf16.mxu0 0
  %10150 = vmatpush1.bf16.msra.mxu0 0
  %10151 = vmatprep.subr.bf16.mxu0 0
  %10152 = vmatpush1.bf16.msra.mxu0 0
  %10153 = vmatprep.subr.bf16.mxu0 0
  %10154 = vmatpush1.bf16.msra.mxu0 %v875
  %10155 = vmatprep.subr.bf16.mxu0 0
  %10156 = vmatpush1.bf16.msra.mxu0 %v874
  %10157 = vmatprep.subr.bf16.mxu0 0
  %10158 = vmatpush2.bf16.msra.mxu0 0
  %10159 = vmatprep.subr.bf16.mxu0 0
  %10160 = vmatpush2.bf16.msra.mxu0 0
  %10161 = vmatprep.subr.bf16.mxu0 0
  %10162 = vmatpush2.bf16.msra.mxu0 0
  %10163 = vmatprep.subr.bf16.mxu0 0
  %10164 = vmatpush2.bf16.msra.mxu0 0
  %10165 = vmatprep.subr.bf16.mxu0 0
  %10166 = vmatpush2.bf16.msra.mxu0 0
  %10167 = vmatprep.subr.bf16.mxu0 0
  %10168 = vmatpush2.bf16.msra.mxu0 0
  %10169 = vmatprep.subr.bf16.mxu0 0
  %10170 = vmatpush2.bf16.msra.mxu0 0
  %10171 = vmatprep.subr.bf16.mxu0 0
  %10172 = vmatpush2.bf16.msra.mxu0 0
  %10173 = vmatprep.mubr.bf16.mxu0 0
  %10174 = vmatmul.mubr.bf16.gmra.mxu0 %v10139
  %v10175 = vpop.f32.mrf.mxu0
  %v10176 = vadd.f32 0.0, %v10175
  %v10177 = vpop.f32.mrf.mxu0
  %v10178 = vpop.f32.mrf.mxu0
  %v10179 = vadd.f32 0.0, %v10178
  %v10180 = vpop.f32.mrf.mxu0
  %10181 = vdwg.mxu0
  %v10183 = vsel %vm174, %v9521, 0
  %10185 = vmatprep.subr.bf16.mxu0 0
  %10186 = vmatpush1.bf16.msra.mxu0 0
  %10187 = vmatprep.subr.bf16.mxu0 0
  %10188 = vmatpush1.bf16.msra.mxu0 0
  %10189 = vmatprep.subr.bf16.mxu0 0
  %10190 = vmatpush1.bf16.msra.mxu0 0
  %10191 = vmatprep.subr.bf16.mxu0 0
  %10192 = vmatpush1.bf16.msra.mxu0 0
  %10193 = vmatprep.subr.bf16.mxu0 0
  %10194 = vmatpush1.bf16.msra.mxu0 0
  %10195 = vmatprep.subr.bf16.mxu0 0
  %10196 = vmatpush1.bf16.msra.mxu0 0
  %10197 = vmatprep.subr.bf16.mxu0 0
  %10198 = vmatpush1.bf16.msra.mxu0 %v877
  %10199 = vmatprep.subr.bf16.mxu0 0
  %10200 = vmatpush1.bf16.msra.mxu0 %v876
  %10201 = vmatprep.subr.bf16.mxu0 0
  %10202 = vmatpush2.bf16.msra.mxu0 0
  %10203 = vmatprep.subr.bf16.mxu0 0
  %10204 = vmatpush2.bf16.msra.mxu0 0
  %10205 = vmatprep.subr.bf16.mxu0 0
  %10206 = vmatpush2.bf16.msra.mxu0 0
  %10207 = vmatprep.subr.bf16.mxu0 0
  %10208 = vmatpush2.bf16.msra.mxu0 0
  %10209 = vmatprep.subr.bf16.mxu0 0
  %10210 = vmatpush2.bf16.msra.mxu0 0
  %10211 = vmatprep.subr.bf16.mxu0 0
  %10212 = vmatpush2.bf16.msra.mxu0 0
  %10213 = vmatprep.subr.bf16.mxu0 0
  %10214 = vmatpush2.bf16.msra.mxu0 0
  %10215 = vmatprep.subr.bf16.mxu0 0
  %10216 = vmatpush2.bf16.msra.mxu0 0
  %10217 = vmatprep.mubr.bf16.mxu0 0
  %10218 = vmatmul.mubr.bf16.gmra.mxu0 %v10183
  %v10219 = vpop.f32.mrf.mxu0
  %v10220 = vadd.f32 0.0, %v10219
  %v10221 = vpop.f32.mrf.mxu0
  %v10222 = vpop.f32.mrf.mxu0
  %v10223 = vadd.f32 0.0, %v10222
  %v10224 = vpop.f32.mrf.mxu0
  %10225 = vdwg.mxu0
  %v10226 = vpack.c.bf16 %v9563, %v9560
  %v10227 = vpack.c.bf16 %v9607, %v9604
  %v10228 = vpack.c.bf16 %v9651, %v9648
  %v10229 = vpack.c.bf16 %v9695, %v9692
  %v10230 = vpack.c.bf16 %v9739, %v9736
  %v10231 = vpack.c.bf16 %v9783, %v9780
  %v10232 = vpack.c.bf16 %v9827, %v9824
  %v10233 = vpack.c.bf16 %v9871, %v9868
  %v10234 = vpack.c.bf16 %v9915, %v9912
  %v10235 = vpack.c.bf16 %v9959, %v9956
  %v10236 = vpack.c.bf16 %v10003, %v10000
  %v10237 = vpack.c.bf16 %v10047, %v10044
  %v10238 = vpack.c.bf16 %v10091, %v10088
  %v10239 = vpack.c.bf16 %v10135, %v10132
  %v10240 = vpack.c.bf16 %v10179, %v10176
  %v10241 = vpack.c.bf16 %v10223, %v10220
  %v10242 = vld [vmem:[%s4] sm:$0xf]
  %v10243 = vld [vmem:[%s4 + $0x4] sm:$0xf]
  %v10244 = vld [vmem:[%s4 + $0x8] sm:$0xf]
  %v10245 = vld [vmem:[%s4 + $0xc] sm:$0xf]
  %v10246 = vld [vmem:[%s4 + $0x10] sm:$0xf]
  %v10247 = vld [vmem:[%s4 + $0x14] sm:$0xf]
  %v10248 = vld [vmem:[%s4 + $0x18] sm:$0xf]
  %v10249 = vld [vmem:[%s4 + $0x1c] sm:$0xf]
  %v10250 = vld [vmem:[%s4 + $0x20] sm:$0xf]
  %v10251 = vld [vmem:[%s4 + $0x24] sm:$0xf]
  %v10252 = vld [vmem:[%s4 + $0x28] sm:$0xf]
  %v10253 = vld [vmem:[%s4 + $0x2c] sm:$0xf]
  %v10254 = vld [vmem:[%s4 + $0x30] sm:$0xf]
  %v10255 = vld [vmem:[%s4 + $0x34] sm:$0xf]
  %v10256 = vld [vmem:[%s4 + $0x38] sm:$0xf]
  %v10257 = vld [vmem:[%s4 + $0x3c] sm:$0xf]
  %v10258 = vld [vmem:[%s5] sm:$0x1]
  %v10260 = vlaneseq
  %v10261 = vshrl.u32 %v10260, 7
  %v10262 = vsub.s32 0, %v10261
  %v10263 = vrot.slane %v10258, %v10262
  %v10281 = vunpack.c.l.b16 %v10242
  %v10282 = vunpack.c.l.b16 %v10243
  %v10283 = vunpack.c.l.b16 %v10244
  %v10284 = vunpack.c.l.b16 %v10245
  %v10285 = vunpack.c.l.b16 %v10246
  %v10286 = vunpack.c.l.b16 %v10247
  %v10287 = vunpack.c.l.b16 %v10248
  %v10288 = vunpack.c.l.b16 %v10249
  %v10289 = vunpack.c.l.b16 %v10250
  %v10290 = vunpack.c.l.b16 %v10251
  %v10291 = vunpack.c.l.b16 %v10252
  %v10292 = vunpack.c.l.b16 %v10253
  %v10293 = vunpack.c.l.b16 %v10254
  %v10294 = vunpack.c.l.b16 %v10255
  %v10295 = vunpack.c.l.b16 %v10256
  %v10296 = vunpack.c.l.b16 %v10257
  %v10297 = vpack.c.b16 %v10282, %v10281
  %v10298 = vpack.c.b16 %v10284, %v10283
  %v10299 = vpack.c.b16 %v10286, %v10285
  %v10300 = vpack.c.b16 %v10288, %v10287
  %v10301 = vpack.c.b16 %v10290, %v10289
  %v10302 = vpack.c.b16 %v10292, %v10291
  %v10303 = vpack.c.b16 %v10294, %v10293
  %v10304 = vpack.c.b16 %v10296, %v10295
  %10313 = vmatprep.subr.bf16.mxu0 0
  %10314 = vmatpush1.bf16.msra.mxu0 %v10304
  %10315 = vmatprep.subr.bf16.mxu0 0
  %10316 = vmatpush1.bf16.msra.mxu0 %v10303
  %10317 = vmatprep.subr.bf16.mxu0 0
  %10318 = vmatpush1.bf16.msra.mxu0 %v10302
  %10319 = vmatprep.subr.bf16.mxu0 0
  %10320 = vmatpush1.bf16.msra.mxu0 %v10301
  %10321 = vmatprep.subr.bf16.mxu0 0
  %10322 = vmatpush1.bf16.msra.mxu0 %v10300
  %10323 = vmatprep.subr.bf16.mxu0 0
  %10324 = vmatpush1.bf16.msra.mxu0 %v10299
  %10325 = vmatprep.subr.bf16.mxu0 0
  %10326 = vmatpush1.bf16.msra.mxu0 %v10298
  %10327 = vmatprep.subr.bf16.mxu0 0
  %10328 = vmatpush1.bf16.msra.mxu0 %v10297
  %10329 = vmatprep.subr.bf16.mxu0 0
  %10330 = vmatpush2.bf16.msra.mxu0 0
  %10331 = vmatprep.subr.bf16.mxu0 0
  %10332 = vmatpush2.bf16.msra.mxu0 0
  %10333 = vmatprep.subr.bf16.mxu0 0
  %10334 = vmatpush2.bf16.msra.mxu0 0
  %10335 = vmatprep.subr.bf16.mxu0 0
  %10336 = vmatpush2.bf16.msra.mxu0 0
  %10337 = vmatprep.subr.bf16.mxu0 0
  %10338 = vmatpush2.bf16.msra.mxu0 0
  %10339 = vmatprep.subr.bf16.mxu0 0
  %10340 = vmatpush2.bf16.msra.mxu0 0
  %10341 = vmatprep.subr.bf16.mxu0 0
  %10342 = vmatpush2.bf16.msra.mxu0 0
  %10343 = vmatprep.subr.bf16.mxu0 0
  %10344 = vmatpush2.bf16.msra.mxu0 0
  %10345 = vmatprep.mubr.bf16.mxu0 0
  %10346 = vmatmul.mubr.bf16.gmra.mxu0 %v10226
  %v10347 = vpop.f32.mrf.mxu0
  %v10348 = vadd.f32 %v10263, %v10347
  %v10349 = vpop.f32.mrf.mxu0
  %v10350 = vpop.f32.mrf.mxu0
  %v10351 = vadd.f32 %v10263, %v10350
  %v10352 = vpop.f32.mrf.mxu0
  %10353 = vmatprep.mubr.bf16.mxu0 0
  %10354 = vmatmul.mubr.bf16.gmra.mxu0 %v10227
  %v10355 = vpop.f32.mrf.mxu0
  %v10356 = vadd.f32 %v10263, %v10355
  %v10357 = vpop.f32.mrf.mxu0
  %v10358 = vpop.f32.mrf.mxu0
  %v10359 = vadd.f32 %v10263, %v10358
  %v10360 = vpop.f32.mrf.mxu0
  %10361 = vmatprep.mubr.bf16.mxu0 0
  %10362 = vmatmul.mubr.bf16.gmra.mxu0 %v10228
  %v10363 = vpop.f32.mrf.mxu0
  %v10364 = vadd.f32 %v10263, %v10363
  %v10365 = vpop.f32.mrf.mxu0
  %v10366 = vpop.f32.mrf.mxu0
  %v10367 = vadd.f32 %v10263, %v10366
  %v10368 = vpop.f32.mrf.mxu0
  %10369 = vmatprep.mubr.bf16.mxu0 0
  %10370 = vmatmul.mubr.bf16.gmra.mxu0 %v10229
  %v10371 = vpop.f32.mrf.mxu0
  %v10372 = vadd.f32 %v10263, %v10371
  %v10373 = vpop.f32.mrf.mxu0
  %v10374 = vpop.f32.mrf.mxu0
  %v10375 = vadd.f32 %v10263, %v10374
  %v10376 = vpop.f32.mrf.mxu0
  %10377 = vmatprep.mubr.bf16.mxu0 0
  %10378 = vmatmul.mubr.bf16.gmra.mxu0 %v10230
  %v10379 = vpop.f32.mrf.mxu0
  %v10380 = vadd.f32 %v10263, %v10379
  %v10381 = vpop.f32.mrf.mxu0
  %v10382 = vpop.f32.mrf.mxu0
  %v10383 = vadd.f32 %v10263, %v10382
  %v10384 = vpop.f32.mrf.mxu0
  %10385 = vmatprep.mubr.bf16.mxu0 0
  %10386 = vmatmul.mubr.bf16.gmra.mxu0 %v10231
  %v10387 = vpop.f32.mrf.mxu0
  %v10388 = vadd.f32 %v10263, %v10387
  %v10389 = vpop.f32.mrf.mxu0
  %v10390 = vpop.f32.mrf.mxu0
  %v10391 = vadd.f32 %v10263, %v10390
  %v10392 = vpop.f32.mrf.mxu0
  %10393 = vmatprep.mubr.bf16.mxu0 0
  %10394 = vmatmul.mubr.bf16.gmra.mxu0 %v10232
  %v10395 = vpop.f32.mrf.mxu0
  %v10396 = vadd.f32 %v10263, %v10395
  %v10397 = vpop.f32.mrf.mxu0
  %v10398 = vpop.f32.mrf.mxu0
  %v10399 = vadd.f32 %v10263, %v10398
  %v10400 = vpop.f32.mrf.mxu0
  %10401 = vmatprep.mubr.bf16.mxu0 0
  %10402 = vmatmul.mubr.bf16.gmra.mxu0 %v10233
  %v10403 = vpop.f32.mrf.mxu0
  %v10404 = vadd.f32 %v10263, %v10403
  %v10405 = vpop.f32.mrf.mxu0
  %v10406 = vpop.f32.mrf.mxu0
  %v10407 = vadd.f32 %v10263, %v10406
  %v10408 = vpop.f32.mrf.mxu0
  %10409 = vmatprep.mubr.bf16.mxu0 0
  %10410 = vmatmul.mubr.bf16.gmra.mxu0 %v10234
  %v10411 = vpop.f32.mrf.mxu0
  %v10412 = vadd.f32 %v10263, %v10411
  %v10413 = vpop.f32.mrf.mxu0
  %v10414 = vpop.f32.mrf.mxu0
  %v10415 = vadd.f32 %v10263, %v10414
  %v10416 = vpop.f32.mrf.mxu0
  %10417 = vmatprep.mubr.bf16.mxu0 0
  %10418 = vmatmul.mubr.bf16.gmra.mxu0 %v10235
  %v10419 = vpop.f32.mrf.mxu0
  %v10420 = vadd.f32 %v10263, %v10419
  %v10421 = vpop.f32.mrf.mxu0
  %v10422 = vpop.f32.mrf.mxu0
  %v10423 = vadd.f32 %v10263, %v10422
  %v10424 = vpop.f32.mrf.mxu0
  %10425 = vmatprep.mubr.bf16.mxu0 0
  %10426 = vmatmul.mubr.bf16.gmra.mxu0 %v10236
  %v10427 = vpop.f32.mrf.mxu0
  %v10428 = vadd.f32 %v10263, %v10427
  %v10429 = vpop.f32.mrf.mxu0
  %v10430 = vpop.f32.mrf.mxu0
  %v10431 = vadd.f32 %v10263, %v10430
  %v10432 = vpop.f32.mrf.mxu0
  %10433 = vmatprep.mubr.bf16.mxu0 0
  %10434 = vmatmul.mubr.bf16.gmra.mxu0 %v10237
  %v10435 = vpop.f32.mrf.mxu0
  %v10436 = vadd.f32 %v10263, %v10435
  %v10437 = vpop.f32.mrf.mxu0
  %v10438 = vpop.f32.mrf.mxu0
  %v10439 = vadd.f32 %v10263, %v10438
  %v10440 = vpop.f32.mrf.mxu0
  %10441 = vmatprep.mubr.bf16.mxu0 0
  %10442 = vmatmul.mubr.bf16.gmra.mxu0 %v10238
  %v10443 = vpop.f32.mrf.mxu0
  %v10444 = vadd.f32 %v10263, %v10443
  %v10445 = vpop.f32.mrf.mxu0
  %v10446 = vpop.f32.mrf.mxu0
  %v10447 = vadd.f32 %v10263, %v10446
  %v10448 = vpop.f32.mrf.mxu0
  %10449 = vmatprep.mubr.bf16.mxu0 0
  %10450 = vmatmul.mubr.bf16.gmra.mxu0 %v10239
  %v10451 = vpop.f32.mrf.mxu0
  %v10452 = vadd.f32 %v10263, %v10451
  %v10453 = vpop.f32.mrf.mxu0
  %v10454 = vpop.f32.mrf.mxu0
  %v10455 = vadd.f32 %v10263, %v10454
  %v10456 = vpop.f32.mrf.mxu0
  %10457 = vmatprep.mubr.bf16.mxu0 0
  %10458 = vmatmul.mubr.bf16.gmra.mxu0 %v10240
  %v10459 = vpop.f32.mrf.mxu0
  %v10460 = vadd.f32 %v10263, %v10459
  %v10461 = vpop.f32.mrf.mxu0
  %v10462 = vpop.f32.mrf.mxu0
  %v10463 = vadd.f32 %v10263, %v10462
  %v10464 = vpop.f32.mrf.mxu0
  %10465 = vmatprep.mubr.bf16.mxu0 0
  %10466 = vmatmul.mubr.bf16.gmra.mxu0 %v10241
  %v10467 = vpop.f32.mrf.mxu0
  %v10468 = vadd.f32 %v10263, %v10467
  %v10469 = vpop.f32.mrf.mxu0
  %v10470 = vpop.f32.mrf.mxu0
  %v10471 = vadd.f32 %v10263, %v10470
  %v10472 = vpop.f32.mrf.mxu0
  %10473 = vdwg.mxu0
  %10474 = vst.msk [vmem:[%s8] sm:$0xff] %vm174, %v10348
  %10475 = vst.msk [vmem:[%s8 + $0x8] sm:$0xff] %vm174, %v10351
  %10476 = vst.msk [vmem:[%s8 + $0x10] sm:$0xff] %vm174, %v10356
  %10477 = vst.msk [vmem:[%s8 + $0x18] sm:$0xff] %vm174, %v10359
  %10478 = vst.msk [vmem:[%s8 + $0x20] sm:$0xff] %vm174, %v10364
  %10479 = vst.msk [vmem:[%s8 + $0x28] sm:$0xff] %vm174, %v10367
  %10480 = vst.msk [vmem:[%s8 + $0x30] sm:$0xff] %vm174, %v10372
  %10481 = vst.msk [vmem:[%s8 + $0x38] sm:$0xff] %vm174, %v10375
  %10482 = vst.msk [vmem:[%s8 + $0x40] sm:$0xff] %vm174, %v10380
  %10483 = vst.msk [vmem:[%s8 + $0x48] sm:$0xff] %vm174, %v10383
  %10484 = vst.msk [vmem:[%s8 + $0x50] sm:$0xff] %vm174, %v10388
  %10485 = vst.msk [vmem:[%s8 + $0x58] sm:$0xff] %vm174, %v10391
  %10486 = vst.msk [vmem:[%s8 + $0x60] sm:$0xff] %vm174, %v10396
  %10487 = vst.msk [vmem:[%s8 + $0x68] sm:$0xff] %vm174, %v10399
  %10488 = vst.msk [vmem:[%s8 + $0x70] sm:$0xff] %vm174, %v10404
  %10489 = vst.msk [vmem:[%s8 + $0x78] sm:$0xff] %vm174, %v10407
  %10490 = vst.msk [vmem:[%s8 + $0x80] sm:$0xff] %vm174, %v10412
  %10491 = vst.msk [vmem:[%s8 + $0x88] sm:$0xff] %vm174, %v10415
  %10492 = vst.msk [vmem:[%s8 + $0x90] sm:$0xff] %vm174, %v10420
  %10493 = vst.msk [vmem:[%s8 + $0x98] sm:$0xff] %vm174, %v10423
  %10494 = vst.msk [vmem:[%s8 + $0xa0] sm:$0xff] %vm174, %v10428
  %10495 = vst.msk [vmem:[%s8 + $0xa8] sm:$0xff] %vm174, %v10431
  %10496 = vst.msk [vmem:[%s8 + $0xb0] sm:$0xff] %vm174, %v10436
  %10497 = vst.msk [vmem:[%s8 + $0xb8] sm:$0xff] %vm174, %v10439
  %10498 = vst.msk [vmem:[%s8 + $0xc0] sm:$0xff] %vm174, %v10444
  %10499 = vst.msk [vmem:[%s8 + $0xc8] sm:$0xff] %vm174, %v10447
  %10500 = vst.msk [vmem:[%s8 + $0xd0] sm:$0xff] %vm174, %v10452
  %10501 = vst.msk [vmem:[%s8 + $0xd8] sm:$0xff] %vm174, %v10455
  %10502 = vst.msk [vmem:[%s8 + $0xe0] sm:$0xff] %vm174, %v10460
  %10503 = vst.msk [vmem:[%s8 + $0xe8] sm:$0xff] %vm174, %v10463
  %10504 = vst.msk [vmem:[%s8 + $0xf0] sm:$0xff] %vm174, %v10468
  %10505 = vst.msk [vmem:[%s8 + $0xf8] sm:$0xff] %vm174, %v10471
  // Predicated region
  $region34: #{tpu_custom_call.1} parent=0 // pred_check
    _
  $region35: #{tpu_custom_call.1} parent=0 // pred_check_branch
    %10507 = sbr.rel (0) target = $region37
  $region36: #{tpu_custom_call.1} parent=0 // pred_region
    _
  $region37: #{tpu_custom_call.1} parent=0 // pred_fallthru
    _
  // Predicated region
  $region38: #{tpu_custom_call.1} parent=0 // pred_check
    _
  $region39: #{tpu_custom_call.1} parent=0 // pred_check_branch
    %10509 = sbr.rel (0) target = $region41
  $region40: #{tpu_custom_call.1} parent=0 // pred_region
    _
  $region41: #{tpu_custom_call.1} parent=0 // pred_fallthru
    _

</llo_original>
